<compile_context>
chip_gen: v5e
topology: v5e:2x2
jax: 0.10.0
libtpu: 0.0.40
codegen_flags: <defaults>
</compile_context>

<pallas_src>
import functools

import jax
import jax.numpy as jnp
from jax.experimental import pallas as pl
from jax.experimental.pallas import tpu as pltpu


# ---------------------------------------------------------------------------
# Pallas kernel: whole recurrence for one image per grid step
# ---------------------------------------------------------------------------

def _recurrent_kernel(x_ref, w_ref, scale_ref, shift_ref, o_ref, xpad_ref,
                      *, H, W, C, t):
    """Fused (t+1) x (conv3x3 + folded-BN + ReLU) recurrence for one image.

    x_ref:     (1, H*W, C)   input image, NHWC flattened over (H, W)
    w_ref:     (9, C, C)     conv weight per tap, (kh*3+kw, Cin, Cout)
    scale_ref: (1, C)        folded BN scale   = gamma / sqrt(var + eps)
    shift_ref: (1, C)        folded BN shift   = beta + (bias - mean) * scale
    o_ref:     (1, H*W, C)   output image
    xpad_ref:  (H+2, W+2, C) f32 VMEM halo scratch
    """
    # Zero the halo scratch every grid step (the border must be zero; the interior
    # is fully overwritten before every use).  ~5 KB -> negligible.  Zeroing every
    # step (instead of only at program_id==0) keeps it correct when the "parallel"
    # batch axis is sharded across TensorCores, each with its own scratch.
    xpad_ref[...] = jnp.zeros_like(xpad_ref)

    x0 = x_ref[0].astype(jnp.float32)          # (H*W, C), stays resident in VMEM
    scale = scale_ref[...]                     # (1, C)
    shift = shift_ref[...]                     # (1, C)

    def conv_bn_relu(a):                       # a: (H*W, C) f32
        # Place the activation in the centre of the zero-padded scratch.
        xpad_ref[1:H + 1, 1:W + 1, :] = a.reshape(H, W, C)
        # 3x3 conv as 9 shifted-window matmuls, f32 accumulation on the MXU.
        acc = jnp.zeros((H * W, C), jnp.float32)
        for kh in range(3):
            for kw in range(3):
                win = xpad_ref[kh:kh + H, kw:kw + W, :].reshape(H * W, C)
                acc = acc + jnp.dot(win, w_ref[kh * 3 + kw],
                                    preferred_element_type=jnp.float32)
        y = acc * scale + shift                # conv-bias + BatchNorm (folded)
        return jnp.maximum(y, 0.0)             # ReLU

    # PyTorch loop: i==0 does x1 = conv(x); every iteration does x1 = conv(x + x1).
    x1 = conv_bn_relu(x0)
    for _ in range(t):
        x1 = conv_bn_relu(x0 + x1)

    o_ref[0] = x1.astype(o_ref.dtype)


# ---------------------------------------------------------------------------
# Wrapper: layout plumbing + parameter folding
# ---------------------------------------------------------------------------

def recurrent_block_forward(x_nchw, params, t=2, eps=1e-5):
    w = params["conv_w"]                        # (C, C, 3, 3)  torch OIHW
    b = params["conv_b"]                        # (C,)
    gamma, beta, mean, var = params["bn"]       # running stats (inference mode)

    B, C, H, W = x_nchw.shape

    # Fold conv bias + inference BatchNorm into a per-channel scale/shift.
    scale = gamma / jnp.sqrt(var + eps)
    shift = beta + (b - mean) * scale

    # NCHW -> NHWC flattened to (B, H*W, C): channels on the lane axis, spatial on
    # sublanes; matches the kernel-internal matmul layout so no in-kernel relayouts.
    x = jnp.transpose(x_nchw, (0, 2, 3, 1)).reshape(B, H * W, C)
    # OIHW -> (tap, Cin, Cout) so each tap is a ready-to-use (C, C) MXU operand.
    wm = jnp.transpose(w, (2, 3, 1, 0)).reshape(9, C, C)

    kernel = functools.partial(_recurrent_kernel, H=H, W=W, C=C, t=t)
    y = pl.pallas_call(
        kernel,
        out_shape=jax.ShapeDtypeStruct((B, H * W, C), x.dtype),
        grid_spec=pltpu.PrefetchScalarGridSpec(
            num_scalar_prefetch=0,
            grid=(B,),                                            # one image / step
            in_specs=[
                pl.BlockSpec((1, H * W, C), lambda i: (i, 0, 0)),  # x
                pl.BlockSpec((9, C, C), lambda i: (0, 0, 0)),      # weights
                pl.BlockSpec((1, C), lambda i: (0, 0)),            # scale
                pl.BlockSpec((1, C), lambda i: (0, 0)),            # shift
            ],
            out_specs=pl.BlockSpec((1, H * W, C), lambda i: (i, 0, 0)),
            scratch_shapes=[pltpu.VMEM((H + 2, W + 2, C), jnp.float32)],
        ),
        compiler_params=pltpu.CompilerParams(
            dimension_semantics=("parallel",),   # pipeline over batch; 2-TC shard on v7x
        ),
    )(x, wm, scale.reshape(1, C), shift.reshape(1, C))

    return jnp.transpose(y.reshape(B, H, W, C), (0, 3, 1, 2))      # back to NCHW


# ---------------------------------------------------------------------------
# Pure-JAX reference (for correctness check)
# ---------------------------------------------------------------------------

def _conv_bn_relu_ref(a_nhwc, w_oihw, bias, bn, eps=1e-5):
    gamma, beta, mean, var = bn
    rhs = jnp.transpose(w_oihw, (2, 3, 1, 0))                      # HWIO
    y = jax.lax.conv_general_dilated(
        a_nhwc, rhs, window_strides=(1, 1), padding="SAME",
        dimension_numbers=("NHWC", "HWIO", "NHWC"))
    y = y + bias
    s = gamma / jnp.sqrt(var + eps)
    y = y * s + (beta - mean * s)
    return jnp.maximum(y, 0.0)


def recurrent_block_ref(x_nchw, params, t=2):
    x = jnp.transpose(x_nchw, (0, 2, 3, 1))
    x1 = _conv_bn_relu_ref(x, params["conv_w"], params["conv_b"], params["bn"])
    for _ in range(t):
        x1 = _conv_bn_relu_ref(x + x1, params["conv_w"], params["conv_b"], params["bn"])
    return jnp.transpose(x1, (0, 3, 1, 2))


# ---------------------------------------------------------------------------
# Main
# ---------------------------------------------------------------------------

if __name__ == "__main__":
    # Recurrent_block(ch_out=4, t=2) on a (2, 4, 16, 16) NCHW input.
    B, C, H, W = 2, 4, 16, 16
    t = 2

    key = jax.random.PRNGKey(0)
    kx, kw, kb, kg, kbe, km, kv = jax.random.split(key, 7)
    x = jax.random.normal(kx, (B, C, H, W), dtype=jnp.float32)
    params = dict(
        conv_w=(0.2 * jax.random.normal(kw, (C, C, 3, 3))).astype(jnp.float32),
        conv_b=(0.1 * jax.random.normal(kb, (C,))).astype(jnp.float32),
        bn=(
            (1.0 + 0.1 * jax.random.normal(kg, (C,))).astype(jnp.float32),          # gamma
            (0.1 * jax.random.normal(kbe, (C,))).astype(jnp.float32),               # beta
            (0.1 * jax.random.normal(km, (C,))).astype(jnp.float32),                # running mean
            (1.0 + 0.1 * jnp.abs(jax.random.normal(kv, (C,)))).astype(jnp.float32), # running var
        ),
    )

    fwd = jax.jit(functools.partial(recurrent_block_forward, t=t))
    out = jax.block_until_ready(fwd(x, params))
    assert out.shape == (B, C, H, W), out.shape

    ref = jax.block_until_ready(recurrent_block_ref(x, params, t=t))
    max_err = float(jnp.max(jnp.abs(out - ref)))
    assert max_err < 1e-3, f"mismatch vs pure-JAX reference: {max_err}"

    # TODO(synk): BatchNorm runs in inference mode (folded running stats, eps=1e-5);
    # training-mode batch statistics are not computed.
    print("KERNEL_OK")
</pallas_src>

<mosaic_0001>
module attributes {stable_mosaic.version = 11 : i64} {
  func.func @_recurrent_kernel(%arg0: i32, %arg1: memref<1x256x4xf32, #tpu.memory_space<vmem>>, %arg2: memref<9x4x4xf32, #tpu.memory_space<vmem>>, %arg3: memref<1x4xf32, #tpu.memory_space<vmem>>, %arg4: memref<1x4xf32, #tpu.memory_space<vmem>>, %arg5: memref<1x256x4xf32, #tpu.memory_space<vmem>>, %arg6: memref<18x18x4xf32, #tpu.memory_space<vmem>>) attributes {dimension_semantics = [#tpu.dimension_semantics<parallel>], iteration_bounds = array<i64: 2>, scalar_prefetch = 0 : i64, scratch_operands = 1 : i64, tpu.core_type = #tpu.core_type<tc>, window_params = [{transform_indices = @transform_0, window_bounds = array<i64: 1, 256, 4>}, {pipeline_mode = #tpu.pipeline_mode<synchronous>, transform_indices = @transform_1, window_bounds = array<i64: 9, 4, 4>}, {pipeline_mode = #tpu.pipeline_mode<synchronous>, transform_indices = @transform_2, window_bounds = array<i64: 1, 4>}, {pipeline_mode = #tpu.pipeline_mode<synchronous>, transform_indices = @transform_3, window_bounds = array<i64: 1, 4>}, {transform_indices = @transform_4, window_bounds = array<i64: 1, 256, 4>}]} {
    %cst = arith.constant 0.000000e+00 : f32
    %0 = vector.broadcast %cst : f32 to vector<18x18x4xf32>
    %c0 = arith.constant 0 : index
    %c0_0 = arith.constant 0 : index
    %c0_1 = arith.constant 0 : index
    %1 = vector.load %arg6[%c0, %c0_0, %c0_1] : memref<18x18x4xf32, #tpu.memory_space<vmem>>, vector<18x18x4xf32>
    tpu.vector_store %arg6[%c0, %c0_0, %c0_1], %0 {strides = array<i32>} : memref<18x18x4xf32, #tpu.memory_space<vmem>>, vector<18x18x4xf32>,
    %c0_2 = arith.constant 0 : index
    %c0_3 = arith.constant 0 : index
    %c0_4 = arith.constant 0 : index
    %2 = vector.load %arg1[%c0_2, %c0_3, %c0_4] : memref<1x256x4xf32, #tpu.memory_space<vmem>>, vector<1x256x4xf32>
    %3 = vector.shape_cast %2 : vector<1x256x4xf32> to vector<256x4xf32>
    %c0_5 = arith.constant 0 : index
    %c0_6 = arith.constant 0 : index
    %4 = vector.load %arg3[%c0_5, %c0_6] : memref<1x4xf32, #tpu.memory_space<vmem>>, vector<1x4xf32>
    %c0_7 = arith.constant 0 : index
    %c0_8 = arith.constant 0 : index
    %5 = vector.load %arg4[%c0_7, %c0_8] : memref<1x4xf32, #tpu.memory_space<vmem>>, vector<1x4xf32>
    %6 = vector.shape_cast %3 : vector<256x4xf32> to vector<16x16x4xf32>
    %c1 = arith.constant 1 : index
    %c1_9 = arith.constant 1 : index
    %c0_10 = arith.constant 0 : index
    %7 = vector.load %arg6[%c1, %c1_9, %c0_10] : memref<18x18x4xf32, #tpu.memory_space<vmem>>, vector<16x16x4xf32>
    tpu.vector_store %arg6[%c1, %c1_9, %c0_10], %6 {strides = array<i32>} : memref<18x18x4xf32, #tpu.memory_space<vmem>>, vector<16x16x4xf32>,
    %cst_11 = arith.constant 0.000000e+00 : f32
    %8 = vector.broadcast %cst_11 : f32 to vector<256x4xf32>
    %c0_12 = arith.constant 0 : index
    %c0_13 = arith.constant 0 : index
    %c0_14 = arith.constant 0 : index
    %9 = vector.load %arg6[%c0_12, %c0_13, %c0_14] : memref<18x18x4xf32, #tpu.memory_space<vmem>>, vector<16x16x4xf32>
    %10 = vector.shape_cast %9 : vector<16x16x4xf32> to vector<256x4xf32>
    %c0_15 = arith.constant 0 : index
    %c0_16 = arith.constant 0 : index
    %c0_17 = arith.constant 0 : index
    %11 = vector.load %arg2[%c0_15, %c0_16, %c0_17] : memref<9x4x4xf32, #tpu.memory_space<vmem>>, vector<1x4x4xf32>
    %12 = vector.shape_cast %11 : vector<1x4x4xf32> to vector<4x4xf32>
    %cst_18 = arith.constant dense<0.000000e+00> : vector<256x4xf32>
    %13 = tpu.matmul %10, %12, %cst_18 {dimension_numbers = #tpu.dot_dimension_numbers<[1], [0], [0], [1], [0, 0, 1, 1], [], []>} : vector<256x4xf32>, vector<4x4xf32>, vector<256x4xf32> -> vector<256x4xf32>
    %14 = arith.addf %8, %13 : vector<256x4xf32>
    %c0_19 = arith.constant 0 : index
    %c1_20 = arith.constant 1 : index
    %c0_21 = arith.constant 0 : index
    %15 = vector.load %arg6[%c0_19, %c1_20, %c0_21] : memref<18x18x4xf32, #tpu.memory_space<vmem>>, vector<16x16x4xf32>
    %16 = vector.shape_cast %15 : vector<16x16x4xf32> to vector<256x4xf32>
    %c1_22 = arith.constant 1 : index
    %c0_23 = arith.constant 0 : index
    %c0_24 = arith.constant 0 : index
    %17 = vector.load %arg2[%c1_22, %c0_23, %c0_24] : memref<9x4x4xf32, #tpu.memory_space<vmem>>, vector<1x4x4xf32>
    %18 = vector.shape_cast %17 : vector<1x4x4xf32> to vector<4x4xf32>
    %cst_25 = arith.constant dense<0.000000e+00> : vector<256x4xf32>
    %19 = tpu.matmul %16, %18, %cst_25 {dimension_numbers = #tpu.dot_dimension_numbers<[1], [0], [0], [1], [0, 0, 1, 1], [], []>} : vector<256x4xf32>, vector<4x4xf32>, vector<256x4xf32> -> vector<256x4xf32>
    %20 = arith.addf %14, %19 : vector<256x4xf32>
    %c0_26 = arith.constant 0 : index
    %c2 = arith.constant 2 : index
    %c0_27 = arith.constant 0 : index
    %21 = vector.load %arg6[%c0_26, %c2, %c0_27] : memref<18x18x4xf32, #tpu.memory_space<vmem>>, vector<16x16x4xf32>
    %22 = vector.shape_cast %21 : vector<16x16x4xf32> to vector<256x4xf32>
    %c2_28 = arith.constant 2 : index
    %c0_29 = arith.constant 0 : index
    %c0_30 = arith.constant 0 : index
    %23 = vector.load %arg2[%c2_28, %c0_29, %c0_30] : memref<9x4x4xf32, #tpu.memory_space<vmem>>, vector<1x4x4xf32>
    %24 = vector.shape_cast %23 : vector<1x4x4xf32> to vector<4x4xf32>
    %cst_31 = arith.constant dense<0.000000e+00> : vector<256x4xf32>
    %25 = tpu.matmul %22, %24, %cst_31 {dimension_numbers = #tpu.dot_dimension_numbers<[1], [0], [0], [1], [0, 0, 1, 1], [], []>} : vector<256x4xf32>, vector<4x4xf32>, vector<256x4xf32> -> vector<256x4xf32>
    %26 = arith.addf %20, %25 : vector<256x4xf32>
    %c1_32 = arith.constant 1 : index
    %c0_33 = arith.constant 0 : index
    %c0_34 = arith.constant 0 : index
    %27 = vector.load %arg6[%c1_32, %c0_33, %c0_34] : memref<18x18x4xf32, #tpu.memory_space<vmem>>, vector<16x16x4xf32>
    %28 = vector.shape_cast %27 : vector<16x16x4xf32> to vector<256x4xf32>
    %c3 = arith.constant 3 : index
    %c0_35 = arith.constant 0 : index
    %c0_36 = arith.constant 0 : index
    %29 = vector.load %arg2[%c3, %c0_35, %c0_36] : memref<9x4x4xf32, #tpu.memory_space<vmem>>, vector<1x4x4xf32>
    %30 = vector.shape_cast %29 : vector<1x4x4xf32> to vector<4x4xf32>
    %cst_37 = arith.constant dense<0.000000e+00> : vector<256x4xf32>
    %31 = tpu.matmul %28, %30, %cst_37 {dimension_numbers = #tpu.dot_dimension_numbers<[1], [0], [0], [1], [0, 0, 1, 1], [], []>} : vector<256x4xf32>, vector<4x4xf32>, vector<256x4xf32> -> vector<256x4xf32>
    %32 = arith.addf %26, %31 : vector<256x4xf32>
    %c1_38 = arith.constant 1 : index
    %c1_39 = arith.constant 1 : index
    %c0_40 = arith.constant 0 : index
    %33 = vector.load %arg6[%c1_38, %c1_39, %c0_40] : memref<18x18x4xf32, #tpu.memory_space<vmem>>, vector<16x16x4xf32>
    %34 = vector.shape_cast %33 : vector<16x16x4xf32> to vector<256x4xf32>
    %c4 = arith.constant 4 : index
    %c0_41 = arith.constant 0 : index
    %c0_42 = arith.constant 0 : index
    %35 = vector.load %arg2[%c4, %c0_41, %c0_42] : memref<9x4x4xf32, #tpu.memory_space<vmem>>, vector<1x4x4xf32>
    %36 = vector.shape_cast %35 : vector<1x4x4xf32> to vector<4x4xf32>
    %cst_43 = arith.constant dense<0.000000e+00> : vector<256x4xf32>
    %37 = tpu.matmul %34, %36, %cst_43 {dimension_numbers = #tpu.dot_dimension_numbers<[1], [0], [0], [1], [0, 0, 1, 1], [], []>} : vector<256x4xf32>, vector<4x4xf32>, vector<256x4xf32> -> vector<256x4xf32>
    %38 = arith.addf %32, %37 : vector<256x4xf32>
    %c1_44 = arith.constant 1 : index
    %c2_45 = arith.constant 2 : index
    %c0_46 = arith.constant 0 : index
    %39 = vector.load %arg6[%c1_44, %c2_45, %c0_46] : memref<18x18x4xf32, #tpu.memory_space<vmem>>, vector<16x16x4xf32>
    %40 = vector.shape_cast %39 : vector<16x16x4xf32> to vector<256x4xf32>
    %c5 = arith.constant 5 : index
    %c0_47 = arith.constant 0 : index
    %c0_48 = arith.constant 0 : index
    %41 = vector.load %arg2[%c5, %c0_47, %c0_48] : memref<9x4x4xf32, #tpu.memory_space<vmem>>, vector<1x4x4xf32>
    %42 = vector.shape_cast %41 : vector<1x4x4xf32> to vector<4x4xf32>
    %cst_49 = arith.constant dense<0.000000e+00> : vector<256x4xf32>
    %43 = tpu.matmul %40, %42, %cst_49 {dimension_numbers = #tpu.dot_dimension_numbers<[1], [0], [0], [1], [0, 0, 1, 1], [], []>} : vector<256x4xf32>, vector<4x4xf32>, vector<256x4xf32> -> vector<256x4xf32>
    %44 = arith.addf %38, %43 : vector<256x4xf32>
    %c2_50 = arith.constant 2 : index
    %c0_51 = arith.constant 0 : index
    %c0_52 = arith.constant 0 : index
    %45 = vector.load %arg6[%c2_50, %c0_51, %c0_52] : memref<18x18x4xf32, #tpu.memory_space<vmem>>, vector<16x16x4xf32>
    %46 = vector.shape_cast %45 : vector<16x16x4xf32> to vector<256x4xf32>
    %c6 = arith.constant 6 : index
    %c0_53 = arith.constant 0 : index
    %c0_54 = arith.constant 0 : index
    %47 = vector.load %arg2[%c6, %c0_53, %c0_54] : memref<9x4x4xf32, #tpu.memory_space<vmem>>, vector<1x4x4xf32>
    %48 = vector.shape_cast %47 : vector<1x4x4xf32> to vector<4x4xf32>
    %cst_55 = arith.constant dense<0.000000e+00> : vector<256x4xf32>
    %49 = tpu.matmul %46, %48, %cst_55 {dimension_numbers = #tpu.dot_dimension_numbers<[1], [0], [0], [1], [0, 0, 1, 1], [], []>} : vector<256x4xf32>, vector<4x4xf32>, vector<256x4xf32> -> vector<256x4xf32>
    %50 = arith.addf %44, %49 : vector<256x4xf32>
    %c2_56 = arith.constant 2 : index
    %c1_57 = arith.constant 1 : index
    %c0_58 = arith.constant 0 : index
    %51 = vector.load %arg6[%c2_56, %c1_57, %c0_58] : memref<18x18x4xf32, #tpu.memory_space<vmem>>, vector<16x16x4xf32>
    %52 = vector.shape_cast %51 : vector<16x16x4xf32> to vector<256x4xf32>
    %c7 = arith.constant 7 : index
    %c0_59 = arith.constant 0 : index
    %c0_60 = arith.constant 0 : index
    %53 = vector.load %arg2[%c7, %c0_59, %c0_60] : memref<9x4x4xf32, #tpu.memory_space<vmem>>, vector<1x4x4xf32>
    %54 = vector.shape_cast %53 : vector<1x4x4xf32> to vector<4x4xf32>
    %cst_61 = arith.constant dense<0.000000e+00> : vector<256x4xf32>
    %55 = tpu.matmul %52, %54, %cst_61 {dimension_numbers = #tpu.dot_dimension_numbers<[1], [0], [0], [1], [0, 0, 1, 1], [], []>} : vector<256x4xf32>, vector<4x4xf32>, vector<256x4xf32> -> vector<256x4xf32>
    %56 = arith.addf %50, %55 : vector<256x4xf32>
    %c2_62 = arith.constant 2 : index
    %c2_63 = arith.constant 2 : index
    %c0_64 = arith.constant 0 : index
    %57 = vector.load %arg6[%c2_62, %c2_63, %c0_64] : memref<18x18x4xf32, #tpu.memory_space<vmem>>, vector<16x16x4xf32>
    %58 = vector.shape_cast %57 : vector<16x16x4xf32> to vector<256x4xf32>
    %c8 = arith.constant 8 : index
    %c0_65 = arith.constant 0 : index
    %c0_66 = arith.constant 0 : index
    %59 = vector.load %arg2[%c8, %c0_65, %c0_66] : memref<9x4x4xf32, #tpu.memory_space<vmem>>, vector<1x4x4xf32>
    %60 = vector.shape_cast %59 : vector<1x4x4xf32> to vector<4x4xf32>
    %cst_67 = arith.constant dense<0.000000e+00> : vector<256x4xf32>
    %61 = tpu.matmul %58, %60, %cst_67 {dimension_numbers = #tpu.dot_dimension_numbers<[1], [0], [0], [1], [0, 0, 1, 1], [], []>} : vector<256x4xf32>, vector<4x4xf32>, vector<256x4xf32> -> vector<256x4xf32>
    %62 = arith.addf %56, %61 : vector<256x4xf32>
    %63 = vector.broadcast %4 : vector<1x4xf32> to vector<256x4xf32>
    %64 = arith.mulf %62, %63 : vector<256x4xf32>
    %65 = vector.broadcast %5 : vector<1x4xf32> to vector<256x4xf32>
    %66 = arith.addf %64, %65 : vector<256x4xf32>
    %cst_68 = arith.constant 0.000000e+00 : f32
    %67 = vector.broadcast %cst_68 : f32 to vector<256x4xf32>
    %68 = arith.maximumf %66, %67 : vector<256x4xf32>
    %69 = arith.addf %3, %68 : vector<256x4xf32>
    %70 = vector.shape_cast %69 : vector<256x4xf32> to vector<16x16x4xf32>
    %c1_69 = arith.constant 1 : index
    %c1_70 = arith.constant 1 : index
    %c0_71 = arith.constant 0 : index
    %71 = vector.load %arg6[%c1_69, %c1_70, %c0_71] : memref<18x18x4xf32, #tpu.memory_space<vmem>>, vector<16x16x4xf32>
    tpu.vector_store %arg6[%c1_69, %c1_70, %c0_71], %70 {strides = array<i32>} : memref<18x18x4xf32, #tpu.memory_space<vmem>>, vector<16x16x4xf32>,
    %cst_72 = arith.constant 0.000000e+00 : f32
    %72 = vector.broadcast %cst_72 : f32 to vector<256x4xf32>
    %c0_73 = arith.constant 0 : index
    %c0_74 = arith.constant 0 : index
    %c0_75 = arith.constant 0 : index
    %73 = vector.load %arg6[%c0_73, %c0_74, %c0_75] : memref<18x18x4xf32, #tpu.memory_space<vmem>>, vector<16x16x4xf32>
    %74 = vector.shape_cast %73 : vector<16x16x4xf32> to vector<256x4xf32>
    %c0_76 = arith.constant 0 : index
    %c0_77 = arith.constant 0 : index
    %c0_78 = arith.constant 0 : index
    %75 = vector.load %arg2[%c0_76, %c0_77, %c0_78] : memref<9x4x4xf32, #tpu.memory_space<vmem>>, vector<1x4x4xf32>
    %76 = vector.shape_cast %75 : vector<1x4x4xf32> to vector<4x4xf32>
    %cst_79 = arith.constant dense<0.000000e+00> : vector<256x4xf32>
    %77 = tpu.matmul %74, %76, %cst_79 {dimension_numbers = #tpu.dot_dimension_numbers<[1], [0], [0], [1], [0, 0, 1, 1], [], []>} : vector<256x4xf32>, vector<4x4xf32>, vector<256x4xf32> -> vector<256x4xf32>
    %78 = arith.addf %72, %77 : vector<256x4xf32>
    %c0_80 = arith.constant 0 : index
    %c1_81 = arith.constant 1 : index
    %c0_82 = arith.constant 0 : index
    %79 = vector.load %arg6[%c0_80, %c1_81, %c0_82] : memref<18x18x4xf32, #tpu.memory_space<vmem>>, vector<16x16x4xf32>
    %80 = vector.shape_cast %79 : vector<16x16x4xf32> to vector<256x4xf32>
    %c1_83 = arith.constant 1 : index
    %c0_84 = arith.constant 0 : index
    %c0_85 = arith.constant 0 : index
    %81 = vector.load %arg2[%c1_83, %c0_84, %c0_85] : memref<9x4x4xf32, #tpu.memory_space<vmem>>, vector<1x4x4xf32>
    %82 = vector.shape_cast %81 : vector<1x4x4xf32> to vector<4x4xf32>
    %cst_86 = arith.constant dense<0.000000e+00> : vector<256x4xf32>
    %83 = tpu.matmul %80, %82, %cst_86 {dimension_numbers = #tpu.dot_dimension_numbers<[1], [0], [0], [1], [0, 0, 1, 1], [], []>} : vector<256x4xf32>, vector<4x4xf32>, vector<256x4xf32> -> vector<256x4xf32>
    %84 = arith.addf %78, %83 : vector<256x4xf32>
    %c0_87 = arith.constant 0 : index
    %c2_88 = arith.constant 2 : index
    %c0_89 = arith.constant 0 : index
    %85 = vector.load %arg6[%c0_87, %c2_88, %c0_89] : memref<18x18x4xf32, #tpu.memory_space<vmem>>, vector<16x16x4xf32>
    %86 = vector.shape_cast %85 : vector<16x16x4xf32> to vector<256x4xf32>
    %c2_90 = arith.constant 2 : index
    %c0_91 = arith.constant 0 : index
    %c0_92 = arith.constant 0 : index
    %87 = vector.load %arg2[%c2_90, %c0_91, %c0_92] : memref<9x4x4xf32, #tpu.memory_space<vmem>>, vector<1x4x4xf32>
    %88 = vector.shape_cast %87 : vector<1x4x4xf32> to vector<4x4xf32>
    %cst_93 = arith.constant dense<0.000000e+00> : vector<256x4xf32>
    %89 = tpu.matmul %86, %88, %cst_93 {dimension_numbers = #tpu.dot_dimension_numbers<[1], [0], [0], [1], [0, 0, 1, 1], [], []>} : vector<256x4xf32>, vector<4x4xf32>, vector<256x4xf32> -> vector<256x4xf32>
    %90 = arith.addf %84, %89 : vector<256x4xf32>
    %c1_94 = arith.constant 1 : index
    %c0_95 = arith.constant 0 : index
    %c0_96 = arith.constant 0 : index
    %91 = vector.load %arg6[%c1_94, %c0_95, %c0_96] : memref<18x18x4xf32, #tpu.memory_space<vmem>>, vector<16x16x4xf32>
    %92 = vector.shape_cast %91 : vector<16x16x4xf32> to vector<256x4xf32>
    %c3_97 = arith.constant 3 : index
    %c0_98 = arith.constant 0 : index
    %c0_99 = arith.constant 0 : index
    %93 = vector.load %arg2[%c3_97, %c0_98, %c0_99] : memref<9x4x4xf32, #tpu.memory_space<vmem>>, vector<1x4x4xf32>
    %94 = vector.shape_cast %93 : vector<1x4x4xf32> to vector<4x4xf32>
    %cst_100 = arith.constant dense<0.000000e+00> : vector<256x4xf32>
    %95 = tpu.matmul %92, %94, %cst_100 {dimension_numbers = #tpu.dot_dimension_numbers<[1], [0], [0], [1], [0, 0, 1, 1], [], []>} : vector<256x4xf32>, vector<4x4xf32>, vector<256x4xf32> -> vector<256x4xf32>
    %96 = arith.addf %90, %95 : vector<256x4xf32>
    %c1_101 = arith.constant 1 : index
    %c1_102 = arith.constant 1 : index
    %c0_103 = arith.constant 0 : index
    %97 = vector.load %arg6[%c1_101, %c1_102, %c0_103] : memref<18x18x4xf32, #tpu.memory_space<vmem>>, vector<16x16x4xf32>
    %98 = vector.shape_cast %97 : vector<16x16x4xf32> to vector<256x4xf32>
    %c4_104 = arith.constant 4 : index
    %c0_105 = arith.constant 0 : index
    %c0_106 = arith.constant 0 : index
    %99 = vector.load %arg2[%c4_104, %c0_105, %c0_106] : memref<9x4x4xf32, #tpu.memory_space<vmem>>, vector<1x4x4xf32>
    %100 = vector.shape_cast %99 : vector<1x4x4xf32> to vector<4x4xf32>
    %cst_107 = arith.constant dense<0.000000e+00> : vector<256x4xf32>
    %101 = tpu.matmul %98, %100, %cst_107 {dimension_numbers = #tpu.dot_dimension_numbers<[1], [0], [0], [1], [0, 0, 1, 1], [], []>} : vector<256x4xf32>, vector<4x4xf32>, vector<256x4xf32> -> vector<256x4xf32>
    %102 = arith.addf %96, %101 : vector<256x4xf32>
    %c1_108 = arith.constant 1 : index
    %c2_109 = arith.constant 2 : index
    %c0_110 = arith.constant 0 : index
    %103 = vector.load %arg6[%c1_108, %c2_109, %c0_110] : memref<18x18x4xf32, #tpu.memory_space<vmem>>, vector<16x16x4xf32>
    %104 = vector.shape_cast %103 : vector<16x16x4xf32> to vector<256x4xf32>
    %c5_111 = arith.constant 5 : index
    %c0_112 = arith.constant 0 : index
    %c0_113 = arith.constant 0 : index
    %105 = vector.load %arg2[%c5_111, %c0_112, %c0_113] : memref<9x4x4xf32, #tpu.memory_space<vmem>>, vector<1x4x4xf32>
    %106 = vector.shape_cast %105 : vector<1x4x4xf32> to vector<4x4xf32>
    %cst_114 = arith.constant dense<0.000000e+00> : vector<256x4xf32>
    %107 = tpu.matmul %104, %106, %cst_114 {dimension_numbers = #tpu.dot_dimension_numbers<[1], [0], [0], [1], [0, 0, 1, 1], [], []>} : vector<256x4xf32>, vector<4x4xf32>, vector<256x4xf32> -> vector<256x4xf32>
    %108 = arith.addf %102, %107 : vector<256x4xf32>
    %c2_115 = arith.constant 2 : index
    %c0_116 = arith.constant 0 : index
    %c0_117 = arith.constant 0 : index
    %109 = vector.load %arg6[%c2_115, %c0_116, %c0_117] : memref<18x18x4xf32, #tpu.memory_space<vmem>>, vector<16x16x4xf32>
    %110 = vector.shape_cast %109 : vector<16x16x4xf32> to vector<256x4xf32>
    %c6_118 = arith.constant 6 : index
    %c0_119 = arith.constant 0 : index
    %c0_120 = arith.constant 0 : index
    %111 = vector.load %arg2[%c6_118, %c0_119, %c0_120] : memref<9x4x4xf32, #tpu.memory_space<vmem>>, vector<1x4x4xf32>
    %112 = vector.shape_cast %111 : vector<1x4x4xf32> to vector<4x4xf32>
    %cst_121 = arith.constant dense<0.000000e+00> : vector<256x4xf32>
    %113 = tpu.matmul %110, %112, %cst_121 {dimension_numbers = #tpu.dot_dimension_numbers<[1], [0], [0], [1], [0, 0, 1, 1], [], []>} : vector<256x4xf32>, vector<4x4xf32>, vector<256x4xf32> -> vector<256x4xf32>
    %114 = arith.addf %108, %113 : vector<256x4xf32>
    %c2_122 = arith.constant 2 : index
    %c1_123 = arith.constant 1 : index
    %c0_124 = arith.constant 0 : index
    %115 = vector.load %arg6[%c2_122, %c1_123, %c0_124] : memref<18x18x4xf32, #tpu.memory_space<vmem>>, vector<16x16x4xf32>
    %116 = vector.shape_cast %115 : vector<16x16x4xf32> to vector<256x4xf32>
    %c7_125 = arith.constant 7 : index
    %c0_126 = arith.constant 0 : index
    %c0_127 = arith.constant 0 : index
    %117 = vector.load %arg2[%c7_125, %c0_126, %c0_127] : memref<9x4x4xf32, #tpu.memory_space<vmem>>, vector<1x4x4xf32>
    %118 = vector.shape_cast %117 : vector<1x4x4xf32> to vector<4x4xf32>
    %cst_128 = arith.constant dense<0.000000e+00> : vector<256x4xf32>
    %119 = tpu.matmul %116, %118, %cst_128 {dimension_numbers = #tpu.dot_dimension_numbers<[1], [0], [0], [1], [0, 0, 1, 1], [], []>} : vector<256x4xf32>, vector<4x4xf32>, vector<256x4xf32> -> vector<256x4xf32>
    %120 = arith.addf %114, %119 : vector<256x4xf32>
    %c2_129 = arith.constant 2 : index
    %c2_130 = arith.constant 2 : index
    %c0_131 = arith.constant 0 : index
    %121 = vector.load %arg6[%c2_129, %c2_130, %c0_131] : memref<18x18x4xf32, #tpu.memory_space<vmem>>, vector<16x16x4xf32>
    %122 = vector.shape_cast %121 : vector<16x16x4xf32> to vector<256x4xf32>
    %c8_132 = arith.constant 8 : index
    %c0_133 = arith.constant 0 : index
    %c0_134 = arith.constant 0 : index
    %123 = vector.load %arg2[%c8_132, %c0_133, %c0_134] : memref<9x4x4xf32, #tpu.memory_space<vmem>>, vector<1x4x4xf32>
    %124 = vector.shape_cast %123 : vector<1x4x4xf32> to vector<4x4xf32>
    %cst_135 = arith.constant dense<0.000000e+00> : vector<256x4xf32>
    %125 = tpu.matmul %122, %124, %cst_135 {dimension_numbers = #tpu.dot_dimension_numbers<[1], [0], [0], [1], [0, 0, 1, 1], [], []>} : vector<256x4xf32>, vector<4x4xf32>, vector<256x4xf32> -> vector<256x4xf32>
    %126 = arith.addf %120, %125 : vector<256x4xf32>
    %127 = vector.broadcast %4 : vector<1x4xf32> to vector<256x4xf32>
    %128 = arith.mulf %126, %127 : vector<256x4xf32>
    %129 = vector.broadcast %5 : vector<1x4xf32> to vector<256x4xf32>
    %130 = arith.addf %128, %129 : vector<256x4xf32>
    %cst_136 = arith.constant 0.000000e+00 : f32
    %131 = vector.broadcast %cst_136 : f32 to vector<256x4xf32>
    %132 = arith.maximumf %130, %131 : vector<256x4xf32>
    %133 = arith.addf %3, %132 : vector<256x4xf32>
    %134 = vector.shape_cast %133 : vector<256x4xf32> to vector<16x16x4xf32>
    %c1_137 = arith.constant 1 : index
    %c1_138 = arith.constant 1 : index
    %c0_139 = arith.constant 0 : index
    %135 = vector.load %arg6[%c1_137, %c1_138, %c0_139] : memref<18x18x4xf32, #tpu.memory_space<vmem>>, vector<16x16x4xf32>
    tpu.vector_store %arg6[%c1_137, %c1_138, %c0_139], %134 {strides = array<i32>} : memref<18x18x4xf32, #tpu.memory_space<vmem>>, vector<16x16x4xf32>,
    %cst_140 = arith.constant 0.000000e+00 : f32
    %136 = vector.broadcast %cst_140 : f32 to vector<256x4xf32>
    %c0_141 = arith.constant 0 : index
    %c0_142 = arith.constant 0 : index
    %c0_143 = arith.constant 0 : index
    %137 = vector.load %arg6[%c0_141, %c0_142, %c0_143] : memref<18x18x4xf32, #tpu.memory_space<vmem>>, vector<16x16x4xf32>
    %138 = vector.shape_cast %137 : vector<16x16x4xf32> to vector<256x4xf32>
    %c0_144 = arith.constant 0 : index
    %c0_145 = arith.constant 0 : index
    %c0_146 = arith.constant 0 : index
    %139 = vector.load %arg2[%c0_144, %c0_145, %c0_146] : memref<9x4x4xf32, #tpu.memory_space<vmem>>, vector<1x4x4xf32>
    %140 = vector.shape_cast %139 : vector<1x4x4xf32> to vector<4x4xf32>
    %cst_147 = arith.constant dense<0.000000e+00> : vector<256x4xf32>
    %141 = tpu.matmul %138, %140, %cst_147 {dimension_numbers = #tpu.dot_dimension_numbers<[1], [0], [0], [1], [0, 0, 1, 1], [], []>} : vector<256x4xf32>, vector<4x4xf32>, vector<256x4xf32> -> vector<256x4xf32>
    %142 = arith.addf %136, %141 : vector<256x4xf32>
    %c0_148 = arith.constant 0 : index
    %c1_149 = arith.constant 1 : index
    %c0_150 = arith.constant 0 : index
    %143 = vector.load %arg6[%c0_148, %c1_149, %c0_150] : memref<18x18x4xf32, #tpu.memory_space<vmem>>, vector<16x16x4xf32>
    %144 = vector.shape_cast %143 : vector<16x16x4xf32> to vector<256x4xf32>
    %c1_151 = arith.constant 1 : index
    %c0_152 = arith.constant 0 : index
    %c0_153 = arith.constant 0 : index
    %145 = vector.load %arg2[%c1_151, %c0_152, %c0_153] : memref<9x4x4xf32, #tpu.memory_space<vmem>>, vector<1x4x4xf32>
    %146 = vector.shape_cast %145 : vector<1x4x4xf32> to vector<4x4xf32>
    %cst_154 = arith.constant dense<0.000000e+00> : vector<256x4xf32>
    %147 = tpu.matmul %144, %146, %cst_154 {dimension_numbers = #tpu.dot_dimension_numbers<[1], [0], [0], [1], [0, 0, 1, 1], [], []>} : vector<256x4xf32>, vector<4x4xf32>, vector<256x4xf32> -> vector<256x4xf32>
    %148 = arith.addf %142, %147 : vector<256x4xf32>
    %c0_155 = arith.constant 0 : index
    %c2_156 = arith.constant 2 : index
    %c0_157 = arith.constant 0 : index
    %149 = vector.load %arg6[%c0_155, %c2_156, %c0_157] : memref<18x18x4xf32, #tpu.memory_space<vmem>>, vector<16x16x4xf32>
    %150 = vector.shape_cast %149 : vector<16x16x4xf32> to vector<256x4xf32>
    %c2_158 = arith.constant 2 : index
    %c0_159 = arith.constant 0 : index
    %c0_160 = arith.constant 0 : index
    %151 = vector.load %arg2[%c2_158, %c0_159, %c0_160] : memref<9x4x4xf32, #tpu.memory_space<vmem>>, vector<1x4x4xf32>
    %152 = vector.shape_cast %151 : vector<1x4x4xf32> to vector<4x4xf32>
    %cst_161 = arith.constant dense<0.000000e+00> : vector<256x4xf32>
    %153 = tpu.matmul %150, %152, %cst_161 {dimension_numbers = #tpu.dot_dimension_numbers<[1], [0], [0], [1], [0, 0, 1, 1], [], []>} : vector<256x4xf32>, vector<4x4xf32>, vector<256x4xf32> -> vector<256x4xf32>
    %154 = arith.addf %148, %153 : vector<256x4xf32>
    %c1_162 = arith.constant 1 : index
    %c0_163 = arith.constant 0 : index
    %c0_164 = arith.constant 0 : index
    %155 = vector.load %arg6[%c1_162, %c0_163, %c0_164] : memref<18x18x4xf32, #tpu.memory_space<vmem>>, vector<16x16x4xf32>
    %156 = vector.shape_cast %155 : vector<16x16x4xf32> to vector<256x4xf32>
    %c3_165 = arith.constant 3 : index
    %c0_166 = arith.constant 0 : index
    %c0_167 = arith.constant 0 : index
    %157 = vector.load %arg2[%c3_165, %c0_166, %c0_167] : memref<9x4x4xf32, #tpu.memory_space<vmem>>, vector<1x4x4xf32>
    %158 = vector.shape_cast %157 : vector<1x4x4xf32> to vector<4x4xf32>
    %cst_168 = arith.constant dense<0.000000e+00> : vector<256x4xf32>
    %159 = tpu.matmul %156, %158, %cst_168 {dimension_numbers = #tpu.dot_dimension_numbers<[1], [0], [0], [1], [0, 0, 1, 1], [], []>} : vector<256x4xf32>, vector<4x4xf32>, vector<256x4xf32> -> vector<256x4xf32>
    %160 = arith.addf %154, %159 : vector<256x4xf32>
    %c1_169 = arith.constant 1 : index
    %c1_170 = arith.constant 1 : index
    %c0_171 = arith.constant 0 : index
    %161 = vector.load %arg6[%c1_169, %c1_170, %c0_171] : memref<18x18x4xf32, #tpu.memory_space<vmem>>, vector<16x16x4xf32>
    %162 = vector.shape_cast %161 : vector<16x16x4xf32> to vector<256x4xf32>
    %c4_172 = arith.constant 4 : index
    %c0_173 = arith.constant 0 : index
    %c0_174 = arith.constant 0 : index
    %163 = vector.load %arg2[%c4_172, %c0_173, %c0_174] : memref<9x4x4xf32, #tpu.memory_space<vmem>>, vector<1x4x4xf32>
    %164 = vector.shape_cast %163 : vector<1x4x4xf32> to vector<4x4xf32>
    %cst_175 = arith.constant dense<0.000000e+00> : vector<256x4xf32>
    %165 = tpu.matmul %162, %164, %cst_175 {dimension_numbers = #tpu.dot_dimension_numbers<[1], [0], [0], [1], [0, 0, 1, 1], [], []>} : vector<256x4xf32>, vector<4x4xf32>, vector<256x4xf32> -> vector<256x4xf32>
    %166 = arith.addf %160, %165 : vector<256x4xf32>
    %c1_176 = arith.constant 1 : index
    %c2_177 = arith.constant 2 : index
    %c0_178 = arith.constant 0 : index
    %167 = vector.load %arg6[%c1_176, %c2_177, %c0_178] : memref<18x18x4xf32, #tpu.memory_space<vmem>>, vector<16x16x4xf32>
    %168 = vector.shape_cast %167 : vector<16x16x4xf32> to vector<256x4xf32>
    %c5_179 = arith.constant 5 : index
    %c0_180 = arith.constant 0 : index
    %c0_181 = arith.constant 0 : index
    %169 = vector.load %arg2[%c5_179, %c0_180, %c0_181] : memref<9x4x4xf32, #tpu.memory_space<vmem>>, vector<1x4x4xf32>
    %170 = vector.shape_cast %169 : vector<1x4x4xf32> to vector<4x4xf32>
    %cst_182 = arith.constant dense<0.000000e+00> : vector<256x4xf32>
    %171 = tpu.matmul %168, %170, %cst_182 {dimension_numbers = #tpu.dot_dimension_numbers<[1], [0], [0], [1], [0, 0, 1, 1], [], []>} : vector<256x4xf32>, vector<4x4xf32>, vector<256x4xf32> -> vector<256x4xf32>
    %172 = arith.addf %166, %171 : vector<256x4xf32>
    %c2_183 = arith.constant 2 : index
    %c0_184 = arith.constant 0 : index
    %c0_185 = arith.constant 0 : index
    %173 = vector.load %arg6[%c2_183, %c0_184, %c0_185] : memref<18x18x4xf32, #tpu.memory_space<vmem>>, vector<16x16x4xf32>
    %174 = vector.shape_cast %173 : vector<16x16x4xf32> to vector<256x4xf32>
    %c6_186 = arith.constant 6 : index
    %c0_187 = arith.constant 0 : index
    %c0_188 = arith.constant 0 : index
    %175 = vector.load %arg2[%c6_186, %c0_187, %c0_188] : memref<9x4x4xf32, #tpu.memory_space<vmem>>, vector<1x4x4xf32>
    %176 = vector.shape_cast %175 : vector<1x4x4xf32> to vector<4x4xf32>
    %cst_189 = arith.constant dense<0.000000e+00> : vector<256x4xf32>
    %177 = tpu.matmul %174, %176, %cst_189 {dimension_numbers = #tpu.dot_dimension_numbers<[1], [0], [0], [1], [0, 0, 1, 1], [], []>} : vector<256x4xf32>, vector<4x4xf32>, vector<256x4xf32> -> vector<256x4xf32>
    %178 = arith.addf %172, %177 : vector<256x4xf32>
    %c2_190 = arith.constant 2 : index
    %c1_191 = arith.constant 1 : index
    %c0_192 = arith.constant 0 : index
    %179 = vector.load %arg6[%c2_190, %c1_191, %c0_192] : memref<18x18x4xf32, #tpu.memory_space<vmem>>, vector<16x16x4xf32>
    %180 = vector.shape_cast %179 : vector<16x16x4xf32> to vector<256x4xf32>
    %c7_193 = arith.constant 7 : index
    %c0_194 = arith.constant 0 : index
    %c0_195 = arith.constant 0 : index
    %181 = vector.load %arg2[%c7_193, %c0_194, %c0_195] : memref<9x4x4xf32, #tpu.memory_space<vmem>>, vector<1x4x4xf32>
    %182 = vector.shape_cast %181 : vector<1x4x4xf32> to vector<4x4xf32>
    %cst_196 = arith.constant dense<0.000000e+00> : vector<256x4xf32>
    %183 = tpu.matmul %180, %182, %cst_196 {dimension_numbers = #tpu.dot_dimension_numbers<[1], [0], [0], [1], [0, 0, 1, 1], [], []>} : vector<256x4xf32>, vector<4x4xf32>, vector<256x4xf32> -> vector<256x4xf32>
    %184 = arith.addf %178, %183 : vector<256x4xf32>
    %c2_197 = arith.constant 2 : index
    %c2_198 = arith.constant 2 : index
    %c0_199 = arith.constant 0 : index
    %185 = vector.load %arg6[%c2_197, %c2_198, %c0_199] : memref<18x18x4xf32, #tpu.memory_space<vmem>>, vector<16x16x4xf32>
    %186 = vector.shape_cast %185 : vector<16x16x4xf32> to vector<256x4xf32>
    %c8_200 = arith.constant 8 : index
    %c0_201 = arith.constant 0 : index
    %c0_202 = arith.constant 0 : index
    %187 = vector.load %arg2[%c8_200, %c0_201, %c0_202] : memref<9x4x4xf32, #tpu.memory_space<vmem>>, vector<1x4x4xf32>
    %188 = vector.shape_cast %187 : vector<1x4x4xf32> to vector<4x4xf32>
    %cst_203 = arith.constant dense<0.000000e+00> : vector<256x4xf32>
    %189 = tpu.matmul %186, %188, %cst_203 {dimension_numbers = #tpu.dot_dimension_numbers<[1], [0], [0], [1], [0, 0, 1, 1], [], []>} : vector<256x4xf32>, vector<4x4xf32>, vector<256x4xf32> -> vector<256x4xf32>
    %190 = arith.addf %184, %189 : vector<256x4xf32>
    %191 = vector.broadcast %4 : vector<1x4xf32> to vector<256x4xf32>
    %192 = arith.mulf %190, %191 : vector<256x4xf32>
    %193 = vector.broadcast %5 : vector<1x4xf32> to vector<256x4xf32>
    %194 = arith.addf %192, %193 : vector<256x4xf32>
    %cst_204 = arith.constant 0.000000e+00 : f32
    %195 = vector.broadcast %cst_204 : f32 to vector<256x4xf32>
    %196 = arith.maximumf %194, %195 : vector<256x4xf32>
    %c0_205 = arith.constant 0 : index
    %c0_206 = arith.constant 0 : index
    %c0_207 = arith.constant 0 : index
    %197 = vector.load %arg5[%c0_205, %c0_206, %c0_207] : memref<1x256x4xf32, #tpu.memory_space<vmem>>, vector<1x256x4xf32>
    %198 = vector.shape_cast %197 : vector<1x256x4xf32> to vector<256x4xf32>
    %199 = vector.shape_cast %196 : vector<256x4xf32> to vector<1x256x4xf32>
    tpu.vector_store %arg5[%c0_205, %c0_206, %c0_207], %199 {strides = array<i32>} : memref<1x256x4xf32, #tpu.memory_space<vmem>>, vector<1x256x4xf32>,
    return
  }
  func.func @transform_0(%arg0: i32) -> (i32, i32, i32) {
    %c0_i32 = arith.constant 0 : i32
    %c0_i32_0 = arith.constant 0 : i32
    %c0_i32_1 = arith.constant 0 : i32
    return %arg0, %c0_i32, %c0_i32_0 : i32, i32, i32
  }
  func.func @transform_1(%arg0: i32) -> (i32, i32, i32) {
    %c0_i32 = arith.constant 0 : i32
    %c0_i32_0 = arith.constant 0 : i32
    %c0_i32_1 = arith.constant 0 : i32
    %c0_i32_2 = arith.constant 0 : i32
    return %c0_i32, %c0_i32_0, %c0_i32_1 : i32, i32, i32
  }
  func.func @transform_2(%arg0: i32) -> (i32, i32) {
    %c0_i32 = arith.constant 0 : i32
    %c0_i32_0 = arith.constant 0 : i32
    %c0_i32_1 = arith.constant 0 : i32
    return %c0_i32, %c0_i32_0 : i32, i32
  }
  func.func @transform_3(%arg0: i32) -> (i32, i32) {
    %c0_i32 = arith.constant 0 : i32
    %c0_i32_0 = arith.constant 0 : i32
    %c0_i32_1 = arith.constant 0 : i32
    return %c0_i32, %c0_i32_0 : i32, i32
  }
  func.func @transform_4(%arg0: i32) -> (i32, i32, i32) {
    %c0_i32 = arith.constant 0 : i32
    %c0_i32_0 = arith.constant 0 : i32
    %c0_i32_1 = arith.constant 0 : i32
    return %arg0, %c0_i32, %c0_i32_0 : i32, i32, i32
  }
}

</mosaic_0001>

<llo_original>
// kernel: recurrent_block_forward.1
$region0: #{recurrent_block_forward.1}
  #allocation0 [shape = 'u32[]', space=smem, size = 0x4, offset = 0x4, fixed_abs, tag = 'smem constant byte address 0x4 - core index']
  #allocation1 [shape = 'u32[72,128]{1,0:T(1,128)}', space=vmem, size = 0x9000, scoped, tag = 'internal scratch']
  #allocation2 [shape = 'f32[18,18,4]{2,1,0:T(8,128)}', space=vmem, size = 0x36000, scoped, tag = 'scratch operand']
  %s0 = inlined_call_operand.vmem [shape: f32[2,256,4], index: 0, kind: input, shape index: {}]
  %s1 = inlined_call_operand.vmem [shape: f32[9,4,4], index: 1, kind: input, shape index: {}]
  %s2 = inlined_call_operand.vmem [shape: f32[1,4], index: 2, kind: input, shape index: {}]
  %s3 = inlined_call_operand.vmem [shape: f32[1,4], index: 3, kind: input, shape index: {}]
  %s4 = inlined_call_operand.vmem [shape: f32[2,256,4], index: 4, kind: output, shape index: {}]
  %s5 = sld [smem:[#allocation0]]
  $region49: #{recurrent_block_forward.1} parent=0
    _
  %s7 = ssub.s32 1, %s5
  %s8 = scalar_select 0, %s7, %s5
  loop: start=0, step=1, limit=4
  $region2: #{recurrent_block_forward.1} parent=0 // loop_pre_header
    _
  $region3: #{recurrent_block_forward.1} parent=0 // loop_header
    %s10 = sphi 0, %s14
    %p11 = scmp.ge.s32.totalorder %s10, 4
    %s20 = sphi 0, %s22
    %s23 = sphi 0, %s20
    %s24 = sphi 0, %s23
    %s40 = sphi 0, %s24
    %s44 = sphi 0, %s44
    %s46 = sphi 0, %s44
    %s47 = sphi 0, %s46
    %s61 = sphi 0, %s47
    %s65 = sphi 0, %s65
    %s67 = sphi 0, %s65
    %s68 = sphi 0, %s67
    %s82 = sphi 0, %s68
    %s86 = sphi 0, %s86
    %s88 = sphi 0, %s86
    %s89 = sphi 0, %s88
    %s103 = sphi 0, %s89
    %s109 = sphi 0, %s111
    %s112 = sphi 0, %s109
    %s113 = sphi 0, %s112
    %s129 = sphi 0, %s113
  $region4: #{recurrent_block_forward.1} parent=0 // loop_header_branch
    %13 = sbr.rel (%p11) target = $region8
  $region5: #{recurrent_block_forward.1} parent=0 // loop_body
    %s15 = ssub.s32 %s10, 1
    %s16 = ssub.s32 %s10, 2
    %s17 = sadd.s32 %s10, 1
    %s18 = ssub.s32 %s10, %s17
    %p19 = scmp.eq.s32.totalorder %s18, 0
    %s21 = sadd.s32 %s20, 1
    %s22 = scalar_select %p19, %s20, %s21
    %p25 = pneg %p19
    %p26 = scmp.eq.s32.totalorder %s10, 1
    %p27 = por %p25, %p26
    %p28 = scmp.ne.s32.totalorder %s20, %s23
    %p29 = scmp.eq.s32.totalorder %s10, 0
    %p30 = por %p28, %p29
    %p31 = scmp.ne.s32.totalorder %s20, %s23
    %p32 = scmp.eq.s32.totalorder %s15, 1
    %p33 = por %p31, %p32
    %p34 = scmp.ne.s32.totalorder %s23, %s24
    %p35 = scmp.eq.s32.totalorder %s15, 0
    %p36 = por %p34, %p35
    %p37 = scmp.ne.s32.totalorder %s23, %s24
    %p38 = scmp.eq.s32.totalorder %s16, 1
    %p39 = por %p37, %p38
    %p41 = scmp.ne.s32.totalorder %s24, %s40
    %p42 = scmp.eq.s32.totalorder %s16, 0
    %p43 = por %p41, %p42
    %s45 = sadd.s32 %s44, 1
    %p48 = scmp.eq.s32.totalorder %s10, 1
    %p49 = scmp.ne.s32.totalorder %s44, %s46
    %p50 = scmp.eq.s32.totalorder %s10, 0
    %p51 = por %p49, %p50
    %p52 = scmp.ne.s32.totalorder %s44, %s46
    %p53 = scmp.eq.s32.totalorder %s15, 1
    %p54 = por %p52, %p53
    %p55 = scmp.ne.s32.totalorder %s46, %s47
    %p56 = scmp.eq.s32.totalorder %s15, 0
    %p57 = por %p55, %p56
    %p58 = scmp.ne.s32.totalorder %s46, %s47
    %p59 = scmp.eq.s32.totalorder %s16, 1
    %p60 = por %p58, %p59
    %p62 = scmp.ne.s32.totalorder %s47, %s61
    %p63 = scmp.eq.s32.totalorder %s16, 0
    %p64 = por %p62, %p63
    %s66 = sadd.s32 %s65, 1
    %p69 = scmp.eq.s32.totalorder %s10, 1
    %p70 = scmp.ne.s32.totalorder %s65, %s67
    %p71 = scmp.eq.s32.totalorder %s10, 0
    %p72 = por %p70, %p71
    %p73 = scmp.ne.s32.totalorder %s65, %s67
    %p74 = scmp.eq.s32.totalorder %s15, 1
    %p75 = por %p73, %p74
    %p76 = scmp.ne.s32.totalorder %s67, %s68
    %p77 = scmp.eq.s32.totalorder %s15, 0
    %p78 = por %p76, %p77
    %p79 = scmp.ne.s32.totalorder %s67, %s68
    %p80 = scmp.eq.s32.totalorder %s16, 1
    %p81 = por %p79, %p80
    %p83 = scmp.ne.s32.totalorder %s68, %s82
    %p84 = scmp.eq.s32.totalorder %s16, 0
    %p85 = por %p83, %p84
    %s87 = sadd.s32 %s86, 1
    %p90 = scmp.eq.s32.totalorder %s10, 1
    %p91 = scmp.ne.s32.totalorder %s86, %s88
    %p92 = scmp.eq.s32.totalorder %s10, 0
    %p93 = por %p91, %p92
    %p94 = scmp.ne.s32.totalorder %s86, %s88
    %p95 = scmp.eq.s32.totalorder %s15, 1
    %p96 = por %p94, %p95
    %p97 = scmp.ne.s32.totalorder %s88, %s89
    %p98 = scmp.eq.s32.totalorder %s15, 0
    %p99 = por %p97, %p98
    %p100 = scmp.ne.s32.totalorder %s88, %s89
    %p101 = scmp.eq.s32.totalorder %s16, 1
    %p102 = por %p100, %p101
    %p104 = scmp.ne.s32.totalorder %s89, %s103
    %p105 = scmp.eq.s32.totalorder %s16, 0
    %p106 = por %p104, %p105
    %s107 = ssub.s32 %s10, %s17
    %p108 = scmp.eq.s32.totalorder %s107, 0
    %s110 = sadd.s32 %s109, 1
    %s111 = scalar_select %p108, %s109, %s110
    %p114 = pneg %p108
    %p115 = scmp.eq.s32.totalorder %s10, 1
    %p116 = por %p114, %p115
    %p117 = scmp.ne.s32.totalorder %s109, %s112
    %p118 = scmp.eq.s32.totalorder %s10, 0
    %p119 = por %p117, %p118
    %p120 = scmp.ne.s32.totalorder %s109, %s112
    %p121 = scmp.eq.s32.totalorder %s15, 1
    %p122 = por %p120, %p121
    %p123 = scmp.ne.s32.totalorder %s112, %s113
    %p124 = scmp.eq.s32.totalorder %s15, 0
    %p125 = por %p123, %p124
    %p126 = scmp.ne.s32.totalorder %s112, %s113
    %p127 = scmp.eq.s32.totalorder %s16, 1
    %p128 = por %p126, %p127
    %p130 = scmp.ne.s32.totalorder %s113, %s129
    %p131 = scmp.eq.s32.totalorder %s16, 0
    %p132 = por %p130, %p131
    %p133 = scmp.le.s32.totalorder 1, %s10
    %p134 = scmp.lt.s32.totalorder %s10, 3
    %p135 = pnand %p133, %p134
    %p136 = pneg %p135
    // Predicated region
    $region9: #{recurrent_block_forward.1} parent=5 // pred_check
      _
    $region10: #{recurrent_block_forward.1} parent=5 // pred_check_branch
      %138 = sbr.rel (%p135) target = $region12
    $region11: #{recurrent_block_forward.1} parent=5 // pred_region
      %s139 = ssub.s32 %s10, 1
      // Predicated region
      $region13: #{recurrent_block_forward.1} parent=11 // pred_check
        %p140 = pneg %p57
      $region14: #{recurrent_block_forward.1} parent=11 // pred_check_branch
        %142 = sbr.rel (%p140) target = $region16
      $region15: #{recurrent_block_forward.1} parent=11 // pred_region
        _
      $region16: #{recurrent_block_forward.1} parent=11 // pred_fallthru
        _
      // Predicated region
      $region17: #{recurrent_block_forward.1} parent=11 // pred_check
        %p143 = pneg %p78
      $region18: #{recurrent_block_forward.1} parent=11 // pred_check_branch
        %145 = sbr.rel (%p143) target = $region20
      $region19: #{recurrent_block_forward.1} parent=11 // pred_region
        _
      $region20: #{recurrent_block_forward.1} parent=11 // pred_fallthru
        _
      // Predicated region
      $region21: #{recurrent_block_forward.1} parent=11 // pred_check
        %p146 = pneg %p99
      $region22: #{recurrent_block_forward.1} parent=11 // pred_check_branch
        %148 = sbr.rel (%p146) target = $region24
      $region23: #{recurrent_block_forward.1} parent=11 // pred_region
        _
      $region24: #{recurrent_block_forward.1} parent=11 // pred_fallthru
        _
    $region12: #{recurrent_block_forward.1} parent=5 // pred_fallthru
      _
    %p149 = scmp.lt.s32.totalorder %s10, 2
    // Predicated region
    $region25: #{recurrent_block_forward.1} parent=5 // pred_check
      %p150 = pneg %p149
    $region26: #{recurrent_block_forward.1} parent=5 // pred_check_branch
      %152 = sbr.rel (%p150) target = $region28
    $region27: #{recurrent_block_forward.1} parent=5 // pred_region
      // Predicated region
      $region29: #{recurrent_block_forward.1} parent=27 // pred_check
        %p153 = pneg %p30
      $region30: #{recurrent_block_forward.1} parent=27 // pred_check_branch
        %155 = sbr.rel (%p153) target = $region32
      $region31: #{recurrent_block_forward.1} parent=27 // pred_region
        %p156 = scmp.lt.s32.totalorder %s10, 1
        %s157 = scalar_select %p156, %s10, 1
        %s158 = smul.addr %s157, 32
        %s159 = smul.addr %s158, 8
        %s160 = scalar_lea.vmem %s0, %s159
      $region32: #{recurrent_block_forward.1} parent=27 // pred_fallthru
        _
    $region28: #{recurrent_block_forward.1} parent=5 // pred_fallthru
      _
    %p161 = scmp.le.s32.totalorder 1, %s10
    %p162 = scmp.lt.s32.totalorder %s10, 3
    %p163 = pnand %p161, %p162
    %p164 = pneg %p163
    // Predicated region
    $region33: #{recurrent_block_forward.1} parent=5 // pred_check
      _
    $region34: #{recurrent_block_forward.1} parent=5 // pred_check_branch
      %166 = sbr.rel (%p163) target = $region36
    $region35: #{recurrent_block_forward.1} parent=5 // pred_region
      %s167 = ssub.s32 %s10, 1
      %p168 = scmp.lt.s32.totalorder %s15, 1
      %s169 = scalar_select %p168, %s15, 1
      %s170 = smul.addr %s169, 32
      %s171 = smul.addr %s170, 8
      %s172 = scalar_lea.vmem %s0, %s171
      %p173 = pneg %p36
      %p174 = pneg %p33
      %p175 = pneg %p57
      %p176 = pneg %p54
      %p177 = pneg %p78
      %p178 = pneg %p75
      %p179 = pneg %p99
      %p180 = pneg %p96
      %p181 = pneg %p125
      %p182 = pneg %p122
      %p183 = scmp.lt.s32.totalorder %s15, 1
      %s184 = scalar_select %p183, %s15, 1
      %s185 = smul.addr %s184, 32
      %s186 = smul.addr %s185, 8
      %s187 = scalar_lea.vmem %s4, %s186
      %p188 = scmp.lt.s32.totalorder %s15, 1
      %s189 = scalar_select %p188, %s15, 1
      %s190 = smul.addr %s189, 32
      %s191 = smul.addr %s190, 8
      %s192 = scalar_lea.vmem %s0, %s191
      %p193 = scmp.lt.s32.totalorder %s15, 1
      %s194 = scalar_select %p193, %s15, 1
      %s195 = smul.addr %s194, 32
      %s196 = smul.addr %s195, 8
      %s197 = scalar_lea.vmem %s4, %s196
      %vm198 = vcmask 31744
      %199 = vst.msk [vmem:[#allocation2] sm:$0xff] %vm198, 0.0
      %200 = vst.msk [vmem:[#allocation2 + $0x8] sm:$0xff] %vm198, 0.0
      %vm201 = vcmask 25600
      %202 = vst.msk [vmem:[#allocation2 + $0x10] sm:$0x3] %vm201, 0.0
      %203 = vst.msk [vmem:[#allocation2 + $0x18] sm:$0xff] %vm198, 0.0
      %204 = vst.msk [vmem:[#allocation2 + $0x20] sm:$0xff] %vm198, 0.0
      %205 = vst.msk [vmem:[#allocation2 + $0x28] sm:$0x3] %vm201, 0.0
      %206 = vst.msk [vmem:[#allocation2 + $0x30] sm:$0xff] %vm198, 0.0
      %207 = vst.msk [vmem:[#allocation2 + $0x38] sm:$0xff] %vm198, 0.0
      %208 = vst.msk [vmem:[#allocation2 + $0x40] sm:$0x3] %vm201, 0.0
      %209 = vst.msk [vmem:[#allocation2 + $0x48] sm:$0xff] %vm198, 0.0
      %210 = vst.msk [vmem:[#allocation2 + $0x50] sm:$0xff] %vm198, 0.0
      %211 = vst.msk [vmem:[#allocation2 + $0x58] sm:$0x3] %vm201, 0.0
      %212 = vst.msk [vmem:[#allocation2 + $0x60] sm:$0xff] %vm198, 0.0
      %213 = vst.msk [vmem:[#allocation2 + $0x68] sm:$0xff] %vm198, 0.0
      %214 = vst.msk [vmem:[#allocation2 + $0x70] sm:$0x3] %vm201, 0.0
      %215 = vst.msk [vmem:[#allocation2 + $0x78] sm:$0xff] %vm198, 0.0
      %216 = vst.msk [vmem:[#allocation2 + $0x80] sm:$0xff] %vm198, 0.0
      %217 = vst.msk [vmem:[#allocation2 + $0x88] sm:$0x3] %vm201, 0.0
      %218 = vst.msk [vmem:[#allocation2 + $0x90] sm:$0xff] %vm198, 0.0
      %219 = vst.msk [vmem:[#allocation2 + $0x98] sm:$0xff] %vm198, 0.0
      %220 = vst.msk [vmem:[#allocation2 + $0xa0] sm:$0x3] %vm201, 0.0
      %221 = vst.msk [vmem:[#allocation2 + $0xa8] sm:$0xff] %vm198, 0.0
      %222 = vst.msk [vmem:[#allocation2 + $0xb0] sm:$0xff] %vm198, 0.0
      %223 = vst.msk [vmem:[#allocation2 + $0xb8] sm:$0x3] %vm201, 0.0
      %224 = vst.msk [vmem:[#allocation2 + $0xc0] sm:$0xff] %vm198, 0.0
      %225 = vst.msk [vmem:[#allocation2 + $0xc8] sm:$0xff] %vm198, 0.0
      %226 = vst.msk [vmem:[#allocation2 + $0xd0] sm:$0x3] %vm201, 0.0
      %227 = vst.msk [vmem:[#allocation2 + $0xd8] sm:$0xff] %vm198, 0.0
      %228 = vst.msk [vmem:[#allocation2 + $0xe0] sm:$0xff] %vm198, 0.0
      %229 = vst.msk [vmem:[#allocation2 + $0xe8] sm:$0x3] %vm201, 0.0
      %230 = vst.msk [vmem:[#allocation2 + $0xf0] sm:$0xff] %vm198, 0.0
      %231 = vst.msk [vmem:[#allocation2 + $0xf8] sm:$0xff] %vm198, 0.0
      %232 = vst.msk [vmem:[#allocation2 + $0x100] sm:$0x3] %vm201, 0.0
      %233 = vst.msk [vmem:[#allocation2 + $0x108] sm:$0xff] %vm198, 0.0
      %234 = vst.msk [vmem:[#allocation2 + $0x110] sm:$0xff] %vm198, 0.0
      %235 = vst.msk [vmem:[#allocation2 + $0x118] sm:$0x3] %vm201, 0.0
      %236 = vst.msk [vmem:[#allocation2 + $0x120] sm:$0xff] %vm198, 0.0
      %237 = vst.msk [vmem:[#allocation2 + $0x128] sm:$0xff] %vm198, 0.0
      %238 = vst.msk [vmem:[#allocation2 + $0x130] sm:$0x3] %vm201, 0.0
      %239 = vst.msk [vmem:[#allocation2 + $0x138] sm:$0xff] %vm198, 0.0
      %240 = vst.msk [vmem:[#allocation2 + $0x140] sm:$0xff] %vm198, 0.0
      %241 = vst.msk [vmem:[#allocation2 + $0x148] sm:$0x3] %vm201, 0.0
      %242 = vst.msk [vmem:[#allocation2 + $0x150] sm:$0xff] %vm198, 0.0
      %243 = vst.msk [vmem:[#allocation2 + $0x158] sm:$0xff] %vm198, 0.0
      %244 = vst.msk [vmem:[#allocation2 + $0x160] sm:$0x3] %vm201, 0.0
      %245 = vst.msk [vmem:[#allocation2 + $0x168] sm:$0xff] %vm198, 0.0
      %246 = vst.msk [vmem:[#allocation2 + $0x170] sm:$0xff] %vm198, 0.0
      %247 = vst.msk [vmem:[#allocation2 + $0x178] sm:$0x3] %vm201, 0.0
      %248 = vst.msk [vmem:[#allocation2 + $0x180] sm:$0xff] %vm198, 0.0
      %249 = vst.msk [vmem:[#allocation2 + $0x188] sm:$0xff] %vm198, 0.0
      %250 = vst.msk [vmem:[#allocation2 + $0x190] sm:$0x3] %vm201, 0.0
      %251 = vst.msk [vmem:[#allocation2 + $0x198] sm:$0xff] %vm198, 0.0
      %252 = vst.msk [vmem:[#allocation2 + $0x1a0] sm:$0xff] %vm198, 0.0
      %253 = vst.msk [vmem:[#allocation2 + $0x1a8] sm:$0x3] %vm201, 0.0
      %v254 = vld [vmem:[%s192] sm:$0xff]
      %v255 = vld [vmem:[%s192 + $0x8] sm:$0xff]
      %v256 = vld [vmem:[%s192 + $0x10] sm:$0xff]
      %v257 = vld [vmem:[%s192 + $0x18] sm:$0xff]
      %v258 = vld [vmem:[%s192 + $0x20] sm:$0xff]
      %v259 = vld [vmem:[%s192 + $0x28] sm:$0xff]
      %v260 = vld [vmem:[%s192 + $0x30] sm:$0xff]
      %v261 = vld [vmem:[%s192 + $0x38] sm:$0xff]
      %v262 = vld [vmem:[%s192 + $0x40] sm:$0xff]
      %v263 = vld [vmem:[%s192 + $0x48] sm:$0xff]
      %v264 = vld [vmem:[%s192 + $0x50] sm:$0xff]
      %v265 = vld [vmem:[%s192 + $0x58] sm:$0xff]
      %v266 = vld [vmem:[%s192 + $0x60] sm:$0xff]
      %v267 = vld [vmem:[%s192 + $0x68] sm:$0xff]
      %v268 = vld [vmem:[%s192 + $0x70] sm:$0xff]
      %v269 = vld [vmem:[%s192 + $0x78] sm:$0xff]
      %v270 = vld [vmem:[%s192 + $0x80] sm:$0xff]
      %v271 = vld [vmem:[%s192 + $0x88] sm:$0xff]
      %v272 = vld [vmem:[%s192 + $0x90] sm:$0xff]
      %v273 = vld [vmem:[%s192 + $0x98] sm:$0xff]
      %v274 = vld [vmem:[%s192 + $0xa0] sm:$0xff]
      %v275 = vld [vmem:[%s192 + $0xa8] sm:$0xff]
      %v276 = vld [vmem:[%s192 + $0xb0] sm:$0xff]
      %v277 = vld [vmem:[%s192 + $0xb8] sm:$0xff]
      %v278 = vld [vmem:[%s192 + $0xc0] sm:$0xff]
      %v279 = vld [vmem:[%s192 + $0xc8] sm:$0xff]
      %v280 = vld [vmem:[%s192 + $0xd0] sm:$0xff]
      %v281 = vld [vmem:[%s192 + $0xd8] sm:$0xff]
      %v282 = vld [vmem:[%s192 + $0xe0] sm:$0xff]
      %v283 = vld [vmem:[%s192 + $0xe8] sm:$0xff]
      %v284 = vld [vmem:[%s192 + $0xf0] sm:$0xff]
      %v285 = vld [vmem:[%s192 + $0xf8] sm:$0xff]
      %v286 = vld [vmem:[%s2] sm:$0x1]
      %v287 = vld [vmem:[%s3] sm:$0x1]
      %s288 = scalar_lea.vmem [#allocation2], 24
      %289 = vst.msk [vmem:[%s288 + $0x1] sm:$0xff] %vm198, %v254
      %290 = vst.msk [vmem:[%s288 + $0x9] sm:$0xff] %vm198, %v255
      %291 = vst.msk [vmem:[%s288 + $0x19] sm:$0xff] %vm198, %v256
      %292 = vst.msk [vmem:[%s288 + $0x21] sm:$0xff] %vm198, %v257
      %293 = vst.msk [vmem:[%s288 + $0x31] sm:$0xff] %vm198, %v258
      %294 = vst.msk [vmem:[%s288 + $0x39] sm:$0xff] %vm198, %v259
      %295 = vst.msk [vmem:[%s288 + $0x49] sm:$0xff] %vm198, %v260
      %296 = vst.msk [vmem:[%s288 + $0x51] sm:$0xff] %vm198, %v261
      %297 = vst.msk [vmem:[%s288 + $0x61] sm:$0xff] %vm198, %v262
      %298 = vst.msk [vmem:[%s288 + $0x69] sm:$0xff] %vm198, %v263
      %299 = vst.msk [vmem:[%s288 + $0x79] sm:$0xff] %vm198, %v264
      %300 = vst.msk [vmem:[%s288 + $0x81] sm:$0xff] %vm198, %v265
      %301 = vst.msk [vmem:[%s288 + $0x91] sm:$0xff] %vm198, %v266
      %302 = vst.msk [vmem:[%s288 + $0x99] sm:$0xff] %vm198, %v267
      %303 = vst.msk [vmem:[%s288 + $0xa9] sm:$0xff] %vm198, %v268
      %304 = vst.msk [vmem:[%s288 + $0xb1] sm:$0xff] %vm198, %v269
      %305 = vst.msk [vmem:[%s288 + $0xc1] sm:$0xff] %vm198, %v270
      %306 = vst.msk [vmem:[%s288 + $0xc9] sm:$0xff] %vm198, %v271
      %307 = vst.msk [vmem:[%s288 + $0xd9] sm:$0xff] %vm198, %v272
      %308 = vst.msk [vmem:[%s288 + $0xe1] sm:$0xff] %vm198, %v273
      %309 = vst.msk [vmem:[%s288 + $0xf1] sm:$0xff] %vm198, %v274
      %310 = vst.msk [vmem:[%s288 + $0xf9] sm:$0xff] %vm198, %v275
      %311 = vst.msk [vmem:[%s288 + $0x109] sm:$0xff] %vm198, %v276
      %312 = vst.msk [vmem:[%s288 + $0x111] sm:$0xff] %vm198, %v277
      %313 = vst.msk [vmem:[%s288 + $0x121] sm:$0xff] %vm198, %v278
      %314 = vst.msk [vmem:[%s288 + $0x129] sm:$0xff] %vm198, %v279
      %315 = vst.msk [vmem:[%s288 + $0x139] sm:$0xff] %vm198, %v280
      %316 = vst.msk [vmem:[%s288 + $0x141] sm:$0xff] %vm198, %v281
      %317 = vst.msk [vmem:[%s288 + $0x151] sm:$0xff] %vm198, %v282
      %318 = vst.msk [vmem:[%s288 + $0x159] sm:$0xff] %vm198, %v283
      %319 = vst.msk [vmem:[%s288 + $0x169] sm:$0xff] %vm198, %v284
      %320 = vst.msk [vmem:[%s288 + $0x171] sm:$0xff] %vm198, %v285
      %v321 = vld [vmem:[#allocation2] sm:$0xff]
      %v322 = vld [vmem:[#allocation2 + $0x8] sm:$0xff]
      %v323 = vld [vmem:[#allocation2 + $0x18] sm:$0xff]
      %v324 = vld [vmem:[#allocation2 + $0x20] sm:$0xff]
      %v325 = vld [vmem:[#allocation2 + $0x30] sm:$0xff]
      %v326 = vld [vmem:[#allocation2 + $0x38] sm:$0xff]
      %v327 = vld [vmem:[#allocation2 + $0x48] sm:$0xff]
      %v328 = vld [vmem:[#allocation2 + $0x50] sm:$0xff]
      %v329 = vld [vmem:[#allocation2 + $0x60] sm:$0xff]
      %v330 = vld [vmem:[#allocation2 + $0x68] sm:$0xff]
      %v331 = vld [vmem:[#allocation2 + $0x78] sm:$0xff]
      %v332 = vld [vmem:[#allocation2 + $0x80] sm:$0xff]
      %v333 = vld [vmem:[#allocation2 + $0x90] sm:$0xff]
      %v334 = vld [vmem:[#allocation2 + $0x98] sm:$0xff]
      %v335 = vld [vmem:[#allocation2 + $0xa8] sm:$0xff]
      %v336 = vld [vmem:[#allocation2 + $0xb0] sm:$0xff]
      %v337 = vld [vmem:[#allocation2 + $0xc0] sm:$0xff]
      %v338 = vld [vmem:[#allocation2 + $0xc8] sm:$0xff]
      %v339 = vld [vmem:[#allocation2 + $0xd8] sm:$0xff]
      %v340 = vld [vmem:[#allocation2 + $0xe0] sm:$0xff]
      %v341 = vld [vmem:[#allocation2 + $0xf0] sm:$0xff]
      %v342 = vld [vmem:[#allocation2 + $0xf8] sm:$0xff]
      %v343 = vld [vmem:[#allocation2 + $0x108] sm:$0xff]
      %v344 = vld [vmem:[#allocation2 + $0x110] sm:$0xff]
      %v345 = vld [vmem:[#allocation2 + $0x120] sm:$0xff]
      %v346 = vld [vmem:[#allocation2 + $0x128] sm:$0xff]
      %v347 = vld [vmem:[#allocation2 + $0x138] sm:$0xff]
      %v348 = vld [vmem:[#allocation2 + $0x140] sm:$0xff]
      %v349 = vld [vmem:[#allocation2 + $0x150] sm:$0xff]
      %v350 = vld [vmem:[#allocation2 + $0x158] sm:$0xff]
      %v351 = vld [vmem:[#allocation2 + $0x168] sm:$0xff]
      %v352 = vld [vmem:[#allocation2 + $0x170] sm:$0xff]
      %v353 = vld [vmem:[%s1] sm:$0xf]
      %v354 = vld [vmem:[#allocation2 + $0x1] sm:$0xff]
      %v355 = vld [vmem:[#allocation2 + $0x9] sm:$0xff]
      %v356 = vld [vmem:[#allocation2 + $0x19] sm:$0xff]
      %v357 = vld [vmem:[#allocation2 + $0x21] sm:$0xff]
      %v358 = vld [vmem:[#allocation2 + $0x31] sm:$0xff]
      %v359 = vld [vmem:[#allocation2 + $0x39] sm:$0xff]
      %v360 = vld [vmem:[#allocation2 + $0x49] sm:$0xff]
      %v361 = vld [vmem:[#allocation2 + $0x51] sm:$0xff]
      %v362 = vld [vmem:[#allocation2 + $0x61] sm:$0xff]
      %v363 = vld [vmem:[#allocation2 + $0x69] sm:$0xff]
      %v364 = vld [vmem:[#allocation2 + $0x79] sm:$0xff]
      %v365 = vld [vmem:[#allocation2 + $0x81] sm:$0xff]
      %v366 = vld [vmem:[#allocation2 + $0x91] sm:$0xff]
      %v367 = vld [vmem:[#allocation2 + $0x99] sm:$0xff]
      %v368 = vld [vmem:[#allocation2 + $0xa9] sm:$0xff]
      %v369 = vld [vmem:[#allocation2 + $0xb1] sm:$0xff]
      %v370 = vld [vmem:[#allocation2 + $0xc1] sm:$0xff]
      %v371 = vld [vmem:[#allocation2 + $0xc9] sm:$0xff]
      %v372 = vld [vmem:[#allocation2 + $0xd9] sm:$0xff]
      %v373 = vld [vmem:[#allocation2 + $0xe1] sm:$0xff]
      %v374 = vld [vmem:[#allocation2 + $0xf1] sm:$0xff]
      %v375 = vld [vmem:[#allocation2 + $0xf9] sm:$0xff]
      %v376 = vld [vmem:[#allocation2 + $0x109] sm:$0xff]
      %v377 = vld [vmem:[#allocation2 + $0x111] sm:$0xff]
      %v378 = vld [vmem:[#allocation2 + $0x121] sm:$0xff]
      %v379 = vld [vmem:[#allocation2 + $0x129] sm:$0xff]
      %v380 = vld [vmem:[#allocation2 + $0x139] sm:$0xff]
      %v381 = vld [vmem:[#allocation2 + $0x141] sm:$0xff]
      %v382 = vld [vmem:[#allocation2 + $0x151] sm:$0xff]
      %v383 = vld [vmem:[#allocation2 + $0x159] sm:$0xff]
      %v384 = vld [vmem:[#allocation2 + $0x169] sm:$0xff]
      %v385 = vld [vmem:[#allocation2 + $0x171] sm:$0xff]
      %s386 = scalar_lea.vmem %s1, 4
      %v387 = vld [vmem:[%s386] sm:$0xf]
      %v389 = vsel %vm198, %v354, 0
      %v392 = vsel %vm198, %v355, 0
      %v395 = vsel %vm198, %v356, 0
      %v398 = vsel %vm198, %v357, 0
      %v401 = vsel %vm198, %v358, 0
      %v404 = vsel %vm198, %v359, 0
      %v407 = vsel %vm198, %v360, 0
      %v410 = vsel %vm198, %v361, 0
      %v413 = vsel %vm198, %v362, 0
      %v416 = vsel %vm198, %v363, 0
      %v419 = vsel %vm198, %v364, 0
      %v422 = vsel %vm198, %v365, 0
      %v425 = vsel %vm198, %v366, 0
      %v428 = vsel %vm198, %v367, 0
      %v431 = vsel %vm198, %v368, 0
      %v434 = vsel %vm198, %v369, 0
      %v437 = vsel %vm198, %v370, 0
      %v440 = vsel %vm198, %v371, 0
      %v443 = vsel %vm198, %v372, 0
      %v446 = vsel %vm198, %v373, 0
      %v449 = vsel %vm198, %v374, 0
      %v452 = vsel %vm198, %v375, 0
      %v455 = vsel %vm198, %v376, 0
      %v458 = vsel %vm198, %v377, 0
      %v461 = vsel %vm198, %v378, 0
      %v464 = vsel %vm198, %v379, 0
      %v467 = vsel %vm198, %v380, 0
      %v470 = vsel %vm198, %v381, 0
      %v473 = vsel %vm198, %v382, 0
      %v476 = vsel %vm198, %v383, 0
      %v479 = vsel %vm198, %v384, 0
      %v482 = vsel %vm198, %v385, 0
      %vm484 = vcmask 1043456
      %v486 = vsel %vm484, %v387, 0
      %488 = vmatpush.msra.mxu0 0.0
      %489 = vmatpush.msra.mxu0 0.0
      %490 = vmatpush.msra.mxu0 0.0
      %491 = vmatpush.msra.mxu0 0.0
      %492 = vmatpush.msra.mxu0 0.0
      %493 = vmatpush.msra.mxu0 0.0
      %494 = vmatpush.msra.mxu0 0.0
      %495 = vmatpush.msra.mxu0 0.0
      %496 = vmatpush.msra.mxu0 0.0
      %497 = vmatpush.msra.mxu0 0.0
      %498 = vmatpush.msra.mxu0 0.0
      %499 = vmatpush.msra.mxu0 0.0
      %500 = vmatpush.msra.mxu0 0.0
      %501 = vmatpush.msra.mxu0 0.0
      %502 = vmatpush.msra.mxu0 0.0
      %503 = vmatpush.msra.mxu0 %v486
      %504 = vmatmul.f32.gmra.mxu0 %v389
      %v505 = vpop.f32.mrf.mxu0
      %v506 = vadd.f32 0.0, %v505
      %507 = vmatmul.f32.gmra.mxu0 %v392
      %v508 = vpop.f32.mrf.mxu0
      %v509 = vadd.f32 0.0, %v508
      %510 = vmatmul.f32.gmra.mxu0 %v395
      %v511 = vpop.f32.mrf.mxu0
      %v512 = vadd.f32 0.0, %v511
      %513 = vmatmul.f32.gmra.mxu0 %v398
      %v514 = vpop.f32.mrf.mxu0
      %v515 = vadd.f32 0.0, %v514
      %516 = vmatmul.f32.gmra.mxu0 %v401
      %v517 = vpop.f32.mrf.mxu0
      %v518 = vadd.f32 0.0, %v517
      %519 = vmatmul.f32.gmra.mxu0 %v404
      %v520 = vpop.f32.mrf.mxu0
      %v521 = vadd.f32 0.0, %v520
      %522 = vmatmul.f32.gmra.mxu0 %v407
      %v523 = vpop.f32.mrf.mxu0
      %v524 = vadd.f32 0.0, %v523
      %525 = vmatmul.f32.gmra.mxu0 %v410
      %v526 = vpop.f32.mrf.mxu0
      %v527 = vadd.f32 0.0, %v526
      %528 = vmatmul.f32.gmra.mxu0 %v413
      %v529 = vpop.f32.mrf.mxu0
      %v530 = vadd.f32 0.0, %v529
      %531 = vmatmul.f32.gmra.mxu0 %v416
      %v532 = vpop.f32.mrf.mxu0
      %v533 = vadd.f32 0.0, %v532
      %534 = vmatmul.f32.gmra.mxu0 %v419
      %v535 = vpop.f32.mrf.mxu0
      %v536 = vadd.f32 0.0, %v535
      %537 = vmatmul.f32.gmra.mxu0 %v422
      %v538 = vpop.f32.mrf.mxu0
      %v539 = vadd.f32 0.0, %v538
      %540 = vmatmul.f32.gmra.mxu0 %v425
      %v541 = vpop.f32.mrf.mxu0
      %v542 = vadd.f32 0.0, %v541
      %543 = vmatmul.f32.gmra.mxu0 %v428
      %v544 = vpop.f32.mrf.mxu0
      %v545 = vadd.f32 0.0, %v544
      %546 = vmatmul.f32.gmra.mxu0 %v431
      %v547 = vpop.f32.mrf.mxu0
      %v548 = vadd.f32 0.0, %v547
      %549 = vmatmul.f32.gmra.mxu0 %v434
      %v550 = vpop.f32.mrf.mxu0
      %v551 = vadd.f32 0.0, %v550
      %552 = vmatmul.f32.gmra.mxu0 %v437
      %v553 = vpop.f32.mrf.mxu0
      %v554 = vadd.f32 0.0, %v553
      %555 = vmatmul.f32.gmra.mxu0 %v440
      %v556 = vpop.f32.mrf.mxu0
      %v557 = vadd.f32 0.0, %v556
      %558 = vmatmul.f32.gmra.mxu0 %v443
      %v559 = vpop.f32.mrf.mxu0
      %v560 = vadd.f32 0.0, %v559
      %561 = vmatmul.f32.gmra.mxu0 %v446
      %v562 = vpop.f32.mrf.mxu0
      %v563 = vadd.f32 0.0, %v562
      %564 = vmatmul.f32.gmra.mxu0 %v449
      %v565 = vpop.f32.mrf.mxu0
      %v566 = vadd.f32 0.0, %v565
      %567 = vmatmul.f32.gmra.mxu0 %v452
      %v568 = vpop.f32.mrf.mxu0
      %v569 = vadd.f32 0.0, %v568
      %570 = vmatmul.f32.gmra.mxu0 %v455
      %v571 = vpop.f32.mrf.mxu0
      %v572 = vadd.f32 0.0, %v571
      %573 = vmatmul.f32.gmra.mxu0 %v458
      %v574 = vpop.f32.mrf.mxu0
      %v575 = vadd.f32 0.0, %v574
      %576 = vmatmul.f32.gmra.mxu0 %v461
      %v577 = vpop.f32.mrf.mxu0
      %v578 = vadd.f32 0.0, %v577
      %579 = vmatmul.f32.gmra.mxu0 %v464
      %v580 = vpop.f32.mrf.mxu0
      %v581 = vadd.f32 0.0, %v580
      %582 = vmatmul.f32.gmra.mxu0 %v467
      %v583 = vpop.f32.mrf.mxu0
      %v584 = vadd.f32 0.0, %v583
      %585 = vmatmul.f32.gmra.mxu0 %v470
      %v586 = vpop.f32.mrf.mxu0
      %v587 = vadd.f32 0.0, %v586
      %588 = vmatmul.f32.gmra.mxu0 %v473
      %v589 = vpop.f32.mrf.mxu0
      %v590 = vadd.f32 0.0, %v589
      %591 = vmatmul.f32.gmra.mxu0 %v476
      %v592 = vpop.f32.mrf.mxu0
      %v593 = vadd.f32 0.0, %v592
      %594 = vmatmul.f32.gmra.mxu0 %v479
      %v595 = vpop.f32.mrf.mxu0
      %v596 = vadd.f32 0.0, %v595
      %597 = vmatmul.f32.gmra.mxu0 %v482
      %v598 = vpop.f32.mrf.mxu0
      %v599 = vadd.f32 0.0, %v598
      %600 = vdwg.mxu0
      %v602 = vsel %vm198, %v321, 0
      %v605 = vsel %vm198, %v322, 0
      %v608 = vsel %vm198, %v323, 0
      %v611 = vsel %vm198, %v324, 0
      %v614 = vsel %vm198, %v325, 0
      %v617 = vsel %vm198, %v326, 0
      %v620 = vsel %vm198, %v327, 0
      %v623 = vsel %vm198, %v328, 0
      %v626 = vsel %vm198, %v329, 0
      %v629 = vsel %vm198, %v330, 0
      %v632 = vsel %vm198, %v331, 0
      %v635 = vsel %vm198, %v332, 0
      %v638 = vsel %vm198, %v333, 0
      %v641 = vsel %vm198, %v334, 0
      %v644 = vsel %vm198, %v335, 0
      %v647 = vsel %vm198, %v336, 0
      %v650 = vsel %vm198, %v337, 0
      %v653 = vsel %vm198, %v338, 0
      %v656 = vsel %vm198, %v339, 0
      %v659 = vsel %vm198, %v340, 0
      %v662 = vsel %vm198, %v341, 0
      %v665 = vsel %vm198, %v342, 0
      %v668 = vsel %vm198, %v343, 0
      %v671 = vsel %vm198, %v344, 0
      %v674 = vsel %vm198, %v345, 0
      %v677 = vsel %vm198, %v346, 0
      %v680 = vsel %vm198, %v347, 0
      %v683 = vsel %vm198, %v348, 0
      %v686 = vsel %vm198, %v349, 0
      %v689 = vsel %vm198, %v350, 0
      %v692 = vsel %vm198, %v351, 0
      %v695 = vsel %vm198, %v352, 0
      %v698 = vsel %vm484, %v353, 0
      %700 = vmatpush.msra.mxu0 0.0
      %701 = vmatpush.msra.mxu0 0.0
      %702 = vmatpush.msra.mxu0 0.0
      %703 = vmatpush.msra.mxu0 0.0
      %704 = vmatpush.msra.mxu0 0.0
      %705 = vmatpush.msra.mxu0 0.0
      %706 = vmatpush.msra.mxu0 0.0
      %707 = vmatpush.msra.mxu0 0.0
      %708 = vmatpush.msra.mxu0 0.0
      %709 = vmatpush.msra.mxu0 0.0
      %710 = vmatpush.msra.mxu0 0.0
      %711 = vmatpush.msra.mxu0 0.0
      %712 = vmatpush.msra.mxu0 0.0
      %713 = vmatpush.msra.mxu0 0.0
      %714 = vmatpush.msra.mxu0 0.0
      %715 = vmatpush.msra.mxu0 %v698
      %716 = vmatmul.f32.gmra.mxu0 %v602
      %v717 = vpop.f32.mrf.mxu0
      %v718 = vadd.f32 %v506, %v717
      %719 = vmatmul.f32.gmra.mxu0 %v605
      %v720 = vpop.f32.mrf.mxu0
      %v721 = vadd.f32 %v509, %v720
      %722 = vmatmul.f32.gmra.mxu0 %v608
      %v723 = vpop.f32.mrf.mxu0
      %v724 = vadd.f32 %v512, %v723
      %725 = vmatmul.f32.gmra.mxu0 %v611
      %v726 = vpop.f32.mrf.mxu0
      %v727 = vadd.f32 %v515, %v726
      %728 = vmatmul.f32.gmra.mxu0 %v614
      %v729 = vpop.f32.mrf.mxu0
      %v730 = vadd.f32 %v518, %v729
      %731 = vmatmul.f32.gmra.mxu0 %v617
      %v732 = vpop.f32.mrf.mxu0
      %v733 = vadd.f32 %v521, %v732
      %734 = vmatmul.f32.gmra.mxu0 %v620
      %v735 = vpop.f32.mrf.mxu0
      %v736 = vadd.f32 %v524, %v735
      %737 = vmatmul.f32.gmra.mxu0 %v623
      %v738 = vpop.f32.mrf.mxu0
      %v739 = vadd.f32 %v527, %v738
      %740 = vmatmul.f32.gmra.mxu0 %v626
      %v741 = vpop.f32.mrf.mxu0
      %v742 = vadd.f32 %v530, %v741
      %743 = vmatmul.f32.gmra.mxu0 %v629
      %v744 = vpop.f32.mrf.mxu0
      %v745 = vadd.f32 %v533, %v744
      %746 = vmatmul.f32.gmra.mxu0 %v632
      %v747 = vpop.f32.mrf.mxu0
      %v748 = vadd.f32 %v536, %v747
      %749 = vmatmul.f32.gmra.mxu0 %v635
      %v750 = vpop.f32.mrf.mxu0
      %v751 = vadd.f32 %v539, %v750
      %752 = vmatmul.f32.gmra.mxu0 %v638
      %v753 = vpop.f32.mrf.mxu0
      %v754 = vadd.f32 %v542, %v753
      %755 = vmatmul.f32.gmra.mxu0 %v641
      %v756 = vpop.f32.mrf.mxu0
      %v757 = vadd.f32 %v545, %v756
      %758 = vmatmul.f32.gmra.mxu0 %v644
      %v759 = vpop.f32.mrf.mxu0
      %v760 = vadd.f32 %v548, %v759
      %761 = vmatmul.f32.gmra.mxu0 %v647
      %v762 = vpop.f32.mrf.mxu0
      %v763 = vadd.f32 %v551, %v762
      %764 = vmatmul.f32.gmra.mxu0 %v650
      %v765 = vpop.f32.mrf.mxu0
      %v766 = vadd.f32 %v554, %v765
      %767 = vmatmul.f32.gmra.mxu0 %v653
      %v768 = vpop.f32.mrf.mxu0
      %v769 = vadd.f32 %v557, %v768
      %770 = vmatmul.f32.gmra.mxu0 %v656
      %v771 = vpop.f32.mrf.mxu0
      %v772 = vadd.f32 %v560, %v771
      %773 = vmatmul.f32.gmra.mxu0 %v659
      %v774 = vpop.f32.mrf.mxu0
      %v775 = vadd.f32 %v563, %v774
      %776 = vmatmul.f32.gmra.mxu0 %v662
      %v777 = vpop.f32.mrf.mxu0
      %v778 = vadd.f32 %v566, %v777
      %779 = vmatmul.f32.gmra.mxu0 %v665
      %v780 = vpop.f32.mrf.mxu0
      %v781 = vadd.f32 %v569, %v780
      %782 = vmatmul.f32.gmra.mxu0 %v668
      %v783 = vpop.f32.mrf.mxu0
      %v784 = vadd.f32 %v572, %v783
      %785 = vmatmul.f32.gmra.mxu0 %v671
      %v786 = vpop.f32.mrf.mxu0
      %v787 = vadd.f32 %v575, %v786
      %788 = vmatmul.f32.gmra.mxu0 %v674
      %v789 = vpop.f32.mrf.mxu0
      %v790 = vadd.f32 %v578, %v789
      %791 = vmatmul.f32.gmra.mxu0 %v677
      %v792 = vpop.f32.mrf.mxu0
      %v793 = vadd.f32 %v581, %v792
      %794 = vmatmul.f32.gmra.mxu0 %v680
      %v795 = vpop.f32.mrf.mxu0
      %v796 = vadd.f32 %v584, %v795
      %797 = vmatmul.f32.gmra.mxu0 %v683
      %v798 = vpop.f32.mrf.mxu0
      %v799 = vadd.f32 %v587, %v798
      %800 = vmatmul.f32.gmra.mxu0 %v686
      %v801 = vpop.f32.mrf.mxu0
      %v802 = vadd.f32 %v590, %v801
      %803 = vmatmul.f32.gmra.mxu0 %v689
      %v804 = vpop.f32.mrf.mxu0
      %v805 = vadd.f32 %v593, %v804
      %806 = vmatmul.f32.gmra.mxu0 %v692
      %v807 = vpop.f32.mrf.mxu0
      %v808 = vadd.f32 %v596, %v807
      %809 = vmatmul.f32.gmra.mxu0 %v695
      %v810 = vpop.f32.mrf.mxu0
      %v811 = vadd.f32 %v599, %v810
      %812 = vdwg.mxu0
      %v813 = vld [vmem:[#allocation2 + $0x2] sm:$0xff]
      %v814 = vld [vmem:[#allocation2 + $0xa] sm:$0xff]
      %v815 = vld [vmem:[#allocation2 + $0x1a] sm:$0xff]
      %v816 = vld [vmem:[#allocation2 + $0x22] sm:$0xff]
      %v817 = vld [vmem:[#allocation2 + $0x32] sm:$0xff]
      %v818 = vld [vmem:[#allocation2 + $0x3a] sm:$0xff]
      %v819 = vld [vmem:[#allocation2 + $0x4a] sm:$0xff]
      %v820 = vld [vmem:[#allocation2 + $0x52] sm:$0xff]
      %v821 = vld [vmem:[#allocation2 + $0x62] sm:$0xff]
      %v822 = vld [vmem:[#allocation2 + $0x6a] sm:$0xff]
      %v823 = vld [vmem:[#allocation2 + $0x7a] sm:$0xff]
      %v824 = vld [vmem:[#allocation2 + $0x82] sm:$0xff]
      %v825 = vld [vmem:[#allocation2 + $0x92] sm:$0xff]
      %v826 = vld [vmem:[#allocation2 + $0x9a] sm:$0xff]
      %v827 = vld [vmem:[#allocation2 + $0xaa] sm:$0xff]
      %v828 = vld [vmem:[#allocation2 + $0xb2] sm:$0xff]
      %v829 = vld [vmem:[#allocation2 + $0xc2] sm:$0xff]
      %v830 = vld [vmem:[#allocation2 + $0xca] sm:$0xff]
      %v831 = vld [vmem:[#allocation2 + $0xda] sm:$0xff]
      %v832 = vld [vmem:[#allocation2 + $0xe2] sm:$0xff]
      %v833 = vld [vmem:[#allocation2 + $0xf2] sm:$0xff]
      %v834 = vld [vmem:[#allocation2 + $0xfa] sm:$0xff]
      %v835 = vld [vmem:[#allocation2 + $0x10a] sm:$0xff]
      %v836 = vld [vmem:[#allocation2 + $0x112] sm:$0xff]
      %v837 = vld [vmem:[#allocation2 + $0x122] sm:$0xff]
      %v838 = vld [vmem:[#allocation2 + $0x12a] sm:$0xff]
      %v839 = vld [vmem:[#allocation2 + $0x13a] sm:$0xff]
      %v840 = vld [vmem:[#allocation2 + $0x142] sm:$0xff]
      %v841 = vld [vmem:[#allocation2 + $0x152] sm:$0xff]
      %v842 = vld [vmem:[#allocation2 + $0x15a] sm:$0xff]
      %v843 = vld [vmem:[#allocation2 + $0x16a] sm:$0xff]
      %v844 = vld [vmem:[#allocation2 + $0x172] sm:$0xff]
      %s845 = scalar_lea.vmem %s1, 8
      %v846 = vld [vmem:[%s845] sm:$0xf]
      %v848 = vsel %vm198, %v813, 0
      %v851 = vsel %vm198, %v814, 0
      %v854 = vsel %vm198, %v815, 0
      %v857 = vsel %vm198, %v816, 0
      %v860 = vsel %vm198, %v817, 0
      %v863 = vsel %vm198, %v818, 0
      %v866 = vsel %vm198, %v819, 0
      %v869 = vsel %vm198, %v820, 0
      %v872 = vsel %vm198, %v821, 0
      %v875 = vsel %vm198, %v822, 0
      %v878 = vsel %vm198, %v823, 0
      %v881 = vsel %vm198, %v824, 0
      %v884 = vsel %vm198, %v825, 0
      %v887 = vsel %vm198, %v826, 0
      %v890 = vsel %vm198, %v827, 0
      %v893 = vsel %vm198, %v828, 0
      %v896 = vsel %vm198, %v829, 0
      %v899 = vsel %vm198, %v830, 0
      %v902 = vsel %vm198, %v831, 0
      %v905 = vsel %vm198, %v832, 0
      %v908 = vsel %vm198, %v833, 0
      %v911 = vsel %vm198, %v834, 0
      %v914 = vsel %vm198, %v835, 0
      %v917 = vsel %vm198, %v836, 0
      %v920 = vsel %vm198, %v837, 0
      %v923 = vsel %vm198, %v838, 0
      %v926 = vsel %vm198, %v839, 0
      %v929 = vsel %vm198, %v840, 0
      %v932 = vsel %vm198, %v841, 0
      %v935 = vsel %vm198, %v842, 0
      %v938 = vsel %vm198, %v843, 0
      %v941 = vsel %vm198, %v844, 0
      %v944 = vsel %vm484, %v846, 0
      %946 = vmatpush.msra.mxu0 0.0
      %947 = vmatpush.msra.mxu0 0.0
      %948 = vmatpush.msra.mxu0 0.0
      %949 = vmatpush.msra.mxu0 0.0
      %950 = vmatpush.msra.mxu0 0.0
      %951 = vmatpush.msra.mxu0 0.0
      %952 = vmatpush.msra.mxu0 0.0
      %953 = vmatpush.msra.mxu0 0.0
      %954 = vmatpush.msra.mxu0 0.0
      %955 = vmatpush.msra.mxu0 0.0
      %956 = vmatpush.msra.mxu0 0.0
      %957 = vmatpush.msra.mxu0 0.0
      %958 = vmatpush.msra.mxu0 0.0
      %959 = vmatpush.msra.mxu0 0.0
      %960 = vmatpush.msra.mxu0 0.0
      %961 = vmatpush.msra.mxu0 %v944
      %962 = vmatmul.f32.gmra.mxu0 %v848
      %v963 = vpop.f32.mrf.mxu0
      %v964 = vadd.f32 0.0, %v963
      %965 = vmatmul.f32.gmra.mxu0 %v851
      %v966 = vpop.f32.mrf.mxu0
      %v967 = vadd.f32 0.0, %v966
      %968 = vmatmul.f32.gmra.mxu0 %v854
      %v969 = vpop.f32.mrf.mxu0
      %v970 = vadd.f32 0.0, %v969
      %971 = vmatmul.f32.gmra.mxu0 %v857
      %v972 = vpop.f32.mrf.mxu0
      %v973 = vadd.f32 0.0, %v972
      %974 = vmatmul.f32.gmra.mxu0 %v860
      %v975 = vpop.f32.mrf.mxu0
      %v976 = vadd.f32 0.0, %v975
      %977 = vmatmul.f32.gmra.mxu0 %v863
      %v978 = vpop.f32.mrf.mxu0
      %v979 = vadd.f32 0.0, %v978
      %980 = vmatmul.f32.gmra.mxu0 %v866
      %v981 = vpop.f32.mrf.mxu0
      %v982 = vadd.f32 0.0, %v981
      %983 = vmatmul.f32.gmra.mxu0 %v869
      %v984 = vpop.f32.mrf.mxu0
      %v985 = vadd.f32 0.0, %v984
      %986 = vmatmul.f32.gmra.mxu0 %v872
      %v987 = vpop.f32.mrf.mxu0
      %v988 = vadd.f32 0.0, %v987
      %989 = vmatmul.f32.gmra.mxu0 %v875
      %v990 = vpop.f32.mrf.mxu0
      %v991 = vadd.f32 0.0, %v990
      %992 = vmatmul.f32.gmra.mxu0 %v878
      %v993 = vpop.f32.mrf.mxu0
      %v994 = vadd.f32 0.0, %v993
      %995 = vmatmul.f32.gmra.mxu0 %v881
      %v996 = vpop.f32.mrf.mxu0
      %v997 = vadd.f32 0.0, %v996
      %998 = vmatmul.f32.gmra.mxu0 %v884
      %v999 = vpop.f32.mrf.mxu0
      %v1000 = vadd.f32 0.0, %v999
      %1001 = vmatmul.f32.gmra.mxu0 %v887
      %v1002 = vpop.f32.mrf.mxu0
      %v1003 = vadd.f32 0.0, %v1002
      %1004 = vmatmul.f32.gmra.mxu0 %v890
      %v1005 = vpop.f32.mrf.mxu0
      %v1006 = vadd.f32 0.0, %v1005
      %1007 = vmatmul.f32.gmra.mxu0 %v893
      %v1008 = vpop.f32.mrf.mxu0
      %v1009 = vadd.f32 0.0, %v1008
      %1010 = vmatmul.f32.gmra.mxu0 %v896
      %v1011 = vpop.f32.mrf.mxu0
      %v1012 = vadd.f32 0.0, %v1011
      %1013 = vmatmul.f32.gmra.mxu0 %v899
      %v1014 = vpop.f32.mrf.mxu0
      %v1015 = vadd.f32 0.0, %v1014
      %1016 = vmatmul.f32.gmra.mxu0 %v902
      %v1017 = vpop.f32.mrf.mxu0
      %v1018 = vadd.f32 0.0, %v1017
      %1019 = vmatmul.f32.gmra.mxu0 %v905
      %v1020 = vpop.f32.mrf.mxu0
      %v1021 = vadd.f32 0.0, %v1020
      %1022 = vmatmul.f32.gmra.mxu0 %v908
      %v1023 = vpop.f32.mrf.mxu0
      %v1024 = vadd.f32 0.0, %v1023
      %1025 = vmatmul.f32.gmra.mxu0 %v911
      %v1026 = vpop.f32.mrf.mxu0
      %v1027 = vadd.f32 0.0, %v1026
      %1028 = vmatmul.f32.gmra.mxu0 %v914
      %v1029 = vpop.f32.mrf.mxu0
      %v1030 = vadd.f32 0.0, %v1029
      %1031 = vmatmul.f32.gmra.mxu0 %v917
      %v1032 = vpop.f32.mrf.mxu0
      %v1033 = vadd.f32 0.0, %v1032
      %1034 = vmatmul.f32.gmra.mxu0 %v920
      %v1035 = vpop.f32.mrf.mxu0
      %v1036 = vadd.f32 0.0, %v1035
      %1037 = vmatmul.f32.gmra.mxu0 %v923
      %v1038 = vpop.f32.mrf.mxu0
      %v1039 = vadd.f32 0.0, %v1038
      %1040 = vmatmul.f32.gmra.mxu0 %v926
      %v1041 = vpop.f32.mrf.mxu0
      %v1042 = vadd.f32 0.0, %v1041
      %1043 = vmatmul.f32.gmra.mxu0 %v929
      %v1044 = vpop.f32.mrf.mxu0
      %v1045 = vadd.f32 0.0, %v1044
      %1046 = vmatmul.f32.gmra.mxu0 %v932
      %v1047 = vpop.f32.mrf.mxu0
      %v1048 = vadd.f32 0.0, %v1047
      %1049 = vmatmul.f32.gmra.mxu0 %v935
      %v1050 = vpop.f32.mrf.mxu0
      %v1051 = vadd.f32 0.0, %v1050
      %1052 = vmatmul.f32.gmra.mxu0 %v938
      %v1053 = vpop.f32.mrf.mxu0
      %v1054 = vadd.f32 0.0, %v1053
      %1055 = vmatmul.f32.gmra.mxu0 %v941
      %v1056 = vpop.f32.mrf.mxu0
      %v1057 = vadd.f32 0.0, %v1056
      %1058 = vdwg.mxu0
      %v1059 = vadd.f32 %v718, %v964
      %v1060 = vadd.f32 %v721, %v967
      %v1061 = vadd.f32 %v724, %v970
      %v1062 = vadd.f32 %v727, %v973
      %v1063 = vadd.f32 %v730, %v976
      %v1064 = vadd.f32 %v733, %v979
      %v1065 = vadd.f32 %v736, %v982
      %v1066 = vadd.f32 %v739, %v985
      %v1067 = vadd.f32 %v742, %v988
      %v1068 = vadd.f32 %v745, %v991
      %v1069 = vadd.f32 %v748, %v994
      %v1070 = vadd.f32 %v751, %v997
      %v1071 = vadd.f32 %v754, %v1000
      %v1072 = vadd.f32 %v757, %v1003
      %v1073 = vadd.f32 %v760, %v1006
      %v1074 = vadd.f32 %v763, %v1009
      %v1075 = vadd.f32 %v766, %v1012
      %v1076 = vadd.f32 %v769, %v1015
      %v1077 = vadd.f32 %v772, %v1018
      %v1078 = vadd.f32 %v775, %v1021
      %v1079 = vadd.f32 %v778, %v1024
      %v1080 = vadd.f32 %v781, %v1027
      %v1081 = vadd.f32 %v784, %v1030
      %v1082 = vadd.f32 %v787, %v1033
      %v1083 = vadd.f32 %v790, %v1036
      %v1084 = vadd.f32 %v793, %v1039
      %v1085 = vadd.f32 %v796, %v1042
      %v1086 = vadd.f32 %v799, %v1045
      %v1087 = vadd.f32 %v802, %v1048
      %v1088 = vadd.f32 %v805, %v1051
      %v1089 = vadd.f32 %v808, %v1054
      %v1090 = vadd.f32 %v811, %v1057
      %v1091 = vld [vmem:[%s288] sm:$0xff]
      %v1092 = vld [vmem:[%s288 + $0x8] sm:$0xff]
      %v1093 = vld [vmem:[%s288 + $0x18] sm:$0xff]
      %v1094 = vld [vmem:[%s288 + $0x20] sm:$0xff]
      %v1095 = vld [vmem:[%s288 + $0x30] sm:$0xff]
      %v1096 = vld [vmem:[%s288 + $0x38] sm:$0xff]
      %v1097 = vld [vmem:[%s288 + $0x48] sm:$0xff]
      %v1098 = vld [vmem:[%s288 + $0x50] sm:$0xff]
      %v1099 = vld [vmem:[%s288 + $0x60] sm:$0xff]
      %v1100 = vld [vmem:[%s288 + $0x68] sm:$0xff]
      %v1101 = vld [vmem:[%s288 + $0x78] sm:$0xff]
      %v1102 = vld [vmem:[%s288 + $0x80] sm:$0xff]
      %v1103 = vld [vmem:[%s288 + $0x90] sm:$0xff]
      %v1104 = vld [vmem:[%s288 + $0x98] sm:$0xff]
      %v1105 = vld [vmem:[%s288 + $0xa8] sm:$0xff]
      %v1106 = vld [vmem:[%s288 + $0xb0] sm:$0xff]
      %v1107 = vld [vmem:[%s288 + $0xc0] sm:$0xff]
      %v1108 = vld [vmem:[%s288 + $0xc8] sm:$0xff]
      %v1109 = vld [vmem:[%s288 + $0xd8] sm:$0xff]
      %v1110 = vld [vmem:[%s288 + $0xe0] sm:$0xff]
      %v1111 = vld [vmem:[%s288 + $0xf0] sm:$0xff]
      %v1112 = vld [vmem:[%s288 + $0xf8] sm:$0xff]
      %v1113 = vld [vmem:[%s288 + $0x108] sm:$0xff]
      %v1114 = vld [vmem:[%s288 + $0x110] sm:$0xff]
      %v1115 = vld [vmem:[%s288 + $0x120] sm:$0xff]
      %v1116 = vld [vmem:[%s288 + $0x128] sm:$0xff]
      %v1117 = vld [vmem:[%s288 + $0x138] sm:$0xff]
      %v1118 = vld [vmem:[%s288 + $0x140] sm:$0xff]
      %v1119 = vld [vmem:[%s288 + $0x150] sm:$0xff]
      %v1120 = vld [vmem:[%s288 + $0x158] sm:$0xff]
      %v1121 = vld [vmem:[%s288 + $0x168] sm:$0xff]
      %v1122 = vld [vmem:[%s288 + $0x170] sm:$0xff]
      %s1123 = scalar_lea.vmem %s1, 12
      %v1124 = vld [vmem:[%s1123] sm:$0xf]
      %v1126 = vsel %vm198, %v1091, 0
      %v1129 = vsel %vm198, %v1092, 0
      %v1132 = vsel %vm198, %v1093, 0
      %v1135 = vsel %vm198, %v1094, 0
      %v1138 = vsel %vm198, %v1095, 0
      %v1141 = vsel %vm198, %v1096, 0
      %v1144 = vsel %vm198, %v1097, 0
      %v1147 = vsel %vm198, %v1098, 0
      %v1150 = vsel %vm198, %v1099, 0
      %v1153 = vsel %vm198, %v1100, 0
      %v1156 = vsel %vm198, %v1101, 0
      %v1159 = vsel %vm198, %v1102, 0
      %v1162 = vsel %vm198, %v1103, 0
      %v1165 = vsel %vm198, %v1104, 0
      %v1168 = vsel %vm198, %v1105, 0
      %v1171 = vsel %vm198, %v1106, 0
      %v1174 = vsel %vm198, %v1107, 0
      %v1177 = vsel %vm198, %v1108, 0
      %v1180 = vsel %vm198, %v1109, 0
      %v1183 = vsel %vm198, %v1110, 0
      %v1186 = vsel %vm198, %v1111, 0
      %v1189 = vsel %vm198, %v1112, 0
      %v1192 = vsel %vm198, %v1113, 0
      %v1195 = vsel %vm198, %v1114, 0
      %v1198 = vsel %vm198, %v1115, 0
      %v1201 = vsel %vm198, %v1116, 0
      %v1204 = vsel %vm198, %v1117, 0
      %v1207 = vsel %vm198, %v1118, 0
      %v1210 = vsel %vm198, %v1119, 0
      %v1213 = vsel %vm198, %v1120, 0
      %v1216 = vsel %vm198, %v1121, 0
      %v1219 = vsel %vm198, %v1122, 0
      %v1222 = vsel %vm484, %v1124, 0
      %1224 = vmatpush.msra.mxu0 0.0
      %1225 = vmatpush.msra.mxu0 0.0
      %1226 = vmatpush.msra.mxu0 0.0
      %1227 = vmatpush.msra.mxu0 0.0
      %1228 = vmatpush.msra.mxu0 0.0
      %1229 = vmatpush.msra.mxu0 0.0
      %1230 = vmatpush.msra.mxu0 0.0
      %1231 = vmatpush.msra.mxu0 0.0
      %1232 = vmatpush.msra.mxu0 0.0
      %1233 = vmatpush.msra.mxu0 0.0
      %1234 = vmatpush.msra.mxu0 0.0
      %1235 = vmatpush.msra.mxu0 0.0
      %1236 = vmatpush.msra.mxu0 0.0
      %1237 = vmatpush.msra.mxu0 0.0
      %1238 = vmatpush.msra.mxu0 0.0
      %1239 = vmatpush.msra.mxu0 %v1222
      %1240 = vmatmul.f32.gmra.mxu0 %v1126
      %v1241 = vpop.f32.mrf.mxu0
      %v1242 = vadd.f32 0.0, %v1241
      %1243 = vmatmul.f32.gmra.mxu0 %v1129
      %v1244 = vpop.f32.mrf.mxu0
      %v1245 = vadd.f32 0.0, %v1244
      %1246 = vmatmul.f32.gmra.mxu0 %v1132
      %v1247 = vpop.f32.mrf.mxu0
      %v1248 = vadd.f32 0.0, %v1247
      %1249 = vmatmul.f32.gmra.mxu0 %v1135
      %v1250 = vpop.f32.mrf.mxu0
      %v1251 = vadd.f32 0.0, %v1250
      %1252 = vmatmul.f32.gmra.mxu0 %v1138
      %v1253 = vpop.f32.mrf.mxu0
      %v1254 = vadd.f32 0.0, %v1253
      %1255 = vmatmul.f32.gmra.mxu0 %v1141
      %v1256 = vpop.f32.mrf.mxu0
      %v1257 = vadd.f32 0.0, %v1256
      %1258 = vmatmul.f32.gmra.mxu0 %v1144
      %v1259 = vpop.f32.mrf.mxu0
      %v1260 = vadd.f32 0.0, %v1259
      %1261 = vmatmul.f32.gmra.mxu0 %v1147
      %v1262 = vpop.f32.mrf.mxu0
      %v1263 = vadd.f32 0.0, %v1262
      %1264 = vmatmul.f32.gmra.mxu0 %v1150
      %v1265 = vpop.f32.mrf.mxu0
      %v1266 = vadd.f32 0.0, %v1265
      %1267 = vmatmul.f32.gmra.mxu0 %v1153
      %v1268 = vpop.f32.mrf.mxu0
      %v1269 = vadd.f32 0.0, %v1268
      %1270 = vmatmul.f32.gmra.mxu0 %v1156
      %v1271 = vpop.f32.mrf.mxu0
      %v1272 = vadd.f32 0.0, %v1271
      %1273 = vmatmul.f32.gmra.mxu0 %v1159
      %v1274 = vpop.f32.mrf.mxu0
      %v1275 = vadd.f32 0.0, %v1274
      %1276 = vmatmul.f32.gmra.mxu0 %v1162
      %v1277 = vpop.f32.mrf.mxu0
      %v1278 = vadd.f32 0.0, %v1277
      %1279 = vmatmul.f32.gmra.mxu0 %v1165
      %v1280 = vpop.f32.mrf.mxu0
      %v1281 = vadd.f32 0.0, %v1280
      %1282 = vmatmul.f32.gmra.mxu0 %v1168
      %v1283 = vpop.f32.mrf.mxu0
      %v1284 = vadd.f32 0.0, %v1283
      %1285 = vmatmul.f32.gmra.mxu0 %v1171
      %v1286 = vpop.f32.mrf.mxu0
      %v1287 = vadd.f32 0.0, %v1286
      %1288 = vmatmul.f32.gmra.mxu0 %v1174
      %v1289 = vpop.f32.mrf.mxu0
      %v1290 = vadd.f32 0.0, %v1289
      %1291 = vmatmul.f32.gmra.mxu0 %v1177
      %v1292 = vpop.f32.mrf.mxu0
      %v1293 = vadd.f32 0.0, %v1292
      %1294 = vmatmul.f32.gmra.mxu0 %v1180
      %v1295 = vpop.f32.mrf.mxu0
      %v1296 = vadd.f32 0.0, %v1295
      %1297 = vmatmul.f32.gmra.mxu0 %v1183
      %v1298 = vpop.f32.mrf.mxu0
      %v1299 = vadd.f32 0.0, %v1298
      %1300 = vmatmul.f32.gmra.mxu0 %v1186
      %v1301 = vpop.f32.mrf.mxu0
      %v1302 = vadd.f32 0.0, %v1301
      %1303 = vmatmul.f32.gmra.mxu0 %v1189
      %v1304 = vpop.f32.mrf.mxu0
      %v1305 = vadd.f32 0.0, %v1304
      %1306 = vmatmul.f32.gmra.mxu0 %v1192
      %v1307 = vpop.f32.mrf.mxu0
      %v1308 = vadd.f32 0.0, %v1307
      %1309 = vmatmul.f32.gmra.mxu0 %v1195
      %v1310 = vpop.f32.mrf.mxu0
      %v1311 = vadd.f32 0.0, %v1310
      %1312 = vmatmul.f32.gmra.mxu0 %v1198
      %v1313 = vpop.f32.mrf.mxu0
      %v1314 = vadd.f32 0.0, %v1313
      %1315 = vmatmul.f32.gmra.mxu0 %v1201
      %v1316 = vpop.f32.mrf.mxu0
      %v1317 = vadd.f32 0.0, %v1316
      %1318 = vmatmul.f32.gmra.mxu0 %v1204
      %v1319 = vpop.f32.mrf.mxu0
      %v1320 = vadd.f32 0.0, %v1319
      %1321 = vmatmul.f32.gmra.mxu0 %v1207
      %v1322 = vpop.f32.mrf.mxu0
      %v1323 = vadd.f32 0.0, %v1322
      %1324 = vmatmul.f32.gmra.mxu0 %v1210
      %v1325 = vpop.f32.mrf.mxu0
      %v1326 = vadd.f32 0.0, %v1325
      %1327 = vmatmul.f32.gmra.mxu0 %v1213
      %v1328 = vpop.f32.mrf.mxu0
      %v1329 = vadd.f32 0.0, %v1328
      %1330 = vmatmul.f32.gmra.mxu0 %v1216
      %v1331 = vpop.f32.mrf.mxu0
      %v1332 = vadd.f32 0.0, %v1331
      %1333 = vmatmul.f32.gmra.mxu0 %v1219
      %v1334 = vpop.f32.mrf.mxu0
      %v1335 = vadd.f32 0.0, %v1334
      %1336 = vdwg.mxu0
      %v1337 = vadd.f32 %v1059, %v1242
      %v1338 = vadd.f32 %v1060, %v1245
      %v1339 = vadd.f32 %v1061, %v1248
      %v1340 = vadd.f32 %v1062, %v1251
      %v1341 = vadd.f32 %v1063, %v1254
      %v1342 = vadd.f32 %v1064, %v1257
      %v1343 = vadd.f32 %v1065, %v1260
      %v1344 = vadd.f32 %v1066, %v1263
      %v1345 = vadd.f32 %v1067, %v1266
      %v1346 = vadd.f32 %v1068, %v1269
      %v1347 = vadd.f32 %v1069, %v1272
      %v1348 = vadd.f32 %v1070, %v1275
      %v1349 = vadd.f32 %v1071, %v1278
      %v1350 = vadd.f32 %v1072, %v1281
      %v1351 = vadd.f32 %v1073, %v1284
      %v1352 = vadd.f32 %v1074, %v1287
      %v1353 = vadd.f32 %v1075, %v1290
      %v1354 = vadd.f32 %v1076, %v1293
      %v1355 = vadd.f32 %v1077, %v1296
      %v1356 = vadd.f32 %v1078, %v1299
      %v1357 = vadd.f32 %v1079, %v1302
      %v1358 = vadd.f32 %v1080, %v1305
      %v1359 = vadd.f32 %v1081, %v1308
      %v1360 = vadd.f32 %v1082, %v1311
      %v1361 = vadd.f32 %v1083, %v1314
      %v1362 = vadd.f32 %v1084, %v1317
      %v1363 = vadd.f32 %v1085, %v1320
      %v1364 = vadd.f32 %v1086, %v1323
      %v1365 = vadd.f32 %v1087, %v1326
      %v1366 = vadd.f32 %v1088, %v1329
      %v1367 = vadd.f32 %v1089, %v1332
      %v1368 = vadd.f32 %v1090, %v1335
      %v1369 = vld [vmem:[%s288 + $0x1] sm:$0xff]
      %v1370 = vld [vmem:[%s288 + $0x9] sm:$0xff]
      %v1371 = vld [vmem:[%s288 + $0x19] sm:$0xff]
      %v1372 = vld [vmem:[%s288 + $0x21] sm:$0xff]
      %v1373 = vld [vmem:[%s288 + $0x31] sm:$0xff]
      %v1374 = vld [vmem:[%s288 + $0x39] sm:$0xff]
      %v1375 = vld [vmem:[%s288 + $0x49] sm:$0xff]
      %v1376 = vld [vmem:[%s288 + $0x51] sm:$0xff]
      %v1377 = vld [vmem:[%s288 + $0x61] sm:$0xff]
      %v1378 = vld [vmem:[%s288 + $0x69] sm:$0xff]
      %v1379 = vld [vmem:[%s288 + $0x79] sm:$0xff]
      %v1380 = vld [vmem:[%s288 + $0x81] sm:$0xff]
      %v1381 = vld [vmem:[%s288 + $0x91] sm:$0xff]
      %v1382 = vld [vmem:[%s288 + $0x99] sm:$0xff]
      %v1383 = vld [vmem:[%s288 + $0xa9] sm:$0xff]
      %v1384 = vld [vmem:[%s288 + $0xb1] sm:$0xff]
      %v1385 = vld [vmem:[%s288 + $0xc1] sm:$0xff]
      %v1386 = vld [vmem:[%s288 + $0xc9] sm:$0xff]
      %v1387 = vld [vmem:[%s288 + $0xd9] sm:$0xff]
      %v1388 = vld [vmem:[%s288 + $0xe1] sm:$0xff]
      %v1389 = vld [vmem:[%s288 + $0xf1] sm:$0xff]
      %v1390 = vld [vmem:[%s288 + $0xf9] sm:$0xff]
      %v1391 = vld [vmem:[%s288 + $0x109] sm:$0xff]
      %v1392 = vld [vmem:[%s288 + $0x111] sm:$0xff]
      %v1393 = vld [vmem:[%s288 + $0x121] sm:$0xff]
      %v1394 = vld [vmem:[%s288 + $0x129] sm:$0xff]
      %v1395 = vld [vmem:[%s288 + $0x139] sm:$0xff]
      %v1396 = vld [vmem:[%s288 + $0x141] sm:$0xff]
      %v1397 = vld [vmem:[%s288 + $0x151] sm:$0xff]
      %v1398 = vld [vmem:[%s288 + $0x159] sm:$0xff]
      %v1399 = vld [vmem:[%s288 + $0x169] sm:$0xff]
      %v1400 = vld [vmem:[%s288 + $0x171] sm:$0xff]
      %s1401 = scalar_lea.vmem %s1, 16
      %v1402 = vld [vmem:[%s1401] sm:$0xf]
      %v1404 = vsel %vm198, %v1369, 0
      %v1407 = vsel %vm198, %v1370, 0
      %v1410 = vsel %vm198, %v1371, 0
      %v1413 = vsel %vm198, %v1372, 0
      %v1416 = vsel %vm198, %v1373, 0
      %v1419 = vsel %vm198, %v1374, 0
      %v1422 = vsel %vm198, %v1375, 0
      %v1425 = vsel %vm198, %v1376, 0
      %v1428 = vsel %vm198, %v1377, 0
      %v1431 = vsel %vm198, %v1378, 0
      %v1434 = vsel %vm198, %v1379, 0
      %v1437 = vsel %vm198, %v1380, 0
      %v1440 = vsel %vm198, %v1381, 0
      %v1443 = vsel %vm198, %v1382, 0
      %v1446 = vsel %vm198, %v1383, 0
      %v1449 = vsel %vm198, %v1384, 0
      %v1452 = vsel %vm198, %v1385, 0
      %v1455 = vsel %vm198, %v1386, 0
      %v1458 = vsel %vm198, %v1387, 0
      %v1461 = vsel %vm198, %v1388, 0
      %v1464 = vsel %vm198, %v1389, 0
      %v1467 = vsel %vm198, %v1390, 0
      %v1470 = vsel %vm198, %v1391, 0
      %v1473 = vsel %vm198, %v1392, 0
      %v1476 = vsel %vm198, %v1393, 0
      %v1479 = vsel %vm198, %v1394, 0
      %v1482 = vsel %vm198, %v1395, 0
      %v1485 = vsel %vm198, %v1396, 0
      %v1488 = vsel %vm198, %v1397, 0
      %v1491 = vsel %vm198, %v1398, 0
      %v1494 = vsel %vm198, %v1399, 0
      %v1497 = vsel %vm198, %v1400, 0
      %v1500 = vsel %vm484, %v1402, 0
      %1502 = vmatpush.msra.mxu0 0.0
      %1503 = vmatpush.msra.mxu0 0.0
      %1504 = vmatpush.msra.mxu0 0.0
      %1505 = vmatpush.msra.mxu0 0.0
      %1506 = vmatpush.msra.mxu0 0.0
      %1507 = vmatpush.msra.mxu0 0.0
      %1508 = vmatpush.msra.mxu0 0.0
      %1509 = vmatpush.msra.mxu0 0.0
      %1510 = vmatpush.msra.mxu0 0.0
      %1511 = vmatpush.msra.mxu0 0.0
      %1512 = vmatpush.msra.mxu0 0.0
      %1513 = vmatpush.msra.mxu0 0.0
      %1514 = vmatpush.msra.mxu0 0.0
      %1515 = vmatpush.msra.mxu0 0.0
      %1516 = vmatpush.msra.mxu0 0.0
      %1517 = vmatpush.msra.mxu0 %v1500
      %1518 = vmatmul.f32.gmra.mxu0 %v1404
      %v1519 = vpop.f32.mrf.mxu0
      %v1520 = vadd.f32 0.0, %v1519
      %1521 = vmatmul.f32.gmra.mxu0 %v1407
      %v1522 = vpop.f32.mrf.mxu0
      %v1523 = vadd.f32 0.0, %v1522
      %1524 = vmatmul.f32.gmra.mxu0 %v1410
      %v1525 = vpop.f32.mrf.mxu0
      %v1526 = vadd.f32 0.0, %v1525
      %1527 = vmatmul.f32.gmra.mxu0 %v1413
      %v1528 = vpop.f32.mrf.mxu0
      %v1529 = vadd.f32 0.0, %v1528
      %1530 = vmatmul.f32.gmra.mxu0 %v1416
      %v1531 = vpop.f32.mrf.mxu0
      %v1532 = vadd.f32 0.0, %v1531
      %1533 = vmatmul.f32.gmra.mxu0 %v1419
      %v1534 = vpop.f32.mrf.mxu0
      %v1535 = vadd.f32 0.0, %v1534
      %1536 = vmatmul.f32.gmra.mxu0 %v1422
      %v1537 = vpop.f32.mrf.mxu0
      %v1538 = vadd.f32 0.0, %v1537
      %1539 = vmatmul.f32.gmra.mxu0 %v1425
      %v1540 = vpop.f32.mrf.mxu0
      %v1541 = vadd.f32 0.0, %v1540
      %1542 = vmatmul.f32.gmra.mxu0 %v1428
      %v1543 = vpop.f32.mrf.mxu0
      %v1544 = vadd.f32 0.0, %v1543
      %1545 = vmatmul.f32.gmra.mxu0 %v1431
      %v1546 = vpop.f32.mrf.mxu0
      %v1547 = vadd.f32 0.0, %v1546
      %1548 = vmatmul.f32.gmra.mxu0 %v1434
      %v1549 = vpop.f32.mrf.mxu0
      %v1550 = vadd.f32 0.0, %v1549
      %1551 = vmatmul.f32.gmra.mxu0 %v1437
      %v1552 = vpop.f32.mrf.mxu0
      %v1553 = vadd.f32 0.0, %v1552
      %1554 = vmatmul.f32.gmra.mxu0 %v1440
      %v1555 = vpop.f32.mrf.mxu0
      %v1556 = vadd.f32 0.0, %v1555
      %1557 = vmatmul.f32.gmra.mxu0 %v1443
      %v1558 = vpop.f32.mrf.mxu0
      %v1559 = vadd.f32 0.0, %v1558
      %1560 = vmatmul.f32.gmra.mxu0 %v1446
      %v1561 = vpop.f32.mrf.mxu0
      %v1562 = vadd.f32 0.0, %v1561
      %1563 = vmatmul.f32.gmra.mxu0 %v1449
      %v1564 = vpop.f32.mrf.mxu0
      %v1565 = vadd.f32 0.0, %v1564
      %1566 = vmatmul.f32.gmra.mxu0 %v1452
      %v1567 = vpop.f32.mrf.mxu0
      %v1568 = vadd.f32 0.0, %v1567
      %1569 = vmatmul.f32.gmra.mxu0 %v1455
      %v1570 = vpop.f32.mrf.mxu0
      %v1571 = vadd.f32 0.0, %v1570
      %1572 = vmatmul.f32.gmra.mxu0 %v1458
      %v1573 = vpop.f32.mrf.mxu0
      %v1574 = vadd.f32 0.0, %v1573
      %1575 = vmatmul.f32.gmra.mxu0 %v1461
      %v1576 = vpop.f32.mrf.mxu0
      %v1577 = vadd.f32 0.0, %v1576
      %1578 = vmatmul.f32.gmra.mxu0 %v1464
      %v1579 = vpop.f32.mrf.mxu0
      %v1580 = vadd.f32 0.0, %v1579
      %1581 = vmatmul.f32.gmra.mxu0 %v1467
      %v1582 = vpop.f32.mrf.mxu0
      %v1583 = vadd.f32 0.0, %v1582
      %1584 = vmatmul.f32.gmra.mxu0 %v1470
      %v1585 = vpop.f32.mrf.mxu0
      %v1586 = vadd.f32 0.0, %v1585
      %1587 = vmatmul.f32.gmra.mxu0 %v1473
      %v1588 = vpop.f32.mrf.mxu0
      %v1589 = vadd.f32 0.0, %v1588
      %1590 = vmatmul.f32.gmra.mxu0 %v1476
      %v1591 = vpop.f32.mrf.mxu0
      %v1592 = vadd.f32 0.0, %v1591
      %1593 = vmatmul.f32.gmra.mxu0 %v1479
      %v1594 = vpop.f32.mrf.mxu0
      %v1595 = vadd.f32 0.0, %v1594
      %1596 = vmatmul.f32.gmra.mxu0 %v1482
      %v1597 = vpop.f32.mrf.mxu0
      %v1598 = vadd.f32 0.0, %v1597
      %1599 = vmatmul.f32.gmra.mxu0 %v1485
      %v1600 = vpop.f32.mrf.mxu0
      %v1601 = vadd.f32 0.0, %v1600
      %1602 = vmatmul.f32.gmra.mxu0 %v1488
      %v1603 = vpop.f32.mrf.mxu0
      %v1604 = vadd.f32 0.0, %v1603
      %1605 = vmatmul.f32.gmra.mxu0 %v1491
      %v1606 = vpop.f32.mrf.mxu0
      %v1607 = vadd.f32 0.0, %v1606
      %1608 = vmatmul.f32.gmra.mxu0 %v1494
      %v1609 = vpop.f32.mrf.mxu0
      %v1610 = vadd.f32 0.0, %v1609
      %1611 = vmatmul.f32.gmra.mxu0 %v1497
      %v1612 = vpop.f32.mrf.mxu0
      %v1613 = vadd.f32 0.0, %v1612
      %1614 = vdwg.mxu0
      %v1615 = vadd.f32 %v1337, %v1520
      %v1616 = vadd.f32 %v1338, %v1523
      %v1617 = vadd.f32 %v1339, %v1526
      %v1618 = vadd.f32 %v1340, %v1529
      %v1619 = vadd.f32 %v1341, %v1532
      %v1620 = vadd.f32 %v1342, %v1535
      %v1621 = vadd.f32 %v1343, %v1538
      %v1622 = vadd.f32 %v1344, %v1541
      %v1623 = vadd.f32 %v1345, %v1544
      %v1624 = vadd.f32 %v1346, %v1547
      %v1625 = vadd.f32 %v1347, %v1550
      %v1626 = vadd.f32 %v1348, %v1553
      %v1627 = vadd.f32 %v1349, %v1556
      %v1628 = vadd.f32 %v1350, %v1559
      %v1629 = vadd.f32 %v1351, %v1562
      %v1630 = vadd.f32 %v1352, %v1565
      %v1631 = vadd.f32 %v1353, %v1568
      %v1632 = vadd.f32 %v1354, %v1571
      %v1633 = vadd.f32 %v1355, %v1574
      %v1634 = vadd.f32 %v1356, %v1577
      %v1635 = vadd.f32 %v1357, %v1580
      %v1636 = vadd.f32 %v1358, %v1583
      %v1637 = vadd.f32 %v1359, %v1586
      %v1638 = vadd.f32 %v1360, %v1589
      %v1639 = vadd.f32 %v1361, %v1592
      %v1640 = vadd.f32 %v1362, %v1595
      %v1641 = vadd.f32 %v1363, %v1598
      %v1642 = vadd.f32 %v1364, %v1601
      %v1643 = vadd.f32 %v1365, %v1604
      %v1644 = vadd.f32 %v1366, %v1607
      %v1645 = vadd.f32 %v1367, %v1610
      %v1646 = vadd.f32 %v1368, %v1613
      %v1647 = vld [vmem:[%s288 + $0x2] sm:$0xff]
      %v1648 = vld [vmem:[%s288 + $0xa] sm:$0xff]
      %v1649 = vld [vmem:[%s288 + $0x1a] sm:$0xff]
      %v1650 = vld [vmem:[%s288 + $0x22] sm:$0xff]
      %v1651 = vld [vmem:[%s288 + $0x32] sm:$0xff]
      %v1652 = vld [vmem:[%s288 + $0x3a] sm:$0xff]
      %v1653 = vld [vmem:[%s288 + $0x4a] sm:$0xff]
      %v1654 = vld [vmem:[%s288 + $0x52] sm:$0xff]
      %v1655 = vld [vmem:[%s288 + $0x62] sm:$0xff]
      %v1656 = vld [vmem:[%s288 + $0x6a] sm:$0xff]
      %v1657 = vld [vmem:[%s288 + $0x7a] sm:$0xff]
      %v1658 = vld [vmem:[%s288 + $0x82] sm:$0xff]
      %v1659 = vld [vmem:[%s288 + $0x92] sm:$0xff]
      %v1660 = vld [vmem:[%s288 + $0x9a] sm:$0xff]
      %v1661 = vld [vmem:[%s288 + $0xaa] sm:$0xff]
      %v1662 = vld [vmem:[%s288 + $0xb2] sm:$0xff]
      %v1663 = vld [vmem:[%s288 + $0xc2] sm:$0xff]
      %v1664 = vld [vmem:[%s288 + $0xca] sm:$0xff]
      %v1665 = vld [vmem:[%s288 + $0xda] sm:$0xff]
      %v1666 = vld [vmem:[%s288 + $0xe2] sm:$0xff]
      %v1667 = vld [vmem:[%s288 + $0xf2] sm:$0xff]
      %v1668 = vld [vmem:[%s288 + $0xfa] sm:$0xff]
      %v1669 = vld [vmem:[%s288 + $0x10a] sm:$0xff]
      %v1670 = vld [vmem:[%s288 + $0x112] sm:$0xff]
      %v1671 = vld [vmem:[%s288 + $0x122] sm:$0xff]
      %v1672 = vld [vmem:[%s288 + $0x12a] sm:$0xff]
      %v1673 = vld [vmem:[%s288 + $0x13a] sm:$0xff]
      %v1674 = vld [vmem:[%s288 + $0x142] sm:$0xff]
      %v1675 = vld [vmem:[%s288 + $0x152] sm:$0xff]
      %v1676 = vld [vmem:[%s288 + $0x15a] sm:$0xff]
      %v1677 = vld [vmem:[%s288 + $0x16a] sm:$0xff]
      %v1678 = vld [vmem:[%s288 + $0x172] sm:$0xff]
      %s1679 = scalar_lea.vmem %s1, 20
      %v1680 = vld [vmem:[%s1679] sm:$0xf]
      %v1682 = vsel %vm198, %v1647, 0
      %v1685 = vsel %vm198, %v1648, 0
      %v1688 = vsel %vm198, %v1649, 0
      %v1691 = vsel %vm198, %v1650, 0
      %v1694 = vsel %vm198, %v1651, 0
      %v1697 = vsel %vm198, %v1652, 0
      %v1700 = vsel %vm198, %v1653, 0
      %v1703 = vsel %vm198, %v1654, 0
      %v1706 = vsel %vm198, %v1655, 0
      %v1709 = vsel %vm198, %v1656, 0
      %v1712 = vsel %vm198, %v1657, 0
      %v1715 = vsel %vm198, %v1658, 0
      %v1718 = vsel %vm198, %v1659, 0
      %v1721 = vsel %vm198, %v1660, 0
      %v1724 = vsel %vm198, %v1661, 0
      %v1727 = vsel %vm198, %v1662, 0
      %v1730 = vsel %vm198, %v1663, 0
      %v1733 = vsel %vm198, %v1664, 0
      %v1736 = vsel %vm198, %v1665, 0
      %v1739 = vsel %vm198, %v1666, 0
      %v1742 = vsel %vm198, %v1667, 0
      %v1745 = vsel %vm198, %v1668, 0
      %v1748 = vsel %vm198, %v1669, 0
      %v1751 = vsel %vm198, %v1670, 0
      %v1754 = vsel %vm198, %v1671, 0
      %v1757 = vsel %vm198, %v1672, 0
      %v1760 = vsel %vm198, %v1673, 0
      %v1763 = vsel %vm198, %v1674, 0
      %v1766 = vsel %vm198, %v1675, 0
      %v1769 = vsel %vm198, %v1676, 0
      %v1772 = vsel %vm198, %v1677, 0
      %v1775 = vsel %vm198, %v1678, 0
      %v1778 = vsel %vm484, %v1680, 0
      %1780 = vmatpush.msra.mxu0 0.0
      %1781 = vmatpush.msra.mxu0 0.0
      %1782 = vmatpush.msra.mxu0 0.0
      %1783 = vmatpush.msra.mxu0 0.0
      %1784 = vmatpush.msra.mxu0 0.0
      %1785 = vmatpush.msra.mxu0 0.0
      %1786 = vmatpush.msra.mxu0 0.0
      %1787 = vmatpush.msra.mxu0 0.0
      %1788 = vmatpush.msra.mxu0 0.0
      %1789 = vmatpush.msra.mxu0 0.0
      %1790 = vmatpush.msra.mxu0 0.0
      %1791 = vmatpush.msra.mxu0 0.0
      %1792 = vmatpush.msra.mxu0 0.0
      %1793 = vmatpush.msra.mxu0 0.0
      %1794 = vmatpush.msra.mxu0 0.0
      %1795 = vmatpush.msra.mxu0 %v1778
      %1796 = vmatmul.f32.gmra.mxu0 %v1682
      %v1797 = vpop.f32.mrf.mxu0
      %v1798 = vadd.f32 0.0, %v1797
      %1799 = vmatmul.f32.gmra.mxu0 %v1685
      %v1800 = vpop.f32.mrf.mxu0
      %v1801 = vadd.f32 0.0, %v1800
      %1802 = vmatmul.f32.gmra.mxu0 %v1688
      %v1803 = vpop.f32.mrf.mxu0
      %v1804 = vadd.f32 0.0, %v1803
      %1805 = vmatmul.f32.gmra.mxu0 %v1691
      %v1806 = vpop.f32.mrf.mxu0
      %v1807 = vadd.f32 0.0, %v1806
      %1808 = vmatmul.f32.gmra.mxu0 %v1694
      %v1809 = vpop.f32.mrf.mxu0
      %v1810 = vadd.f32 0.0, %v1809
      %1811 = vmatmul.f32.gmra.mxu0 %v1697
      %v1812 = vpop.f32.mrf.mxu0
      %v1813 = vadd.f32 0.0, %v1812
      %1814 = vmatmul.f32.gmra.mxu0 %v1700
      %v1815 = vpop.f32.mrf.mxu0
      %v1816 = vadd.f32 0.0, %v1815
      %1817 = vmatmul.f32.gmra.mxu0 %v1703
      %v1818 = vpop.f32.mrf.mxu0
      %v1819 = vadd.f32 0.0, %v1818
      %1820 = vmatmul.f32.gmra.mxu0 %v1706
      %v1821 = vpop.f32.mrf.mxu0
      %v1822 = vadd.f32 0.0, %v1821
      %1823 = vmatmul.f32.gmra.mxu0 %v1709
      %v1824 = vpop.f32.mrf.mxu0
      %v1825 = vadd.f32 0.0, %v1824
      %1826 = vmatmul.f32.gmra.mxu0 %v1712
      %v1827 = vpop.f32.mrf.mxu0
      %v1828 = vadd.f32 0.0, %v1827
      %1829 = vmatmul.f32.gmra.mxu0 %v1715
      %v1830 = vpop.f32.mrf.mxu0
      %v1831 = vadd.f32 0.0, %v1830
      %1832 = vmatmul.f32.gmra.mxu0 %v1718
      %v1833 = vpop.f32.mrf.mxu0
      %v1834 = vadd.f32 0.0, %v1833
      %1835 = vmatmul.f32.gmra.mxu0 %v1721
      %v1836 = vpop.f32.mrf.mxu0
      %v1837 = vadd.f32 0.0, %v1836
      %1838 = vmatmul.f32.gmra.mxu0 %v1724
      %v1839 = vpop.f32.mrf.mxu0
      %v1840 = vadd.f32 0.0, %v1839
      %1841 = vmatmul.f32.gmra.mxu0 %v1727
      %v1842 = vpop.f32.mrf.mxu0
      %v1843 = vadd.f32 0.0, %v1842
      %1844 = vmatmul.f32.gmra.mxu0 %v1730
      %v1845 = vpop.f32.mrf.mxu0
      %v1846 = vadd.f32 0.0, %v1845
      %1847 = vmatmul.f32.gmra.mxu0 %v1733
      %v1848 = vpop.f32.mrf.mxu0
      %v1849 = vadd.f32 0.0, %v1848
      %1850 = vmatmul.f32.gmra.mxu0 %v1736
      %v1851 = vpop.f32.mrf.mxu0
      %v1852 = vadd.f32 0.0, %v1851
      %1853 = vmatmul.f32.gmra.mxu0 %v1739
      %v1854 = vpop.f32.mrf.mxu0
      %v1855 = vadd.f32 0.0, %v1854
      %1856 = vmatmul.f32.gmra.mxu0 %v1742
      %v1857 = vpop.f32.mrf.mxu0
      %v1858 = vadd.f32 0.0, %v1857
      %1859 = vmatmul.f32.gmra.mxu0 %v1745
      %v1860 = vpop.f32.mrf.mxu0
      %v1861 = vadd.f32 0.0, %v1860
      %1862 = vmatmul.f32.gmra.mxu0 %v1748
      %v1863 = vpop.f32.mrf.mxu0
      %v1864 = vadd.f32 0.0, %v1863
      %1865 = vmatmul.f32.gmra.mxu0 %v1751
      %v1866 = vpop.f32.mrf.mxu0
      %v1867 = vadd.f32 0.0, %v1866
      %1868 = vmatmul.f32.gmra.mxu0 %v1754
      %v1869 = vpop.f32.mrf.mxu0
      %v1870 = vadd.f32 0.0, %v1869
      %1871 = vmatmul.f32.gmra.mxu0 %v1757
      %v1872 = vpop.f32.mrf.mxu0
      %v1873 = vadd.f32 0.0, %v1872
      %1874 = vmatmul.f32.gmra.mxu0 %v1760
      %v1875 = vpop.f32.mrf.mxu0
      %v1876 = vadd.f32 0.0, %v1875
      %1877 = vmatmul.f32.gmra.mxu0 %v1763
      %v1878 = vpop.f32.mrf.mxu0
      %v1879 = vadd.f32 0.0, %v1878
      %1880 = vmatmul.f32.gmra.mxu0 %v1766
      %v1881 = vpop.f32.mrf.mxu0
      %v1882 = vadd.f32 0.0, %v1881
      %1883 = vmatmul.f32.gmra.mxu0 %v1769
      %v1884 = vpop.f32.mrf.mxu0
      %v1885 = vadd.f32 0.0, %v1884
      %1886 = vmatmul.f32.gmra.mxu0 %v1772
      %v1887 = vpop.f32.mrf.mxu0
      %v1888 = vadd.f32 0.0, %v1887
      %1889 = vmatmul.f32.gmra.mxu0 %v1775
      %v1890 = vpop.f32.mrf.mxu0
      %v1891 = vadd.f32 0.0, %v1890
      %1892 = vdwg.mxu0
      %v1893 = vadd.f32 %v1615, %v1798
      %v1894 = vadd.f32 %v1616, %v1801
      %v1895 = vadd.f32 %v1617, %v1804
      %v1896 = vadd.f32 %v1618, %v1807
      %v1897 = vadd.f32 %v1619, %v1810
      %v1898 = vadd.f32 %v1620, %v1813
      %v1899 = vadd.f32 %v1621, %v1816
      %v1900 = vadd.f32 %v1622, %v1819
      %v1901 = vadd.f32 %v1623, %v1822
      %v1902 = vadd.f32 %v1624, %v1825
      %v1903 = vadd.f32 %v1625, %v1828
      %v1904 = vadd.f32 %v1626, %v1831
      %v1905 = vadd.f32 %v1627, %v1834
      %v1906 = vadd.f32 %v1628, %v1837
      %v1907 = vadd.f32 %v1629, %v1840
      %v1908 = vadd.f32 %v1630, %v1843
      %v1909 = vadd.f32 %v1631, %v1846
      %v1910 = vadd.f32 %v1632, %v1849
      %v1911 = vadd.f32 %v1633, %v1852
      %v1912 = vadd.f32 %v1634, %v1855
      %v1913 = vadd.f32 %v1635, %v1858
      %v1914 = vadd.f32 %v1636, %v1861
      %v1915 = vadd.f32 %v1637, %v1864
      %v1916 = vadd.f32 %v1638, %v1867
      %v1917 = vadd.f32 %v1639, %v1870
      %v1918 = vadd.f32 %v1640, %v1873
      %v1919 = vadd.f32 %v1641, %v1876
      %v1920 = vadd.f32 %v1642, %v1879
      %v1921 = vadd.f32 %v1643, %v1882
      %v1922 = vadd.f32 %v1644, %v1885
      %v1923 = vadd.f32 %v1645, %v1888
      %v1924 = vadd.f32 %v1646, %v1891
      %s1925 = scalar_lea.vmem [#allocation2], 48
      %v1926 = vld [vmem:[%s1925] sm:$0xff]
      %v1927 = vld [vmem:[%s1925 + $0x8] sm:$0xff]
      %v1928 = vld [vmem:[%s1925 + $0x18] sm:$0xff]
      %v1929 = vld [vmem:[%s1925 + $0x20] sm:$0xff]
      %v1930 = vld [vmem:[%s1925 + $0x30] sm:$0xff]
      %v1931 = vld [vmem:[%s1925 + $0x38] sm:$0xff]
      %v1932 = vld [vmem:[%s1925 + $0x48] sm:$0xff]
      %v1933 = vld [vmem:[%s1925 + $0x50] sm:$0xff]
      %v1934 = vld [vmem:[%s1925 + $0x60] sm:$0xff]
      %v1935 = vld [vmem:[%s1925 + $0x68] sm:$0xff]
      %v1936 = vld [vmem:[%s1925 + $0x78] sm:$0xff]
      %v1937 = vld [vmem:[%s1925 + $0x80] sm:$0xff]
      %v1938 = vld [vmem:[%s1925 + $0x90] sm:$0xff]
      %v1939 = vld [vmem:[%s1925 + $0x98] sm:$0xff]
      %v1940 = vld [vmem:[%s1925 + $0xa8] sm:$0xff]
      %v1941 = vld [vmem:[%s1925 + $0xb0] sm:$0xff]
      %v1942 = vld [vmem:[%s1925 + $0xc0] sm:$0xff]
      %v1943 = vld [vmem:[%s1925 + $0xc8] sm:$0xff]
      %v1944 = vld [vmem:[%s1925 + $0xd8] sm:$0xff]
      %v1945 = vld [vmem:[%s1925 + $0xe0] sm:$0xff]
      %v1946 = vld [vmem:[%s1925 + $0xf0] sm:$0xff]
      %v1947 = vld [vmem:[%s1925 + $0xf8] sm:$0xff]
      %v1948 = vld [vmem:[%s1925 + $0x108] sm:$0xff]
      %v1949 = vld [vmem:[%s1925 + $0x110] sm:$0xff]
      %v1950 = vld [vmem:[%s1925 + $0x120] sm:$0xff]
      %v1951 = vld [vmem:[%s1925 + $0x128] sm:$0xff]
      %v1952 = vld [vmem:[%s1925 + $0x138] sm:$0xff]
      %v1953 = vld [vmem:[%s1925 + $0x140] sm:$0xff]
      %v1954 = vld [vmem:[%s1925 + $0x150] sm:$0xff]
      %v1955 = vld [vmem:[%s1925 + $0x158] sm:$0xff]
      %v1956 = vld [vmem:[%s1925 + $0x168] sm:$0xff]
      %v1957 = vld [vmem:[%s1925 + $0x170] sm:$0xff]
      %s1958 = scalar_lea.vmem %s1, 24
      %v1959 = vld [vmem:[%s1958] sm:$0xf]
      %v1961 = vsel %vm198, %v1926, 0
      %v1964 = vsel %vm198, %v1927, 0
      %v1967 = vsel %vm198, %v1928, 0
      %v1970 = vsel %vm198, %v1929, 0
      %v1973 = vsel %vm198, %v1930, 0
      %v1976 = vsel %vm198, %v1931, 0
      %v1979 = vsel %vm198, %v1932, 0
      %v1982 = vsel %vm198, %v1933, 0
      %v1985 = vsel %vm198, %v1934, 0
      %v1988 = vsel %vm198, %v1935, 0
      %v1991 = vsel %vm198, %v1936, 0
      %v1994 = vsel %vm198, %v1937, 0
      %v1997 = vsel %vm198, %v1938, 0
      %v2000 = vsel %vm198, %v1939, 0
      %v2003 = vsel %vm198, %v1940, 0
      %v2006 = vsel %vm198, %v1941, 0
      %v2009 = vsel %vm198, %v1942, 0
      %v2012 = vsel %vm198, %v1943, 0
      %v2015 = vsel %vm198, %v1944, 0
      %v2018 = vsel %vm198, %v1945, 0
      %v2021 = vsel %vm198, %v1946, 0
      %v2024 = vsel %vm198, %v1947, 0
      %v2027 = vsel %vm198, %v1948, 0
      %v2030 = vsel %vm198, %v1949, 0
      %v2033 = vsel %vm198, %v1950, 0
      %v2036 = vsel %vm198, %v1951, 0
      %v2039 = vsel %vm198, %v1952, 0
      %v2042 = vsel %vm198, %v1953, 0
      %v2045 = vsel %vm198, %v1954, 0
      %v2048 = vsel %vm198, %v1955, 0
      %v2051 = vsel %vm198, %v1956, 0
      %v2054 = vsel %vm198, %v1957, 0
      %v2057 = vsel %vm484, %v1959, 0
      %2059 = vmatpush.msra.mxu0 0.0
      %2060 = vmatpush.msra.mxu0 0.0
      %2061 = vmatpush.msra.mxu0 0.0
      %2062 = vmatpush.msra.mxu0 0.0
      %2063 = vmatpush.msra.mxu0 0.0
      %2064 = vmatpush.msra.mxu0 0.0
      %2065 = vmatpush.msra.mxu0 0.0
      %2066 = vmatpush.msra.mxu0 0.0
      %2067 = vmatpush.msra.mxu0 0.0
      %2068 = vmatpush.msra.mxu0 0.0
      %2069 = vmatpush.msra.mxu0 0.0
      %2070 = vmatpush.msra.mxu0 0.0
      %2071 = vmatpush.msra.mxu0 0.0
      %2072 = vmatpush.msra.mxu0 0.0
      %2073 = vmatpush.msra.mxu0 0.0
      %2074 = vmatpush.msra.mxu0 %v2057
      %2075 = vmatmul.f32.gmra.mxu0 %v1961
      %v2076 = vpop.f32.mrf.mxu0
      %v2077 = vadd.f32 0.0, %v2076
      %2078 = vmatmul.f32.gmra.mxu0 %v1964
      %v2079 = vpop.f32.mrf.mxu0
      %v2080 = vadd.f32 0.0, %v2079
      %2081 = vmatmul.f32.gmra.mxu0 %v1967
      %v2082 = vpop.f32.mrf.mxu0
      %v2083 = vadd.f32 0.0, %v2082
      %2084 = vmatmul.f32.gmra.mxu0 %v1970
      %v2085 = vpop.f32.mrf.mxu0
      %v2086 = vadd.f32 0.0, %v2085
      %2087 = vmatmul.f32.gmra.mxu0 %v1973
      %v2088 = vpop.f32.mrf.mxu0
      %v2089 = vadd.f32 0.0, %v2088
      %2090 = vmatmul.f32.gmra.mxu0 %v1976
      %v2091 = vpop.f32.mrf.mxu0
      %v2092 = vadd.f32 0.0, %v2091
      %2093 = vmatmul.f32.gmra.mxu0 %v1979
      %v2094 = vpop.f32.mrf.mxu0
      %v2095 = vadd.f32 0.0, %v2094
      %2096 = vmatmul.f32.gmra.mxu0 %v1982
      %v2097 = vpop.f32.mrf.mxu0
      %v2098 = vadd.f32 0.0, %v2097
      %2099 = vmatmul.f32.gmra.mxu0 %v1985
      %v2100 = vpop.f32.mrf.mxu0
      %v2101 = vadd.f32 0.0, %v2100
      %2102 = vmatmul.f32.gmra.mxu0 %v1988
      %v2103 = vpop.f32.mrf.mxu0
      %v2104 = vadd.f32 0.0, %v2103
      %2105 = vmatmul.f32.gmra.mxu0 %v1991
      %v2106 = vpop.f32.mrf.mxu0
      %v2107 = vadd.f32 0.0, %v2106
      %2108 = vmatmul.f32.gmra.mxu0 %v1994
      %v2109 = vpop.f32.mrf.mxu0
      %v2110 = vadd.f32 0.0, %v2109
      %2111 = vmatmul.f32.gmra.mxu0 %v1997
      %v2112 = vpop.f32.mrf.mxu0
      %v2113 = vadd.f32 0.0, %v2112
      %2114 = vmatmul.f32.gmra.mxu0 %v2000
      %v2115 = vpop.f32.mrf.mxu0
      %v2116 = vadd.f32 0.0, %v2115
      %2117 = vmatmul.f32.gmra.mxu0 %v2003
      %v2118 = vpop.f32.mrf.mxu0
      %v2119 = vadd.f32 0.0, %v2118
      %2120 = vmatmul.f32.gmra.mxu0 %v2006
      %v2121 = vpop.f32.mrf.mxu0
      %v2122 = vadd.f32 0.0, %v2121
      %2123 = vmatmul.f32.gmra.mxu0 %v2009
      %v2124 = vpop.f32.mrf.mxu0
      %v2125 = vadd.f32 0.0, %v2124
      %2126 = vmatmul.f32.gmra.mxu0 %v2012
      %v2127 = vpop.f32.mrf.mxu0
      %v2128 = vadd.f32 0.0, %v2127
      %2129 = vmatmul.f32.gmra.mxu0 %v2015
      %v2130 = vpop.f32.mrf.mxu0
      %v2131 = vadd.f32 0.0, %v2130
      %2132 = vmatmul.f32.gmra.mxu0 %v2018
      %v2133 = vpop.f32.mrf.mxu0
      %v2134 = vadd.f32 0.0, %v2133
      %2135 = vmatmul.f32.gmra.mxu0 %v2021
      %v2136 = vpop.f32.mrf.mxu0
      %v2137 = vadd.f32 0.0, %v2136
      %2138 = vmatmul.f32.gmra.mxu0 %v2024
      %v2139 = vpop.f32.mrf.mxu0
      %v2140 = vadd.f32 0.0, %v2139
      %2141 = vmatmul.f32.gmra.mxu0 %v2027
      %v2142 = vpop.f32.mrf.mxu0
      %v2143 = vadd.f32 0.0, %v2142
      %2144 = vmatmul.f32.gmra.mxu0 %v2030
      %v2145 = vpop.f32.mrf.mxu0
      %v2146 = vadd.f32 0.0, %v2145
      %2147 = vmatmul.f32.gmra.mxu0 %v2033
      %v2148 = vpop.f32.mrf.mxu0
      %v2149 = vadd.f32 0.0, %v2148
      %2150 = vmatmul.f32.gmra.mxu0 %v2036
      %v2151 = vpop.f32.mrf.mxu0
      %v2152 = vadd.f32 0.0, %v2151
      %2153 = vmatmul.f32.gmra.mxu0 %v2039
      %v2154 = vpop.f32.mrf.mxu0
      %v2155 = vadd.f32 0.0, %v2154
      %2156 = vmatmul.f32.gmra.mxu0 %v2042
      %v2157 = vpop.f32.mrf.mxu0
      %v2158 = vadd.f32 0.0, %v2157
      %2159 = vmatmul.f32.gmra.mxu0 %v2045
      %v2160 = vpop.f32.mrf.mxu0
      %v2161 = vadd.f32 0.0, %v2160
      %2162 = vmatmul.f32.gmra.mxu0 %v2048
      %v2163 = vpop.f32.mrf.mxu0
      %v2164 = vadd.f32 0.0, %v2163
      %2165 = vmatmul.f32.gmra.mxu0 %v2051
      %v2166 = vpop.f32.mrf.mxu0
      %v2167 = vadd.f32 0.0, %v2166
      %2168 = vmatmul.f32.gmra.mxu0 %v2054
      %v2169 = vpop.f32.mrf.mxu0
      %v2170 = vadd.f32 0.0, %v2169
      %2171 = vdwg.mxu0
      %v2172 = vadd.f32 %v1893, %v2077
      %v2173 = vadd.f32 %v1894, %v2080
      %v2174 = vadd.f32 %v1895, %v2083
      %v2175 = vadd.f32 %v1896, %v2086
      %v2176 = vadd.f32 %v1897, %v2089
      %v2177 = vadd.f32 %v1898, %v2092
      %v2178 = vadd.f32 %v1899, %v2095
      %v2179 = vadd.f32 %v1900, %v2098
      %v2180 = vadd.f32 %v1901, %v2101
      %v2181 = vadd.f32 %v1902, %v2104
      %v2182 = vadd.f32 %v1903, %v2107
      %v2183 = vadd.f32 %v1904, %v2110
      %v2184 = vadd.f32 %v1905, %v2113
      %v2185 = vadd.f32 %v1906, %v2116
      %v2186 = vadd.f32 %v1907, %v2119
      %v2187 = vadd.f32 %v1908, %v2122
      %v2188 = vadd.f32 %v1909, %v2125
      %v2189 = vadd.f32 %v1910, %v2128
      %v2190 = vadd.f32 %v1911, %v2131
      %v2191 = vadd.f32 %v1912, %v2134
      %v2192 = vadd.f32 %v1913, %v2137
      %v2193 = vadd.f32 %v1914, %v2140
      %v2194 = vadd.f32 %v1915, %v2143
      %v2195 = vadd.f32 %v1916, %v2146
      %v2196 = vadd.f32 %v1917, %v2149
      %v2197 = vadd.f32 %v1918, %v2152
      %v2198 = vadd.f32 %v1919, %v2155
      %v2199 = vadd.f32 %v1920, %v2158
      %v2200 = vadd.f32 %v1921, %v2161
      %v2201 = vadd.f32 %v1922, %v2164
      %v2202 = vadd.f32 %v1923, %v2167
      %v2203 = vadd.f32 %v1924, %v2170
      %v2204 = vld [vmem:[%s1925 + $0x1] sm:$0xff]
      %v2205 = vld [vmem:[%s1925 + $0x9] sm:$0xff]
      %v2206 = vld [vmem:[%s1925 + $0x19] sm:$0xff]
      %v2207 = vld [vmem:[%s1925 + $0x21] sm:$0xff]
      %v2208 = vld [vmem:[%s1925 + $0x31] sm:$0xff]
      %v2209 = vld [vmem:[%s1925 + $0x39] sm:$0xff]
      %v2210 = vld [vmem:[%s1925 + $0x49] sm:$0xff]
      %v2211 = vld [vmem:[%s1925 + $0x51] sm:$0xff]
      %v2212 = vld [vmem:[%s1925 + $0x61] sm:$0xff]
      %v2213 = vld [vmem:[%s1925 + $0x69] sm:$0xff]
      %v2214 = vld [vmem:[%s1925 + $0x79] sm:$0xff]
      %v2215 = vld [vmem:[%s1925 + $0x81] sm:$0xff]
      %v2216 = vld [vmem:[%s1925 + $0x91] sm:$0xff]
      %v2217 = vld [vmem:[%s1925 + $0x99] sm:$0xff]
      %v2218 = vld [vmem:[%s1925 + $0xa9] sm:$0xff]
      %v2219 = vld [vmem:[%s1925 + $0xb1] sm:$0xff]
      %v2220 = vld [vmem:[%s1925 + $0xc1] sm:$0xff]
      %v2221 = vld [vmem:[%s1925 + $0xc9] sm:$0xff]
      %v2222 = vld [vmem:[%s1925 + $0xd9] sm:$0xff]
      %v2223 = vld [vmem:[%s1925 + $0xe1] sm:$0xff]
      %v2224 = vld [vmem:[%s1925 + $0xf1] sm:$0xff]
      %v2225 = vld [vmem:[%s1925 + $0xf9] sm:$0xff]
      %v2226 = vld [vmem:[%s1925 + $0x109] sm:$0xff]
      %v2227 = vld [vmem:[%s1925 + $0x111] sm:$0xff]
      %v2228 = vld [vmem:[%s1925 + $0x121] sm:$0xff]
      %v2229 = vld [vmem:[%s1925 + $0x129] sm:$0xff]
      %v2230 = vld [vmem:[%s1925 + $0x139] sm:$0xff]
      %v2231 = vld [vmem:[%s1925 + $0x141] sm:$0xff]
      %v2232 = vld [vmem:[%s1925 + $0x151] sm:$0xff]
      %v2233 = vld [vmem:[%s1925 + $0x159] sm:$0xff]
      %v2234 = vld [vmem:[%s1925 + $0x169] sm:$0xff]
      %v2235 = vld [vmem:[%s1925 + $0x171] sm:$0xff]
      %s2236 = scalar_lea.vmem %s1, 28
      %v2237 = vld [vmem:[%s2236] sm:$0xf]
      %v2239 = vsel %vm198, %v2204, 0
      %v2242 = vsel %vm198, %v2205, 0
      %v2245 = vsel %vm198, %v2206, 0
      %v2248 = vsel %vm198, %v2207, 0
      %v2251 = vsel %vm198, %v2208, 0
      %v2254 = vsel %vm198, %v2209, 0
      %v2257 = vsel %vm198, %v2210, 0
      %v2260 = vsel %vm198, %v2211, 0
      %v2263 = vsel %vm198, %v2212, 0
      %v2266 = vsel %vm198, %v2213, 0
      %v2269 = vsel %vm198, %v2214, 0
      %v2272 = vsel %vm198, %v2215, 0
      %v2275 = vsel %vm198, %v2216, 0
      %v2278 = vsel %vm198, %v2217, 0
      %v2281 = vsel %vm198, %v2218, 0
      %v2284 = vsel %vm198, %v2219, 0
      %v2287 = vsel %vm198, %v2220, 0
      %v2290 = vsel %vm198, %v2221, 0
      %v2293 = vsel %vm198, %v2222, 0
      %v2296 = vsel %vm198, %v2223, 0
      %v2299 = vsel %vm198, %v2224, 0
      %v2302 = vsel %vm198, %v2225, 0
      %v2305 = vsel %vm198, %v2226, 0
      %v2308 = vsel %vm198, %v2227, 0
      %v2311 = vsel %vm198, %v2228, 0
      %v2314 = vsel %vm198, %v2229, 0
      %v2317 = vsel %vm198, %v2230, 0
      %v2320 = vsel %vm198, %v2231, 0
      %v2323 = vsel %vm198, %v2232, 0
      %v2326 = vsel %vm198, %v2233, 0
      %v2329 = vsel %vm198, %v2234, 0
      %v2332 = vsel %vm198, %v2235, 0
      %v2335 = vsel %vm484, %v2237, 0
      %2337 = vmatpush.msra.mxu0 0.0
      %2338 = vmatpush.msra.mxu0 0.0
      %2339 = vmatpush.msra.mxu0 0.0
      %2340 = vmatpush.msra.mxu0 0.0
      %2341 = vmatpush.msra.mxu0 0.0
      %2342 = vmatpush.msra.mxu0 0.0
      %2343 = vmatpush.msra.mxu0 0.0
      %2344 = vmatpush.msra.mxu0 0.0
      %2345 = vmatpush.msra.mxu0 0.0
      %2346 = vmatpush.msra.mxu0 0.0
      %2347 = vmatpush.msra.mxu0 0.0
      %2348 = vmatpush.msra.mxu0 0.0
      %2349 = vmatpush.msra.mxu0 0.0
      %2350 = vmatpush.msra.mxu0 0.0
      %2351 = vmatpush.msra.mxu0 0.0
      %2352 = vmatpush.msra.mxu0 %v2335
      %2353 = vmatmul.f32.gmra.mxu0 %v2239
      %v2354 = vpop.f32.mrf.mxu0
      %v2355 = vadd.f32 0.0, %v2354
      %2356 = vmatmul.f32.gmra.mxu0 %v2242
      %v2357 = vpop.f32.mrf.mxu0
      %v2358 = vadd.f32 0.0, %v2357
      %2359 = vmatmul.f32.gmra.mxu0 %v2245
      %v2360 = vpop.f32.mrf.mxu0
      %v2361 = vadd.f32 0.0, %v2360
      %2362 = vmatmul.f32.gmra.mxu0 %v2248
      %v2363 = vpop.f32.mrf.mxu0
      %v2364 = vadd.f32 0.0, %v2363
      %2365 = vmatmul.f32.gmra.mxu0 %v2251
      %v2366 = vpop.f32.mrf.mxu0
      %v2367 = vadd.f32 0.0, %v2366
      %2368 = vmatmul.f32.gmra.mxu0 %v2254
      %v2369 = vpop.f32.mrf.mxu0
      %v2370 = vadd.f32 0.0, %v2369
      %2371 = vmatmul.f32.gmra.mxu0 %v2257
      %v2372 = vpop.f32.mrf.mxu0
      %v2373 = vadd.f32 0.0, %v2372
      %2374 = vmatmul.f32.gmra.mxu0 %v2260
      %v2375 = vpop.f32.mrf.mxu0
      %v2376 = vadd.f32 0.0, %v2375
      %2377 = vmatmul.f32.gmra.mxu0 %v2263
      %v2378 = vpop.f32.mrf.mxu0
      %v2379 = vadd.f32 0.0, %v2378
      %2380 = vmatmul.f32.gmra.mxu0 %v2266
      %v2381 = vpop.f32.mrf.mxu0
      %v2382 = vadd.f32 0.0, %v2381
      %2383 = vmatmul.f32.gmra.mxu0 %v2269
      %v2384 = vpop.f32.mrf.mxu0
      %v2385 = vadd.f32 0.0, %v2384
      %2386 = vmatmul.f32.gmra.mxu0 %v2272
      %v2387 = vpop.f32.mrf.mxu0
      %v2388 = vadd.f32 0.0, %v2387
      %2389 = vmatmul.f32.gmra.mxu0 %v2275
      %v2390 = vpop.f32.mrf.mxu0
      %v2391 = vadd.f32 0.0, %v2390
      %2392 = vmatmul.f32.gmra.mxu0 %v2278
      %v2393 = vpop.f32.mrf.mxu0
      %v2394 = vadd.f32 0.0, %v2393
      %2395 = vmatmul.f32.gmra.mxu0 %v2281
      %v2396 = vpop.f32.mrf.mxu0
      %v2397 = vadd.f32 0.0, %v2396
      %2398 = vmatmul.f32.gmra.mxu0 %v2284
      %v2399 = vpop.f32.mrf.mxu0
      %v2400 = vadd.f32 0.0, %v2399
      %2401 = vmatmul.f32.gmra.mxu0 %v2287
      %v2402 = vpop.f32.mrf.mxu0
      %v2403 = vadd.f32 0.0, %v2402
      %2404 = vmatmul.f32.gmra.mxu0 %v2290
      %v2405 = vpop.f32.mrf.mxu0
      %v2406 = vadd.f32 0.0, %v2405
      %2407 = vmatmul.f32.gmra.mxu0 %v2293
      %v2408 = vpop.f32.mrf.mxu0
      %v2409 = vadd.f32 0.0, %v2408
      %2410 = vmatmul.f32.gmra.mxu0 %v2296
      %v2411 = vpop.f32.mrf.mxu0
      %v2412 = vadd.f32 0.0, %v2411
      %2413 = vmatmul.f32.gmra.mxu0 %v2299
      %v2414 = vpop.f32.mrf.mxu0
      %v2415 = vadd.f32 0.0, %v2414
      %2416 = vmatmul.f32.gmra.mxu0 %v2302
      %v2417 = vpop.f32.mrf.mxu0
      %v2418 = vadd.f32 0.0, %v2417
      %2419 = vmatmul.f32.gmra.mxu0 %v2305
      %v2420 = vpop.f32.mrf.mxu0
      %v2421 = vadd.f32 0.0, %v2420
      %2422 = vmatmul.f32.gmra.mxu0 %v2308
      %v2423 = vpop.f32.mrf.mxu0
      %v2424 = vadd.f32 0.0, %v2423
      %2425 = vmatmul.f32.gmra.mxu0 %v2311
      %v2426 = vpop.f32.mrf.mxu0
      %v2427 = vadd.f32 0.0, %v2426
      %2428 = vmatmul.f32.gmra.mxu0 %v2314
      %v2429 = vpop.f32.mrf.mxu0
      %v2430 = vadd.f32 0.0, %v2429
      %2431 = vmatmul.f32.gmra.mxu0 %v2317
      %v2432 = vpop.f32.mrf.mxu0
      %v2433 = vadd.f32 0.0, %v2432
      %2434 = vmatmul.f32.gmra.mxu0 %v2320
      %v2435 = vpop.f32.mrf.mxu0
      %v2436 = vadd.f32 0.0, %v2435
      %2437 = vmatmul.f32.gmra.mxu0 %v2323
      %v2438 = vpop.f32.mrf.mxu0
      %v2439 = vadd.f32 0.0, %v2438
      %2440 = vmatmul.f32.gmra.mxu0 %v2326
      %v2441 = vpop.f32.mrf.mxu0
      %v2442 = vadd.f32 0.0, %v2441
      %2443 = vmatmul.f32.gmra.mxu0 %v2329
      %v2444 = vpop.f32.mrf.mxu0
      %v2445 = vadd.f32 0.0, %v2444
      %2446 = vmatmul.f32.gmra.mxu0 %v2332
      %v2447 = vpop.f32.mrf.mxu0
      %v2448 = vadd.f32 0.0, %v2447
      %2449 = vdwg.mxu0
      %v2450 = vadd.f32 %v2172, %v2355
      %v2451 = vadd.f32 %v2173, %v2358
      %v2452 = vadd.f32 %v2174, %v2361
      %v2453 = vadd.f32 %v2175, %v2364
      %v2454 = vadd.f32 %v2176, %v2367
      %v2455 = vadd.f32 %v2177, %v2370
      %v2456 = vadd.f32 %v2178, %v2373
      %v2457 = vadd.f32 %v2179, %v2376
      %v2458 = vadd.f32 %v2180, %v2379
      %v2459 = vadd.f32 %v2181, %v2382
      %v2460 = vadd.f32 %v2182, %v2385
      %v2461 = vadd.f32 %v2183, %v2388
      %v2462 = vadd.f32 %v2184, %v2391
      %v2463 = vadd.f32 %v2185, %v2394
      %v2464 = vadd.f32 %v2186, %v2397
      %v2465 = vadd.f32 %v2187, %v2400
      %v2466 = vadd.f32 %v2188, %v2403
      %v2467 = vadd.f32 %v2189, %v2406
      %v2468 = vadd.f32 %v2190, %v2409
      %v2469 = vadd.f32 %v2191, %v2412
      %v2470 = vadd.f32 %v2192, %v2415
      %v2471 = vadd.f32 %v2193, %v2418
      %v2472 = vadd.f32 %v2194, %v2421
      %v2473 = vadd.f32 %v2195, %v2424
      %v2474 = vadd.f32 %v2196, %v2427
      %v2475 = vadd.f32 %v2197, %v2430
      %v2476 = vadd.f32 %v2198, %v2433
      %v2477 = vadd.f32 %v2199, %v2436
      %v2478 = vadd.f32 %v2200, %v2439
      %v2479 = vadd.f32 %v2201, %v2442
      %v2480 = vadd.f32 %v2202, %v2445
      %v2481 = vadd.f32 %v2203, %v2448
      %v2482 = vld [vmem:[%s1925 + $0x2] sm:$0xff]
      %v2483 = vld [vmem:[%s1925 + $0xa] sm:$0xff]
      %v2484 = vld [vmem:[%s1925 + $0x1a] sm:$0xff]
      %v2485 = vld [vmem:[%s1925 + $0x22] sm:$0xff]
      %v2486 = vld [vmem:[%s1925 + $0x32] sm:$0xff]
      %v2487 = vld [vmem:[%s1925 + $0x3a] sm:$0xff]
      %v2488 = vld [vmem:[%s1925 + $0x4a] sm:$0xff]
      %v2489 = vld [vmem:[%s1925 + $0x52] sm:$0xff]
      %v2490 = vld [vmem:[%s1925 + $0x62] sm:$0xff]
      %v2491 = vld [vmem:[%s1925 + $0x6a] sm:$0xff]
      %v2492 = vld [vmem:[%s1925 + $0x7a] sm:$0xff]
      %v2493 = vld [vmem:[%s1925 + $0x82] sm:$0xff]
      %v2494 = vld [vmem:[%s1925 + $0x92] sm:$0xff]
      %v2495 = vld [vmem:[%s1925 + $0x9a] sm:$0xff]
      %v2496 = vld [vmem:[%s1925 + $0xaa] sm:$0xff]
      %v2497 = vld [vmem:[%s1925 + $0xb2] sm:$0xff]
      %v2498 = vld [vmem:[%s1925 + $0xc2] sm:$0xff]
      %v2499 = vld [vmem:[%s1925 + $0xca] sm:$0xff]
      %v2500 = vld [vmem:[%s1925 + $0xda] sm:$0xff]
      %v2501 = vld [vmem:[%s1925 + $0xe2] sm:$0xff]
      %v2502 = vld [vmem:[%s1925 + $0xf2] sm:$0xff]
      %v2503 = vld [vmem:[%s1925 + $0xfa] sm:$0xff]
      %v2504 = vld [vmem:[%s1925 + $0x10a] sm:$0xff]
      %v2505 = vld [vmem:[%s1925 + $0x112] sm:$0xff]
      %v2506 = vld [vmem:[%s1925 + $0x122] sm:$0xff]
      %v2507 = vld [vmem:[%s1925 + $0x12a] sm:$0xff]
      %v2508 = vld [vmem:[%s1925 + $0x13a] sm:$0xff]
      %v2509 = vld [vmem:[%s1925 + $0x142] sm:$0xff]
      %v2510 = vld [vmem:[%s1925 + $0x152] sm:$0xff]
      %v2511 = vld [vmem:[%s1925 + $0x15a] sm:$0xff]
      %v2512 = vld [vmem:[%s1925 + $0x16a] sm:$0xff]
      %v2513 = vld [vmem:[%s1925 + $0x172] sm:$0xff]
      %s2514 = scalar_lea.vmem %s1, 32
      %v2515 = vld [vmem:[%s2514] sm:$0xf]
      %v2517 = vsel %vm198, %v2482, 0
      %v2520 = vsel %vm198, %v2483, 0
      %v2523 = vsel %vm198, %v2484, 0
      %v2526 = vsel %vm198, %v2485, 0
      %v2529 = vsel %vm198, %v2486, 0
      %v2532 = vsel %vm198, %v2487, 0
      %v2535 = vsel %vm198, %v2488, 0
      %v2538 = vsel %vm198, %v2489, 0
      %v2541 = vsel %vm198, %v2490, 0
      %v2544 = vsel %vm198, %v2491, 0
      %v2547 = vsel %vm198, %v2492, 0
      %v2550 = vsel %vm198, %v2493, 0
      %v2553 = vsel %vm198, %v2494, 0
      %v2556 = vsel %vm198, %v2495, 0
      %v2559 = vsel %vm198, %v2496, 0
      %v2562 = vsel %vm198, %v2497, 0
      %v2565 = vsel %vm198, %v2498, 0
      %v2568 = vsel %vm198, %v2499, 0
      %v2571 = vsel %vm198, %v2500, 0
      %v2574 = vsel %vm198, %v2501, 0
      %v2577 = vsel %vm198, %v2502, 0
      %v2580 = vsel %vm198, %v2503, 0
      %v2583 = vsel %vm198, %v2504, 0
      %v2586 = vsel %vm198, %v2505, 0
      %v2589 = vsel %vm198, %v2506, 0
      %v2592 = vsel %vm198, %v2507, 0
      %v2595 = vsel %vm198, %v2508, 0
      %v2598 = vsel %vm198, %v2509, 0
      %v2601 = vsel %vm198, %v2510, 0
      %v2604 = vsel %vm198, %v2511, 0
      %v2607 = vsel %vm198, %v2512, 0
      %v2610 = vsel %vm198, %v2513, 0
      %v2613 = vsel %vm484, %v2515, 0
      %2615 = vmatpush.msra.mxu0 0.0
      %2616 = vmatpush.msra.mxu0 0.0
      %2617 = vmatpush.msra.mxu0 0.0
      %2618 = vmatpush.msra.mxu0 0.0
      %2619 = vmatpush.msra.mxu0 0.0
      %2620 = vmatpush.msra.mxu0 0.0
      %2621 = vmatpush.msra.mxu0 0.0
      %2622 = vmatpush.msra.mxu0 0.0
      %2623 = vmatpush.msra.mxu0 0.0
      %2624 = vmatpush.msra.mxu0 0.0
      %2625 = vmatpush.msra.mxu0 0.0
      %2626 = vmatpush.msra.mxu0 0.0
      %2627 = vmatpush.msra.mxu0 0.0
      %2628 = vmatpush.msra.mxu0 0.0
      %2629 = vmatpush.msra.mxu0 0.0
      %2630 = vmatpush.msra.mxu0 %v2613
      %2631 = vmatmul.f32.gmra.mxu0 %v2517
      %v2632 = vpop.f32.mrf.mxu0
      %v2633 = vadd.f32 0.0, %v2632
      %2634 = vmatmul.f32.gmra.mxu0 %v2520
      %v2635 = vpop.f32.mrf.mxu0
      %v2636 = vadd.f32 0.0, %v2635
      %2637 = vmatmul.f32.gmra.mxu0 %v2523
      %v2638 = vpop.f32.mrf.mxu0
      %v2639 = vadd.f32 0.0, %v2638
      %2640 = vmatmul.f32.gmra.mxu0 %v2526
      %v2641 = vpop.f32.mrf.mxu0
      %v2642 = vadd.f32 0.0, %v2641
      %2643 = vmatmul.f32.gmra.mxu0 %v2529
      %v2644 = vpop.f32.mrf.mxu0
      %v2645 = vadd.f32 0.0, %v2644
      %2646 = vmatmul.f32.gmra.mxu0 %v2532
      %v2647 = vpop.f32.mrf.mxu0
      %v2648 = vadd.f32 0.0, %v2647
      %2649 = vmatmul.f32.gmra.mxu0 %v2535
      %v2650 = vpop.f32.mrf.mxu0
      %v2651 = vadd.f32 0.0, %v2650
      %2652 = vmatmul.f32.gmra.mxu0 %v2538
      %v2653 = vpop.f32.mrf.mxu0
      %v2654 = vadd.f32 0.0, %v2653
      %2655 = vmatmul.f32.gmra.mxu0 %v2541
      %v2656 = vpop.f32.mrf.mxu0
      %v2657 = vadd.f32 0.0, %v2656
      %2658 = vmatmul.f32.gmra.mxu0 %v2544
      %v2659 = vpop.f32.mrf.mxu0
      %v2660 = vadd.f32 0.0, %v2659
      %2661 = vmatmul.f32.gmra.mxu0 %v2547
      %v2662 = vpop.f32.mrf.mxu0
      %v2663 = vadd.f32 0.0, %v2662
      %2664 = vmatmul.f32.gmra.mxu0 %v2550
      %v2665 = vpop.f32.mrf.mxu0
      %v2666 = vadd.f32 0.0, %v2665
      %2667 = vmatmul.f32.gmra.mxu0 %v2553
      %v2668 = vpop.f32.mrf.mxu0
      %v2669 = vadd.f32 0.0, %v2668
      %2670 = vmatmul.f32.gmra.mxu0 %v2556
      %v2671 = vpop.f32.mrf.mxu0
      %v2672 = vadd.f32 0.0, %v2671
      %2673 = vmatmul.f32.gmra.mxu0 %v2559
      %v2674 = vpop.f32.mrf.mxu0
      %v2675 = vadd.f32 0.0, %v2674
      %2676 = vmatmul.f32.gmra.mxu0 %v2562
      %v2677 = vpop.f32.mrf.mxu0
      %v2678 = vadd.f32 0.0, %v2677
      %2679 = vmatmul.f32.gmra.mxu0 %v2565
      %v2680 = vpop.f32.mrf.mxu0
      %v2681 = vadd.f32 0.0, %v2680
      %2682 = vmatmul.f32.gmra.mxu0 %v2568
      %v2683 = vpop.f32.mrf.mxu0
      %v2684 = vadd.f32 0.0, %v2683
      %2685 = vmatmul.f32.gmra.mxu0 %v2571
      %v2686 = vpop.f32.mrf.mxu0
      %v2687 = vadd.f32 0.0, %v2686
      %2688 = vmatmul.f32.gmra.mxu0 %v2574
      %v2689 = vpop.f32.mrf.mxu0
      %v2690 = vadd.f32 0.0, %v2689
      %2691 = vmatmul.f32.gmra.mxu0 %v2577
      %v2692 = vpop.f32.mrf.mxu0
      %v2693 = vadd.f32 0.0, %v2692
      %2694 = vmatmul.f32.gmra.mxu0 %v2580
      %v2695 = vpop.f32.mrf.mxu0
      %v2696 = vadd.f32 0.0, %v2695
      %2697 = vmatmul.f32.gmra.mxu0 %v2583
      %v2698 = vpop.f32.mrf.mxu0
      %v2699 = vadd.f32 0.0, %v2698
      %2700 = vmatmul.f32.gmra.mxu0 %v2586
      %v2701 = vpop.f32.mrf.mxu0
      %v2702 = vadd.f32 0.0, %v2701
      %2703 = vmatmul.f32.gmra.mxu0 %v2589
      %v2704 = vpop.f32.mrf.mxu0
      %v2705 = vadd.f32 0.0, %v2704
      %2706 = vmatmul.f32.gmra.mxu0 %v2592
      %v2707 = vpop.f32.mrf.mxu0
      %v2708 = vadd.f32 0.0, %v2707
      %2709 = vmatmul.f32.gmra.mxu0 %v2595
      %v2710 = vpop.f32.mrf.mxu0
      %v2711 = vadd.f32 0.0, %v2710
      %2712 = vmatmul.f32.gmra.mxu0 %v2598
      %v2713 = vpop.f32.mrf.mxu0
      %v2714 = vadd.f32 0.0, %v2713
      %2715 = vmatmul.f32.gmra.mxu0 %v2601
      %v2716 = vpop.f32.mrf.mxu0
      %v2717 = vadd.f32 0.0, %v2716
      %2718 = vmatmul.f32.gmra.mxu0 %v2604
      %v2719 = vpop.f32.mrf.mxu0
      %v2720 = vadd.f32 0.0, %v2719
      %2721 = vmatmul.f32.gmra.mxu0 %v2607
      %v2722 = vpop.f32.mrf.mxu0
      %v2723 = vadd.f32 0.0, %v2722
      %2724 = vmatmul.f32.gmra.mxu0 %v2610
      %v2725 = vpop.f32.mrf.mxu0
      %v2726 = vadd.f32 0.0, %v2725
      %2727 = vdwg.mxu0
      %v2728 = vadd.f32 %v2450, %v2633
      %v2729 = vadd.f32 %v2451, %v2636
      %v2730 = vadd.f32 %v2452, %v2639
      %v2731 = vadd.f32 %v2453, %v2642
      %v2732 = vadd.f32 %v2454, %v2645
      %v2733 = vadd.f32 %v2455, %v2648
      %v2734 = vadd.f32 %v2456, %v2651
      %v2735 = vadd.f32 %v2457, %v2654
      %v2736 = vadd.f32 %v2458, %v2657
      %v2737 = vadd.f32 %v2459, %v2660
      %v2738 = vadd.f32 %v2460, %v2663
      %v2739 = vadd.f32 %v2461, %v2666
      %v2740 = vadd.f32 %v2462, %v2669
      %v2741 = vadd.f32 %v2463, %v2672
      %v2742 = vadd.f32 %v2464, %v2675
      %v2743 = vadd.f32 %v2465, %v2678
      %v2744 = vadd.f32 %v2466, %v2681
      %v2745 = vadd.f32 %v2467, %v2684
      %v2746 = vadd.f32 %v2468, %v2687
      %v2747 = vadd.f32 %v2469, %v2690
      %v2748 = vadd.f32 %v2470, %v2693
      %v2749 = vadd.f32 %v2471, %v2696
      %v2750 = vadd.f32 %v2472, %v2699
      %v2751 = vadd.f32 %v2473, %v2702
      %v2752 = vadd.f32 %v2474, %v2705
      %v2753 = vadd.f32 %v2475, %v2708
      %v2754 = vadd.f32 %v2476, %v2711
      %v2755 = vadd.f32 %v2477, %v2714
      %v2756 = vadd.f32 %v2478, %v2717
      %v2757 = vadd.f32 %v2479, %v2720
      %v2758 = vadd.f32 %v2480, %v2723
      %v2759 = vadd.f32 %v2481, %v2726
      %v2761 = vperm.slane %v286, 0
      %v2763 = vmul.f32 %v2728, %v2761
      %v2764 = vmul.f32 %v2729, %v2761
      %v2765 = vmul.f32 %v2730, %v2761
      %v2766 = vmul.f32 %v2731, %v2761
      %v2767 = vmul.f32 %v2732, %v2761
      %v2768 = vmul.f32 %v2733, %v2761
      %v2769 = vmul.f32 %v2734, %v2761
      %v2770 = vmul.f32 %v2735, %v2761
      %v2771 = vmul.f32 %v2736, %v2761
      %v2772 = vmul.f32 %v2737, %v2761
      %v2773 = vmul.f32 %v2738, %v2761
      %v2774 = vmul.f32 %v2739, %v2761
      %v2775 = vmul.f32 %v2740, %v2761
      %v2776 = vmul.f32 %v2741, %v2761
      %v2777 = vmul.f32 %v2742, %v2761
      %v2778 = vmul.f32 %v2743, %v2761
      %v2779 = vmul.f32 %v2744, %v2761
      %v2780 = vmul.f32 %v2745, %v2761
      %v2781 = vmul.f32 %v2746, %v2761
      %v2782 = vmul.f32 %v2747, %v2761
      %v2783 = vmul.f32 %v2748, %v2761
      %v2784 = vmul.f32 %v2749, %v2761
      %v2785 = vmul.f32 %v2750, %v2761
      %v2786 = vmul.f32 %v2751, %v2761
      %v2787 = vmul.f32 %v2752, %v2761
      %v2788 = vmul.f32 %v2753, %v2761
      %v2789 = vmul.f32 %v2754, %v2761
      %v2790 = vmul.f32 %v2755, %v2761
      %v2791 = vmul.f32 %v2756, %v2761
      %v2792 = vmul.f32 %v2757, %v2761
      %v2793 = vmul.f32 %v2758, %v2761
      %v2794 = vmul.f32 %v2759, %v2761
      %v2796 = vperm.slane %v287, 0
      %v2798 = vadd.f32 %v2763, %v2796
      %v2799 = vadd.f32 %v2764, %v2796
      %v2800 = vadd.f32 %v2765, %v2796
      %v2801 = vadd.f32 %v2766, %v2796
      %v2802 = vadd.f32 %v2767, %v2796
      %v2803 = vadd.f32 %v2768, %v2796
      %v2804 = vadd.f32 %v2769, %v2796
      %v2805 = vadd.f32 %v2770, %v2796
      %v2806 = vadd.f32 %v2771, %v2796
      %v2807 = vadd.f32 %v2772, %v2796
      %v2808 = vadd.f32 %v2773, %v2796
      %v2809 = vadd.f32 %v2774, %v2796
      %v2810 = vadd.f32 %v2775, %v2796
      %v2811 = vadd.f32 %v2776, %v2796
      %v2812 = vadd.f32 %v2777, %v2796
      %v2813 = vadd.f32 %v2778, %v2796
      %v2814 = vadd.f32 %v2779, %v2796
      %v2815 = vadd.f32 %v2780, %v2796
      %v2816 = vadd.f32 %v2781, %v2796
      %v2817 = vadd.f32 %v2782, %v2796
      %v2818 = vadd.f32 %v2783, %v2796
      %v2819 = vadd.f32 %v2784, %v2796
      %v2820 = vadd.f32 %v2785, %v2796
      %v2821 = vadd.f32 %v2786, %v2796
      %v2822 = vadd.f32 %v2787, %v2796
      %v2823 = vadd.f32 %v2788, %v2796
      %v2824 = vadd.f32 %v2789, %v2796
      %v2825 = vadd.f32 %v2790, %v2796
      %v2826 = vadd.f32 %v2791, %v2796
      %v2827 = vadd.f32 %v2792, %v2796
      %v2828 = vadd.f32 %v2793, %v2796
      %v2829 = vadd.f32 %v2794, %v2796
      %v2830 = vmax.f32 %v2798, 0.0
      %v2831 = vmax.f32 %v2799, 0.0
      %v2832 = vmax.f32 %v2800, 0.0
      %v2833 = vmax.f32 %v2801, 0.0
      %v2834 = vmax.f32 %v2802, 0.0
      %v2835 = vmax.f32 %v2803, 0.0
      %v2836 = vmax.f32 %v2804, 0.0
      %v2837 = vmax.f32 %v2805, 0.0
      %v2838 = vmax.f32 %v2806, 0.0
      %v2839 = vmax.f32 %v2807, 0.0
      %v2840 = vmax.f32 %v2808, 0.0
      %v2841 = vmax.f32 %v2809, 0.0
      %v2842 = vmax.f32 %v2810, 0.0
      %v2843 = vmax.f32 %v2811, 0.0
      %v2844 = vmax.f32 %v2812, 0.0
      %v2845 = vmax.f32 %v2813, 0.0
      %v2846 = vmax.f32 %v2814, 0.0
      %v2847 = vmax.f32 %v2815, 0.0
      %v2848 = vmax.f32 %v2816, 0.0
      %v2849 = vmax.f32 %v2817, 0.0
      %v2850 = vmax.f32 %v2818, 0.0
      %v2851 = vmax.f32 %v2819, 0.0
      %v2852 = vmax.f32 %v2820, 0.0
      %v2853 = vmax.f32 %v2821, 0.0
      %v2854 = vmax.f32 %v2822, 0.0
      %v2855 = vmax.f32 %v2823, 0.0
      %v2856 = vmax.f32 %v2824, 0.0
      %v2857 = vmax.f32 %v2825, 0.0
      %v2858 = vmax.f32 %v2826, 0.0
      %v2859 = vmax.f32 %v2827, 0.0
      %v2860 = vmax.f32 %v2828, 0.0
      %v2861 = vmax.f32 %v2829, 0.0
      %v2862 = vadd.f32 %v254, %v2830
      %v2863 = vadd.f32 %v255, %v2831
      %v2864 = vadd.f32 %v256, %v2832
      %v2865 = vadd.f32 %v257, %v2833
      %v2866 = vadd.f32 %v258, %v2834
      %v2867 = vadd.f32 %v259, %v2835
      %v2868 = vadd.f32 %v260, %v2836
      %v2869 = vadd.f32 %v261, %v2837
      %v2870 = vadd.f32 %v262, %v2838
      %v2871 = vadd.f32 %v263, %v2839
      %v2872 = vadd.f32 %v264, %v2840
      %v2873 = vadd.f32 %v265, %v2841
      %v2874 = vadd.f32 %v266, %v2842
      %v2875 = vadd.f32 %v267, %v2843
      %v2876 = vadd.f32 %v268, %v2844
      %v2877 = vadd.f32 %v269, %v2845
      %v2878 = vadd.f32 %v270, %v2846
      %v2879 = vadd.f32 %v271, %v2847
      %v2880 = vadd.f32 %v272, %v2848
      %v2881 = vadd.f32 %v273, %v2849
      %v2882 = vadd.f32 %v274, %v2850
      %v2883 = vadd.f32 %v275, %v2851
      %v2884 = vadd.f32 %v276, %v2852
      %v2885 = vadd.f32 %v277, %v2853
      %v2886 = vadd.f32 %v278, %v2854
      %v2887 = vadd.f32 %v279, %v2855
      %v2888 = vadd.f32 %v280, %v2856
      %v2889 = vadd.f32 %v281, %v2857
      %v2890 = vadd.f32 %v282, %v2858
      %v2891 = vadd.f32 %v283, %v2859
      %v2892 = vadd.f32 %v284, %v2860
      %v2893 = vadd.f32 %v285, %v2861
      %2894 = vst.msk [vmem:[%s288 + $0x1] sm:$0xff] %vm198, %v2862
      %2895 = vst.msk [vmem:[%s288 + $0x9] sm:$0xff] %vm198, %v2863
      %2896 = vst.msk [vmem:[%s288 + $0x19] sm:$0xff] %vm198, %v2864
      %2897 = vst.msk [vmem:[%s288 + $0x21] sm:$0xff] %vm198, %v2865
      %2898 = vst.msk [vmem:[%s288 + $0x31] sm:$0xff] %vm198, %v2866
      %2899 = vst.msk [vmem:[%s288 + $0x39] sm:$0xff] %vm198, %v2867
      %2900 = vst.msk [vmem:[%s288 + $0x49] sm:$0xff] %vm198, %v2868
      %2901 = vst.msk [vmem:[%s288 + $0x51] sm:$0xff] %vm198, %v2869
      %2902 = vst.msk [vmem:[%s288 + $0x61] sm:$0xff] %vm198, %v2870
      %2903 = vst.msk [vmem:[%s288 + $0x69] sm:$0xff] %vm198, %v2871
      %2904 = vst.msk [vmem:[%s288 + $0x79] sm:$0xff] %vm198, %v2872
      %2905 = vst.msk [vmem:[%s288 + $0x81] sm:$0xff] %vm198, %v2873
      %2906 = vst.msk [vmem:[%s288 + $0x91] sm:$0xff] %vm198, %v2874
      %2907 = vst.msk [vmem:[%s288 + $0x99] sm:$0xff] %vm198, %v2875
      %2908 = vst.msk [vmem:[%s288 + $0xa9] sm:$0xff] %vm198, %v2876
      %2909 = vst.msk [vmem:[%s288 + $0xb1] sm:$0xff] %vm198, %v2877
      %2910 = vst.msk [vmem:[%s288 + $0xc1] sm:$0xff] %vm198, %v2878
      %2911 = vst.msk [vmem:[%s288 + $0xc9] sm:$0xff] %vm198, %v2879
      %2912 = vst.msk [vmem:[%s288 + $0xd9] sm:$0xff] %vm198, %v2880
      %2913 = vst.msk [vmem:[%s288 + $0xe1] sm:$0xff] %vm198, %v2881
      %2914 = vst.msk [vmem:[%s288 + $0xf1] sm:$0xff] %vm198, %v2882
      %2915 = vst.msk [vmem:[%s288 + $0xf9] sm:$0xff] %vm198, %v2883
      %2916 = vst.msk [vmem:[%s288 + $0x109] sm:$0xff] %vm198, %v2884
      %2917 = vst.msk [vmem:[%s288 + $0x111] sm:$0xff] %vm198, %v2885
      %2918 = vst.msk [vmem:[%s288 + $0x121] sm:$0xff] %vm198, %v2886
      %2919 = vst.msk [vmem:[%s288 + $0x129] sm:$0xff] %vm198, %v2887
      %2920 = vst.msk [vmem:[%s288 + $0x139] sm:$0xff] %vm198, %v2888
      %2921 = vst.msk [vmem:[%s288 + $0x141] sm:$0xff] %vm198, %v2889
      %2922 = vst.msk [vmem:[%s288 + $0x151] sm:$0xff] %vm198, %v2890
      %2923 = vst.msk [vmem:[%s288 + $0x159] sm:$0xff] %vm198, %v2891
      %2924 = vst.msk [vmem:[%s288 + $0x169] sm:$0xff] %vm198, %v2892
      %2925 = vst.msk [vmem:[%s288 + $0x171] sm:$0xff] %vm198, %v2893
      %v2926 = vld [vmem:[#allocation2] sm:$0xff]
      %v2927 = vld [vmem:[#allocation2 + $0x8] sm:$0xff]
      %v2928 = vld [vmem:[#allocation2 + $0x18] sm:$0xff]
      %v2929 = vld [vmem:[#allocation2 + $0x20] sm:$0xff]
      %v2930 = vld [vmem:[#allocation2 + $0x30] sm:$0xff]
      %v2931 = vld [vmem:[#allocation2 + $0x38] sm:$0xff]
      %v2932 = vld [vmem:[#allocation2 + $0x48] sm:$0xff]
      %v2933 = vld [vmem:[#allocation2 + $0x50] sm:$0xff]
      %v2934 = vld [vmem:[#allocation2 + $0x60] sm:$0xff]
      %v2935 = vld [vmem:[#allocation2 + $0x68] sm:$0xff]
      %v2936 = vld [vmem:[#allocation2 + $0x78] sm:$0xff]
      %v2937 = vld [vmem:[#allocation2 + $0x80] sm:$0xff]
      %v2938 = vld [vmem:[#allocation2 + $0x90] sm:$0xff]
      %v2939 = vld [vmem:[#allocation2 + $0x98] sm:$0xff]
      %v2940 = vld [vmem:[#allocation2 + $0xa8] sm:$0xff]
      %v2941 = vld [vmem:[#allocation2 + $0xb0] sm:$0xff]
      %v2942 = vld [vmem:[#allocation2 + $0xc0] sm:$0xff]
      %v2943 = vld [vmem:[#allocation2 + $0xc8] sm:$0xff]
      %v2944 = vld [vmem:[#allocation2 + $0xd8] sm:$0xff]
      %v2945 = vld [vmem:[#allocation2 + $0xe0] sm:$0xff]
      %v2946 = vld [vmem:[#allocation2 + $0xf0] sm:$0xff]
      %v2947 = vld [vmem:[#allocation2 + $0xf8] sm:$0xff]
      %v2948 = vld [vmem:[#allocation2 + $0x108] sm:$0xff]
      %v2949 = vld [vmem:[#allocation2 + $0x110] sm:$0xff]
      %v2950 = vld [vmem:[#allocation2 + $0x120] sm:$0xff]
      %v2951 = vld [vmem:[#allocation2 + $0x128] sm:$0xff]
      %v2952 = vld [vmem:[#allocation2 + $0x138] sm:$0xff]
      %v2953 = vld [vmem:[#allocation2 + $0x140] sm:$0xff]
      %v2954 = vld [vmem:[#allocation2 + $0x150] sm:$0xff]
      %v2955 = vld [vmem:[#allocation2 + $0x158] sm:$0xff]
      %v2956 = vld [vmem:[#allocation2 + $0x168] sm:$0xff]
      %v2957 = vld [vmem:[#allocation2 + $0x170] sm:$0xff]
      %v2958 = vld [vmem:[%s1] sm:$0xf]
      %v2959 = vld [vmem:[#allocation2 + $0x1] sm:$0xff]
      %v2960 = vld [vmem:[#allocation2 + $0x9] sm:$0xff]
      %v2961 = vld [vmem:[#allocation2 + $0x19] sm:$0xff]
      %v2962 = vld [vmem:[#allocation2 + $0x21] sm:$0xff]
      %v2963 = vld [vmem:[#allocation2 + $0x31] sm:$0xff]
      %v2964 = vld [vmem:[#allocation2 + $0x39] sm:$0xff]
      %v2965 = vld [vmem:[#allocation2 + $0x49] sm:$0xff]
      %v2966 = vld [vmem:[#allocation2 + $0x51] sm:$0xff]
      %v2967 = vld [vmem:[#allocation2 + $0x61] sm:$0xff]
      %v2968 = vld [vmem:[#allocation2 + $0x69] sm:$0xff]
      %v2969 = vld [vmem:[#allocation2 + $0x79] sm:$0xff]
      %v2970 = vld [vmem:[#allocation2 + $0x81] sm:$0xff]
      %v2971 = vld [vmem:[#allocation2 + $0x91] sm:$0xff]
      %v2972 = vld [vmem:[#allocation2 + $0x99] sm:$0xff]
      %v2973 = vld [vmem:[#allocation2 + $0xa9] sm:$0xff]
      %v2974 = vld [vmem:[#allocation2 + $0xb1] sm:$0xff]
      %v2975 = vld [vmem:[#allocation2 + $0xc1] sm:$0xff]
      %v2976 = vld [vmem:[#allocation2 + $0xc9] sm:$0xff]
      %v2977 = vld [vmem:[#allocation2 + $0xd9] sm:$0xff]
      %v2978 = vld [vmem:[#allocation2 + $0xe1] sm:$0xff]
      %v2979 = vld [vmem:[#allocation2 + $0xf1] sm:$0xff]
      %v2980 = vld [vmem:[#allocation2 + $0xf9] sm:$0xff]
      %v2981 = vld [vmem:[#allocation2 + $0x109] sm:$0xff]
      %v2982 = vld [vmem:[#allocation2 + $0x111] sm:$0xff]
      %v2983 = vld [vmem:[#allocation2 + $0x121] sm:$0xff]
      %v2984 = vld [vmem:[#allocation2 + $0x129] sm:$0xff]
      %v2985 = vld [vmem:[#allocation2 + $0x139] sm:$0xff]
      %v2986 = vld [vmem:[#allocation2 + $0x141] sm:$0xff]
      %v2987 = vld [vmem:[#allocation2 + $0x151] sm:$0xff]
      %v2988 = vld [vmem:[#allocation2 + $0x159] sm:$0xff]
      %v2989 = vld [vmem:[#allocation2 + $0x169] sm:$0xff]
      %v2990 = vld [vmem:[#allocation2 + $0x171] sm:$0xff]
      %v2991 = vld [vmem:[%s386] sm:$0xf]
      %v2993 = vsel %vm198, %v2959, 0
      %v2996 = vsel %vm198, %v2960, 0
      %v2999 = vsel %vm198, %v2961, 0
      %v3002 = vsel %vm198, %v2962, 0
      %v3005 = vsel %vm198, %v2963, 0
      %v3008 = vsel %vm198, %v2964, 0
      %v3011 = vsel %vm198, %v2965, 0
      %v3014 = vsel %vm198, %v2966, 0
      %v3017 = vsel %vm198, %v2967, 0
      %v3020 = vsel %vm198, %v2968, 0
      %v3023 = vsel %vm198, %v2969, 0
      %v3026 = vsel %vm198, %v2970, 0
      %v3029 = vsel %vm198, %v2971, 0
      %v3032 = vsel %vm198, %v2972, 0
      %v3035 = vsel %vm198, %v2973, 0
      %v3038 = vsel %vm198, %v2974, 0
      %v3041 = vsel %vm198, %v2975, 0
      %v3044 = vsel %vm198, %v2976, 0
      %v3047 = vsel %vm198, %v2977, 0
      %v3050 = vsel %vm198, %v2978, 0
      %v3053 = vsel %vm198, %v2979, 0
      %v3056 = vsel %vm198, %v2980, 0
      %v3059 = vsel %vm198, %v2981, 0
      %v3062 = vsel %vm198, %v2982, 0
      %v3065 = vsel %vm198, %v2983, 0
      %v3068 = vsel %vm198, %v2984, 0
      %v3071 = vsel %vm198, %v2985, 0
      %v3074 = vsel %vm198, %v2986, 0
      %v3077 = vsel %vm198, %v2987, 0
      %v3080 = vsel %vm198, %v2988, 0
      %v3083 = vsel %vm198, %v2989, 0
      %v3086 = vsel %vm198, %v2990, 0
      %v3089 = vsel %vm484, %v2991, 0
      %3091 = vmatpush.msra.mxu0 0.0
      %3092 = vmatpush.msra.mxu0 0.0
      %3093 = vmatpush.msra.mxu0 0.0
      %3094 = vmatpush.msra.mxu0 0.0
      %3095 = vmatpush.msra.mxu0 0.0
      %3096 = vmatpush.msra.mxu0 0.0
      %3097 = vmatpush.msra.mxu0 0.0
      %3098 = vmatpush.msra.mxu0 0.0
      %3099 = vmatpush.msra.mxu0 0.0
      %3100 = vmatpush.msra.mxu0 0.0
      %3101 = vmatpush.msra.mxu0 0.0
      %3102 = vmatpush.msra.mxu0 0.0
      %3103 = vmatpush.msra.mxu0 0.0
      %3104 = vmatpush.msra.mxu0 0.0
      %3105 = vmatpush.msra.mxu0 0.0
      %3106 = vmatpush.msra.mxu0 %v3089
      %3107 = vmatmul.f32.gmra.mxu0 %v2993
      %v3108 = vpop.f32.mrf.mxu0
      %v3109 = vadd.f32 0.0, %v3108
      %3110 = vmatmul.f32.gmra.mxu0 %v2996
      %v3111 = vpop.f32.mrf.mxu0
      %v3112 = vadd.f32 0.0, %v3111
      %3113 = vmatmul.f32.gmra.mxu0 %v2999
      %v3114 = vpop.f32.mrf.mxu0
      %v3115 = vadd.f32 0.0, %v3114
      %3116 = vmatmul.f32.gmra.mxu0 %v3002
      %v3117 = vpop.f32.mrf.mxu0
      %v3118 = vadd.f32 0.0, %v3117
      %3119 = vmatmul.f32.gmra.mxu0 %v3005
      %v3120 = vpop.f32.mrf.mxu0
      %v3121 = vadd.f32 0.0, %v3120
      %3122 = vmatmul.f32.gmra.mxu0 %v3008
      %v3123 = vpop.f32.mrf.mxu0
      %v3124 = vadd.f32 0.0, %v3123
      %3125 = vmatmul.f32.gmra.mxu0 %v3011
      %v3126 = vpop.f32.mrf.mxu0
      %v3127 = vadd.f32 0.0, %v3126
      %3128 = vmatmul.f32.gmra.mxu0 %v3014
      %v3129 = vpop.f32.mrf.mxu0
      %v3130 = vadd.f32 0.0, %v3129
      %3131 = vmatmul.f32.gmra.mxu0 %v3017
      %v3132 = vpop.f32.mrf.mxu0
      %v3133 = vadd.f32 0.0, %v3132
      %3134 = vmatmul.f32.gmra.mxu0 %v3020
      %v3135 = vpop.f32.mrf.mxu0
      %v3136 = vadd.f32 0.0, %v3135
      %3137 = vmatmul.f32.gmra.mxu0 %v3023
      %v3138 = vpop.f32.mrf.mxu0
      %v3139 = vadd.f32 0.0, %v3138
      %3140 = vmatmul.f32.gmra.mxu0 %v3026
      %v3141 = vpop.f32.mrf.mxu0
      %v3142 = vadd.f32 0.0, %v3141
      %3143 = vmatmul.f32.gmra.mxu0 %v3029
      %v3144 = vpop.f32.mrf.mxu0
      %v3145 = vadd.f32 0.0, %v3144
      %3146 = vmatmul.f32.gmra.mxu0 %v3032
      %v3147 = vpop.f32.mrf.mxu0
      %v3148 = vadd.f32 0.0, %v3147
      %3149 = vmatmul.f32.gmra.mxu0 %v3035
      %v3150 = vpop.f32.mrf.mxu0
      %v3151 = vadd.f32 0.0, %v3150
      %3152 = vmatmul.f32.gmra.mxu0 %v3038
      %v3153 = vpop.f32.mrf.mxu0
      %v3154 = vadd.f32 0.0, %v3153
      %3155 = vmatmul.f32.gmra.mxu0 %v3041
      %v3156 = vpop.f32.mrf.mxu0
      %v3157 = vadd.f32 0.0, %v3156
      %3158 = vmatmul.f32.gmra.mxu0 %v3044
      %v3159 = vpop.f32.mrf.mxu0
      %v3160 = vadd.f32 0.0, %v3159
      %3161 = vmatmul.f32.gmra.mxu0 %v3047
      %v3162 = vpop.f32.mrf.mxu0
      %v3163 = vadd.f32 0.0, %v3162
      %3164 = vmatmul.f32.gmra.mxu0 %v3050
      %v3165 = vpop.f32.mrf.mxu0
      %v3166 = vadd.f32 0.0, %v3165
      %3167 = vmatmul.f32.gmra.mxu0 %v3053
      %v3168 = vpop.f32.mrf.mxu0
      %v3169 = vadd.f32 0.0, %v3168
      %3170 = vmatmul.f32.gmra.mxu0 %v3056
      %v3171 = vpop.f32.mrf.mxu0
      %v3172 = vadd.f32 0.0, %v3171
      %3173 = vmatmul.f32.gmra.mxu0 %v3059
      %v3174 = vpop.f32.mrf.mxu0
      %v3175 = vadd.f32 0.0, %v3174
      %3176 = vmatmul.f32.gmra.mxu0 %v3062
      %v3177 = vpop.f32.mrf.mxu0
      %v3178 = vadd.f32 0.0, %v3177
      %3179 = vmatmul.f32.gmra.mxu0 %v3065
      %v3180 = vpop.f32.mrf.mxu0
      %v3181 = vadd.f32 0.0, %v3180
      %3182 = vmatmul.f32.gmra.mxu0 %v3068
      %v3183 = vpop.f32.mrf.mxu0
      %v3184 = vadd.f32 0.0, %v3183
      %3185 = vmatmul.f32.gmra.mxu0 %v3071
      %v3186 = vpop.f32.mrf.mxu0
      %v3187 = vadd.f32 0.0, %v3186
      %3188 = vmatmul.f32.gmra.mxu0 %v3074
      %v3189 = vpop.f32.mrf.mxu0
      %v3190 = vadd.f32 0.0, %v3189
      %3191 = vmatmul.f32.gmra.mxu0 %v3077
      %v3192 = vpop.f32.mrf.mxu0
      %v3193 = vadd.f32 0.0, %v3192
      %3194 = vmatmul.f32.gmra.mxu0 %v3080
      %v3195 = vpop.f32.mrf.mxu0
      %v3196 = vadd.f32 0.0, %v3195
      %3197 = vmatmul.f32.gmra.mxu0 %v3083
      %v3198 = vpop.f32.mrf.mxu0
      %v3199 = vadd.f32 0.0, %v3198
      %3200 = vmatmul.f32.gmra.mxu0 %v3086
      %v3201 = vpop.f32.mrf.mxu0
      %v3202 = vadd.f32 0.0, %v3201
      %3203 = vdwg.mxu0
      %v3205 = vsel %vm198, %v2926, 0
      %v3208 = vsel %vm198, %v2927, 0
      %v3211 = vsel %vm198, %v2928, 0
      %v3214 = vsel %vm198, %v2929, 0
      %v3217 = vsel %vm198, %v2930, 0
      %v3220 = vsel %vm198, %v2931, 0
      %v3223 = vsel %vm198, %v2932, 0
      %v3226 = vsel %vm198, %v2933, 0
      %v3229 = vsel %vm198, %v2934, 0
      %v3232 = vsel %vm198, %v2935, 0
      %v3235 = vsel %vm198, %v2936, 0
      %v3238 = vsel %vm198, %v2937, 0
      %v3241 = vsel %vm198, %v2938, 0
      %v3244 = vsel %vm198, %v2939, 0
      %v3247 = vsel %vm198, %v2940, 0
      %v3250 = vsel %vm198, %v2941, 0
      %v3253 = vsel %vm198, %v2942, 0
      %v3256 = vsel %vm198, %v2943, 0
      %v3259 = vsel %vm198, %v2944, 0
      %v3262 = vsel %vm198, %v2945, 0
      %v3265 = vsel %vm198, %v2946, 0
      %v3268 = vsel %vm198, %v2947, 0
      %v3271 = vsel %vm198, %v2948, 0
      %v3274 = vsel %vm198, %v2949, 0
      %v3277 = vsel %vm198, %v2950, 0
      %v3280 = vsel %vm198, %v2951, 0
      %v3283 = vsel %vm198, %v2952, 0
      %v3286 = vsel %vm198, %v2953, 0
      %v3289 = vsel %vm198, %v2954, 0
      %v3292 = vsel %vm198, %v2955, 0
      %v3295 = vsel %vm198, %v2956, 0
      %v3298 = vsel %vm198, %v2957, 0
      %v3301 = vsel %vm484, %v2958, 0
      %3303 = vmatpush.msra.mxu0 0.0
      %3304 = vmatpush.msra.mxu0 0.0
      %3305 = vmatpush.msra.mxu0 0.0
      %3306 = vmatpush.msra.mxu0 0.0
      %3307 = vmatpush.msra.mxu0 0.0
      %3308 = vmatpush.msra.mxu0 0.0
      %3309 = vmatpush.msra.mxu0 0.0
      %3310 = vmatpush.msra.mxu0 0.0
      %3311 = vmatpush.msra.mxu0 0.0
      %3312 = vmatpush.msra.mxu0 0.0
      %3313 = vmatpush.msra.mxu0 0.0
      %3314 = vmatpush.msra.mxu0 0.0
      %3315 = vmatpush.msra.mxu0 0.0
      %3316 = vmatpush.msra.mxu0 0.0
      %3317 = vmatpush.msra.mxu0 0.0
      %3318 = vmatpush.msra.mxu0 %v3301
      %3319 = vmatmul.f32.gmra.mxu0 %v3205
      %v3320 = vpop.f32.mrf.mxu0
      %v3321 = vadd.f32 %v3109, %v3320
      %3322 = vmatmul.f32.gmra.mxu0 %v3208
      %v3323 = vpop.f32.mrf.mxu0
      %v3324 = vadd.f32 %v3112, %v3323
      %3325 = vmatmul.f32.gmra.mxu0 %v3211
      %v3326 = vpop.f32.mrf.mxu0
      %v3327 = vadd.f32 %v3115, %v3326
      %3328 = vmatmul.f32.gmra.mxu0 %v3214
      %v3329 = vpop.f32.mrf.mxu0
      %v3330 = vadd.f32 %v3118, %v3329
      %3331 = vmatmul.f32.gmra.mxu0 %v3217
      %v3332 = vpop.f32.mrf.mxu0
      %v3333 = vadd.f32 %v3121, %v3332
      %3334 = vmatmul.f32.gmra.mxu0 %v3220
      %v3335 = vpop.f32.mrf.mxu0
      %v3336 = vadd.f32 %v3124, %v3335
      %3337 = vmatmul.f32.gmra.mxu0 %v3223
      %v3338 = vpop.f32.mrf.mxu0
      %v3339 = vadd.f32 %v3127, %v3338
      %3340 = vmatmul.f32.gmra.mxu0 %v3226
      %v3341 = vpop.f32.mrf.mxu0
      %v3342 = vadd.f32 %v3130, %v3341
      %3343 = vmatmul.f32.gmra.mxu0 %v3229
      %v3344 = vpop.f32.mrf.mxu0
      %v3345 = vadd.f32 %v3133, %v3344
      %3346 = vmatmul.f32.gmra.mxu0 %v3232
      %v3347 = vpop.f32.mrf.mxu0
      %v3348 = vadd.f32 %v3136, %v3347
      %3349 = vmatmul.f32.gmra.mxu0 %v3235
      %v3350 = vpop.f32.mrf.mxu0
      %v3351 = vadd.f32 %v3139, %v3350
      %3352 = vmatmul.f32.gmra.mxu0 %v3238
      %v3353 = vpop.f32.mrf.mxu0
      %v3354 = vadd.f32 %v3142, %v3353
      %3355 = vmatmul.f32.gmra.mxu0 %v3241
      %v3356 = vpop.f32.mrf.mxu0
      %v3357 = vadd.f32 %v3145, %v3356
      %3358 = vmatmul.f32.gmra.mxu0 %v3244
      %v3359 = vpop.f32.mrf.mxu0
      %v3360 = vadd.f32 %v3148, %v3359
      %3361 = vmatmul.f32.gmra.mxu0 %v3247
      %v3362 = vpop.f32.mrf.mxu0
      %v3363 = vadd.f32 %v3151, %v3362
      %3364 = vmatmul.f32.gmra.mxu0 %v3250
      %v3365 = vpop.f32.mrf.mxu0
      %v3366 = vadd.f32 %v3154, %v3365
      %3367 = vmatmul.f32.gmra.mxu0 %v3253
      %v3368 = vpop.f32.mrf.mxu0
      %v3369 = vadd.f32 %v3157, %v3368
      %3370 = vmatmul.f32.gmra.mxu0 %v3256
      %v3371 = vpop.f32.mrf.mxu0
      %v3372 = vadd.f32 %v3160, %v3371
      %3373 = vmatmul.f32.gmra.mxu0 %v3259
      %v3374 = vpop.f32.mrf.mxu0
      %v3375 = vadd.f32 %v3163, %v3374
      %3376 = vmatmul.f32.gmra.mxu0 %v3262
      %v3377 = vpop.f32.mrf.mxu0
      %v3378 = vadd.f32 %v3166, %v3377
      %3379 = vmatmul.f32.gmra.mxu0 %v3265
      %v3380 = vpop.f32.mrf.mxu0
      %v3381 = vadd.f32 %v3169, %v3380
      %3382 = vmatmul.f32.gmra.mxu0 %v3268
      %v3383 = vpop.f32.mrf.mxu0
      %v3384 = vadd.f32 %v3172, %v3383
      %3385 = vmatmul.f32.gmra.mxu0 %v3271
      %v3386 = vpop.f32.mrf.mxu0
      %v3387 = vadd.f32 %v3175, %v3386
      %3388 = vmatmul.f32.gmra.mxu0 %v3274
      %v3389 = vpop.f32.mrf.mxu0
      %v3390 = vadd.f32 %v3178, %v3389
      %3391 = vmatmul.f32.gmra.mxu0 %v3277
      %v3392 = vpop.f32.mrf.mxu0
      %v3393 = vadd.f32 %v3181, %v3392
      %3394 = vmatmul.f32.gmra.mxu0 %v3280
      %v3395 = vpop.f32.mrf.mxu0
      %v3396 = vadd.f32 %v3184, %v3395
      %3397 = vmatmul.f32.gmra.mxu0 %v3283
      %v3398 = vpop.f32.mrf.mxu0
      %v3399 = vadd.f32 %v3187, %v3398
      %3400 = vmatmul.f32.gmra.mxu0 %v3286
      %v3401 = vpop.f32.mrf.mxu0
      %v3402 = vadd.f32 %v3190, %v3401
      %3403 = vmatmul.f32.gmra.mxu0 %v3289
      %v3404 = vpop.f32.mrf.mxu0
      %v3405 = vadd.f32 %v3193, %v3404
      %3406 = vmatmul.f32.gmra.mxu0 %v3292
      %v3407 = vpop.f32.mrf.mxu0
      %v3408 = vadd.f32 %v3196, %v3407
      %3409 = vmatmul.f32.gmra.mxu0 %v3295
      %v3410 = vpop.f32.mrf.mxu0
      %v3411 = vadd.f32 %v3199, %v3410
      %3412 = vmatmul.f32.gmra.mxu0 %v3298
      %v3413 = vpop.f32.mrf.mxu0
      %v3414 = vadd.f32 %v3202, %v3413
      %3415 = vdwg.mxu0
      %v3416 = vld [vmem:[#allocation2 + $0x2] sm:$0xff]
      %v3417 = vld [vmem:[#allocation2 + $0xa] sm:$0xff]
      %v3418 = vld [vmem:[#allocation2 + $0x1a] sm:$0xff]
      %v3419 = vld [vmem:[#allocation2 + $0x22] sm:$0xff]
      %v3420 = vld [vmem:[#allocation2 + $0x32] sm:$0xff]
      %v3421 = vld [vmem:[#allocation2 + $0x3a] sm:$0xff]
      %v3422 = vld [vmem:[#allocation2 + $0x4a] sm:$0xff]
      %v3423 = vld [vmem:[#allocation2 + $0x52] sm:$0xff]
      %v3424 = vld [vmem:[#allocation2 + $0x62] sm:$0xff]
      %v3425 = vld [vmem:[#allocation2 + $0x6a] sm:$0xff]
      %v3426 = vld [vmem:[#allocation2 + $0x7a] sm:$0xff]
      %v3427 = vld [vmem:[#allocation2 + $0x82] sm:$0xff]
      %v3428 = vld [vmem:[#allocation2 + $0x92] sm:$0xff]
      %v3429 = vld [vmem:[#allocation2 + $0x9a] sm:$0xff]
      %v3430 = vld [vmem:[#allocation2 + $0xaa] sm:$0xff]
      %v3431 = vld [vmem:[#allocation2 + $0xb2] sm:$0xff]
      %v3432 = vld [vmem:[#allocation2 + $0xc2] sm:$0xff]
      %v3433 = vld [vmem:[#allocation2 + $0xca] sm:$0xff]
      %v3434 = vld [vmem:[#allocation2 + $0xda] sm:$0xff]
      %v3435 = vld [vmem:[#allocation2 + $0xe2] sm:$0xff]
      %v3436 = vld [vmem:[#allocation2 + $0xf2] sm:$0xff]
      %v3437 = vld [vmem:[#allocation2 + $0xfa] sm:$0xff]
      %v3438 = vld [vmem:[#allocation2 + $0x10a] sm:$0xff]
      %v3439 = vld [vmem:[#allocation2 + $0x112] sm:$0xff]
      %v3440 = vld [vmem:[#allocation2 + $0x122] sm:$0xff]
      %v3441 = vld [vmem:[#allocation2 + $0x12a] sm:$0xff]
      %v3442 = vld [vmem:[#allocation2 + $0x13a] sm:$0xff]
      %v3443 = vld [vmem:[#allocation2 + $0x142] sm:$0xff]
      %v3444 = vld [vmem:[#allocation2 + $0x152] sm:$0xff]
      %v3445 = vld [vmem:[#allocation2 + $0x15a] sm:$0xff]
      %v3446 = vld [vmem:[#allocation2 + $0x16a] sm:$0xff]
      %v3447 = vld [vmem:[#allocation2 + $0x172] sm:$0xff]
      %v3448 = vld [vmem:[%s845] sm:$0xf]
      %v3450 = vsel %vm198, %v3416, 0
      %v3453 = vsel %vm198, %v3417, 0
      %v3456 = vsel %vm198, %v3418, 0
      %v3459 = vsel %vm198, %v3419, 0
      %v3462 = vsel %vm198, %v3420, 0
      %v3465 = vsel %vm198, %v3421, 0
      %v3468 = vsel %vm198, %v3422, 0
      %v3471 = vsel %vm198, %v3423, 0
      %v3474 = vsel %vm198, %v3424, 0
      %v3477 = vsel %vm198, %v3425, 0
      %v3480 = vsel %vm198, %v3426, 0
      %v3483 = vsel %vm198, %v3427, 0
      %v3486 = vsel %vm198, %v3428, 0
      %v3489 = vsel %vm198, %v3429, 0
      %v3492 = vsel %vm198, %v3430, 0
      %v3495 = vsel %vm198, %v3431, 0
      %v3498 = vsel %vm198, %v3432, 0
      %v3501 = vsel %vm198, %v3433, 0
      %v3504 = vsel %vm198, %v3434, 0
      %v3507 = vsel %vm198, %v3435, 0
      %v3510 = vsel %vm198, %v3436, 0
      %v3513 = vsel %vm198, %v3437, 0
      %v3516 = vsel %vm198, %v3438, 0
      %v3519 = vsel %vm198, %v3439, 0
      %v3522 = vsel %vm198, %v3440, 0
      %v3525 = vsel %vm198, %v3441, 0
      %v3528 = vsel %vm198, %v3442, 0
      %v3531 = vsel %vm198, %v3443, 0
      %v3534 = vsel %vm198, %v3444, 0
      %v3537 = vsel %vm198, %v3445, 0
      %v3540 = vsel %vm198, %v3446, 0
      %v3543 = vsel %vm198, %v3447, 0
      %v3546 = vsel %vm484, %v3448, 0
      %3548 = vmatpush.msra.mxu0 0.0
      %3549 = vmatpush.msra.mxu0 0.0
      %3550 = vmatpush.msra.mxu0 0.0
      %3551 = vmatpush.msra.mxu0 0.0
      %3552 = vmatpush.msra.mxu0 0.0
      %3553 = vmatpush.msra.mxu0 0.0
      %3554 = vmatpush.msra.mxu0 0.0
      %3555 = vmatpush.msra.mxu0 0.0
      %3556 = vmatpush.msra.mxu0 0.0
      %3557 = vmatpush.msra.mxu0 0.0
      %3558 = vmatpush.msra.mxu0 0.0
      %3559 = vmatpush.msra.mxu0 0.0
      %3560 = vmatpush.msra.mxu0 0.0
      %3561 = vmatpush.msra.mxu0 0.0
      %3562 = vmatpush.msra.mxu0 0.0
      %3563 = vmatpush.msra.mxu0 %v3546
      %3564 = vmatmul.f32.gmra.mxu0 %v3450
      %v3565 = vpop.f32.mrf.mxu0
      %v3566 = vadd.f32 0.0, %v3565
      %3567 = vmatmul.f32.gmra.mxu0 %v3453
      %v3568 = vpop.f32.mrf.mxu0
      %v3569 = vadd.f32 0.0, %v3568
      %3570 = vmatmul.f32.gmra.mxu0 %v3456
      %v3571 = vpop.f32.mrf.mxu0
      %v3572 = vadd.f32 0.0, %v3571
      %3573 = vmatmul.f32.gmra.mxu0 %v3459
      %v3574 = vpop.f32.mrf.mxu0
      %v3575 = vadd.f32 0.0, %v3574
      %3576 = vmatmul.f32.gmra.mxu0 %v3462
      %v3577 = vpop.f32.mrf.mxu0
      %v3578 = vadd.f32 0.0, %v3577
      %3579 = vmatmul.f32.gmra.mxu0 %v3465
      %v3580 = vpop.f32.mrf.mxu0
      %v3581 = vadd.f32 0.0, %v3580
      %3582 = vmatmul.f32.gmra.mxu0 %v3468
      %v3583 = vpop.f32.mrf.mxu0
      %v3584 = vadd.f32 0.0, %v3583
      %3585 = vmatmul.f32.gmra.mxu0 %v3471
      %v3586 = vpop.f32.mrf.mxu0
      %v3587 = vadd.f32 0.0, %v3586
      %3588 = vmatmul.f32.gmra.mxu0 %v3474
      %v3589 = vpop.f32.mrf.mxu0
      %v3590 = vadd.f32 0.0, %v3589
      %3591 = vmatmul.f32.gmra.mxu0 %v3477
      %v3592 = vpop.f32.mrf.mxu0
      %v3593 = vadd.f32 0.0, %v3592
      %3594 = vmatmul.f32.gmra.mxu0 %v3480
      %v3595 = vpop.f32.mrf.mxu0
      %v3596 = vadd.f32 0.0, %v3595
      %3597 = vmatmul.f32.gmra.mxu0 %v3483
      %v3598 = vpop.f32.mrf.mxu0
      %v3599 = vadd.f32 0.0, %v3598
      %3600 = vmatmul.f32.gmra.mxu0 %v3486
      %v3601 = vpop.f32.mrf.mxu0
      %v3602 = vadd.f32 0.0, %v3601
      %3603 = vmatmul.f32.gmra.mxu0 %v3489
      %v3604 = vpop.f32.mrf.mxu0
      %v3605 = vadd.f32 0.0, %v3604
      %3606 = vmatmul.f32.gmra.mxu0 %v3492
      %v3607 = vpop.f32.mrf.mxu0
      %v3608 = vadd.f32 0.0, %v3607
      %3609 = vmatmul.f32.gmra.mxu0 %v3495
      %v3610 = vpop.f32.mrf.mxu0
      %v3611 = vadd.f32 0.0, %v3610
      %3612 = vmatmul.f32.gmra.mxu0 %v3498
      %v3613 = vpop.f32.mrf.mxu0
      %v3614 = vadd.f32 0.0, %v3613
      %3615 = vmatmul.f32.gmra.mxu0 %v3501
      %v3616 = vpop.f32.mrf.mxu0
      %v3617 = vadd.f32 0.0, %v3616
      %3618 = vmatmul.f32.gmra.mxu0 %v3504
      %v3619 = vpop.f32.mrf.mxu0
      %v3620 = vadd.f32 0.0, %v3619
      %3621 = vmatmul.f32.gmra.mxu0 %v3507
      %v3622 = vpop.f32.mrf.mxu0
      %v3623 = vadd.f32 0.0, %v3622
      %3624 = vmatmul.f32.gmra.mxu0 %v3510
      %v3625 = vpop.f32.mrf.mxu0
      %v3626 = vadd.f32 0.0, %v3625
      %3627 = vmatmul.f32.gmra.mxu0 %v3513
      %v3628 = vpop.f32.mrf.mxu0
      %v3629 = vadd.f32 0.0, %v3628
      %3630 = vmatmul.f32.gmra.mxu0 %v3516
      %v3631 = vpop.f32.mrf.mxu0
      %v3632 = vadd.f32 0.0, %v3631
      %3633 = vmatmul.f32.gmra.mxu0 %v3519
      %v3634 = vpop.f32.mrf.mxu0
      %v3635 = vadd.f32 0.0, %v3634
      %3636 = vmatmul.f32.gmra.mxu0 %v3522
      %v3637 = vpop.f32.mrf.mxu0
      %v3638 = vadd.f32 0.0, %v3637
      %3639 = vmatmul.f32.gmra.mxu0 %v3525
      %v3640 = vpop.f32.mrf.mxu0
      %v3641 = vadd.f32 0.0, %v3640
      %3642 = vmatmul.f32.gmra.mxu0 %v3528
      %v3643 = vpop.f32.mrf.mxu0
      %v3644 = vadd.f32 0.0, %v3643
      %3645 = vmatmul.f32.gmra.mxu0 %v3531
      %v3646 = vpop.f32.mrf.mxu0
      %v3647 = vadd.f32 0.0, %v3646
      %3648 = vmatmul.f32.gmra.mxu0 %v3534
      %v3649 = vpop.f32.mrf.mxu0
      %v3650 = vadd.f32 0.0, %v3649
      %3651 = vmatmul.f32.gmra.mxu0 %v3537
      %v3652 = vpop.f32.mrf.mxu0
      %v3653 = vadd.f32 0.0, %v3652
      %3654 = vmatmul.f32.gmra.mxu0 %v3540
      %v3655 = vpop.f32.mrf.mxu0
      %v3656 = vadd.f32 0.0, %v3655
      %3657 = vmatmul.f32.gmra.mxu0 %v3543
      %v3658 = vpop.f32.mrf.mxu0
      %v3659 = vadd.f32 0.0, %v3658
      %3660 = vdwg.mxu0
      %v3661 = vadd.f32 %v3321, %v3566
      %v3662 = vadd.f32 %v3324, %v3569
      %v3663 = vadd.f32 %v3327, %v3572
      %v3664 = vadd.f32 %v3330, %v3575
      %v3665 = vadd.f32 %v3333, %v3578
      %v3666 = vadd.f32 %v3336, %v3581
      %v3667 = vadd.f32 %v3339, %v3584
      %v3668 = vadd.f32 %v3342, %v3587
      %v3669 = vadd.f32 %v3345, %v3590
      %v3670 = vadd.f32 %v3348, %v3593
      %v3671 = vadd.f32 %v3351, %v3596
      %v3672 = vadd.f32 %v3354, %v3599
      %v3673 = vadd.f32 %v3357, %v3602
      %v3674 = vadd.f32 %v3360, %v3605
      %v3675 = vadd.f32 %v3363, %v3608
      %v3676 = vadd.f32 %v3366, %v3611
      %v3677 = vadd.f32 %v3369, %v3614
      %v3678 = vadd.f32 %v3372, %v3617
      %v3679 = vadd.f32 %v3375, %v3620
      %v3680 = vadd.f32 %v3378, %v3623
      %v3681 = vadd.f32 %v3381, %v3626
      %v3682 = vadd.f32 %v3384, %v3629
      %v3683 = vadd.f32 %v3387, %v3632
      %v3684 = vadd.f32 %v3390, %v3635
      %v3685 = vadd.f32 %v3393, %v3638
      %v3686 = vadd.f32 %v3396, %v3641
      %v3687 = vadd.f32 %v3399, %v3644
      %v3688 = vadd.f32 %v3402, %v3647
      %v3689 = vadd.f32 %v3405, %v3650
      %v3690 = vadd.f32 %v3408, %v3653
      %v3691 = vadd.f32 %v3411, %v3656
      %v3692 = vadd.f32 %v3414, %v3659
      %v3693 = vld [vmem:[%s288] sm:$0xff]
      %v3694 = vld [vmem:[%s288 + $0x8] sm:$0xff]
      %v3695 = vld [vmem:[%s288 + $0x18] sm:$0xff]
      %v3696 = vld [vmem:[%s288 + $0x20] sm:$0xff]
      %v3697 = vld [vmem:[%s288 + $0x30] sm:$0xff]
      %v3698 = vld [vmem:[%s288 + $0x38] sm:$0xff]
      %v3699 = vld [vmem:[%s288 + $0x48] sm:$0xff]
      %v3700 = vld [vmem:[%s288 + $0x50] sm:$0xff]
      %v3701 = vld [vmem:[%s288 + $0x60] sm:$0xff]
      %v3702 = vld [vmem:[%s288 + $0x68] sm:$0xff]
      %v3703 = vld [vmem:[%s288 + $0x78] sm:$0xff]
      %v3704 = vld [vmem:[%s288 + $0x80] sm:$0xff]
      %v3705 = vld [vmem:[%s288 + $0x90] sm:$0xff]
      %v3706 = vld [vmem:[%s288 + $0x98] sm:$0xff]
      %v3707 = vld [vmem:[%s288 + $0xa8] sm:$0xff]
      %v3708 = vld [vmem:[%s288 + $0xb0] sm:$0xff]
      %v3709 = vld [vmem:[%s288 + $0xc0] sm:$0xff]
      %v3710 = vld [vmem:[%s288 + $0xc8] sm:$0xff]
      %v3711 = vld [vmem:[%s288 + $0xd8] sm:$0xff]
      %v3712 = vld [vmem:[%s288 + $0xe0] sm:$0xff]
      %v3713 = vld [vmem:[%s288 + $0xf0] sm:$0xff]
      %v3714 = vld [vmem:[%s288 + $0xf8] sm:$0xff]
      %v3715 = vld [vmem:[%s288 + $0x108] sm:$0xff]
      %v3716 = vld [vmem:[%s288 + $0x110] sm:$0xff]
      %v3717 = vld [vmem:[%s288 + $0x120] sm:$0xff]
      %v3718 = vld [vmem:[%s288 + $0x128] sm:$0xff]
      %v3719 = vld [vmem:[%s288 + $0x138] sm:$0xff]
      %v3720 = vld [vmem:[%s288 + $0x140] sm:$0xff]
      %v3721 = vld [vmem:[%s288 + $0x150] sm:$0xff]
      %v3722 = vld [vmem:[%s288 + $0x158] sm:$0xff]
      %v3723 = vld [vmem:[%s288 + $0x168] sm:$0xff]
      %v3724 = vld [vmem:[%s288 + $0x170] sm:$0xff]
      %v3725 = vld [vmem:[%s1123] sm:$0xf]
      %v3727 = vsel %vm198, %v3693, 0
      %v3730 = vsel %vm198, %v3694, 0
      %v3733 = vsel %vm198, %v3695, 0
      %v3736 = vsel %vm198, %v3696, 0
      %v3739 = vsel %vm198, %v3697, 0
      %v3742 = vsel %vm198, %v3698, 0
      %v3745 = vsel %vm198, %v3699, 0
      %v3748 = vsel %vm198, %v3700, 0
      %v3751 = vsel %vm198, %v3701, 0
      %v3754 = vsel %vm198, %v3702, 0
      %v3757 = vsel %vm198, %v3703, 0
      %v3760 = vsel %vm198, %v3704, 0
      %v3763 = vsel %vm198, %v3705, 0
      %v3766 = vsel %vm198, %v3706, 0
      %v3769 = vsel %vm198, %v3707, 0
      %v3772 = vsel %vm198, %v3708, 0
      %v3775 = vsel %vm198, %v3709, 0
      %v3778 = vsel %vm198, %v3710, 0
      %v3781 = vsel %vm198, %v3711, 0
      %v3784 = vsel %vm198, %v3712, 0
      %v3787 = vsel %vm198, %v3713, 0
      %v3790 = vsel %vm198, %v3714, 0
      %v3793 = vsel %vm198, %v3715, 0
      %v3796 = vsel %vm198, %v3716, 0
      %v3799 = vsel %vm198, %v3717, 0
      %v3802 = vsel %vm198, %v3718, 0
      %v3805 = vsel %vm198, %v3719, 0
      %v3808 = vsel %vm198, %v3720, 0
      %v3811 = vsel %vm198, %v3721, 0
      %v3814 = vsel %vm198, %v3722, 0
      %v3817 = vsel %vm198, %v3723, 0
      %v3820 = vsel %vm198, %v3724, 0
      %v3823 = vsel %vm484, %v3725, 0
      %3825 = vmatpush.msra.mxu0 0.0
      %3826 = vmatpush.msra.mxu0 0.0
      %3827 = vmatpush.msra.mxu0 0.0
      %3828 = vmatpush.msra.mxu0 0.0
      %3829 = vmatpush.msra.mxu0 0.0
      %3830 = vmatpush.msra.mxu0 0.0
      %3831 = vmatpush.msra.mxu0 0.0
      %3832 = vmatpush.msra.mxu0 0.0
      %3833 = vmatpush.msra.mxu0 0.0
      %3834 = vmatpush.msra.mxu0 0.0
      %3835 = vmatpush.msra.mxu0 0.0
      %3836 = vmatpush.msra.mxu0 0.0
      %3837 = vmatpush.msra.mxu0 0.0
      %3838 = vmatpush.msra.mxu0 0.0
      %3839 = vmatpush.msra.mxu0 0.0
      %3840 = vmatpush.msra.mxu0 %v3823
      %3841 = vmatmul.f32.gmra.mxu0 %v3727
      %v3842 = vpop.f32.mrf.mxu0
      %v3843 = vadd.f32 0.0, %v3842
      %3844 = vmatmul.f32.gmra.mxu0 %v3730
      %v3845 = vpop.f32.mrf.mxu0
      %v3846 = vadd.f32 0.0, %v3845
      %3847 = vmatmul.f32.gmra.mxu0 %v3733
      %v3848 = vpop.f32.mrf.mxu0
      %v3849 = vadd.f32 0.0, %v3848
      %3850 = vmatmul.f32.gmra.mxu0 %v3736
      %v3851 = vpop.f32.mrf.mxu0
      %v3852 = vadd.f32 0.0, %v3851
      %3853 = vmatmul.f32.gmra.mxu0 %v3739
      %v3854 = vpop.f32.mrf.mxu0
      %v3855 = vadd.f32 0.0, %v3854
      %3856 = vmatmul.f32.gmra.mxu0 %v3742
      %v3857 = vpop.f32.mrf.mxu0
      %v3858 = vadd.f32 0.0, %v3857
      %3859 = vmatmul.f32.gmra.mxu0 %v3745
      %v3860 = vpop.f32.mrf.mxu0
      %v3861 = vadd.f32 0.0, %v3860
      %3862 = vmatmul.f32.gmra.mxu0 %v3748
      %v3863 = vpop.f32.mrf.mxu0
      %v3864 = vadd.f32 0.0, %v3863
      %3865 = vmatmul.f32.gmra.mxu0 %v3751
      %v3866 = vpop.f32.mrf.mxu0
      %v3867 = vadd.f32 0.0, %v3866
      %3868 = vmatmul.f32.gmra.mxu0 %v3754
      %v3869 = vpop.f32.mrf.mxu0
      %v3870 = vadd.f32 0.0, %v3869
      %3871 = vmatmul.f32.gmra.mxu0 %v3757
      %v3872 = vpop.f32.mrf.mxu0
      %v3873 = vadd.f32 0.0, %v3872
      %3874 = vmatmul.f32.gmra.mxu0 %v3760
      %v3875 = vpop.f32.mrf.mxu0
      %v3876 = vadd.f32 0.0, %v3875
      %3877 = vmatmul.f32.gmra.mxu0 %v3763
      %v3878 = vpop.f32.mrf.mxu0
      %v3879 = vadd.f32 0.0, %v3878
      %3880 = vmatmul.f32.gmra.mxu0 %v3766
      %v3881 = vpop.f32.mrf.mxu0
      %v3882 = vadd.f32 0.0, %v3881
      %3883 = vmatmul.f32.gmra.mxu0 %v3769
      %v3884 = vpop.f32.mrf.mxu0
      %v3885 = vadd.f32 0.0, %v3884
      %3886 = vmatmul.f32.gmra.mxu0 %v3772
      %v3887 = vpop.f32.mrf.mxu0
      %v3888 = vadd.f32 0.0, %v3887
      %3889 = vmatmul.f32.gmra.mxu0 %v3775
      %v3890 = vpop.f32.mrf.mxu0
      %v3891 = vadd.f32 0.0, %v3890
      %3892 = vmatmul.f32.gmra.mxu0 %v3778
      %v3893 = vpop.f32.mrf.mxu0
      %v3894 = vadd.f32 0.0, %v3893
      %3895 = vmatmul.f32.gmra.mxu0 %v3781
      %v3896 = vpop.f32.mrf.mxu0
      %v3897 = vadd.f32 0.0, %v3896
      %3898 = vmatmul.f32.gmra.mxu0 %v3784
      %v3899 = vpop.f32.mrf.mxu0
      %v3900 = vadd.f32 0.0, %v3899
      %3901 = vmatmul.f32.gmra.mxu0 %v3787
      %v3902 = vpop.f32.mrf.mxu0
      %v3903 = vadd.f32 0.0, %v3902
      %3904 = vmatmul.f32.gmra.mxu0 %v3790
      %v3905 = vpop.f32.mrf.mxu0
      %v3906 = vadd.f32 0.0, %v3905
      %3907 = vmatmul.f32.gmra.mxu0 %v3793
      %v3908 = vpop.f32.mrf.mxu0
      %v3909 = vadd.f32 0.0, %v3908
      %3910 = vmatmul.f32.gmra.mxu0 %v3796
      %v3911 = vpop.f32.mrf.mxu0
      %v3912 = vadd.f32 0.0, %v3911
      %3913 = vmatmul.f32.gmra.mxu0 %v3799
      %v3914 = vpop.f32.mrf.mxu0
      %v3915 = vadd.f32 0.0, %v3914
      %3916 = vmatmul.f32.gmra.mxu0 %v3802
      %v3917 = vpop.f32.mrf.mxu0
      %v3918 = vadd.f32 0.0, %v3917
      %3919 = vmatmul.f32.gmra.mxu0 %v3805
      %v3920 = vpop.f32.mrf.mxu0
      %v3921 = vadd.f32 0.0, %v3920
      %3922 = vmatmul.f32.gmra.mxu0 %v3808
      %v3923 = vpop.f32.mrf.mxu0
      %v3924 = vadd.f32 0.0, %v3923
      %3925 = vmatmul.f32.gmra.mxu0 %v3811
      %v3926 = vpop.f32.mrf.mxu0
      %v3927 = vadd.f32 0.0, %v3926
      %3928 = vmatmul.f32.gmra.mxu0 %v3814
      %v3929 = vpop.f32.mrf.mxu0
      %v3930 = vadd.f32 0.0, %v3929
      %3931 = vmatmul.f32.gmra.mxu0 %v3817
      %v3932 = vpop.f32.mrf.mxu0
      %v3933 = vadd.f32 0.0, %v3932
      %3934 = vmatmul.f32.gmra.mxu0 %v3820
      %v3935 = vpop.f32.mrf.mxu0
      %v3936 = vadd.f32 0.0, %v3935
      %3937 = vdwg.mxu0
      %v3938 = vadd.f32 %v3661, %v3843
      %v3939 = vadd.f32 %v3662, %v3846
      %v3940 = vadd.f32 %v3663, %v3849
      %v3941 = vadd.f32 %v3664, %v3852
      %v3942 = vadd.f32 %v3665, %v3855
      %v3943 = vadd.f32 %v3666, %v3858
      %v3944 = vadd.f32 %v3667, %v3861
      %v3945 = vadd.f32 %v3668, %v3864
      %v3946 = vadd.f32 %v3669, %v3867
      %v3947 = vadd.f32 %v3670, %v3870
      %v3948 = vadd.f32 %v3671, %v3873
      %v3949 = vadd.f32 %v3672, %v3876
      %v3950 = vadd.f32 %v3673, %v3879
      %v3951 = vadd.f32 %v3674, %v3882
      %v3952 = vadd.f32 %v3675, %v3885
      %v3953 = vadd.f32 %v3676, %v3888
      %v3954 = vadd.f32 %v3677, %v3891
      %v3955 = vadd.f32 %v3678, %v3894
      %v3956 = vadd.f32 %v3679, %v3897
      %v3957 = vadd.f32 %v3680, %v3900
      %v3958 = vadd.f32 %v3681, %v3903
      %v3959 = vadd.f32 %v3682, %v3906
      %v3960 = vadd.f32 %v3683, %v3909
      %v3961 = vadd.f32 %v3684, %v3912
      %v3962 = vadd.f32 %v3685, %v3915
      %v3963 = vadd.f32 %v3686, %v3918
      %v3964 = vadd.f32 %v3687, %v3921
      %v3965 = vadd.f32 %v3688, %v3924
      %v3966 = vadd.f32 %v3689, %v3927
      %v3967 = vadd.f32 %v3690, %v3930
      %v3968 = vadd.f32 %v3691, %v3933
      %v3969 = vadd.f32 %v3692, %v3936
      %v3970 = vld [vmem:[%s288 + $0x1] sm:$0xff]
      %v3971 = vld [vmem:[%s288 + $0x9] sm:$0xff]
      %v3972 = vld [vmem:[%s288 + $0x19] sm:$0xff]
      %v3973 = vld [vmem:[%s288 + $0x21] sm:$0xff]
      %v3974 = vld [vmem:[%s288 + $0x31] sm:$0xff]
      %v3975 = vld [vmem:[%s288 + $0x39] sm:$0xff]
      %v3976 = vld [vmem:[%s288 + $0x49] sm:$0xff]
      %v3977 = vld [vmem:[%s288 + $0x51] sm:$0xff]
      %v3978 = vld [vmem:[%s288 + $0x61] sm:$0xff]
      %v3979 = vld [vmem:[%s288 + $0x69] sm:$0xff]
      %v3980 = vld [vmem:[%s288 + $0x79] sm:$0xff]
      %v3981 = vld [vmem:[%s288 + $0x81] sm:$0xff]
      %v3982 = vld [vmem:[%s288 + $0x91] sm:$0xff]
      %v3983 = vld [vmem:[%s288 + $0x99] sm:$0xff]
      %v3984 = vld [vmem:[%s288 + $0xa9] sm:$0xff]
      %v3985 = vld [vmem:[%s288 + $0xb1] sm:$0xff]
      %v3986 = vld [vmem:[%s288 + $0xc1] sm:$0xff]
      %v3987 = vld [vmem:[%s288 + $0xc9] sm:$0xff]
      %v3988 = vld [vmem:[%s288 + $0xd9] sm:$0xff]
      %v3989 = vld [vmem:[%s288 + $0xe1] sm:$0xff]
      %v3990 = vld [vmem:[%s288 + $0xf1] sm:$0xff]
      %v3991 = vld [vmem:[%s288 + $0xf9] sm:$0xff]
      %v3992 = vld [vmem:[%s288 + $0x109] sm:$0xff]
      %v3993 = vld [vmem:[%s288 + $0x111] sm:$0xff]
      %v3994 = vld [vmem:[%s288 + $0x121] sm:$0xff]
      %v3995 = vld [vmem:[%s288 + $0x129] sm:$0xff]
      %v3996 = vld [vmem:[%s288 + $0x139] sm:$0xff]
      %v3997 = vld [vmem:[%s288 + $0x141] sm:$0xff]
      %v3998 = vld [vmem:[%s288 + $0x151] sm:$0xff]
      %v3999 = vld [vmem:[%s288 + $0x159] sm:$0xff]
      %v4000 = vld [vmem:[%s288 + $0x169] sm:$0xff]
      %v4001 = vld [vmem:[%s288 + $0x171] sm:$0xff]
      %v4002 = vld [vmem:[%s1401] sm:$0xf]
      %v4004 = vsel %vm198, %v3970, 0
      %v4007 = vsel %vm198, %v3971, 0
      %v4010 = vsel %vm198, %v3972, 0
      %v4013 = vsel %vm198, %v3973, 0
      %v4016 = vsel %vm198, %v3974, 0
      %v4019 = vsel %vm198, %v3975, 0
      %v4022 = vsel %vm198, %v3976, 0
      %v4025 = vsel %vm198, %v3977, 0
      %v4028 = vsel %vm198, %v3978, 0
      %v4031 = vsel %vm198, %v3979, 0
      %v4034 = vsel %vm198, %v3980, 0
      %v4037 = vsel %vm198, %v3981, 0
      %v4040 = vsel %vm198, %v3982, 0
      %v4043 = vsel %vm198, %v3983, 0
      %v4046 = vsel %vm198, %v3984, 0
      %v4049 = vsel %vm198, %v3985, 0
      %v4052 = vsel %vm198, %v3986, 0
      %v4055 = vsel %vm198, %v3987, 0
      %v4058 = vsel %vm198, %v3988, 0
      %v4061 = vsel %vm198, %v3989, 0
      %v4064 = vsel %vm198, %v3990, 0
      %v4067 = vsel %vm198, %v3991, 0
      %v4070 = vsel %vm198, %v3992, 0
      %v4073 = vsel %vm198, %v3993, 0
      %v4076 = vsel %vm198, %v3994, 0
      %v4079 = vsel %vm198, %v3995, 0
      %v4082 = vsel %vm198, %v3996, 0
      %v4085 = vsel %vm198, %v3997, 0
      %v4088 = vsel %vm198, %v3998, 0
      %v4091 = vsel %vm198, %v3999, 0
      %v4094 = vsel %vm198, %v4000, 0
      %v4097 = vsel %vm198, %v4001, 0
      %v4100 = vsel %vm484, %v4002, 0
      %4102 = vmatpush.msra.mxu0 0.0
      %4103 = vmatpush.msra.mxu0 0.0
      %4104 = vmatpush.msra.mxu0 0.0
      %4105 = vmatpush.msra.mxu0 0.0
      %4106 = vmatpush.msra.mxu0 0.0
      %4107 = vmatpush.msra.mxu0 0.0
      %4108 = vmatpush.msra.mxu0 0.0
      %4109 = vmatpush.msra.mxu0 0.0
      %4110 = vmatpush.msra.mxu0 0.0
      %4111 = vmatpush.msra.mxu0 0.0
      %4112 = vmatpush.msra.mxu0 0.0
      %4113 = vmatpush.msra.mxu0 0.0
      %4114 = vmatpush.msra.mxu0 0.0
      %4115 = vmatpush.msra.mxu0 0.0
      %4116 = vmatpush.msra.mxu0 0.0
      %4117 = vmatpush.msra.mxu0 %v4100
      %4118 = vmatmul.f32.gmra.mxu0 %v4004
      %v4119 = vpop.f32.mrf.mxu0
      %v4120 = vadd.f32 0.0, %v4119
      %4121 = vmatmul.f32.gmra.mxu0 %v4007
      %v4122 = vpop.f32.mrf.mxu0
      %v4123 = vadd.f32 0.0, %v4122
      %4124 = vmatmul.f32.gmra.mxu0 %v4010
      %v4125 = vpop.f32.mrf.mxu0
      %v4126 = vadd.f32 0.0, %v4125
      %4127 = vmatmul.f32.gmra.mxu0 %v4013
      %v4128 = vpop.f32.mrf.mxu0
      %v4129 = vadd.f32 0.0, %v4128
      %4130 = vmatmul.f32.gmra.mxu0 %v4016
      %v4131 = vpop.f32.mrf.mxu0
      %v4132 = vadd.f32 0.0, %v4131
      %4133 = vmatmul.f32.gmra.mxu0 %v4019
      %v4134 = vpop.f32.mrf.mxu0
      %v4135 = vadd.f32 0.0, %v4134
      %4136 = vmatmul.f32.gmra.mxu0 %v4022
      %v4137 = vpop.f32.mrf.mxu0
      %v4138 = vadd.f32 0.0, %v4137
      %4139 = vmatmul.f32.gmra.mxu0 %v4025
      %v4140 = vpop.f32.mrf.mxu0
      %v4141 = vadd.f32 0.0, %v4140
      %4142 = vmatmul.f32.gmra.mxu0 %v4028
      %v4143 = vpop.f32.mrf.mxu0
      %v4144 = vadd.f32 0.0, %v4143
      %4145 = vmatmul.f32.gmra.mxu0 %v4031
      %v4146 = vpop.f32.mrf.mxu0
      %v4147 = vadd.f32 0.0, %v4146
      %4148 = vmatmul.f32.gmra.mxu0 %v4034
      %v4149 = vpop.f32.mrf.mxu0
      %v4150 = vadd.f32 0.0, %v4149
      %4151 = vmatmul.f32.gmra.mxu0 %v4037
      %v4152 = vpop.f32.mrf.mxu0
      %v4153 = vadd.f32 0.0, %v4152
      %4154 = vmatmul.f32.gmra.mxu0 %v4040
      %v4155 = vpop.f32.mrf.mxu0
      %v4156 = vadd.f32 0.0, %v4155
      %4157 = vmatmul.f32.gmra.mxu0 %v4043
      %v4158 = vpop.f32.mrf.mxu0
      %v4159 = vadd.f32 0.0, %v4158
      %4160 = vmatmul.f32.gmra.mxu0 %v4046
      %v4161 = vpop.f32.mrf.mxu0
      %v4162 = vadd.f32 0.0, %v4161
      %4163 = vmatmul.f32.gmra.mxu0 %v4049
      %v4164 = vpop.f32.mrf.mxu0
      %v4165 = vadd.f32 0.0, %v4164
      %4166 = vmatmul.f32.gmra.mxu0 %v4052
      %v4167 = vpop.f32.mrf.mxu0
      %v4168 = vadd.f32 0.0, %v4167
      %4169 = vmatmul.f32.gmra.mxu0 %v4055
      %v4170 = vpop.f32.mrf.mxu0
      %v4171 = vadd.f32 0.0, %v4170
      %4172 = vmatmul.f32.gmra.mxu0 %v4058
      %v4173 = vpop.f32.mrf.mxu0
      %v4174 = vadd.f32 0.0, %v4173
      %4175 = vmatmul.f32.gmra.mxu0 %v4061
      %v4176 = vpop.f32.mrf.mxu0
      %v4177 = vadd.f32 0.0, %v4176
      %4178 = vmatmul.f32.gmra.mxu0 %v4064
      %v4179 = vpop.f32.mrf.mxu0
      %v4180 = vadd.f32 0.0, %v4179
      %4181 = vmatmul.f32.gmra.mxu0 %v4067
      %v4182 = vpop.f32.mrf.mxu0
      %v4183 = vadd.f32 0.0, %v4182
      %4184 = vmatmul.f32.gmra.mxu0 %v4070
      %v4185 = vpop.f32.mrf.mxu0
      %v4186 = vadd.f32 0.0, %v4185
      %4187 = vmatmul.f32.gmra.mxu0 %v4073
      %v4188 = vpop.f32.mrf.mxu0
      %v4189 = vadd.f32 0.0, %v4188
      %4190 = vmatmul.f32.gmra.mxu0 %v4076
      %v4191 = vpop.f32.mrf.mxu0
      %v4192 = vadd.f32 0.0, %v4191
      %4193 = vmatmul.f32.gmra.mxu0 %v4079
      %v4194 = vpop.f32.mrf.mxu0
      %v4195 = vadd.f32 0.0, %v4194
      %4196 = vmatmul.f32.gmra.mxu0 %v4082
      %v4197 = vpop.f32.mrf.mxu0
      %v4198 = vadd.f32 0.0, %v4197
      %4199 = vmatmul.f32.gmra.mxu0 %v4085
      %v4200 = vpop.f32.mrf.mxu0
      %v4201 = vadd.f32 0.0, %v4200
      %4202 = vmatmul.f32.gmra.mxu0 %v4088
      %v4203 = vpop.f32.mrf.mxu0
      %v4204 = vadd.f32 0.0, %v4203
      %4205 = vmatmul.f32.gmra.mxu0 %v4091
      %v4206 = vpop.f32.mrf.mxu0
      %v4207 = vadd.f32 0.0, %v4206
      %4208 = vmatmul.f32.gmra.mxu0 %v4094
      %v4209 = vpop.f32.mrf.mxu0
      %v4210 = vadd.f32 0.0, %v4209
      %4211 = vmatmul.f32.gmra.mxu0 %v4097
      %v4212 = vpop.f32.mrf.mxu0
      %v4213 = vadd.f32 0.0, %v4212
      %4214 = vdwg.mxu0
      %v4215 = vadd.f32 %v3938, %v4120
      %v4216 = vadd.f32 %v3939, %v4123
      %v4217 = vadd.f32 %v3940, %v4126
      %v4218 = vadd.f32 %v3941, %v4129
      %v4219 = vadd.f32 %v3942, %v4132
      %v4220 = vadd.f32 %v3943, %v4135
      %v4221 = vadd.f32 %v3944, %v4138
      %v4222 = vadd.f32 %v3945, %v4141
      %v4223 = vadd.f32 %v3946, %v4144
      %v4224 = vadd.f32 %v3947, %v4147
      %v4225 = vadd.f32 %v3948, %v4150
      %v4226 = vadd.f32 %v3949, %v4153
      %v4227 = vadd.f32 %v3950, %v4156
      %v4228 = vadd.f32 %v3951, %v4159
      %v4229 = vadd.f32 %v3952, %v4162
      %v4230 = vadd.f32 %v3953, %v4165
      %v4231 = vadd.f32 %v3954, %v4168
      %v4232 = vadd.f32 %v3955, %v4171
      %v4233 = vadd.f32 %v3956, %v4174
      %v4234 = vadd.f32 %v3957, %v4177
      %v4235 = vadd.f32 %v3958, %v4180
      %v4236 = vadd.f32 %v3959, %v4183
      %v4237 = vadd.f32 %v3960, %v4186
      %v4238 = vadd.f32 %v3961, %v4189
      %v4239 = vadd.f32 %v3962, %v4192
      %v4240 = vadd.f32 %v3963, %v4195
      %v4241 = vadd.f32 %v3964, %v4198
      %v4242 = vadd.f32 %v3965, %v4201
      %v4243 = vadd.f32 %v3966, %v4204
      %v4244 = vadd.f32 %v3967, %v4207
      %v4245 = vadd.f32 %v3968, %v4210
      %v4246 = vadd.f32 %v3969, %v4213
      %v4247 = vld [vmem:[%s288 + $0x2] sm:$0xff]
      %v4248 = vld [vmem:[%s288 + $0xa] sm:$0xff]
      %v4249 = vld [vmem:[%s288 + $0x1a] sm:$0xff]
      %v4250 = vld [vmem:[%s288 + $0x22] sm:$0xff]
      %v4251 = vld [vmem:[%s288 + $0x32] sm:$0xff]
      %v4252 = vld [vmem:[%s288 + $0x3a] sm:$0xff]
      %v4253 = vld [vmem:[%s288 + $0x4a] sm:$0xff]
      %v4254 = vld [vmem:[%s288 + $0x52] sm:$0xff]
      %v4255 = vld [vmem:[%s288 + $0x62] sm:$0xff]
      %v4256 = vld [vmem:[%s288 + $0x6a] sm:$0xff]
      %v4257 = vld [vmem:[%s288 + $0x7a] sm:$0xff]
      %v4258 = vld [vmem:[%s288 + $0x82] sm:$0xff]
      %v4259 = vld [vmem:[%s288 + $0x92] sm:$0xff]
      %v4260 = vld [vmem:[%s288 + $0x9a] sm:$0xff]
      %v4261 = vld [vmem:[%s288 + $0xaa] sm:$0xff]
      %v4262 = vld [vmem:[%s288 + $0xb2] sm:$0xff]
      %v4263 = vld [vmem:[%s288 + $0xc2] sm:$0xff]
      %v4264 = vld [vmem:[%s288 + $0xca] sm:$0xff]
      %v4265 = vld [vmem:[%s288 + $0xda] sm:$0xff]
      %v4266 = vld [vmem:[%s288 + $0xe2] sm:$0xff]
      %v4267 = vld [vmem:[%s288 + $0xf2] sm:$0xff]
      %v4268 = vld [vmem:[%s288 + $0xfa] sm:$0xff]
      %v4269 = vld [vmem:[%s288 + $0x10a] sm:$0xff]
      %v4270 = vld [vmem:[%s288 + $0x112] sm:$0xff]
      %v4271 = vld [vmem:[%s288 + $0x122] sm:$0xff]
      %v4272 = vld [vmem:[%s288 + $0x12a] sm:$0xff]
      %v4273 = vld [vmem:[%s288 + $0x13a] sm:$0xff]
      %v4274 = vld [vmem:[%s288 + $0x142] sm:$0xff]
      %v4275 = vld [vmem:[%s288 + $0x152] sm:$0xff]
      %v4276 = vld [vmem:[%s288 + $0x15a] sm:$0xff]
      %v4277 = vld [vmem:[%s288 + $0x16a] sm:$0xff]
      %v4278 = vld [vmem:[%s288 + $0x172] sm:$0xff]
      %v4279 = vld [vmem:[%s1679] sm:$0xf]
      %v4281 = vsel %vm198, %v4247, 0
      %v4284 = vsel %vm198, %v4248, 0
      %v4287 = vsel %vm198, %v4249, 0
      %v4290 = vsel %vm198, %v4250, 0
      %v4293 = vsel %vm198, %v4251, 0
      %v4296 = vsel %vm198, %v4252, 0
      %v4299 = vsel %vm198, %v4253, 0
      %v4302 = vsel %vm198, %v4254, 0
      %v4305 = vsel %vm198, %v4255, 0
      %v4308 = vsel %vm198, %v4256, 0
      %v4311 = vsel %vm198, %v4257, 0
      %v4314 = vsel %vm198, %v4258, 0
      %v4317 = vsel %vm198, %v4259, 0
      %v4320 = vsel %vm198, %v4260, 0
      %v4323 = vsel %vm198, %v4261, 0
      %v4326 = vsel %vm198, %v4262, 0
      %v4329 = vsel %vm198, %v4263, 0
      %v4332 = vsel %vm198, %v4264, 0
      %v4335 = vsel %vm198, %v4265, 0
      %v4338 = vsel %vm198, %v4266, 0
      %v4341 = vsel %vm198, %v4267, 0
      %v4344 = vsel %vm198, %v4268, 0
      %v4347 = vsel %vm198, %v4269, 0
      %v4350 = vsel %vm198, %v4270, 0
      %v4353 = vsel %vm198, %v4271, 0
      %v4356 = vsel %vm198, %v4272, 0
      %v4359 = vsel %vm198, %v4273, 0
      %v4362 = vsel %vm198, %v4274, 0
      %v4365 = vsel %vm198, %v4275, 0
      %v4368 = vsel %vm198, %v4276, 0
      %v4371 = vsel %vm198, %v4277, 0
      %v4374 = vsel %vm198, %v4278, 0
      %v4377 = vsel %vm484, %v4279, 0
      %4379 = vmatpush.msra.mxu0 0.0
      %4380 = vmatpush.msra.mxu0 0.0
      %4381 = vmatpush.msra.mxu0 0.0
      %4382 = vmatpush.msra.mxu0 0.0
      %4383 = vmatpush.msra.mxu0 0.0
      %4384 = vmatpush.msra.mxu0 0.0
      %4385 = vmatpush.msra.mxu0 0.0
      %4386 = vmatpush.msra.mxu0 0.0
      %4387 = vmatpush.msra.mxu0 0.0
      %4388 = vmatpush.msra.mxu0 0.0
      %4389 = vmatpush.msra.mxu0 0.0
      %4390 = vmatpush.msra.mxu0 0.0
      %4391 = vmatpush.msra.mxu0 0.0
      %4392 = vmatpush.msra.mxu0 0.0
      %4393 = vmatpush.msra.mxu0 0.0
      %4394 = vmatpush.msra.mxu0 %v4377
      %4395 = vmatmul.f32.gmra.mxu0 %v4281
      %v4396 = vpop.f32.mrf.mxu0
      %v4397 = vadd.f32 0.0, %v4396
      %4398 = vmatmul.f32.gmra.mxu0 %v4284
      %v4399 = vpop.f32.mrf.mxu0
      %v4400 = vadd.f32 0.0, %v4399
      %4401 = vmatmul.f32.gmra.mxu0 %v4287
      %v4402 = vpop.f32.mrf.mxu0
      %v4403 = vadd.f32 0.0, %v4402
      %4404 = vmatmul.f32.gmra.mxu0 %v4290
      %v4405 = vpop.f32.mrf.mxu0
      %v4406 = vadd.f32 0.0, %v4405
      %4407 = vmatmul.f32.gmra.mxu0 %v4293
      %v4408 = vpop.f32.mrf.mxu0
      %v4409 = vadd.f32 0.0, %v4408
      %4410 = vmatmul.f32.gmra.mxu0 %v4296
      %v4411 = vpop.f32.mrf.mxu0
      %v4412 = vadd.f32 0.0, %v4411
      %4413 = vmatmul.f32.gmra.mxu0 %v4299
      %v4414 = vpop.f32.mrf.mxu0
      %v4415 = vadd.f32 0.0, %v4414
      %4416 = vmatmul.f32.gmra.mxu0 %v4302
      %v4417 = vpop.f32.mrf.mxu0
      %v4418 = vadd.f32 0.0, %v4417
      %4419 = vmatmul.f32.gmra.mxu0 %v4305
      %v4420 = vpop.f32.mrf.mxu0
      %v4421 = vadd.f32 0.0, %v4420
      %4422 = vmatmul.f32.gmra.mxu0 %v4308
      %v4423 = vpop.f32.mrf.mxu0
      %v4424 = vadd.f32 0.0, %v4423
      %4425 = vmatmul.f32.gmra.mxu0 %v4311
      %v4426 = vpop.f32.mrf.mxu0
      %v4427 = vadd.f32 0.0, %v4426
      %4428 = vmatmul.f32.gmra.mxu0 %v4314
      %v4429 = vpop.f32.mrf.mxu0
      %v4430 = vadd.f32 0.0, %v4429
      %4431 = vmatmul.f32.gmra.mxu0 %v4317
      %v4432 = vpop.f32.mrf.mxu0
      %v4433 = vadd.f32 0.0, %v4432
      %4434 = vmatmul.f32.gmra.mxu0 %v4320
      %v4435 = vpop.f32.mrf.mxu0
      %v4436 = vadd.f32 0.0, %v4435
      %4437 = vmatmul.f32.gmra.mxu0 %v4323
      %v4438 = vpop.f32.mrf.mxu0
      %v4439 = vadd.f32 0.0, %v4438
      %4440 = vmatmul.f32.gmra.mxu0 %v4326
      %v4441 = vpop.f32.mrf.mxu0
      %v4442 = vadd.f32 0.0, %v4441
      %4443 = vmatmul.f32.gmra.mxu0 %v4329
      %v4444 = vpop.f32.mrf.mxu0
      %v4445 = vadd.f32 0.0, %v4444
      %4446 = vmatmul.f32.gmra.mxu0 %v4332
      %v4447 = vpop.f32.mrf.mxu0
      %v4448 = vadd.f32 0.0, %v4447
      %4449 = vmatmul.f32.gmra.mxu0 %v4335
      %v4450 = vpop.f32.mrf.mxu0
      %v4451 = vadd.f32 0.0, %v4450
      %4452 = vmatmul.f32.gmra.mxu0 %v4338
      %v4453 = vpop.f32.mrf.mxu0
      %v4454 = vadd.f32 0.0, %v4453
      %4455 = vmatmul.f32.gmra.mxu0 %v4341
      %v4456 = vpop.f32.mrf.mxu0
      %v4457 = vadd.f32 0.0, %v4456
      %4458 = vmatmul.f32.gmra.mxu0 %v4344
      %v4459 = vpop.f32.mrf.mxu0
      %v4460 = vadd.f32 0.0, %v4459
      %4461 = vmatmul.f32.gmra.mxu0 %v4347
      %v4462 = vpop.f32.mrf.mxu0
      %v4463 = vadd.f32 0.0, %v4462
      %4464 = vmatmul.f32.gmra.mxu0 %v4350
      %v4465 = vpop.f32.mrf.mxu0
      %v4466 = vadd.f32 0.0, %v4465
      %4467 = vmatmul.f32.gmra.mxu0 %v4353
      %v4468 = vpop.f32.mrf.mxu0
      %v4469 = vadd.f32 0.0, %v4468
      %4470 = vmatmul.f32.gmra.mxu0 %v4356
      %v4471 = vpop.f32.mrf.mxu0
      %v4472 = vadd.f32 0.0, %v4471
      %4473 = vmatmul.f32.gmra.mxu0 %v4359
      %v4474 = vpop.f32.mrf.mxu0
      %v4475 = vadd.f32 0.0, %v4474
      %4476 = vmatmul.f32.gmra.mxu0 %v4362
      %v4477 = vpop.f32.mrf.mxu0
      %v4478 = vadd.f32 0.0, %v4477
      %4479 = vmatmul.f32.gmra.mxu0 %v4365
      %v4480 = vpop.f32.mrf.mxu0
      %v4481 = vadd.f32 0.0, %v4480
      %4482 = vmatmul.f32.gmra.mxu0 %v4368
      %v4483 = vpop.f32.mrf.mxu0
      %v4484 = vadd.f32 0.0, %v4483
      %4485 = vmatmul.f32.gmra.mxu0 %v4371
      %v4486 = vpop.f32.mrf.mxu0
      %v4487 = vadd.f32 0.0, %v4486
      %4488 = vmatmul.f32.gmra.mxu0 %v4374
      %v4489 = vpop.f32.mrf.mxu0
      %v4490 = vadd.f32 0.0, %v4489
      %4491 = vdwg.mxu0
      %v4492 = vadd.f32 %v4215, %v4397
      %v4493 = vadd.f32 %v4216, %v4400
      %v4494 = vadd.f32 %v4217, %v4403
      %v4495 = vadd.f32 %v4218, %v4406
      %v4496 = vadd.f32 %v4219, %v4409
      %v4497 = vadd.f32 %v4220, %v4412
      %v4498 = vadd.f32 %v4221, %v4415
      %v4499 = vadd.f32 %v4222, %v4418
      %v4500 = vadd.f32 %v4223, %v4421
      %v4501 = vadd.f32 %v4224, %v4424
      %v4502 = vadd.f32 %v4225, %v4427
      %v4503 = vadd.f32 %v4226, %v4430
      %v4504 = vadd.f32 %v4227, %v4433
      %v4505 = vadd.f32 %v4228, %v4436
      %v4506 = vadd.f32 %v4229, %v4439
      %v4507 = vadd.f32 %v4230, %v4442
      %v4508 = vadd.f32 %v4231, %v4445
      %v4509 = vadd.f32 %v4232, %v4448
      %v4510 = vadd.f32 %v4233, %v4451
      %v4511 = vadd.f32 %v4234, %v4454
      %v4512 = vadd.f32 %v4235, %v4457
      %v4513 = vadd.f32 %v4236, %v4460
      %v4514 = vadd.f32 %v4237, %v4463
      %v4515 = vadd.f32 %v4238, %v4466
      %v4516 = vadd.f32 %v4239, %v4469
      %v4517 = vadd.f32 %v4240, %v4472
      %v4518 = vadd.f32 %v4241, %v4475
      %v4519 = vadd.f32 %v4242, %v4478
      %v4520 = vadd.f32 %v4243, %v4481
      %v4521 = vadd.f32 %v4244, %v4484
      %v4522 = vadd.f32 %v4245, %v4487
      %v4523 = vadd.f32 %v4246, %v4490
      %v4524 = vld [vmem:[%s1925] sm:$0xff]
      %v4525 = vld [vmem:[%s1925 + $0x8] sm:$0xff]
      %v4526 = vld [vmem:[%s1925 + $0x18] sm:$0xff]
      %v4527 = vld [vmem:[%s1925 + $0x20] sm:$0xff]
      %v4528 = vld [vmem:[%s1925 + $0x30] sm:$0xff]
      %v4529 = vld [vmem:[%s1925 + $0x38] sm:$0xff]
      %v4530 = vld [vmem:[%s1925 + $0x48] sm:$0xff]
      %v4531 = vld [vmem:[%s1925 + $0x50] sm:$0xff]
      %v4532 = vld [vmem:[%s1925 + $0x60] sm:$0xff]
      %v4533 = vld [vmem:[%s1925 + $0x68] sm:$0xff]
      %v4534 = vld [vmem:[%s1925 + $0x78] sm:$0xff]
      %v4535 = vld [vmem:[%s1925 + $0x80] sm:$0xff]
      %v4536 = vld [vmem:[%s1925 + $0x90] sm:$0xff]
      %v4537 = vld [vmem:[%s1925 + $0x98] sm:$0xff]
      %v4538 = vld [vmem:[%s1925 + $0xa8] sm:$0xff]
      %v4539 = vld [vmem:[%s1925 + $0xb0] sm:$0xff]
      %v4540 = vld [vmem:[%s1925 + $0xc0] sm:$0xff]
      %v4541 = vld [vmem:[%s1925 + $0xc8] sm:$0xff]
      %v4542 = vld [vmem:[%s1925 + $0xd8] sm:$0xff]
      %v4543 = vld [vmem:[%s1925 + $0xe0] sm:$0xff]
      %v4544 = vld [vmem:[%s1925 + $0xf0] sm:$0xff]
      %v4545 = vld [vmem:[%s1925 + $0xf8] sm:$0xff]
      %v4546 = vld [vmem:[%s1925 + $0x108] sm:$0xff]
      %v4547 = vld [vmem:[%s1925 + $0x110] sm:$0xff]
      %v4548 = vld [vmem:[%s1925 + $0x120] sm:$0xff]
      %v4549 = vld [vmem:[%s1925 + $0x128] sm:$0xff]
      %v4550 = vld [vmem:[%s1925 + $0x138] sm:$0xff]
      %v4551 = vld [vmem:[%s1925 + $0x140] sm:$0xff]
      %v4552 = vld [vmem:[%s1925 + $0x150] sm:$0xff]
      %v4553 = vld [vmem:[%s1925 + $0x158] sm:$0xff]
      %v4554 = vld [vmem:[%s1925 + $0x168] sm:$0xff]
      %v4555 = vld [vmem:[%s1925 + $0x170] sm:$0xff]
      %v4556 = vld [vmem:[%s1958] sm:$0xf]
      %v4558 = vsel %vm198, %v4524, 0
      %v4561 = vsel %vm198, %v4525, 0
      %v4564 = vsel %vm198, %v4526, 0
      %v4567 = vsel %vm198, %v4527, 0
      %v4570 = vsel %vm198, %v4528, 0
      %v4573 = vsel %vm198, %v4529, 0
      %v4576 = vsel %vm198, %v4530, 0
      %v4579 = vsel %vm198, %v4531, 0
      %v4582 = vsel %vm198, %v4532, 0
      %v4585 = vsel %vm198, %v4533, 0
      %v4588 = vsel %vm198, %v4534, 0
      %v4591 = vsel %vm198, %v4535, 0
      %v4594 = vsel %vm198, %v4536, 0
      %v4597 = vsel %vm198, %v4537, 0
      %v4600 = vsel %vm198, %v4538, 0
      %v4603 = vsel %vm198, %v4539, 0
      %v4606 = vsel %vm198, %v4540, 0
      %v4609 = vsel %vm198, %v4541, 0
      %v4612 = vsel %vm198, %v4542, 0
      %v4615 = vsel %vm198, %v4543, 0
      %v4618 = vsel %vm198, %v4544, 0
      %v4621 = vsel %vm198, %v4545, 0
      %v4624 = vsel %vm198, %v4546, 0
      %v4627 = vsel %vm198, %v4547, 0
      %v4630 = vsel %vm198, %v4548, 0
      %v4633 = vsel %vm198, %v4549, 0
      %v4636 = vsel %vm198, %v4550, 0
      %v4639 = vsel %vm198, %v4551, 0
      %v4642 = vsel %vm198, %v4552, 0
      %v4645 = vsel %vm198, %v4553, 0
      %v4648 = vsel %vm198, %v4554, 0
      %v4651 = vsel %vm198, %v4555, 0
      %v4654 = vsel %vm484, %v4556, 0
      %4656 = vmatpush.msra.mxu0 0.0
      %4657 = vmatpush.msra.mxu0 0.0
      %4658 = vmatpush.msra.mxu0 0.0
      %4659 = vmatpush.msra.mxu0 0.0
      %4660 = vmatpush.msra.mxu0 0.0
      %4661 = vmatpush.msra.mxu0 0.0
      %4662 = vmatpush.msra.mxu0 0.0
      %4663 = vmatpush.msra.mxu0 0.0
      %4664 = vmatpush.msra.mxu0 0.0
      %4665 = vmatpush.msra.mxu0 0.0
      %4666 = vmatpush.msra.mxu0 0.0
      %4667 = vmatpush.msra.mxu0 0.0
      %4668 = vmatpush.msra.mxu0 0.0
      %4669 = vmatpush.msra.mxu0 0.0
      %4670 = vmatpush.msra.mxu0 0.0
      %4671 = vmatpush.msra.mxu0 %v4654
      %4672 = vmatmul.f32.gmra.mxu0 %v4558
      %v4673 = vpop.f32.mrf.mxu0
      %v4674 = vadd.f32 0.0, %v4673
      %4675 = vmatmul.f32.gmra.mxu0 %v4561
      %v4676 = vpop.f32.mrf.mxu0
      %v4677 = vadd.f32 0.0, %v4676
      %4678 = vmatmul.f32.gmra.mxu0 %v4564
      %v4679 = vpop.f32.mrf.mxu0
      %v4680 = vadd.f32 0.0, %v4679
      %4681 = vmatmul.f32.gmra.mxu0 %v4567
      %v4682 = vpop.f32.mrf.mxu0
      %v4683 = vadd.f32 0.0, %v4682
      %4684 = vmatmul.f32.gmra.mxu0 %v4570
      %v4685 = vpop.f32.mrf.mxu0
      %v4686 = vadd.f32 0.0, %v4685
      %4687 = vmatmul.f32.gmra.mxu0 %v4573
      %v4688 = vpop.f32.mrf.mxu0
      %v4689 = vadd.f32 0.0, %v4688
      %4690 = vmatmul.f32.gmra.mxu0 %v4576
      %v4691 = vpop.f32.mrf.mxu0
      %v4692 = vadd.f32 0.0, %v4691
      %4693 = vmatmul.f32.gmra.mxu0 %v4579
      %v4694 = vpop.f32.mrf.mxu0
      %v4695 = vadd.f32 0.0, %v4694
      %4696 = vmatmul.f32.gmra.mxu0 %v4582
      %v4697 = vpop.f32.mrf.mxu0
      %v4698 = vadd.f32 0.0, %v4697
      %4699 = vmatmul.f32.gmra.mxu0 %v4585
      %v4700 = vpop.f32.mrf.mxu0
      %v4701 = vadd.f32 0.0, %v4700
      %4702 = vmatmul.f32.gmra.mxu0 %v4588
      %v4703 = vpop.f32.mrf.mxu0
      %v4704 = vadd.f32 0.0, %v4703
      %4705 = vmatmul.f32.gmra.mxu0 %v4591
      %v4706 = vpop.f32.mrf.mxu0
      %v4707 = vadd.f32 0.0, %v4706
      %4708 = vmatmul.f32.gmra.mxu0 %v4594
      %v4709 = vpop.f32.mrf.mxu0
      %v4710 = vadd.f32 0.0, %v4709
      %4711 = vmatmul.f32.gmra.mxu0 %v4597
      %v4712 = vpop.f32.mrf.mxu0
      %v4713 = vadd.f32 0.0, %v4712
      %4714 = vmatmul.f32.gmra.mxu0 %v4600
      %v4715 = vpop.f32.mrf.mxu0
      %v4716 = vadd.f32 0.0, %v4715
      %4717 = vmatmul.f32.gmra.mxu0 %v4603
      %v4718 = vpop.f32.mrf.mxu0
      %v4719 = vadd.f32 0.0, %v4718
      %4720 = vmatmul.f32.gmra.mxu0 %v4606
      %v4721 = vpop.f32.mrf.mxu0
      %v4722 = vadd.f32 0.0, %v4721
      %4723 = vmatmul.f32.gmra.mxu0 %v4609
      %v4724 = vpop.f32.mrf.mxu0
      %v4725 = vadd.f32 0.0, %v4724
      %4726 = vmatmul.f32.gmra.mxu0 %v4612
      %v4727 = vpop.f32.mrf.mxu0
      %v4728 = vadd.f32 0.0, %v4727
      %4729 = vmatmul.f32.gmra.mxu0 %v4615
      %v4730 = vpop.f32.mrf.mxu0
      %v4731 = vadd.f32 0.0, %v4730
      %4732 = vmatmul.f32.gmra.mxu0 %v4618
      %v4733 = vpop.f32.mrf.mxu0
      %v4734 = vadd.f32 0.0, %v4733
      %4735 = vmatmul.f32.gmra.mxu0 %v4621
      %v4736 = vpop.f32.mrf.mxu0
      %v4737 = vadd.f32 0.0, %v4736
      %4738 = vmatmul.f32.gmra.mxu0 %v4624
      %v4739 = vpop.f32.mrf.mxu0
      %v4740 = vadd.f32 0.0, %v4739
      %4741 = vmatmul.f32.gmra.mxu0 %v4627
      %v4742 = vpop.f32.mrf.mxu0
      %v4743 = vadd.f32 0.0, %v4742
      %4744 = vmatmul.f32.gmra.mxu0 %v4630
      %v4745 = vpop.f32.mrf.mxu0
      %v4746 = vadd.f32 0.0, %v4745
      %4747 = vmatmul.f32.gmra.mxu0 %v4633
      %v4748 = vpop.f32.mrf.mxu0
      %v4749 = vadd.f32 0.0, %v4748
      %4750 = vmatmul.f32.gmra.mxu0 %v4636
      %v4751 = vpop.f32.mrf.mxu0
      %v4752 = vadd.f32 0.0, %v4751
      %4753 = vmatmul.f32.gmra.mxu0 %v4639
      %v4754 = vpop.f32.mrf.mxu0
      %v4755 = vadd.f32 0.0, %v4754
      %4756 = vmatmul.f32.gmra.mxu0 %v4642
      %v4757 = vpop.f32.mrf.mxu0
      %v4758 = vadd.f32 0.0, %v4757
      %4759 = vmatmul.f32.gmra.mxu0 %v4645
      %v4760 = vpop.f32.mrf.mxu0
      %v4761 = vadd.f32 0.0, %v4760
      %4762 = vmatmul.f32.gmra.mxu0 %v4648
      %v4763 = vpop.f32.mrf.mxu0
      %v4764 = vadd.f32 0.0, %v4763
      %4765 = vmatmul.f32.gmra.mxu0 %v4651
      %v4766 = vpop.f32.mrf.mxu0
      %v4767 = vadd.f32 0.0, %v4766
      %4768 = vdwg.mxu0
      %v4769 = vadd.f32 %v4492, %v4674
      %v4770 = vadd.f32 %v4493, %v4677
      %v4771 = vadd.f32 %v4494, %v4680
      %v4772 = vadd.f32 %v4495, %v4683
      %v4773 = vadd.f32 %v4496, %v4686
      %v4774 = vadd.f32 %v4497, %v4689
      %v4775 = vadd.f32 %v4498, %v4692
      %v4776 = vadd.f32 %v4499, %v4695
      %v4777 = vadd.f32 %v4500, %v4698
      %v4778 = vadd.f32 %v4501, %v4701
      %v4779 = vadd.f32 %v4502, %v4704
      %v4780 = vadd.f32 %v4503, %v4707
      %v4781 = vadd.f32 %v4504, %v4710
      %v4782 = vadd.f32 %v4505, %v4713
      %v4783 = vadd.f32 %v4506, %v4716
      %v4784 = vadd.f32 %v4507, %v4719
      %v4785 = vadd.f32 %v4508, %v4722
      %v4786 = vadd.f32 %v4509, %v4725
      %v4787 = vadd.f32 %v4510, %v4728
      %v4788 = vadd.f32 %v4511, %v4731
      %v4789 = vadd.f32 %v4512, %v4734
      %v4790 = vadd.f32 %v4513, %v4737
      %v4791 = vadd.f32 %v4514, %v4740
      %v4792 = vadd.f32 %v4515, %v4743
      %v4793 = vadd.f32 %v4516, %v4746
      %v4794 = vadd.f32 %v4517, %v4749
      %v4795 = vadd.f32 %v4518, %v4752
      %v4796 = vadd.f32 %v4519, %v4755
      %v4797 = vadd.f32 %v4520, %v4758
      %v4798 = vadd.f32 %v4521, %v4761
      %v4799 = vadd.f32 %v4522, %v4764
      %v4800 = vadd.f32 %v4523, %v4767
      %v4801 = vld [vmem:[%s1925 + $0x1] sm:$0xff]
      %v4802 = vld [vmem:[%s1925 + $0x9] sm:$0xff]
      %v4803 = vld [vmem:[%s1925 + $0x19] sm:$0xff]
      %v4804 = vld [vmem:[%s1925 + $0x21] sm:$0xff]
      %v4805 = vld [vmem:[%s1925 + $0x31] sm:$0xff]
      %v4806 = vld [vmem:[%s1925 + $0x39] sm:$0xff]
      %v4807 = vld [vmem:[%s1925 + $0x49] sm:$0xff]
      %v4808 = vld [vmem:[%s1925 + $0x51] sm:$0xff]
      %v4809 = vld [vmem:[%s1925 + $0x61] sm:$0xff]
      %v4810 = vld [vmem:[%s1925 + $0x69] sm:$0xff]
      %v4811 = vld [vmem:[%s1925 + $0x79] sm:$0xff]
      %v4812 = vld [vmem:[%s1925 + $0x81] sm:$0xff]
      %v4813 = vld [vmem:[%s1925 + $0x91] sm:$0xff]
      %v4814 = vld [vmem:[%s1925 + $0x99] sm:$0xff]
      %v4815 = vld [vmem:[%s1925 + $0xa9] sm:$0xff]
      %v4816 = vld [vmem:[%s1925 + $0xb1] sm:$0xff]
      %v4817 = vld [vmem:[%s1925 + $0xc1] sm:$0xff]
      %v4818 = vld [vmem:[%s1925 + $0xc9] sm:$0xff]
      %v4819 = vld [vmem:[%s1925 + $0xd9] sm:$0xff]
      %v4820 = vld [vmem:[%s1925 + $0xe1] sm:$0xff]
      %v4821 = vld [vmem:[%s1925 + $0xf1] sm:$0xff]
      %v4822 = vld [vmem:[%s1925 + $0xf9] sm:$0xff]
      %v4823 = vld [vmem:[%s1925 + $0x109] sm:$0xff]
      %v4824 = vld [vmem:[%s1925 + $0x111] sm:$0xff]
      %v4825 = vld [vmem:[%s1925 + $0x121] sm:$0xff]
      %v4826 = vld [vmem:[%s1925 + $0x129] sm:$0xff]
      %v4827 = vld [vmem:[%s1925 + $0x139] sm:$0xff]
      %v4828 = vld [vmem:[%s1925 + $0x141] sm:$0xff]
      %v4829 = vld [vmem:[%s1925 + $0x151] sm:$0xff]
      %v4830 = vld [vmem:[%s1925 + $0x159] sm:$0xff]
      %v4831 = vld [vmem:[%s1925 + $0x169] sm:$0xff]
      %v4832 = vld [vmem:[%s1925 + $0x171] sm:$0xff]
      %v4833 = vld [vmem:[%s2236] sm:$0xf]
      %v4835 = vsel %vm198, %v4801, 0
      %v4838 = vsel %vm198, %v4802, 0
      %v4841 = vsel %vm198, %v4803, 0
      %v4844 = vsel %vm198, %v4804, 0
      %v4847 = vsel %vm198, %v4805, 0
      %v4850 = vsel %vm198, %v4806, 0
      %v4853 = vsel %vm198, %v4807, 0
      %v4856 = vsel %vm198, %v4808, 0
      %v4859 = vsel %vm198, %v4809, 0
      %v4862 = vsel %vm198, %v4810, 0
      %v4865 = vsel %vm198, %v4811, 0
      %v4868 = vsel %vm198, %v4812, 0
      %v4871 = vsel %vm198, %v4813, 0
      %v4874 = vsel %vm198, %v4814, 0
      %v4877 = vsel %vm198, %v4815, 0
      %v4880 = vsel %vm198, %v4816, 0
      %v4883 = vsel %vm198, %v4817, 0
      %v4886 = vsel %vm198, %v4818, 0
      %v4889 = vsel %vm198, %v4819, 0
      %v4892 = vsel %vm198, %v4820, 0
      %v4895 = vsel %vm198, %v4821, 0
      %v4898 = vsel %vm198, %v4822, 0
      %v4901 = vsel %vm198, %v4823, 0
      %v4904 = vsel %vm198, %v4824, 0
      %v4907 = vsel %vm198, %v4825, 0
      %v4910 = vsel %vm198, %v4826, 0
      %v4913 = vsel %vm198, %v4827, 0
      %v4916 = vsel %vm198, %v4828, 0
      %v4919 = vsel %vm198, %v4829, 0
      %v4922 = vsel %vm198, %v4830, 0
      %v4925 = vsel %vm198, %v4831, 0
      %v4928 = vsel %vm198, %v4832, 0
      %v4931 = vsel %vm484, %v4833, 0
      %4933 = vmatpush.msra.mxu0 0.0
      %4934 = vmatpush.msra.mxu0 0.0
      %4935 = vmatpush.msra.mxu0 0.0
      %4936 = vmatpush.msra.mxu0 0.0
      %4937 = vmatpush.msra.mxu0 0.0
      %4938 = vmatpush.msra.mxu0 0.0
      %4939 = vmatpush.msra.mxu0 0.0
      %4940 = vmatpush.msra.mxu0 0.0
      %4941 = vmatpush.msra.mxu0 0.0
      %4942 = vmatpush.msra.mxu0 0.0
      %4943 = vmatpush.msra.mxu0 0.0
      %4944 = vmatpush.msra.mxu0 0.0
      %4945 = vmatpush.msra.mxu0 0.0
      %4946 = vmatpush.msra.mxu0 0.0
      %4947 = vmatpush.msra.mxu0 0.0
      %4948 = vmatpush.msra.mxu0 %v4931
      %4949 = vmatmul.f32.gmra.mxu0 %v4835
      %v4950 = vpop.f32.mrf.mxu0
      %v4951 = vadd.f32 0.0, %v4950
      %4952 = vmatmul.f32.gmra.mxu0 %v4838
      %v4953 = vpop.f32.mrf.mxu0
      %v4954 = vadd.f32 0.0, %v4953
      %4955 = vmatmul.f32.gmra.mxu0 %v4841
      %v4956 = vpop.f32.mrf.mxu0
      %v4957 = vadd.f32 0.0, %v4956
      %4958 = vmatmul.f32.gmra.mxu0 %v4844
      %v4959 = vpop.f32.mrf.mxu0
      %v4960 = vadd.f32 0.0, %v4959
      %4961 = vmatmul.f32.gmra.mxu0 %v4847
      %v4962 = vpop.f32.mrf.mxu0
      %v4963 = vadd.f32 0.0, %v4962
      %4964 = vmatmul.f32.gmra.mxu0 %v4850
      %v4965 = vpop.f32.mrf.mxu0
      %v4966 = vadd.f32 0.0, %v4965
      %4967 = vmatmul.f32.gmra.mxu0 %v4853
      %v4968 = vpop.f32.mrf.mxu0
      %v4969 = vadd.f32 0.0, %v4968
      %4970 = vmatmul.f32.gmra.mxu0 %v4856
      %v4971 = vpop.f32.mrf.mxu0
      %v4972 = vadd.f32 0.0, %v4971
      %4973 = vmatmul.f32.gmra.mxu0 %v4859
      %v4974 = vpop.f32.mrf.mxu0
      %v4975 = vadd.f32 0.0, %v4974
      %4976 = vmatmul.f32.gmra.mxu0 %v4862
      %v4977 = vpop.f32.mrf.mxu0
      %v4978 = vadd.f32 0.0, %v4977
      %4979 = vmatmul.f32.gmra.mxu0 %v4865
      %v4980 = vpop.f32.mrf.mxu0
      %v4981 = vadd.f32 0.0, %v4980
      %4982 = vmatmul.f32.gmra.mxu0 %v4868
      %v4983 = vpop.f32.mrf.mxu0
      %v4984 = vadd.f32 0.0, %v4983
      %4985 = vmatmul.f32.gmra.mxu0 %v4871
      %v4986 = vpop.f32.mrf.mxu0
      %v4987 = vadd.f32 0.0, %v4986
      %4988 = vmatmul.f32.gmra.mxu0 %v4874
      %v4989 = vpop.f32.mrf.mxu0
      %v4990 = vadd.f32 0.0, %v4989
      %4991 = vmatmul.f32.gmra.mxu0 %v4877
      %v4992 = vpop.f32.mrf.mxu0
      %v4993 = vadd.f32 0.0, %v4992
      %4994 = vmatmul.f32.gmra.mxu0 %v4880
      %v4995 = vpop.f32.mrf.mxu0
      %v4996 = vadd.f32 0.0, %v4995
      %4997 = vmatmul.f32.gmra.mxu0 %v4883
      %v4998 = vpop.f32.mrf.mxu0
      %v4999 = vadd.f32 0.0, %v4998
      %5000 = vmatmul.f32.gmra.mxu0 %v4886
      %v5001 = vpop.f32.mrf.mxu0
      %v5002 = vadd.f32 0.0, %v5001
      %5003 = vmatmul.f32.gmra.mxu0 %v4889
      %v5004 = vpop.f32.mrf.mxu0
      %v5005 = vadd.f32 0.0, %v5004
      %5006 = vmatmul.f32.gmra.mxu0 %v4892
      %v5007 = vpop.f32.mrf.mxu0
      %v5008 = vadd.f32 0.0, %v5007
      %5009 = vmatmul.f32.gmra.mxu0 %v4895
      %v5010 = vpop.f32.mrf.mxu0
      %v5011 = vadd.f32 0.0, %v5010
      %5012 = vmatmul.f32.gmra.mxu0 %v4898
      %v5013 = vpop.f32.mrf.mxu0
      %v5014 = vadd.f32 0.0, %v5013
      %5015 = vmatmul.f32.gmra.mxu0 %v4901
      %v5016 = vpop.f32.mrf.mxu0
      %v5017 = vadd.f32 0.0, %v5016
      %5018 = vmatmul.f32.gmra.mxu0 %v4904
      %v5019 = vpop.f32.mrf.mxu0
      %v5020 = vadd.f32 0.0, %v5019
      %5021 = vmatmul.f32.gmra.mxu0 %v4907
      %v5022 = vpop.f32.mrf.mxu0
      %v5023 = vadd.f32 0.0, %v5022
      %5024 = vmatmul.f32.gmra.mxu0 %v4910
      %v5025 = vpop.f32.mrf.mxu0
      %v5026 = vadd.f32 0.0, %v5025
      %5027 = vmatmul.f32.gmra.mxu0 %v4913
      %v5028 = vpop.f32.mrf.mxu0
      %v5029 = vadd.f32 0.0, %v5028
      %5030 = vmatmul.f32.gmra.mxu0 %v4916
      %v5031 = vpop.f32.mrf.mxu0
      %v5032 = vadd.f32 0.0, %v5031
      %5033 = vmatmul.f32.gmra.mxu0 %v4919
      %v5034 = vpop.f32.mrf.mxu0
      %v5035 = vadd.f32 0.0, %v5034
      %5036 = vmatmul.f32.gmra.mxu0 %v4922
      %v5037 = vpop.f32.mrf.mxu0
      %v5038 = vadd.f32 0.0, %v5037
      %5039 = vmatmul.f32.gmra.mxu0 %v4925
      %v5040 = vpop.f32.mrf.mxu0
      %v5041 = vadd.f32 0.0, %v5040
      %5042 = vmatmul.f32.gmra.mxu0 %v4928
      %v5043 = vpop.f32.mrf.mxu0
      %v5044 = vadd.f32 0.0, %v5043
      %5045 = vdwg.mxu0
      %v5046 = vadd.f32 %v4769, %v4951
      %v5047 = vadd.f32 %v4770, %v4954
      %v5048 = vadd.f32 %v4771, %v4957
      %v5049 = vadd.f32 %v4772, %v4960
      %v5050 = vadd.f32 %v4773, %v4963
      %v5051 = vadd.f32 %v4774, %v4966
      %v5052 = vadd.f32 %v4775, %v4969
      %v5053 = vadd.f32 %v4776, %v4972
      %v5054 = vadd.f32 %v4777, %v4975
      %v5055 = vadd.f32 %v4778, %v4978
      %v5056 = vadd.f32 %v4779, %v4981
      %v5057 = vadd.f32 %v4780, %v4984
      %v5058 = vadd.f32 %v4781, %v4987
      %v5059 = vadd.f32 %v4782, %v4990
      %v5060 = vadd.f32 %v4783, %v4993
      %v5061 = vadd.f32 %v4784, %v4996
      %v5062 = vadd.f32 %v4785, %v4999
      %v5063 = vadd.f32 %v4786, %v5002
      %v5064 = vadd.f32 %v4787, %v5005
      %v5065 = vadd.f32 %v4788, %v5008
      %v5066 = vadd.f32 %v4789, %v5011
      %v5067 = vadd.f32 %v4790, %v5014
      %v5068 = vadd.f32 %v4791, %v5017
      %v5069 = vadd.f32 %v4792, %v5020
      %v5070 = vadd.f32 %v4793, %v5023
      %v5071 = vadd.f32 %v4794, %v5026
      %v5072 = vadd.f32 %v4795, %v5029
      %v5073 = vadd.f32 %v4796, %v5032
      %v5074 = vadd.f32 %v4797, %v5035
      %v5075 = vadd.f32 %v4798, %v5038
      %v5076 = vadd.f32 %v4799, %v5041
      %v5077 = vadd.f32 %v4800, %v5044
      %v5078 = vld [vmem:[%s1925 + $0x2] sm:$0xff]
      %v5079 = vld [vmem:[%s1925 + $0xa] sm:$0xff]
      %v5080 = vld [vmem:[%s1925 + $0x1a] sm:$0xff]
      %v5081 = vld [vmem:[%s1925 + $0x22] sm:$0xff]
      %v5082 = vld [vmem:[%s1925 + $0x32] sm:$0xff]
      %v5083 = vld [vmem:[%s1925 + $0x3a] sm:$0xff]
      %v5084 = vld [vmem:[%s1925 + $0x4a] sm:$0xff]
      %v5085 = vld [vmem:[%s1925 + $0x52] sm:$0xff]
      %v5086 = vld [vmem:[%s1925 + $0x62] sm:$0xff]
      %v5087 = vld [vmem:[%s1925 + $0x6a] sm:$0xff]
      %v5088 = vld [vmem:[%s1925 + $0x7a] sm:$0xff]
      %v5089 = vld [vmem:[%s1925 + $0x82] sm:$0xff]
      %v5090 = vld [vmem:[%s1925 + $0x92] sm:$0xff]
      %v5091 = vld [vmem:[%s1925 + $0x9a] sm:$0xff]
      %v5092 = vld [vmem:[%s1925 + $0xaa] sm:$0xff]
      %v5093 = vld [vmem:[%s1925 + $0xb2] sm:$0xff]
      %v5094 = vld [vmem:[%s1925 + $0xc2] sm:$0xff]
      %v5095 = vld [vmem:[%s1925 + $0xca] sm:$0xff]
      %v5096 = vld [vmem:[%s1925 + $0xda] sm:$0xff]
      %v5097 = vld [vmem:[%s1925 + $0xe2] sm:$0xff]
      %v5098 = vld [vmem:[%s1925 + $0xf2] sm:$0xff]
      %v5099 = vld [vmem:[%s1925 + $0xfa] sm:$0xff]
      %v5100 = vld [vmem:[%s1925 + $0x10a] sm:$0xff]
      %v5101 = vld [vmem:[%s1925 + $0x112] sm:$0xff]
      %v5102 = vld [vmem:[%s1925 + $0x122] sm:$0xff]
      %v5103 = vld [vmem:[%s1925 + $0x12a] sm:$0xff]
      %v5104 = vld [vmem:[%s1925 + $0x13a] sm:$0xff]
      %v5105 = vld [vmem:[%s1925 + $0x142] sm:$0xff]
      %v5106 = vld [vmem:[%s1925 + $0x152] sm:$0xff]
      %v5107 = vld [vmem:[%s1925 + $0x15a] sm:$0xff]
      %v5108 = vld [vmem:[%s1925 + $0x16a] sm:$0xff]
      %v5109 = vld [vmem:[%s1925 + $0x172] sm:$0xff]
      %v5110 = vld [vmem:[%s2514] sm:$0xf]
      %v5112 = vsel %vm198, %v5078, 0
      %v5115 = vsel %vm198, %v5079, 0
      %v5118 = vsel %vm198, %v5080, 0
      %v5121 = vsel %vm198, %v5081, 0
      %v5124 = vsel %vm198, %v5082, 0
      %v5127 = vsel %vm198, %v5083, 0
      %v5130 = vsel %vm198, %v5084, 0
      %v5133 = vsel %vm198, %v5085, 0
      %v5136 = vsel %vm198, %v5086, 0
      %v5139 = vsel %vm198, %v5087, 0
      %v5142 = vsel %vm198, %v5088, 0
      %v5145 = vsel %vm198, %v5089, 0
      %v5148 = vsel %vm198, %v5090, 0
      %v5151 = vsel %vm198, %v5091, 0
      %v5154 = vsel %vm198, %v5092, 0
      %v5157 = vsel %vm198, %v5093, 0
      %v5160 = vsel %vm198, %v5094, 0
      %v5163 = vsel %vm198, %v5095, 0
      %v5166 = vsel %vm198, %v5096, 0
      %v5169 = vsel %vm198, %v5097, 0
      %v5172 = vsel %vm198, %v5098, 0
      %v5175 = vsel %vm198, %v5099, 0
      %v5178 = vsel %vm198, %v5100, 0
      %v5181 = vsel %vm198, %v5101, 0
      %v5184 = vsel %vm198, %v5102, 0
      %v5187 = vsel %vm198, %v5103, 0
      %v5190 = vsel %vm198, %v5104, 0
      %v5193 = vsel %vm198, %v5105, 0
      %v5196 = vsel %vm198, %v5106, 0
      %v5199 = vsel %vm198, %v5107, 0
      %v5202 = vsel %vm198, %v5108, 0
      %v5205 = vsel %vm198, %v5109, 0
      %v5208 = vsel %vm484, %v5110, 0
      %5210 = vmatpush.msra.mxu0 0.0
      %5211 = vmatpush.msra.mxu0 0.0
      %5212 = vmatpush.msra.mxu0 0.0
      %5213 = vmatpush.msra.mxu0 0.0
      %5214 = vmatpush.msra.mxu0 0.0
      %5215 = vmatpush.msra.mxu0 0.0
      %5216 = vmatpush.msra.mxu0 0.0
      %5217 = vmatpush.msra.mxu0 0.0
      %5218 = vmatpush.msra.mxu0 0.0
      %5219 = vmatpush.msra.mxu0 0.0
      %5220 = vmatpush.msra.mxu0 0.0
      %5221 = vmatpush.msra.mxu0 0.0
      %5222 = vmatpush.msra.mxu0 0.0
      %5223 = vmatpush.msra.mxu0 0.0
      %5224 = vmatpush.msra.mxu0 0.0
      %5225 = vmatpush.msra.mxu0 %v5208
      %5226 = vmatmul.f32.gmra.mxu0 %v5112
      %v5227 = vpop.f32.mrf.mxu0
      %v5228 = vadd.f32 0.0, %v5227
      %5229 = vmatmul.f32.gmra.mxu0 %v5115
      %v5230 = vpop.f32.mrf.mxu0
      %v5231 = vadd.f32 0.0, %v5230
      %5232 = vmatmul.f32.gmra.mxu0 %v5118
      %v5233 = vpop.f32.mrf.mxu0
      %v5234 = vadd.f32 0.0, %v5233
      %5235 = vmatmul.f32.gmra.mxu0 %v5121
      %v5236 = vpop.f32.mrf.mxu0
      %v5237 = vadd.f32 0.0, %v5236
      %5238 = vmatmul.f32.gmra.mxu0 %v5124
      %v5239 = vpop.f32.mrf.mxu0
      %v5240 = vadd.f32 0.0, %v5239
      %5241 = vmatmul.f32.gmra.mxu0 %v5127
      %v5242 = vpop.f32.mrf.mxu0
      %v5243 = vadd.f32 0.0, %v5242
      %5244 = vmatmul.f32.gmra.mxu0 %v5130
      %v5245 = vpop.f32.mrf.mxu0
      %v5246 = vadd.f32 0.0, %v5245
      %5247 = vmatmul.f32.gmra.mxu0 %v5133
      %v5248 = vpop.f32.mrf.mxu0
      %v5249 = vadd.f32 0.0, %v5248
      %5250 = vmatmul.f32.gmra.mxu0 %v5136
      %v5251 = vpop.f32.mrf.mxu0
      %v5252 = vadd.f32 0.0, %v5251
      %5253 = vmatmul.f32.gmra.mxu0 %v5139
      %v5254 = vpop.f32.mrf.mxu0
      %v5255 = vadd.f32 0.0, %v5254
      %5256 = vmatmul.f32.gmra.mxu0 %v5142
      %v5257 = vpop.f32.mrf.mxu0
      %v5258 = vadd.f32 0.0, %v5257
      %5259 = vmatmul.f32.gmra.mxu0 %v5145
      %v5260 = vpop.f32.mrf.mxu0
      %v5261 = vadd.f32 0.0, %v5260
      %5262 = vmatmul.f32.gmra.mxu0 %v5148
      %v5263 = vpop.f32.mrf.mxu0
      %v5264 = vadd.f32 0.0, %v5263
      %5265 = vmatmul.f32.gmra.mxu0 %v5151
      %v5266 = vpop.f32.mrf.mxu0
      %v5267 = vadd.f32 0.0, %v5266
      %5268 = vmatmul.f32.gmra.mxu0 %v5154
      %v5269 = vpop.f32.mrf.mxu0
      %v5270 = vadd.f32 0.0, %v5269
      %5271 = vmatmul.f32.gmra.mxu0 %v5157
      %v5272 = vpop.f32.mrf.mxu0
      %v5273 = vadd.f32 0.0, %v5272
      %5274 = vmatmul.f32.gmra.mxu0 %v5160
      %v5275 = vpop.f32.mrf.mxu0
      %v5276 = vadd.f32 0.0, %v5275
      %5277 = vmatmul.f32.gmra.mxu0 %v5163
      %v5278 = vpop.f32.mrf.mxu0
      %v5279 = vadd.f32 0.0, %v5278
      %5280 = vmatmul.f32.gmra.mxu0 %v5166
      %v5281 = vpop.f32.mrf.mxu0
      %v5282 = vadd.f32 0.0, %v5281
      %5283 = vmatmul.f32.gmra.mxu0 %v5169
      %v5284 = vpop.f32.mrf.mxu0
      %v5285 = vadd.f32 0.0, %v5284
      %5286 = vmatmul.f32.gmra.mxu0 %v5172
      %v5287 = vpop.f32.mrf.mxu0
      %v5288 = vadd.f32 0.0, %v5287
      %5289 = vmatmul.f32.gmra.mxu0 %v5175
      %v5290 = vpop.f32.mrf.mxu0
      %v5291 = vadd.f32 0.0, %v5290
      %5292 = vmatmul.f32.gmra.mxu0 %v5178
      %v5293 = vpop.f32.mrf.mxu0
      %v5294 = vadd.f32 0.0, %v5293
      %5295 = vmatmul.f32.gmra.mxu0 %v5181
      %v5296 = vpop.f32.mrf.mxu0
      %v5297 = vadd.f32 0.0, %v5296
      %5298 = vmatmul.f32.gmra.mxu0 %v5184
      %v5299 = vpop.f32.mrf.mxu0
      %v5300 = vadd.f32 0.0, %v5299
      %5301 = vmatmul.f32.gmra.mxu0 %v5187
      %v5302 = vpop.f32.mrf.mxu0
      %v5303 = vadd.f32 0.0, %v5302
      %5304 = vmatmul.f32.gmra.mxu0 %v5190
      %v5305 = vpop.f32.mrf.mxu0
      %v5306 = vadd.f32 0.0, %v5305
      %5307 = vmatmul.f32.gmra.mxu0 %v5193
      %v5308 = vpop.f32.mrf.mxu0
      %v5309 = vadd.f32 0.0, %v5308
      %5310 = vmatmul.f32.gmra.mxu0 %v5196
      %v5311 = vpop.f32.mrf.mxu0
      %v5312 = vadd.f32 0.0, %v5311
      %5313 = vmatmul.f32.gmra.mxu0 %v5199
      %v5314 = vpop.f32.mrf.mxu0
      %v5315 = vadd.f32 0.0, %v5314
      %5316 = vmatmul.f32.gmra.mxu0 %v5202
      %v5317 = vpop.f32.mrf.mxu0
      %v5318 = vadd.f32 0.0, %v5317
      %5319 = vmatmul.f32.gmra.mxu0 %v5205
      %v5320 = vpop.f32.mrf.mxu0
      %v5321 = vadd.f32 0.0, %v5320
      %5322 = vdwg.mxu0
      %v5323 = vadd.f32 %v5046, %v5228
      %v5324 = vadd.f32 %v5047, %v5231
      %v5325 = vadd.f32 %v5048, %v5234
      %v5326 = vadd.f32 %v5049, %v5237
      %v5327 = vadd.f32 %v5050, %v5240
      %v5328 = vadd.f32 %v5051, %v5243
      %v5329 = vadd.f32 %v5052, %v5246
      %v5330 = vadd.f32 %v5053, %v5249
      %v5331 = vadd.f32 %v5054, %v5252
      %v5332 = vadd.f32 %v5055, %v5255
      %v5333 = vadd.f32 %v5056, %v5258
      %v5334 = vadd.f32 %v5057, %v5261
      %v5335 = vadd.f32 %v5058, %v5264
      %v5336 = vadd.f32 %v5059, %v5267
      %v5337 = vadd.f32 %v5060, %v5270
      %v5338 = vadd.f32 %v5061, %v5273
      %v5339 = vadd.f32 %v5062, %v5276
      %v5340 = vadd.f32 %v5063, %v5279
      %v5341 = vadd.f32 %v5064, %v5282
      %v5342 = vadd.f32 %v5065, %v5285
      %v5343 = vadd.f32 %v5066, %v5288
      %v5344 = vadd.f32 %v5067, %v5291
      %v5345 = vadd.f32 %v5068, %v5294
      %v5346 = vadd.f32 %v5069, %v5297
      %v5347 = vadd.f32 %v5070, %v5300
      %v5348 = vadd.f32 %v5071, %v5303
      %v5349 = vadd.f32 %v5072, %v5306
      %v5350 = vadd.f32 %v5073, %v5309
      %v5351 = vadd.f32 %v5074, %v5312
      %v5352 = vadd.f32 %v5075, %v5315
      %v5353 = vadd.f32 %v5076, %v5318
      %v5354 = vadd.f32 %v5077, %v5321
      %v5355 = vmul.f32 %v5323, %v2761
      %v5356 = vmul.f32 %v5324, %v2761
      %v5357 = vmul.f32 %v5325, %v2761
      %v5358 = vmul.f32 %v5326, %v2761
      %v5359 = vmul.f32 %v5327, %v2761
      %v5360 = vmul.f32 %v5328, %v2761
      %v5361 = vmul.f32 %v5329, %v2761
      %v5362 = vmul.f32 %v5330, %v2761
      %v5363 = vmul.f32 %v5331, %v2761
      %v5364 = vmul.f32 %v5332, %v2761
      %v5365 = vmul.f32 %v5333, %v2761
      %v5366 = vmul.f32 %v5334, %v2761
      %v5367 = vmul.f32 %v5335, %v2761
      %v5368 = vmul.f32 %v5336, %v2761
      %v5369 = vmul.f32 %v5337, %v2761
      %v5370 = vmul.f32 %v5338, %v2761
      %v5371 = vmul.f32 %v5339, %v2761
      %v5372 = vmul.f32 %v5340, %v2761
      %v5373 = vmul.f32 %v5341, %v2761
      %v5374 = vmul.f32 %v5342, %v2761
      %v5375 = vmul.f32 %v5343, %v2761
      %v5376 = vmul.f32 %v5344, %v2761
      %v5377 = vmul.f32 %v5345, %v2761
      %v5378 = vmul.f32 %v5346, %v2761
      %v5379 = vmul.f32 %v5347, %v2761
      %v5380 = vmul.f32 %v5348, %v2761
      %v5381 = vmul.f32 %v5349, %v2761
      %v5382 = vmul.f32 %v5350, %v2761
      %v5383 = vmul.f32 %v5351, %v2761
      %v5384 = vmul.f32 %v5352, %v2761
      %v5385 = vmul.f32 %v5353, %v2761
      %v5386 = vmul.f32 %v5354, %v2761
      %v5387 = vadd.f32 %v5355, %v2796
      %v5388 = vadd.f32 %v5356, %v2796
      %v5389 = vadd.f32 %v5357, %v2796
      %v5390 = vadd.f32 %v5358, %v2796
      %v5391 = vadd.f32 %v5359, %v2796
      %v5392 = vadd.f32 %v5360, %v2796
      %v5393 = vadd.f32 %v5361, %v2796
      %v5394 = vadd.f32 %v5362, %v2796
      %v5395 = vadd.f32 %v5363, %v2796
      %v5396 = vadd.f32 %v5364, %v2796
      %v5397 = vadd.f32 %v5365, %v2796
      %v5398 = vadd.f32 %v5366, %v2796
      %v5399 = vadd.f32 %v5367, %v2796
      %v5400 = vadd.f32 %v5368, %v2796
      %v5401 = vadd.f32 %v5369, %v2796
      %v5402 = vadd.f32 %v5370, %v2796
      %v5403 = vadd.f32 %v5371, %v2796
      %v5404 = vadd.f32 %v5372, %v2796
      %v5405 = vadd.f32 %v5373, %v2796
      %v5406 = vadd.f32 %v5374, %v2796
      %v5407 = vadd.f32 %v5375, %v2796
      %v5408 = vadd.f32 %v5376, %v2796
      %v5409 = vadd.f32 %v5377, %v2796
      %v5410 = vadd.f32 %v5378, %v2796
      %v5411 = vadd.f32 %v5379, %v2796
      %v5412 = vadd.f32 %v5380, %v2796
      %v5413 = vadd.f32 %v5381, %v2796
      %v5414 = vadd.f32 %v5382, %v2796
      %v5415 = vadd.f32 %v5383, %v2796
      %v5416 = vadd.f32 %v5384, %v2796
      %v5417 = vadd.f32 %v5385, %v2796
      %v5418 = vadd.f32 %v5386, %v2796
      %v5419 = vmax.f32 %v5387, 0.0
      %v5420 = vmax.f32 %v5388, 0.0
      %v5421 = vmax.f32 %v5389, 0.0
      %v5422 = vmax.f32 %v5390, 0.0
      %v5423 = vmax.f32 %v5391, 0.0
      %v5424 = vmax.f32 %v5392, 0.0
      %v5425 = vmax.f32 %v5393, 0.0
      %v5426 = vmax.f32 %v5394, 0.0
      %v5427 = vmax.f32 %v5395, 0.0
      %v5428 = vmax.f32 %v5396, 0.0
      %v5429 = vmax.f32 %v5397, 0.0
      %v5430 = vmax.f32 %v5398, 0.0
      %v5431 = vmax.f32 %v5399, 0.0
      %v5432 = vmax.f32 %v5400, 0.0
      %v5433 = vmax.f32 %v5401, 0.0
      %v5434 = vmax.f32 %v5402, 0.0
      %v5435 = vmax.f32 %v5403, 0.0
      %v5436 = vmax.f32 %v5404, 0.0
      %v5437 = vmax.f32 %v5405, 0.0
      %v5438 = vmax.f32 %v5406, 0.0
      %v5439 = vmax.f32 %v5407, 0.0
      %v5440 = vmax.f32 %v5408, 0.0
      %v5441 = vmax.f32 %v5409, 0.0
      %v5442 = vmax.f32 %v5410, 0.0
      %v5443 = vmax.f32 %v5411, 0.0
      %v5444 = vmax.f32 %v5412, 0.0
      %v5445 = vmax.f32 %v5413, 0.0
      %v5446 = vmax.f32 %v5414, 0.0
      %v5447 = vmax.f32 %v5415, 0.0
      %v5448 = vmax.f32 %v5416, 0.0
      %v5449 = vmax.f32 %v5417, 0.0
      %v5450 = vmax.f32 %v5418, 0.0
      %v5451 = vadd.f32 %v254, %v5419
      %v5452 = vadd.f32 %v255, %v5420
      %v5453 = vadd.f32 %v256, %v5421
      %v5454 = vadd.f32 %v257, %v5422
      %v5455 = vadd.f32 %v258, %v5423
      %v5456 = vadd.f32 %v259, %v5424
      %v5457 = vadd.f32 %v260, %v5425
      %v5458 = vadd.f32 %v261, %v5426
      %v5459 = vadd.f32 %v262, %v5427
      %v5460 = vadd.f32 %v263, %v5428
      %v5461 = vadd.f32 %v264, %v5429
      %v5462 = vadd.f32 %v265, %v5430
      %v5463 = vadd.f32 %v266, %v5431
      %v5464 = vadd.f32 %v267, %v5432
      %v5465 = vadd.f32 %v268, %v5433
      %v5466 = vadd.f32 %v269, %v5434
      %v5467 = vadd.f32 %v270, %v5435
      %v5468 = vadd.f32 %v271, %v5436
      %v5469 = vadd.f32 %v272, %v5437
      %v5470 = vadd.f32 %v273, %v5438
      %v5471 = vadd.f32 %v274, %v5439
      %v5472 = vadd.f32 %v275, %v5440
      %v5473 = vadd.f32 %v276, %v5441
      %v5474 = vadd.f32 %v277, %v5442
      %v5475 = vadd.f32 %v278, %v5443
      %v5476 = vadd.f32 %v279, %v5444
      %v5477 = vadd.f32 %v280, %v5445
      %v5478 = vadd.f32 %v281, %v5446
      %v5479 = vadd.f32 %v282, %v5447
      %v5480 = vadd.f32 %v283, %v5448
      %v5481 = vadd.f32 %v284, %v5449
      %v5482 = vadd.f32 %v285, %v5450
      %5483 = vst.msk [vmem:[%s288 + $0x1] sm:$0xff] %vm198, %v5451
      %5484 = vst.msk [vmem:[%s288 + $0x9] sm:$0xff] %vm198, %v5452
      %5485 = vst.msk [vmem:[%s288 + $0x19] sm:$0xff] %vm198, %v5453
      %5486 = vst.msk [vmem:[%s288 + $0x21] sm:$0xff] %vm198, %v5454
      %5487 = vst.msk [vmem:[%s288 + $0x31] sm:$0xff] %vm198, %v5455
      %5488 = vst.msk [vmem:[%s288 + $0x39] sm:$0xff] %vm198, %v5456
      %5489 = vst.msk [vmem:[%s288 + $0x49] sm:$0xff] %vm198, %v5457
      %5490 = vst.msk [vmem:[%s288 + $0x51] sm:$0xff] %vm198, %v5458
      %5491 = vst.msk [vmem:[%s288 + $0x61] sm:$0xff] %vm198, %v5459
      %5492 = vst.msk [vmem:[%s288 + $0x69] sm:$0xff] %vm198, %v5460
      %5493 = vst.msk [vmem:[%s288 + $0x79] sm:$0xff] %vm198, %v5461
      %5494 = vst.msk [vmem:[%s288 + $0x81] sm:$0xff] %vm198, %v5462
      %5495 = vst.msk [vmem:[%s288 + $0x91] sm:$0xff] %vm198, %v5463
      %5496 = vst.msk [vmem:[%s288 + $0x99] sm:$0xff] %vm198, %v5464
      %5497 = vst.msk [vmem:[%s288 + $0xa9] sm:$0xff] %vm198, %v5465
      %5498 = vst.msk [vmem:[%s288 + $0xb1] sm:$0xff] %vm198, %v5466
      %5499 = vst.msk [vmem:[%s288 + $0xc1] sm:$0xff] %vm198, %v5467
      %5500 = vst.msk [vmem:[%s288 + $0xc9] sm:$0xff] %vm198, %v5468
      %5501 = vst.msk [vmem:[%s288 + $0xd9] sm:$0xff] %vm198, %v5469
      %5502 = vst.msk [vmem:[%s288 + $0xe1] sm:$0xff] %vm198, %v5470
      %5503 = vst.msk [vmem:[%s288 + $0xf1] sm:$0xff] %vm198, %v5471
      %5504 = vst.msk [vmem:[%s288 + $0xf9] sm:$0xff] %vm198, %v5472
      %5505 = vst.msk [vmem:[%s288 + $0x109] sm:$0xff] %vm198, %v5473
      %5506 = vst.msk [vmem:[%s288 + $0x111] sm:$0xff] %vm198, %v5474
      %5507 = vst.msk [vmem:[%s288 + $0x121] sm:$0xff] %vm198, %v5475
      %5508 = vst.msk [vmem:[%s288 + $0x129] sm:$0xff] %vm198, %v5476
      %5509 = vst.msk [vmem:[%s288 + $0x139] sm:$0xff] %vm198, %v5477
      %5510 = vst.msk [vmem:[%s288 + $0x141] sm:$0xff] %vm198, %v5478
      %5511 = vst.msk [vmem:[%s288 + $0x151] sm:$0xff] %vm198, %v5479
      %5512 = vst.msk [vmem:[%s288 + $0x159] sm:$0xff] %vm198, %v5480
      %5513 = vst.msk [vmem:[%s288 + $0x169] sm:$0xff] %vm198, %v5481
      %5514 = vst.msk [vmem:[%s288 + $0x171] sm:$0xff] %vm198, %v5482
      %v5515 = vld [vmem:[#allocation2] sm:$0xff]
      %v5516 = vld [vmem:[#allocation2 + $0x8] sm:$0xff]
      %v5517 = vld [vmem:[#allocation2 + $0x18] sm:$0xff]
      %v5518 = vld [vmem:[#allocation2 + $0x20] sm:$0xff]
      %v5519 = vld [vmem:[#allocation2 + $0x30] sm:$0xff]
      %v5520 = vld [vmem:[#allocation2 + $0x38] sm:$0xff]
      %v5521 = vld [vmem:[#allocation2 + $0x48] sm:$0xff]
      %v5522 = vld [vmem:[#allocation2 + $0x50] sm:$0xff]
      %v5523 = vld [vmem:[#allocation2 + $0x60] sm:$0xff]
      %v5524 = vld [vmem:[#allocation2 + $0x68] sm:$0xff]
      %v5525 = vld [vmem:[#allocation2 + $0x78] sm:$0xff]
      %v5526 = vld [vmem:[#allocation2 + $0x80] sm:$0xff]
      %v5527 = vld [vmem:[#allocation2 + $0x90] sm:$0xff]
      %v5528 = vld [vmem:[#allocation2 + $0x98] sm:$0xff]
      %v5529 = vld [vmem:[#allocation2 + $0xa8] sm:$0xff]
      %v5530 = vld [vmem:[#allocation2 + $0xb0] sm:$0xff]
      %v5531 = vld [vmem:[#allocation2 + $0xc0] sm:$0xff]
      %v5532 = vld [vmem:[#allocation2 + $0xc8] sm:$0xff]
      %v5533 = vld [vmem:[#allocation2 + $0xd8] sm:$0xff]
      %v5534 = vld [vmem:[#allocation2 + $0xe0] sm:$0xff]
      %v5535 = vld [vmem:[#allocation2 + $0xf0] sm:$0xff]
      %v5536 = vld [vmem:[#allocation2 + $0xf8] sm:$0xff]
      %v5537 = vld [vmem:[#allocation2 + $0x108] sm:$0xff]
      %v5538 = vld [vmem:[#allocation2 + $0x110] sm:$0xff]
      %v5539 = vld [vmem:[#allocation2 + $0x120] sm:$0xff]
      %v5540 = vld [vmem:[#allocation2 + $0x128] sm:$0xff]
      %v5541 = vld [vmem:[#allocation2 + $0x138] sm:$0xff]
      %v5542 = vld [vmem:[#allocation2 + $0x140] sm:$0xff]
      %v5543 = vld [vmem:[#allocation2 + $0x150] sm:$0xff]
      %v5544 = vld [vmem:[#allocation2 + $0x158] sm:$0xff]
      %v5545 = vld [vmem:[#allocation2 + $0x168] sm:$0xff]
      %v5546 = vld [vmem:[#allocation2 + $0x170] sm:$0xff]
      %v5547 = vld [vmem:[%s1] sm:$0xf]
      %v5548 = vld [vmem:[#allocation2 + $0x1] sm:$0xff]
      %v5549 = vld [vmem:[#allocation2 + $0x9] sm:$0xff]
      %v5550 = vld [vmem:[#allocation2 + $0x19] sm:$0xff]
      %v5551 = vld [vmem:[#allocation2 + $0x21] sm:$0xff]
      %v5552 = vld [vmem:[#allocation2 + $0x31] sm:$0xff]
      %v5553 = vld [vmem:[#allocation2 + $0x39] sm:$0xff]
      %v5554 = vld [vmem:[#allocation2 + $0x49] sm:$0xff]
      %v5555 = vld [vmem:[#allocation2 + $0x51] sm:$0xff]
      %v5556 = vld [vmem:[#allocation2 + $0x61] sm:$0xff]
      %v5557 = vld [vmem:[#allocation2 + $0x69] sm:$0xff]
      %v5558 = vld [vmem:[#allocation2 + $0x79] sm:$0xff]
      %v5559 = vld [vmem:[#allocation2 + $0x81] sm:$0xff]
      %v5560 = vld [vmem:[#allocation2 + $0x91] sm:$0xff]
      %v5561 = vld [vmem:[#allocation2 + $0x99] sm:$0xff]
      %v5562 = vld [vmem:[#allocation2 + $0xa9] sm:$0xff]
      %v5563 = vld [vmem:[#allocation2 + $0xb1] sm:$0xff]
      %v5564 = vld [vmem:[#allocation2 + $0xc1] sm:$0xff]
      %v5565 = vld [vmem:[#allocation2 + $0xc9] sm:$0xff]
      %v5566 = vld [vmem:[#allocation2 + $0xd9] sm:$0xff]
      %v5567 = vld [vmem:[#allocation2 + $0xe1] sm:$0xff]
      %v5568 = vld [vmem:[#allocation2 + $0xf1] sm:$0xff]
      %v5569 = vld [vmem:[#allocation2 + $0xf9] sm:$0xff]
      %v5570 = vld [vmem:[#allocation2 + $0x109] sm:$0xff]
      %v5571 = vld [vmem:[#allocation2 + $0x111] sm:$0xff]
      %v5572 = vld [vmem:[#allocation2 + $0x121] sm:$0xff]
      %v5573 = vld [vmem:[#allocation2 + $0x129] sm:$0xff]
      %v5574 = vld [vmem:[#allocation2 + $0x139] sm:$0xff]
      %v5575 = vld [vmem:[#allocation2 + $0x141] sm:$0xff]
      %v5576 = vld [vmem:[#allocation2 + $0x151] sm:$0xff]
      %v5577 = vld [vmem:[#allocation2 + $0x159] sm:$0xff]
      %v5578 = vld [vmem:[#allocation2 + $0x169] sm:$0xff]
      %v5579 = vld [vmem:[#allocation2 + $0x171] sm:$0xff]
      %v5580 = vld [vmem:[%s386] sm:$0xf]
      %v5582 = vsel %vm198, %v5548, 0
      %v5585 = vsel %vm198, %v5549, 0
      %v5588 = vsel %vm198, %v5550, 0
      %v5591 = vsel %vm198, %v5551, 0
      %v5594 = vsel %vm198, %v5552, 0
      %v5597 = vsel %vm198, %v5553, 0
      %v5600 = vsel %vm198, %v5554, 0
      %v5603 = vsel %vm198, %v5555, 0
      %v5606 = vsel %vm198, %v5556, 0
      %v5609 = vsel %vm198, %v5557, 0
      %v5612 = vsel %vm198, %v5558, 0
      %v5615 = vsel %vm198, %v5559, 0
      %v5618 = vsel %vm198, %v5560, 0
      %v5621 = vsel %vm198, %v5561, 0
      %v5624 = vsel %vm198, %v5562, 0
      %v5627 = vsel %vm198, %v5563, 0
      %v5630 = vsel %vm198, %v5564, 0
      %v5633 = vsel %vm198, %v5565, 0
      %v5636 = vsel %vm198, %v5566, 0
      %v5639 = vsel %vm198, %v5567, 0
      %v5642 = vsel %vm198, %v5568, 0
      %v5645 = vsel %vm198, %v5569, 0
      %v5648 = vsel %vm198, %v5570, 0
      %v5651 = vsel %vm198, %v5571, 0
      %v5654 = vsel %vm198, %v5572, 0
      %v5657 = vsel %vm198, %v5573, 0
      %v5660 = vsel %vm198, %v5574, 0
      %v5663 = vsel %vm198, %v5575, 0
      %v5666 = vsel %vm198, %v5576, 0
      %v5669 = vsel %vm198, %v5577, 0
      %v5672 = vsel %vm198, %v5578, 0
      %v5675 = vsel %vm198, %v5579, 0
      %v5678 = vsel %vm484, %v5580, 0
      %5680 = vmatpush.msra.mxu0 0.0
      %5681 = vmatpush.msra.mxu0 0.0
      %5682 = vmatpush.msra.mxu0 0.0
      %5683 = vmatpush.msra.mxu0 0.0
      %5684 = vmatpush.msra.mxu0 0.0
      %5685 = vmatpush.msra.mxu0 0.0
      %5686 = vmatpush.msra.mxu0 0.0
      %5687 = vmatpush.msra.mxu0 0.0
      %5688 = vmatpush.msra.mxu0 0.0
      %5689 = vmatpush.msra.mxu0 0.0
      %5690 = vmatpush.msra.mxu0 0.0
      %5691 = vmatpush.msra.mxu0 0.0
      %5692 = vmatpush.msra.mxu0 0.0
      %5693 = vmatpush.msra.mxu0 0.0
      %5694 = vmatpush.msra.mxu0 0.0
      %5695 = vmatpush.msra.mxu0 %v5678
      %5696 = vmatmul.f32.gmra.mxu0 %v5582
      %v5697 = vpop.f32.mrf.mxu0
      %v5698 = vadd.f32 0.0, %v5697
      %5699 = vmatmul.f32.gmra.mxu0 %v5585
      %v5700 = vpop.f32.mrf.mxu0
      %v5701 = vadd.f32 0.0, %v5700
      %5702 = vmatmul.f32.gmra.mxu0 %v5588
      %v5703 = vpop.f32.mrf.mxu0
      %v5704 = vadd.f32 0.0, %v5703
      %5705 = vmatmul.f32.gmra.mxu0 %v5591
      %v5706 = vpop.f32.mrf.mxu0
      %v5707 = vadd.f32 0.0, %v5706
      %5708 = vmatmul.f32.gmra.mxu0 %v5594
      %v5709 = vpop.f32.mrf.mxu0
      %v5710 = vadd.f32 0.0, %v5709
      %5711 = vmatmul.f32.gmra.mxu0 %v5597
      %v5712 = vpop.f32.mrf.mxu0
      %v5713 = vadd.f32 0.0, %v5712
      %5714 = vmatmul.f32.gmra.mxu0 %v5600
      %v5715 = vpop.f32.mrf.mxu0
      %v5716 = vadd.f32 0.0, %v5715
      %5717 = vmatmul.f32.gmra.mxu0 %v5603
      %v5718 = vpop.f32.mrf.mxu0
      %v5719 = vadd.f32 0.0, %v5718
      %5720 = vmatmul.f32.gmra.mxu0 %v5606
      %v5721 = vpop.f32.mrf.mxu0
      %v5722 = vadd.f32 0.0, %v5721
      %5723 = vmatmul.f32.gmra.mxu0 %v5609
      %v5724 = vpop.f32.mrf.mxu0
      %v5725 = vadd.f32 0.0, %v5724
      %5726 = vmatmul.f32.gmra.mxu0 %v5612
      %v5727 = vpop.f32.mrf.mxu0
      %v5728 = vadd.f32 0.0, %v5727
      %5729 = vmatmul.f32.gmra.mxu0 %v5615
      %v5730 = vpop.f32.mrf.mxu0
      %v5731 = vadd.f32 0.0, %v5730
      %5732 = vmatmul.f32.gmra.mxu0 %v5618
      %v5733 = vpop.f32.mrf.mxu0
      %v5734 = vadd.f32 0.0, %v5733
      %5735 = vmatmul.f32.gmra.mxu0 %v5621
      %v5736 = vpop.f32.mrf.mxu0
      %v5737 = vadd.f32 0.0, %v5736
      %5738 = vmatmul.f32.gmra.mxu0 %v5624
      %v5739 = vpop.f32.mrf.mxu0
      %v5740 = vadd.f32 0.0, %v5739
      %5741 = vmatmul.f32.gmra.mxu0 %v5627
      %v5742 = vpop.f32.mrf.mxu0
      %v5743 = vadd.f32 0.0, %v5742
      %5744 = vmatmul.f32.gmra.mxu0 %v5630
      %v5745 = vpop.f32.mrf.mxu0
      %v5746 = vadd.f32 0.0, %v5745
      %5747 = vmatmul.f32.gmra.mxu0 %v5633
      %v5748 = vpop.f32.mrf.mxu0
      %v5749 = vadd.f32 0.0, %v5748
      %5750 = vmatmul.f32.gmra.mxu0 %v5636
      %v5751 = vpop.f32.mrf.mxu0
      %v5752 = vadd.f32 0.0, %v5751
      %5753 = vmatmul.f32.gmra.mxu0 %v5639
      %v5754 = vpop.f32.mrf.mxu0
      %v5755 = vadd.f32 0.0, %v5754
      %5756 = vmatmul.f32.gmra.mxu0 %v5642
      %v5757 = vpop.f32.mrf.mxu0
      %v5758 = vadd.f32 0.0, %v5757
      %5759 = vmatmul.f32.gmra.mxu0 %v5645
      %v5760 = vpop.f32.mrf.mxu0
      %v5761 = vadd.f32 0.0, %v5760
      %5762 = vmatmul.f32.gmra.mxu0 %v5648
      %v5763 = vpop.f32.mrf.mxu0
      %v5764 = vadd.f32 0.0, %v5763
      %5765 = vmatmul.f32.gmra.mxu0 %v5651
      %v5766 = vpop.f32.mrf.mxu0
      %v5767 = vadd.f32 0.0, %v5766
      %5768 = vmatmul.f32.gmra.mxu0 %v5654
      %v5769 = vpop.f32.mrf.mxu0
      %v5770 = vadd.f32 0.0, %v5769
      %5771 = vmatmul.f32.gmra.mxu0 %v5657
      %v5772 = vpop.f32.mrf.mxu0
      %v5773 = vadd.f32 0.0, %v5772
      %5774 = vmatmul.f32.gmra.mxu0 %v5660
      %v5775 = vpop.f32.mrf.mxu0
      %v5776 = vadd.f32 0.0, %v5775
      %5777 = vmatmul.f32.gmra.mxu0 %v5663
      %v5778 = vpop.f32.mrf.mxu0
      %v5779 = vadd.f32 0.0, %v5778
      %5780 = vmatmul.f32.gmra.mxu0 %v5666
      %v5781 = vpop.f32.mrf.mxu0
      %v5782 = vadd.f32 0.0, %v5781
      %5783 = vmatmul.f32.gmra.mxu0 %v5669
      %v5784 = vpop.f32.mrf.mxu0
      %v5785 = vadd.f32 0.0, %v5784
      %5786 = vmatmul.f32.gmra.mxu0 %v5672
      %v5787 = vpop.f32.mrf.mxu0
      %v5788 = vadd.f32 0.0, %v5787
      %5789 = vmatmul.f32.gmra.mxu0 %v5675
      %v5790 = vpop.f32.mrf.mxu0
      %v5791 = vadd.f32 0.0, %v5790
      %5792 = vdwg.mxu0
      %v5794 = vsel %vm198, %v5515, 0
      %v5797 = vsel %vm198, %v5516, 0
      %v5800 = vsel %vm198, %v5517, 0
      %v5803 = vsel %vm198, %v5518, 0
      %v5806 = vsel %vm198, %v5519, 0
      %v5809 = vsel %vm198, %v5520, 0
      %v5812 = vsel %vm198, %v5521, 0
      %v5815 = vsel %vm198, %v5522, 0
      %v5818 = vsel %vm198, %v5523, 0
      %v5821 = vsel %vm198, %v5524, 0
      %v5824 = vsel %vm198, %v5525, 0
      %v5827 = vsel %vm198, %v5526, 0
      %v5830 = vsel %vm198, %v5527, 0
      %v5833 = vsel %vm198, %v5528, 0
      %v5836 = vsel %vm198, %v5529, 0
      %v5839 = vsel %vm198, %v5530, 0
      %v5842 = vsel %vm198, %v5531, 0
      %v5845 = vsel %vm198, %v5532, 0
      %v5848 = vsel %vm198, %v5533, 0
      %v5851 = vsel %vm198, %v5534, 0
      %v5854 = vsel %vm198, %v5535, 0
      %v5857 = vsel %vm198, %v5536, 0
      %v5860 = vsel %vm198, %v5537, 0
      %v5863 = vsel %vm198, %v5538, 0
      %v5866 = vsel %vm198, %v5539, 0
      %v5869 = vsel %vm198, %v5540, 0
      %v5872 = vsel %vm198, %v5541, 0
      %v5875 = vsel %vm198, %v5542, 0
      %v5878 = vsel %vm198, %v5543, 0
      %v5881 = vsel %vm198, %v5544, 0
      %v5884 = vsel %vm198, %v5545, 0
      %v5887 = vsel %vm198, %v5546, 0
      %v5890 = vsel %vm484, %v5547, 0
      %5892 = vmatpush.msra.mxu0 0.0
      %5893 = vmatpush.msra.mxu0 0.0
      %5894 = vmatpush.msra.mxu0 0.0
      %5895 = vmatpush.msra.mxu0 0.0
      %5896 = vmatpush.msra.mxu0 0.0
      %5897 = vmatpush.msra.mxu0 0.0
      %5898 = vmatpush.msra.mxu0 0.0
      %5899 = vmatpush.msra.mxu0 0.0
      %5900 = vmatpush.msra.mxu0 0.0
      %5901 = vmatpush.msra.mxu0 0.0
      %5902 = vmatpush.msra.mxu0 0.0
      %5903 = vmatpush.msra.mxu0 0.0
      %5904 = vmatpush.msra.mxu0 0.0
      %5905 = vmatpush.msra.mxu0 0.0
      %5906 = vmatpush.msra.mxu0 0.0
      %5907 = vmatpush.msra.mxu0 %v5890
      %5908 = vmatmul.f32.gmra.mxu0 %v5794
      %v5909 = vpop.f32.mrf.mxu0
      %v5910 = vadd.f32 %v5698, %v5909
      %5911 = vmatmul.f32.gmra.mxu0 %v5797
      %v5912 = vpop.f32.mrf.mxu0
      %v5913 = vadd.f32 %v5701, %v5912
      %5914 = vmatmul.f32.gmra.mxu0 %v5800
      %v5915 = vpop.f32.mrf.mxu0
      %v5916 = vadd.f32 %v5704, %v5915
      %5917 = vmatmul.f32.gmra.mxu0 %v5803
      %v5918 = vpop.f32.mrf.mxu0
      %v5919 = vadd.f32 %v5707, %v5918
      %5920 = vmatmul.f32.gmra.mxu0 %v5806
      %v5921 = vpop.f32.mrf.mxu0
      %v5922 = vadd.f32 %v5710, %v5921
      %5923 = vmatmul.f32.gmra.mxu0 %v5809
      %v5924 = vpop.f32.mrf.mxu0
      %v5925 = vadd.f32 %v5713, %v5924
      %5926 = vmatmul.f32.gmra.mxu0 %v5812
      %v5927 = vpop.f32.mrf.mxu0
      %v5928 = vadd.f32 %v5716, %v5927
      %5929 = vmatmul.f32.gmra.mxu0 %v5815
      %v5930 = vpop.f32.mrf.mxu0
      %v5931 = vadd.f32 %v5719, %v5930
      %5932 = vmatmul.f32.gmra.mxu0 %v5818
      %v5933 = vpop.f32.mrf.mxu0
      %v5934 = vadd.f32 %v5722, %v5933
      %5935 = vmatmul.f32.gmra.mxu0 %v5821
      %v5936 = vpop.f32.mrf.mxu0
      %v5937 = vadd.f32 %v5725, %v5936
      %5938 = vmatmul.f32.gmra.mxu0 %v5824
      %v5939 = vpop.f32.mrf.mxu0
      %v5940 = vadd.f32 %v5728, %v5939
      %5941 = vmatmul.f32.gmra.mxu0 %v5827
      %v5942 = vpop.f32.mrf.mxu0
      %v5943 = vadd.f32 %v5731, %v5942
      %5944 = vmatmul.f32.gmra.mxu0 %v5830
      %v5945 = vpop.f32.mrf.mxu0
      %v5946 = vadd.f32 %v5734, %v5945
      %5947 = vmatmul.f32.gmra.mxu0 %v5833
      %v5948 = vpop.f32.mrf.mxu0
      %v5949 = vadd.f32 %v5737, %v5948
      %5950 = vmatmul.f32.gmra.mxu0 %v5836
      %v5951 = vpop.f32.mrf.mxu0
      %v5952 = vadd.f32 %v5740, %v5951
      %5953 = vmatmul.f32.gmra.mxu0 %v5839
      %v5954 = vpop.f32.mrf.mxu0
      %v5955 = vadd.f32 %v5743, %v5954
      %5956 = vmatmul.f32.gmra.mxu0 %v5842
      %v5957 = vpop.f32.mrf.mxu0
      %v5958 = vadd.f32 %v5746, %v5957
      %5959 = vmatmul.f32.gmra.mxu0 %v5845
      %v5960 = vpop.f32.mrf.mxu0
      %v5961 = vadd.f32 %v5749, %v5960
      %5962 = vmatmul.f32.gmra.mxu0 %v5848
      %v5963 = vpop.f32.mrf.mxu0
      %v5964 = vadd.f32 %v5752, %v5963
      %5965 = vmatmul.f32.gmra.mxu0 %v5851
      %v5966 = vpop.f32.mrf.mxu0
      %v5967 = vadd.f32 %v5755, %v5966
      %5968 = vmatmul.f32.gmra.mxu0 %v5854
      %v5969 = vpop.f32.mrf.mxu0
      %v5970 = vadd.f32 %v5758, %v5969
      %5971 = vmatmul.f32.gmra.mxu0 %v5857
      %v5972 = vpop.f32.mrf.mxu0
      %v5973 = vadd.f32 %v5761, %v5972
      %5974 = vmatmul.f32.gmra.mxu0 %v5860
      %v5975 = vpop.f32.mrf.mxu0
      %v5976 = vadd.f32 %v5764, %v5975
      %5977 = vmatmul.f32.gmra.mxu0 %v5863
      %v5978 = vpop.f32.mrf.mxu0
      %v5979 = vadd.f32 %v5767, %v5978
      %5980 = vmatmul.f32.gmra.mxu0 %v5866
      %v5981 = vpop.f32.mrf.mxu0
      %v5982 = vadd.f32 %v5770, %v5981
      %5983 = vmatmul.f32.gmra.mxu0 %v5869
      %v5984 = vpop.f32.mrf.mxu0
      %v5985 = vadd.f32 %v5773, %v5984
      %5986 = vmatmul.f32.gmra.mxu0 %v5872
      %v5987 = vpop.f32.mrf.mxu0
      %v5988 = vadd.f32 %v5776, %v5987
      %5989 = vmatmul.f32.gmra.mxu0 %v5875
      %v5990 = vpop.f32.mrf.mxu0
      %v5991 = vadd.f32 %v5779, %v5990
      %5992 = vmatmul.f32.gmra.mxu0 %v5878
      %v5993 = vpop.f32.mrf.mxu0
      %v5994 = vadd.f32 %v5782, %v5993
      %5995 = vmatmul.f32.gmra.mxu0 %v5881
      %v5996 = vpop.f32.mrf.mxu0
      %v5997 = vadd.f32 %v5785, %v5996
      %5998 = vmatmul.f32.gmra.mxu0 %v5884
      %v5999 = vpop.f32.mrf.mxu0
      %v6000 = vadd.f32 %v5788, %v5999
      %6001 = vmatmul.f32.gmra.mxu0 %v5887
      %v6002 = vpop.f32.mrf.mxu0
      %v6003 = vadd.f32 %v5791, %v6002
      %6004 = vdwg.mxu0
      %v6005 = vld [vmem:[#allocation2 + $0x2] sm:$0xff]
      %v6006 = vld [vmem:[#allocation2 + $0xa] sm:$0xff]
      %v6007 = vld [vmem:[#allocation2 + $0x1a] sm:$0xff]
      %v6008 = vld [vmem:[#allocation2 + $0x22] sm:$0xff]
      %v6009 = vld [vmem:[#allocation2 + $0x32] sm:$0xff]
      %v6010 = vld [vmem:[#allocation2 + $0x3a] sm:$0xff]
      %v6011 = vld [vmem:[#allocation2 + $0x4a] sm:$0xff]
      %v6012 = vld [vmem:[#allocation2 + $0x52] sm:$0xff]
      %v6013 = vld [vmem:[#allocation2 + $0x62] sm:$0xff]
      %v6014 = vld [vmem:[#allocation2 + $0x6a] sm:$0xff]
      %v6015 = vld [vmem:[#allocation2 + $0x7a] sm:$0xff]
      %v6016 = vld [vmem:[#allocation2 + $0x82] sm:$0xff]
      %v6017 = vld [vmem:[#allocation2 + $0x92] sm:$0xff]
      %v6018 = vld [vmem:[#allocation2 + $0x9a] sm:$0xff]
      %v6019 = vld [vmem:[#allocation2 + $0xaa] sm:$0xff]
      %v6020 = vld [vmem:[#allocation2 + $0xb2] sm:$0xff]
      %v6021 = vld [vmem:[#allocation2 + $0xc2] sm:$0xff]
      %v6022 = vld [vmem:[#allocation2 + $0xca] sm:$0xff]
      %v6023 = vld [vmem:[#allocation2 + $0xda] sm:$0xff]
      %v6024 = vld [vmem:[#allocation2 + $0xe2] sm:$0xff]
      %v6025 = vld [vmem:[#allocation2 + $0xf2] sm:$0xff]
      %v6026 = vld [vmem:[#allocation2 + $0xfa] sm:$0xff]
      %v6027 = vld [vmem:[#allocation2 + $0x10a] sm:$0xff]
      %v6028 = vld [vmem:[#allocation2 + $0x112] sm:$0xff]
      %v6029 = vld [vmem:[#allocation2 + $0x122] sm:$0xff]
      %v6030 = vld [vmem:[#allocation2 + $0x12a] sm:$0xff]
      %v6031 = vld [vmem:[#allocation2 + $0x13a] sm:$0xff]
      %v6032 = vld [vmem:[#allocation2 + $0x142] sm:$0xff]
      %v6033 = vld [vmem:[#allocation2 + $0x152] sm:$0xff]
      %v6034 = vld [vmem:[#allocation2 + $0x15a] sm:$0xff]
      %v6035 = vld [vmem:[#allocation2 + $0x16a] sm:$0xff]
      %v6036 = vld [vmem:[#allocation2 + $0x172] sm:$0xff]
      %v6037 = vld [vmem:[%s845] sm:$0xf]
      %v6039 = vsel %vm198, %v6005, 0
      %v6042 = vsel %vm198, %v6006, 0
      %v6045 = vsel %vm198, %v6007, 0
      %v6048 = vsel %vm198, %v6008, 0
      %v6051 = vsel %vm198, %v6009, 0
      %v6054 = vsel %vm198, %v6010, 0
      %v6057 = vsel %vm198, %v6011, 0
      %v6060 = vsel %vm198, %v6012, 0
      %v6063 = vsel %vm198, %v6013, 0
      %v6066 = vsel %vm198, %v6014, 0
      %v6069 = vsel %vm198, %v6015, 0
      %v6072 = vsel %vm198, %v6016, 0
      %v6075 = vsel %vm198, %v6017, 0
      %v6078 = vsel %vm198, %v6018, 0
      %v6081 = vsel %vm198, %v6019, 0
      %v6084 = vsel %vm198, %v6020, 0
      %v6087 = vsel %vm198, %v6021, 0
      %v6090 = vsel %vm198, %v6022, 0
      %v6093 = vsel %vm198, %v6023, 0
      %v6096 = vsel %vm198, %v6024, 0
      %v6099 = vsel %vm198, %v6025, 0
      %v6102 = vsel %vm198, %v6026, 0
      %v6105 = vsel %vm198, %v6027, 0
      %v6108 = vsel %vm198, %v6028, 0
      %v6111 = vsel %vm198, %v6029, 0
      %v6114 = vsel %vm198, %v6030, 0
      %v6117 = vsel %vm198, %v6031, 0
      %v6120 = vsel %vm198, %v6032, 0
      %v6123 = vsel %vm198, %v6033, 0
      %v6126 = vsel %vm198, %v6034, 0
      %v6129 = vsel %vm198, %v6035, 0
      %v6132 = vsel %vm198, %v6036, 0
      %v6135 = vsel %vm484, %v6037, 0
      %6137 = vmatpush.msra.mxu0 0.0
      %6138 = vmatpush.msra.mxu0 0.0
      %6139 = vmatpush.msra.mxu0 0.0
      %6140 = vmatpush.msra.mxu0 0.0
      %6141 = vmatpush.msra.mxu0 0.0
      %6142 = vmatpush.msra.mxu0 0.0
      %6143 = vmatpush.msra.mxu0 0.0
      %6144 = vmatpush.msra.mxu0 0.0
      %6145 = vmatpush.msra.mxu0 0.0
      %6146 = vmatpush.msra.mxu0 0.0
      %6147 = vmatpush.msra.mxu0 0.0
      %6148 = vmatpush.msra.mxu0 0.0
      %6149 = vmatpush.msra.mxu0 0.0
      %6150 = vmatpush.msra.mxu0 0.0
      %6151 = vmatpush.msra.mxu0 0.0
      %6152 = vmatpush.msra.mxu0 %v6135
      %6153 = vmatmul.f32.gmra.mxu0 %v6039
      %v6154 = vpop.f32.mrf.mxu0
      %v6155 = vadd.f32 0.0, %v6154
      %6156 = vmatmul.f32.gmra.mxu0 %v6042
      %v6157 = vpop.f32.mrf.mxu0
      %v6158 = vadd.f32 0.0, %v6157
      %6159 = vmatmul.f32.gmra.mxu0 %v6045
      %v6160 = vpop.f32.mrf.mxu0
      %v6161 = vadd.f32 0.0, %v6160
      %6162 = vmatmul.f32.gmra.mxu0 %v6048
      %v6163 = vpop.f32.mrf.mxu0
      %v6164 = vadd.f32 0.0, %v6163
      %6165 = vmatmul.f32.gmra.mxu0 %v6051
      %v6166 = vpop.f32.mrf.mxu0
      %v6167 = vadd.f32 0.0, %v6166
      %6168 = vmatmul.f32.gmra.mxu0 %v6054
      %v6169 = vpop.f32.mrf.mxu0
      %v6170 = vadd.f32 0.0, %v6169
      %6171 = vmatmul.f32.gmra.mxu0 %v6057
      %v6172 = vpop.f32.mrf.mxu0
      %v6173 = vadd.f32 0.0, %v6172
      %6174 = vmatmul.f32.gmra.mxu0 %v6060
      %v6175 = vpop.f32.mrf.mxu0
      %v6176 = vadd.f32 0.0, %v6175
      %6177 = vmatmul.f32.gmra.mxu0 %v6063
      %v6178 = vpop.f32.mrf.mxu0
      %v6179 = vadd.f32 0.0, %v6178
      %6180 = vmatmul.f32.gmra.mxu0 %v6066
      %v6181 = vpop.f32.mrf.mxu0
      %v6182 = vadd.f32 0.0, %v6181
      %6183 = vmatmul.f32.gmra.mxu0 %v6069
      %v6184 = vpop.f32.mrf.mxu0
      %v6185 = vadd.f32 0.0, %v6184
      %6186 = vmatmul.f32.gmra.mxu0 %v6072
      %v6187 = vpop.f32.mrf.mxu0
      %v6188 = vadd.f32 0.0, %v6187
      %6189 = vmatmul.f32.gmra.mxu0 %v6075
      %v6190 = vpop.f32.mrf.mxu0
      %v6191 = vadd.f32 0.0, %v6190
      %6192 = vmatmul.f32.gmra.mxu0 %v6078
      %v6193 = vpop.f32.mrf.mxu0
      %v6194 = vadd.f32 0.0, %v6193
      %6195 = vmatmul.f32.gmra.mxu0 %v6081
      %v6196 = vpop.f32.mrf.mxu0
      %v6197 = vadd.f32 0.0, %v6196
      %6198 = vmatmul.f32.gmra.mxu0 %v6084
      %v6199 = vpop.f32.mrf.mxu0
      %v6200 = vadd.f32 0.0, %v6199
      %6201 = vmatmul.f32.gmra.mxu0 %v6087
      %v6202 = vpop.f32.mrf.mxu0
      %v6203 = vadd.f32 0.0, %v6202
      %6204 = vmatmul.f32.gmra.mxu0 %v6090
      %v6205 = vpop.f32.mrf.mxu0
      %v6206 = vadd.f32 0.0, %v6205
      %6207 = vmatmul.f32.gmra.mxu0 %v6093
      %v6208 = vpop.f32.mrf.mxu0
      %v6209 = vadd.f32 0.0, %v6208
      %6210 = vmatmul.f32.gmra.mxu0 %v6096
      %v6211 = vpop.f32.mrf.mxu0
      %v6212 = vadd.f32 0.0, %v6211
      %6213 = vmatmul.f32.gmra.mxu0 %v6099
      %v6214 = vpop.f32.mrf.mxu0
      %v6215 = vadd.f32 0.0, %v6214
      %6216 = vmatmul.f32.gmra.mxu0 %v6102
      %v6217 = vpop.f32.mrf.mxu0
      %v6218 = vadd.f32 0.0, %v6217
      %6219 = vmatmul.f32.gmra.mxu0 %v6105
      %v6220 = vpop.f32.mrf.mxu0
      %v6221 = vadd.f32 0.0, %v6220
      %6222 = vmatmul.f32.gmra.mxu0 %v6108
      %v6223 = vpop.f32.mrf.mxu0
      %v6224 = vadd.f32 0.0, %v6223
      %6225 = vmatmul.f32.gmra.mxu0 %v6111
      %v6226 = vpop.f32.mrf.mxu0
      %v6227 = vadd.f32 0.0, %v6226
      %6228 = vmatmul.f32.gmra.mxu0 %v6114
      %v6229 = vpop.f32.mrf.mxu0
      %v6230 = vadd.f32 0.0, %v6229
      %6231 = vmatmul.f32.gmra.mxu0 %v6117
      %v6232 = vpop.f32.mrf.mxu0
      %v6233 = vadd.f32 0.0, %v6232
      %6234 = vmatmul.f32.gmra.mxu0 %v6120
      %v6235 = vpop.f32.mrf.mxu0
      %v6236 = vadd.f32 0.0, %v6235
      %6237 = vmatmul.f32.gmra.mxu0 %v6123
      %v6238 = vpop.f32.mrf.mxu0
      %v6239 = vadd.f32 0.0, %v6238
      %6240 = vmatmul.f32.gmra.mxu0 %v6126
      %v6241 = vpop.f32.mrf.mxu0
      %v6242 = vadd.f32 0.0, %v6241
      %6243 = vmatmul.f32.gmra.mxu0 %v6129
      %v6244 = vpop.f32.mrf.mxu0
      %v6245 = vadd.f32 0.0, %v6244
      %6246 = vmatmul.f32.gmra.mxu0 %v6132
      %v6247 = vpop.f32.mrf.mxu0
      %v6248 = vadd.f32 0.0, %v6247
      %6249 = vdwg.mxu0
      %v6250 = vadd.f32 %v5910, %v6155
      %v6251 = vadd.f32 %v5913, %v6158
      %v6252 = vadd.f32 %v5916, %v6161
      %v6253 = vadd.f32 %v5919, %v6164
      %v6254 = vadd.f32 %v5922, %v6167
      %v6255 = vadd.f32 %v5925, %v6170
      %v6256 = vadd.f32 %v5928, %v6173
      %v6257 = vadd.f32 %v5931, %v6176
      %v6258 = vadd.f32 %v5934, %v6179
      %v6259 = vadd.f32 %v5937, %v6182
      %v6260 = vadd.f32 %v5940, %v6185
      %v6261 = vadd.f32 %v5943, %v6188
      %v6262 = vadd.f32 %v5946, %v6191
      %v6263 = vadd.f32 %v5949, %v6194
      %v6264 = vadd.f32 %v5952, %v6197
      %v6265 = vadd.f32 %v5955, %v6200
      %v6266 = vadd.f32 %v5958, %v6203
      %v6267 = vadd.f32 %v5961, %v6206
      %v6268 = vadd.f32 %v5964, %v6209
      %v6269 = vadd.f32 %v5967, %v6212
      %v6270 = vadd.f32 %v5970, %v6215
      %v6271 = vadd.f32 %v5973, %v6218
      %v6272 = vadd.f32 %v5976, %v6221
      %v6273 = vadd.f32 %v5979, %v6224
      %v6274 = vadd.f32 %v5982, %v6227
      %v6275 = vadd.f32 %v5985, %v6230
      %v6276 = vadd.f32 %v5988, %v6233
      %v6277 = vadd.f32 %v5991, %v6236
      %v6278 = vadd.f32 %v5994, %v6239
      %v6279 = vadd.f32 %v5997, %v6242
      %v6280 = vadd.f32 %v6000, %v6245
      %v6281 = vadd.f32 %v6003, %v6248
      %v6282 = vld [vmem:[%s288] sm:$0xff]
      %v6283 = vld [vmem:[%s288 + $0x8] sm:$0xff]
      %v6284 = vld [vmem:[%s288 + $0x18] sm:$0xff]
      %v6285 = vld [vmem:[%s288 + $0x20] sm:$0xff]
      %v6286 = vld [vmem:[%s288 + $0x30] sm:$0xff]
      %v6287 = vld [vmem:[%s288 + $0x38] sm:$0xff]
      %v6288 = vld [vmem:[%s288 + $0x48] sm:$0xff]
      %v6289 = vld [vmem:[%s288 + $0x50] sm:$0xff]
      %v6290 = vld [vmem:[%s288 + $0x60] sm:$0xff]
      %v6291 = vld [vmem:[%s288 + $0x68] sm:$0xff]
      %v6292 = vld [vmem:[%s288 + $0x78] sm:$0xff]
      %v6293 = vld [vmem:[%s288 + $0x80] sm:$0xff]
      %v6294 = vld [vmem:[%s288 + $0x90] sm:$0xff]
      %v6295 = vld [vmem:[%s288 + $0x98] sm:$0xff]
      %v6296 = vld [vmem:[%s288 + $0xa8] sm:$0xff]
      %v6297 = vld [vmem:[%s288 + $0xb0] sm:$0xff]
      %v6298 = vld [vmem:[%s288 + $0xc0] sm:$0xff]
      %v6299 = vld [vmem:[%s288 + $0xc8] sm:$0xff]
      %v6300 = vld [vmem:[%s288 + $0xd8] sm:$0xff]
      %v6301 = vld [vmem:[%s288 + $0xe0] sm:$0xff]
      %v6302 = vld [vmem:[%s288 + $0xf0] sm:$0xff]
      %v6303 = vld [vmem:[%s288 + $0xf8] sm:$0xff]
      %v6304 = vld [vmem:[%s288 + $0x108] sm:$0xff]
      %v6305 = vld [vmem:[%s288 + $0x110] sm:$0xff]
      %v6306 = vld [vmem:[%s288 + $0x120] sm:$0xff]
      %v6307 = vld [vmem:[%s288 + $0x128] sm:$0xff]
      %v6308 = vld [vmem:[%s288 + $0x138] sm:$0xff]
      %v6309 = vld [vmem:[%s288 + $0x140] sm:$0xff]
      %v6310 = vld [vmem:[%s288 + $0x150] sm:$0xff]
      %v6311 = vld [vmem:[%s288 + $0x158] sm:$0xff]
      %v6312 = vld [vmem:[%s288 + $0x168] sm:$0xff]
      %v6313 = vld [vmem:[%s288 + $0x170] sm:$0xff]
      %v6314 = vld [vmem:[%s1123] sm:$0xf]
      %v6316 = vsel %vm198, %v6282, 0
      %v6319 = vsel %vm198, %v6283, 0
      %v6322 = vsel %vm198, %v6284, 0
      %v6325 = vsel %vm198, %v6285, 0
      %v6328 = vsel %vm198, %v6286, 0
      %v6331 = vsel %vm198, %v6287, 0
      %v6334 = vsel %vm198, %v6288, 0
      %v6337 = vsel %vm198, %v6289, 0
      %v6340 = vsel %vm198, %v6290, 0
      %v6343 = vsel %vm198, %v6291, 0
      %v6346 = vsel %vm198, %v6292, 0
      %v6349 = vsel %vm198, %v6293, 0
      %v6352 = vsel %vm198, %v6294, 0
      %v6355 = vsel %vm198, %v6295, 0
      %v6358 = vsel %vm198, %v6296, 0
      %v6361 = vsel %vm198, %v6297, 0
      %v6364 = vsel %vm198, %v6298, 0
      %v6367 = vsel %vm198, %v6299, 0
      %v6370 = vsel %vm198, %v6300, 0
      %v6373 = vsel %vm198, %v6301, 0
      %v6376 = vsel %vm198, %v6302, 0
      %v6379 = vsel %vm198, %v6303, 0
      %v6382 = vsel %vm198, %v6304, 0
      %v6385 = vsel %vm198, %v6305, 0
      %v6388 = vsel %vm198, %v6306, 0
      %v6391 = vsel %vm198, %v6307, 0
      %v6394 = vsel %vm198, %v6308, 0
      %v6397 = vsel %vm198, %v6309, 0
      %v6400 = vsel %vm198, %v6310, 0
      %v6403 = vsel %vm198, %v6311, 0
      %v6406 = vsel %vm198, %v6312, 0
      %v6409 = vsel %vm198, %v6313, 0
      %v6412 = vsel %vm484, %v6314, 0
      %6414 = vmatpush.msra.mxu0 0.0
      %6415 = vmatpush.msra.mxu0 0.0
      %6416 = vmatpush.msra.mxu0 0.0
      %6417 = vmatpush.msra.mxu0 0.0
      %6418 = vmatpush.msra.mxu0 0.0
      %6419 = vmatpush.msra.mxu0 0.0
      %6420 = vmatpush.msra.mxu0 0.0
      %6421 = vmatpush.msra.mxu0 0.0
      %6422 = vmatpush.msra.mxu0 0.0
      %6423 = vmatpush.msra.mxu0 0.0
      %6424 = vmatpush.msra.mxu0 0.0
      %6425 = vmatpush.msra.mxu0 0.0
      %6426 = vmatpush.msra.mxu0 0.0
      %6427 = vmatpush.msra.mxu0 0.0
      %6428 = vmatpush.msra.mxu0 0.0
      %6429 = vmatpush.msra.mxu0 %v6412
      %6430 = vmatmul.f32.gmra.mxu0 %v6316
      %v6431 = vpop.f32.mrf.mxu0
      %v6432 = vadd.f32 0.0, %v6431
      %6433 = vmatmul.f32.gmra.mxu0 %v6319
      %v6434 = vpop.f32.mrf.mxu0
      %v6435 = vadd.f32 0.0, %v6434
      %6436 = vmatmul.f32.gmra.mxu0 %v6322
      %v6437 = vpop.f32.mrf.mxu0
      %v6438 = vadd.f32 0.0, %v6437
      %6439 = vmatmul.f32.gmra.mxu0 %v6325
      %v6440 = vpop.f32.mrf.mxu0
      %v6441 = vadd.f32 0.0, %v6440
      %6442 = vmatmul.f32.gmra.mxu0 %v6328
      %v6443 = vpop.f32.mrf.mxu0
      %v6444 = vadd.f32 0.0, %v6443
      %6445 = vmatmul.f32.gmra.mxu0 %v6331
      %v6446 = vpop.f32.mrf.mxu0
      %v6447 = vadd.f32 0.0, %v6446
      %6448 = vmatmul.f32.gmra.mxu0 %v6334
      %v6449 = vpop.f32.mrf.mxu0
      %v6450 = vadd.f32 0.0, %v6449
      %6451 = vmatmul.f32.gmra.mxu0 %v6337
      %v6452 = vpop.f32.mrf.mxu0
      %v6453 = vadd.f32 0.0, %v6452
      %6454 = vmatmul.f32.gmra.mxu0 %v6340
      %v6455 = vpop.f32.mrf.mxu0
      %v6456 = vadd.f32 0.0, %v6455
      %6457 = vmatmul.f32.gmra.mxu0 %v6343
      %v6458 = vpop.f32.mrf.mxu0
      %v6459 = vadd.f32 0.0, %v6458
      %6460 = vmatmul.f32.gmra.mxu0 %v6346
      %v6461 = vpop.f32.mrf.mxu0
      %v6462 = vadd.f32 0.0, %v6461
      %6463 = vmatmul.f32.gmra.mxu0 %v6349
      %v6464 = vpop.f32.mrf.mxu0
      %v6465 = vadd.f32 0.0, %v6464
      %6466 = vmatmul.f32.gmra.mxu0 %v6352
      %v6467 = vpop.f32.mrf.mxu0
      %v6468 = vadd.f32 0.0, %v6467
      %6469 = vmatmul.f32.gmra.mxu0 %v6355
      %v6470 = vpop.f32.mrf.mxu0
      %v6471 = vadd.f32 0.0, %v6470
      %6472 = vmatmul.f32.gmra.mxu0 %v6358
      %v6473 = vpop.f32.mrf.mxu0
      %v6474 = vadd.f32 0.0, %v6473
      %6475 = vmatmul.f32.gmra.mxu0 %v6361
      %v6476 = vpop.f32.mrf.mxu0
      %v6477 = vadd.f32 0.0, %v6476
      %6478 = vmatmul.f32.gmra.mxu0 %v6364
      %v6479 = vpop.f32.mrf.mxu0
      %v6480 = vadd.f32 0.0, %v6479
      %6481 = vmatmul.f32.gmra.mxu0 %v6367
      %v6482 = vpop.f32.mrf.mxu0
      %v6483 = vadd.f32 0.0, %v6482
      %6484 = vmatmul.f32.gmra.mxu0 %v6370
      %v6485 = vpop.f32.mrf.mxu0
      %v6486 = vadd.f32 0.0, %v6485
      %6487 = vmatmul.f32.gmra.mxu0 %v6373
      %v6488 = vpop.f32.mrf.mxu0
      %v6489 = vadd.f32 0.0, %v6488
      %6490 = vmatmul.f32.gmra.mxu0 %v6376
      %v6491 = vpop.f32.mrf.mxu0
      %v6492 = vadd.f32 0.0, %v6491
      %6493 = vmatmul.f32.gmra.mxu0 %v6379
      %v6494 = vpop.f32.mrf.mxu0
      %v6495 = vadd.f32 0.0, %v6494
      %6496 = vmatmul.f32.gmra.mxu0 %v6382
      %v6497 = vpop.f32.mrf.mxu0
      %v6498 = vadd.f32 0.0, %v6497
      %6499 = vmatmul.f32.gmra.mxu0 %v6385
      %v6500 = vpop.f32.mrf.mxu0
      %v6501 = vadd.f32 0.0, %v6500
      %6502 = vmatmul.f32.gmra.mxu0 %v6388
      %v6503 = vpop.f32.mrf.mxu0
      %v6504 = vadd.f32 0.0, %v6503
      %6505 = vmatmul.f32.gmra.mxu0 %v6391
      %v6506 = vpop.f32.mrf.mxu0
      %v6507 = vadd.f32 0.0, %v6506
      %6508 = vmatmul.f32.gmra.mxu0 %v6394
      %v6509 = vpop.f32.mrf.mxu0
      %v6510 = vadd.f32 0.0, %v6509
      %6511 = vmatmul.f32.gmra.mxu0 %v6397
      %v6512 = vpop.f32.mrf.mxu0
      %v6513 = vadd.f32 0.0, %v6512
      %6514 = vmatmul.f32.gmra.mxu0 %v6400
      %v6515 = vpop.f32.mrf.mxu0
      %v6516 = vadd.f32 0.0, %v6515
      %6517 = vmatmul.f32.gmra.mxu0 %v6403
      %v6518 = vpop.f32.mrf.mxu0
      %v6519 = vadd.f32 0.0, %v6518
      %6520 = vmatmul.f32.gmra.mxu0 %v6406
      %v6521 = vpop.f32.mrf.mxu0
      %v6522 = vadd.f32 0.0, %v6521
      %6523 = vmatmul.f32.gmra.mxu0 %v6409
      %v6524 = vpop.f32.mrf.mxu0
      %v6525 = vadd.f32 0.0, %v6524
      %6526 = vdwg.mxu0
      %v6527 = vadd.f32 %v6250, %v6432
      %v6528 = vadd.f32 %v6251, %v6435
      %v6529 = vadd.f32 %v6252, %v6438
      %v6530 = vadd.f32 %v6253, %v6441
      %v6531 = vadd.f32 %v6254, %v6444
      %v6532 = vadd.f32 %v6255, %v6447
      %v6533 = vadd.f32 %v6256, %v6450
      %v6534 = vadd.f32 %v6257, %v6453
      %v6535 = vadd.f32 %v6258, %v6456
      %v6536 = vadd.f32 %v6259, %v6459
      %v6537 = vadd.f32 %v6260, %v6462
      %v6538 = vadd.f32 %v6261, %v6465
      %v6539 = vadd.f32 %v6262, %v6468
      %v6540 = vadd.f32 %v6263, %v6471
      %v6541 = vadd.f32 %v6264, %v6474
      %v6542 = vadd.f32 %v6265, %v6477
      %v6543 = vadd.f32 %v6266, %v6480
      %v6544 = vadd.f32 %v6267, %v6483
      %v6545 = vadd.f32 %v6268, %v6486
      %v6546 = vadd.f32 %v6269, %v6489
      %v6547 = vadd.f32 %v6270, %v6492
      %v6548 = vadd.f32 %v6271, %v6495
      %v6549 = vadd.f32 %v6272, %v6498
      %v6550 = vadd.f32 %v6273, %v6501
      %v6551 = vadd.f32 %v6274, %v6504
      %v6552 = vadd.f32 %v6275, %v6507
      %v6553 = vadd.f32 %v6276, %v6510
      %v6554 = vadd.f32 %v6277, %v6513
      %v6555 = vadd.f32 %v6278, %v6516
      %v6556 = vadd.f32 %v6279, %v6519
      %v6557 = vadd.f32 %v6280, %v6522
      %v6558 = vadd.f32 %v6281, %v6525
      %v6559 = vld [vmem:[%s288 + $0x1] sm:$0xff]
      %v6560 = vld [vmem:[%s288 + $0x9] sm:$0xff]
      %v6561 = vld [vmem:[%s288 + $0x19] sm:$0xff]
      %v6562 = vld [vmem:[%s288 + $0x21] sm:$0xff]
      %v6563 = vld [vmem:[%s288 + $0x31] sm:$0xff]
      %v6564 = vld [vmem:[%s288 + $0x39] sm:$0xff]
      %v6565 = vld [vmem:[%s288 + $0x49] sm:$0xff]
      %v6566 = vld [vmem:[%s288 + $0x51] sm:$0xff]
      %v6567 = vld [vmem:[%s288 + $0x61] sm:$0xff]
      %v6568 = vld [vmem:[%s288 + $0x69] sm:$0xff]
      %v6569 = vld [vmem:[%s288 + $0x79] sm:$0xff]
      %v6570 = vld [vmem:[%s288 + $0x81] sm:$0xff]
      %v6571 = vld [vmem:[%s288 + $0x91] sm:$0xff]
      %v6572 = vld [vmem:[%s288 + $0x99] sm:$0xff]
      %v6573 = vld [vmem:[%s288 + $0xa9] sm:$0xff]
      %v6574 = vld [vmem:[%s288 + $0xb1] sm:$0xff]
      %v6575 = vld [vmem:[%s288 + $0xc1] sm:$0xff]
      %v6576 = vld [vmem:[%s288 + $0xc9] sm:$0xff]
      %v6577 = vld [vmem:[%s288 + $0xd9] sm:$0xff]
      %v6578 = vld [vmem:[%s288 + $0xe1] sm:$0xff]
      %v6579 = vld [vmem:[%s288 + $0xf1] sm:$0xff]
      %v6580 = vld [vmem:[%s288 + $0xf9] sm:$0xff]
      %v6581 = vld [vmem:[%s288 + $0x109] sm:$0xff]
      %v6582 = vld [vmem:[%s288 + $0x111] sm:$0xff]
      %v6583 = vld [vmem:[%s288 + $0x121] sm:$0xff]
      %v6584 = vld [vmem:[%s288 + $0x129] sm:$0xff]
      %v6585 = vld [vmem:[%s288 + $0x139] sm:$0xff]
      %v6586 = vld [vmem:[%s288 + $0x141] sm:$0xff]
      %v6587 = vld [vmem:[%s288 + $0x151] sm:$0xff]
      %v6588 = vld [vmem:[%s288 + $0x159] sm:$0xff]
      %v6589 = vld [vmem:[%s288 + $0x169] sm:$0xff]
      %v6590 = vld [vmem:[%s288 + $0x171] sm:$0xff]
      %v6591 = vld [vmem:[%s1401] sm:$0xf]
      %v6593 = vsel %vm198, %v6559, 0
      %v6596 = vsel %vm198, %v6560, 0
      %v6599 = vsel %vm198, %v6561, 0
      %v6602 = vsel %vm198, %v6562, 0
      %v6605 = vsel %vm198, %v6563, 0
      %v6608 = vsel %vm198, %v6564, 0
      %v6611 = vsel %vm198, %v6565, 0
      %v6614 = vsel %vm198, %v6566, 0
      %v6617 = vsel %vm198, %v6567, 0
      %v6620 = vsel %vm198, %v6568, 0
      %v6623 = vsel %vm198, %v6569, 0
      %v6626 = vsel %vm198, %v6570, 0
      %v6629 = vsel %vm198, %v6571, 0
      %v6632 = vsel %vm198, %v6572, 0
      %v6635 = vsel %vm198, %v6573, 0
      %v6638 = vsel %vm198, %v6574, 0
      %v6641 = vsel %vm198, %v6575, 0
      %v6644 = vsel %vm198, %v6576, 0
      %v6647 = vsel %vm198, %v6577, 0
      %v6650 = vsel %vm198, %v6578, 0
      %v6653 = vsel %vm198, %v6579, 0
      %v6656 = vsel %vm198, %v6580, 0
      %v6659 = vsel %vm198, %v6581, 0
      %v6662 = vsel %vm198, %v6582, 0
      %v6665 = vsel %vm198, %v6583, 0
      %v6668 = vsel %vm198, %v6584, 0
      %v6671 = vsel %vm198, %v6585, 0
      %v6674 = vsel %vm198, %v6586, 0
      %v6677 = vsel %vm198, %v6587, 0
      %v6680 = vsel %vm198, %v6588, 0
      %v6683 = vsel %vm198, %v6589, 0
      %v6686 = vsel %vm198, %v6590, 0
      %v6689 = vsel %vm484, %v6591, 0
      %6691 = vmatpush.msra.mxu0 0.0
      %6692 = vmatpush.msra.mxu0 0.0
      %6693 = vmatpush.msra.mxu0 0.0
      %6694 = vmatpush.msra.mxu0 0.0
      %6695 = vmatpush.msra.mxu0 0.0
      %6696 = vmatpush.msra.mxu0 0.0
      %6697 = vmatpush.msra.mxu0 0.0
      %6698 = vmatpush.msra.mxu0 0.0
      %6699 = vmatpush.msra.mxu0 0.0
      %6700 = vmatpush.msra.mxu0 0.0
      %6701 = vmatpush.msra.mxu0 0.0
      %6702 = vmatpush.msra.mxu0 0.0
      %6703 = vmatpush.msra.mxu0 0.0
      %6704 = vmatpush.msra.mxu0 0.0
      %6705 = vmatpush.msra.mxu0 0.0
      %6706 = vmatpush.msra.mxu0 %v6689
      %6707 = vmatmul.f32.gmra.mxu0 %v6593
      %v6708 = vpop.f32.mrf.mxu0
      %v6709 = vadd.f32 0.0, %v6708
      %6710 = vmatmul.f32.gmra.mxu0 %v6596
      %v6711 = vpop.f32.mrf.mxu0
      %v6712 = vadd.f32 0.0, %v6711
      %6713 = vmatmul.f32.gmra.mxu0 %v6599
      %v6714 = vpop.f32.mrf.mxu0
      %v6715 = vadd.f32 0.0, %v6714
      %6716 = vmatmul.f32.gmra.mxu0 %v6602
      %v6717 = vpop.f32.mrf.mxu0
      %v6718 = vadd.f32 0.0, %v6717
      %6719 = vmatmul.f32.gmra.mxu0 %v6605
      %v6720 = vpop.f32.mrf.mxu0
      %v6721 = vadd.f32 0.0, %v6720
      %6722 = vmatmul.f32.gmra.mxu0 %v6608
      %v6723 = vpop.f32.mrf.mxu0
      %v6724 = vadd.f32 0.0, %v6723
      %6725 = vmatmul.f32.gmra.mxu0 %v6611
      %v6726 = vpop.f32.mrf.mxu0
      %v6727 = vadd.f32 0.0, %v6726
      %6728 = vmatmul.f32.gmra.mxu0 %v6614
      %v6729 = vpop.f32.mrf.mxu0
      %v6730 = vadd.f32 0.0, %v6729
      %6731 = vmatmul.f32.gmra.mxu0 %v6617
      %v6732 = vpop.f32.mrf.mxu0
      %v6733 = vadd.f32 0.0, %v6732
      %6734 = vmatmul.f32.gmra.mxu0 %v6620
      %v6735 = vpop.f32.mrf.mxu0
      %v6736 = vadd.f32 0.0, %v6735
      %6737 = vmatmul.f32.gmra.mxu0 %v6623
      %v6738 = vpop.f32.mrf.mxu0
      %v6739 = vadd.f32 0.0, %v6738
      %6740 = vmatmul.f32.gmra.mxu0 %v6626
      %v6741 = vpop.f32.mrf.mxu0
      %v6742 = vadd.f32 0.0, %v6741
      %6743 = vmatmul.f32.gmra.mxu0 %v6629
      %v6744 = vpop.f32.mrf.mxu0
      %v6745 = vadd.f32 0.0, %v6744
      %6746 = vmatmul.f32.gmra.mxu0 %v6632
      %v6747 = vpop.f32.mrf.mxu0
      %v6748 = vadd.f32 0.0, %v6747
      %6749 = vmatmul.f32.gmra.mxu0 %v6635
      %v6750 = vpop.f32.mrf.mxu0
      %v6751 = vadd.f32 0.0, %v6750
      %6752 = vmatmul.f32.gmra.mxu0 %v6638
      %v6753 = vpop.f32.mrf.mxu0
      %v6754 = vadd.f32 0.0, %v6753
      %6755 = vmatmul.f32.gmra.mxu0 %v6641
      %v6756 = vpop.f32.mrf.mxu0
      %v6757 = vadd.f32 0.0, %v6756
      %6758 = vmatmul.f32.gmra.mxu0 %v6644
      %v6759 = vpop.f32.mrf.mxu0
      %v6760 = vadd.f32 0.0, %v6759
      %6761 = vmatmul.f32.gmra.mxu0 %v6647
      %v6762 = vpop.f32.mrf.mxu0
      %v6763 = vadd.f32 0.0, %v6762
      %6764 = vmatmul.f32.gmra.mxu0 %v6650
      %v6765 = vpop.f32.mrf.mxu0
      %v6766 = vadd.f32 0.0, %v6765
      %6767 = vmatmul.f32.gmra.mxu0 %v6653
      %v6768 = vpop.f32.mrf.mxu0
      %v6769 = vadd.f32 0.0, %v6768
      %6770 = vmatmul.f32.gmra.mxu0 %v6656
      %v6771 = vpop.f32.mrf.mxu0
      %v6772 = vadd.f32 0.0, %v6771
      %6773 = vmatmul.f32.gmra.mxu0 %v6659
      %v6774 = vpop.f32.mrf.mxu0
      %v6775 = vadd.f32 0.0, %v6774
      %6776 = vmatmul.f32.gmra.mxu0 %v6662
      %v6777 = vpop.f32.mrf.mxu0
      %v6778 = vadd.f32 0.0, %v6777
      %6779 = vmatmul.f32.gmra.mxu0 %v6665
      %v6780 = vpop.f32.mrf.mxu0
      %v6781 = vadd.f32 0.0, %v6780
      %6782 = vmatmul.f32.gmra.mxu0 %v6668
      %v6783 = vpop.f32.mrf.mxu0
      %v6784 = vadd.f32 0.0, %v6783
      %6785 = vmatmul.f32.gmra.mxu0 %v6671
      %v6786 = vpop.f32.mrf.mxu0
      %v6787 = vadd.f32 0.0, %v6786
      %6788 = vmatmul.f32.gmra.mxu0 %v6674
      %v6789 = vpop.f32.mrf.mxu0
      %v6790 = vadd.f32 0.0, %v6789
      %6791 = vmatmul.f32.gmra.mxu0 %v6677
      %v6792 = vpop.f32.mrf.mxu0
      %v6793 = vadd.f32 0.0, %v6792
      %6794 = vmatmul.f32.gmra.mxu0 %v6680
      %v6795 = vpop.f32.mrf.mxu0
      %v6796 = vadd.f32 0.0, %v6795
      %6797 = vmatmul.f32.gmra.mxu0 %v6683
      %v6798 = vpop.f32.mrf.mxu0
      %v6799 = vadd.f32 0.0, %v6798
      %6800 = vmatmul.f32.gmra.mxu0 %v6686
      %v6801 = vpop.f32.mrf.mxu0
      %v6802 = vadd.f32 0.0, %v6801
      %6803 = vdwg.mxu0
      %v6804 = vadd.f32 %v6527, %v6709
      %v6805 = vadd.f32 %v6528, %v6712
      %v6806 = vadd.f32 %v6529, %v6715
      %v6807 = vadd.f32 %v6530, %v6718
      %v6808 = vadd.f32 %v6531, %v6721
      %v6809 = vadd.f32 %v6532, %v6724
      %v6810 = vadd.f32 %v6533, %v6727
      %v6811 = vadd.f32 %v6534, %v6730
      %v6812 = vadd.f32 %v6535, %v6733
      %v6813 = vadd.f32 %v6536, %v6736
      %v6814 = vadd.f32 %v6537, %v6739
      %v6815 = vadd.f32 %v6538, %v6742
      %v6816 = vadd.f32 %v6539, %v6745
      %v6817 = vadd.f32 %v6540, %v6748
      %v6818 = vadd.f32 %v6541, %v6751
      %v6819 = vadd.f32 %v6542, %v6754
      %v6820 = vadd.f32 %v6543, %v6757
      %v6821 = vadd.f32 %v6544, %v6760
      %v6822 = vadd.f32 %v6545, %v6763
      %v6823 = vadd.f32 %v6546, %v6766
      %v6824 = vadd.f32 %v6547, %v6769
      %v6825 = vadd.f32 %v6548, %v6772
      %v6826 = vadd.f32 %v6549, %v6775
      %v6827 = vadd.f32 %v6550, %v6778
      %v6828 = vadd.f32 %v6551, %v6781
      %v6829 = vadd.f32 %v6552, %v6784
      %v6830 = vadd.f32 %v6553, %v6787
      %v6831 = vadd.f32 %v6554, %v6790
      %v6832 = vadd.f32 %v6555, %v6793
      %v6833 = vadd.f32 %v6556, %v6796
      %v6834 = vadd.f32 %v6557, %v6799
      %v6835 = vadd.f32 %v6558, %v6802
      %v6836 = vld [vmem:[%s288 + $0x2] sm:$0xff]
      %v6837 = vld [vmem:[%s288 + $0xa] sm:$0xff]
      %v6838 = vld [vmem:[%s288 + $0x1a] sm:$0xff]
      %v6839 = vld [vmem:[%s288 + $0x22] sm:$0xff]
      %v6840 = vld [vmem:[%s288 + $0x32] sm:$0xff]
      %v6841 = vld [vmem:[%s288 + $0x3a] sm:$0xff]
      %v6842 = vld [vmem:[%s288 + $0x4a] sm:$0xff]
      %v6843 = vld [vmem:[%s288 + $0x52] sm:$0xff]
      %v6844 = vld [vmem:[%s288 + $0x62] sm:$0xff]
      %v6845 = vld [vmem:[%s288 + $0x6a] sm:$0xff]
      %v6846 = vld [vmem:[%s288 + $0x7a] sm:$0xff]
      %v6847 = vld [vmem:[%s288 + $0x82] sm:$0xff]
      %v6848 = vld [vmem:[%s288 + $0x92] sm:$0xff]
      %v6849 = vld [vmem:[%s288 + $0x9a] sm:$0xff]
      %v6850 = vld [vmem:[%s288 + $0xaa] sm:$0xff]
      %v6851 = vld [vmem:[%s288 + $0xb2] sm:$0xff]
      %v6852 = vld [vmem:[%s288 + $0xc2] sm:$0xff]
      %v6853 = vld [vmem:[%s288 + $0xca] sm:$0xff]
      %v6854 = vld [vmem:[%s288 + $0xda] sm:$0xff]
      %v6855 = vld [vmem:[%s288 + $0xe2] sm:$0xff]
      %v6856 = vld [vmem:[%s288 + $0xf2] sm:$0xff]
      %v6857 = vld [vmem:[%s288 + $0xfa] sm:$0xff]
      %v6858 = vld [vmem:[%s288 + $0x10a] sm:$0xff]
      %v6859 = vld [vmem:[%s288 + $0x112] sm:$0xff]
      %v6860 = vld [vmem:[%s288 + $0x122] sm:$0xff]
      %v6861 = vld [vmem:[%s288 + $0x12a] sm:$0xff]
      %v6862 = vld [vmem:[%s288 + $0x13a] sm:$0xff]
      %v6863 = vld [vmem:[%s288 + $0x142] sm:$0xff]
      %v6864 = vld [vmem:[%s288 + $0x152] sm:$0xff]
      %v6865 = vld [vmem:[%s288 + $0x15a] sm:$0xff]
      %v6866 = vld [vmem:[%s288 + $0x16a] sm:$0xff]
      %v6867 = vld [vmem:[%s288 + $0x172] sm:$0xff]
      %v6868 = vld [vmem:[%s1679] sm:$0xf]
      %v6870 = vsel %vm198, %v6836, 0
      %v6873 = vsel %vm198, %v6837, 0
      %v6876 = vsel %vm198, %v6838, 0
      %v6879 = vsel %vm198, %v6839, 0
      %v6882 = vsel %vm198, %v6840, 0
      %v6885 = vsel %vm198, %v6841, 0
      %v6888 = vsel %vm198, %v6842, 0
      %v6891 = vsel %vm198, %v6843, 0
      %v6894 = vsel %vm198, %v6844, 0
      %v6897 = vsel %vm198, %v6845, 0
      %v6900 = vsel %vm198, %v6846, 0
      %v6903 = vsel %vm198, %v6847, 0
      %v6906 = vsel %vm198, %v6848, 0
      %v6909 = vsel %vm198, %v6849, 0
      %v6912 = vsel %vm198, %v6850, 0
      %v6915 = vsel %vm198, %v6851, 0
      %v6918 = vsel %vm198, %v6852, 0
      %v6921 = vsel %vm198, %v6853, 0
      %v6924 = vsel %vm198, %v6854, 0
      %v6927 = vsel %vm198, %v6855, 0
      %v6930 = vsel %vm198, %v6856, 0
      %v6933 = vsel %vm198, %v6857, 0
      %v6936 = vsel %vm198, %v6858, 0
      %v6939 = vsel %vm198, %v6859, 0
      %v6942 = vsel %vm198, %v6860, 0
      %v6945 = vsel %vm198, %v6861, 0
      %v6948 = vsel %vm198, %v6862, 0
      %v6951 = vsel %vm198, %v6863, 0
      %v6954 = vsel %vm198, %v6864, 0
      %v6957 = vsel %vm198, %v6865, 0
      %v6960 = vsel %vm198, %v6866, 0
      %v6963 = vsel %vm198, %v6867, 0
      %v6966 = vsel %vm484, %v6868, 0
      %6968 = vmatpush.msra.mxu0 0.0
      %6969 = vmatpush.msra.mxu0 0.0
      %6970 = vmatpush.msra.mxu0 0.0
      %6971 = vmatpush.msra.mxu0 0.0
      %6972 = vmatpush.msra.mxu0 0.0
      %6973 = vmatpush.msra.mxu0 0.0
      %6974 = vmatpush.msra.mxu0 0.0
      %6975 = vmatpush.msra.mxu0 0.0
      %6976 = vmatpush.msra.mxu0 0.0
      %6977 = vmatpush.msra.mxu0 0.0
      %6978 = vmatpush.msra.mxu0 0.0
      %6979 = vmatpush.msra.mxu0 0.0
      %6980 = vmatpush.msra.mxu0 0.0
      %6981 = vmatpush.msra.mxu0 0.0
      %6982 = vmatpush.msra.mxu0 0.0
      %6983 = vmatpush.msra.mxu0 %v6966
      %6984 = vmatmul.f32.gmra.mxu0 %v6870
      %v6985 = vpop.f32.mrf.mxu0
      %v6986 = vadd.f32 0.0, %v6985
      %6987 = vmatmul.f32.gmra.mxu0 %v6873
      %v6988 = vpop.f32.mrf.mxu0
      %v6989 = vadd.f32 0.0, %v6988
      %6990 = vmatmul.f32.gmra.mxu0 %v6876
      %v6991 = vpop.f32.mrf.mxu0
      %v6992 = vadd.f32 0.0, %v6991
      %6993 = vmatmul.f32.gmra.mxu0 %v6879
      %v6994 = vpop.f32.mrf.mxu0
      %v6995 = vadd.f32 0.0, %v6994
      %6996 = vmatmul.f32.gmra.mxu0 %v6882
      %v6997 = vpop.f32.mrf.mxu0
      %v6998 = vadd.f32 0.0, %v6997
      %6999 = vmatmul.f32.gmra.mxu0 %v6885
      %v7000 = vpop.f32.mrf.mxu0
      %v7001 = vadd.f32 0.0, %v7000
      %7002 = vmatmul.f32.gmra.mxu0 %v6888
      %v7003 = vpop.f32.mrf.mxu0
      %v7004 = vadd.f32 0.0, %v7003
      %7005 = vmatmul.f32.gmra.mxu0 %v6891
      %v7006 = vpop.f32.mrf.mxu0
      %v7007 = vadd.f32 0.0, %v7006
      %7008 = vmatmul.f32.gmra.mxu0 %v6894
      %v7009 = vpop.f32.mrf.mxu0
      %v7010 = vadd.f32 0.0, %v7009
      %7011 = vmatmul.f32.gmra.mxu0 %v6897
      %v7012 = vpop.f32.mrf.mxu0
      %v7013 = vadd.f32 0.0, %v7012
      %7014 = vmatmul.f32.gmra.mxu0 %v6900
      %v7015 = vpop.f32.mrf.mxu0
      %v7016 = vadd.f32 0.0, %v7015
      %7017 = vmatmul.f32.gmra.mxu0 %v6903
      %v7018 = vpop.f32.mrf.mxu0
      %v7019 = vadd.f32 0.0, %v7018
      %7020 = vmatmul.f32.gmra.mxu0 %v6906
      %v7021 = vpop.f32.mrf.mxu0
      %v7022 = vadd.f32 0.0, %v7021
      %7023 = vmatmul.f32.gmra.mxu0 %v6909
      %v7024 = vpop.f32.mrf.mxu0
      %v7025 = vadd.f32 0.0, %v7024
      %7026 = vmatmul.f32.gmra.mxu0 %v6912
      %v7027 = vpop.f32.mrf.mxu0
      %v7028 = vadd.f32 0.0, %v7027
      %7029 = vmatmul.f32.gmra.mxu0 %v6915
      %v7030 = vpop.f32.mrf.mxu0
      %v7031 = vadd.f32 0.0, %v7030
      %7032 = vmatmul.f32.gmra.mxu0 %v6918
      %v7033 = vpop.f32.mrf.mxu0
      %v7034 = vadd.f32 0.0, %v7033
      %7035 = vmatmul.f32.gmra.mxu0 %v6921
      %v7036 = vpop.f32.mrf.mxu0
      %v7037 = vadd.f32 0.0, %v7036
      %7038 = vmatmul.f32.gmra.mxu0 %v6924
      %v7039 = vpop.f32.mrf.mxu0
      %v7040 = vadd.f32 0.0, %v7039
      %7041 = vmatmul.f32.gmra.mxu0 %v6927
      %v7042 = vpop.f32.mrf.mxu0
      %v7043 = vadd.f32 0.0, %v7042
      %7044 = vmatmul.f32.gmra.mxu0 %v6930
      %v7045 = vpop.f32.mrf.mxu0
      %v7046 = vadd.f32 0.0, %v7045
      %7047 = vmatmul.f32.gmra.mxu0 %v6933
      %v7048 = vpop.f32.mrf.mxu0
      %v7049 = vadd.f32 0.0, %v7048
      %7050 = vmatmul.f32.gmra.mxu0 %v6936
      %v7051 = vpop.f32.mrf.mxu0
      %v7052 = vadd.f32 0.0, %v7051
      %7053 = vmatmul.f32.gmra.mxu0 %v6939
      %v7054 = vpop.f32.mrf.mxu0
      %v7055 = vadd.f32 0.0, %v7054
      %7056 = vmatmul.f32.gmra.mxu0 %v6942
      %v7057 = vpop.f32.mrf.mxu0
      %v7058 = vadd.f32 0.0, %v7057
      %7059 = vmatmul.f32.gmra.mxu0 %v6945
      %v7060 = vpop.f32.mrf.mxu0
      %v7061 = vadd.f32 0.0, %v7060
      %7062 = vmatmul.f32.gmra.mxu0 %v6948
      %v7063 = vpop.f32.mrf.mxu0
      %v7064 = vadd.f32 0.0, %v7063
      %7065 = vmatmul.f32.gmra.mxu0 %v6951
      %v7066 = vpop.f32.mrf.mxu0
      %v7067 = vadd.f32 0.0, %v7066
      %7068 = vmatmul.f32.gmra.mxu0 %v6954
      %v7069 = vpop.f32.mrf.mxu0
      %v7070 = vadd.f32 0.0, %v7069
      %7071 = vmatmul.f32.gmra.mxu0 %v6957
      %v7072 = vpop.f32.mrf.mxu0
      %v7073 = vadd.f32 0.0, %v7072
      %7074 = vmatmul.f32.gmra.mxu0 %v6960
      %v7075 = vpop.f32.mrf.mxu0
      %v7076 = vadd.f32 0.0, %v7075
      %7077 = vmatmul.f32.gmra.mxu0 %v6963
      %v7078 = vpop.f32.mrf.mxu0
      %v7079 = vadd.f32 0.0, %v7078
      %7080 = vdwg.mxu0
      %v7081 = vadd.f32 %v6804, %v6986
      %v7082 = vadd.f32 %v6805, %v6989
      %v7083 = vadd.f32 %v6806, %v6992
      %v7084 = vadd.f32 %v6807, %v6995
      %v7085 = vadd.f32 %v6808, %v6998
      %v7086 = vadd.f32 %v6809, %v7001
      %v7087 = vadd.f32 %v6810, %v7004
      %v7088 = vadd.f32 %v6811, %v7007
      %v7089 = vadd.f32 %v6812, %v7010
      %v7090 = vadd.f32 %v6813, %v7013
      %v7091 = vadd.f32 %v6814, %v7016
      %v7092 = vadd.f32 %v6815, %v7019
      %v7093 = vadd.f32 %v6816, %v7022
      %v7094 = vadd.f32 %v6817, %v7025
      %v7095 = vadd.f32 %v6818, %v7028
      %v7096 = vadd.f32 %v6819, %v7031
      %v7097 = vadd.f32 %v6820, %v7034
      %v7098 = vadd.f32 %v6821, %v7037
      %v7099 = vadd.f32 %v6822, %v7040
      %v7100 = vadd.f32 %v6823, %v7043
      %v7101 = vadd.f32 %v6824, %v7046
      %v7102 = vadd.f32 %v6825, %v7049
      %v7103 = vadd.f32 %v6826, %v7052
      %v7104 = vadd.f32 %v6827, %v7055
      %v7105 = vadd.f32 %v6828, %v7058
      %v7106 = vadd.f32 %v6829, %v7061
      %v7107 = vadd.f32 %v6830, %v7064
      %v7108 = vadd.f32 %v6831, %v7067
      %v7109 = vadd.f32 %v6832, %v7070
      %v7110 = vadd.f32 %v6833, %v7073
      %v7111 = vadd.f32 %v6834, %v7076
      %v7112 = vadd.f32 %v6835, %v7079
      %v7113 = vld [vmem:[%s1925] sm:$0xff]
      %v7114 = vld [vmem:[%s1925 + $0x8] sm:$0xff]
      %v7115 = vld [vmem:[%s1925 + $0x18] sm:$0xff]
      %v7116 = vld [vmem:[%s1925 + $0x20] sm:$0xff]
      %v7117 = vld [vmem:[%s1925 + $0x30] sm:$0xff]
      %v7118 = vld [vmem:[%s1925 + $0x38] sm:$0xff]
      %v7119 = vld [vmem:[%s1925 + $0x48] sm:$0xff]
      %v7120 = vld [vmem:[%s1925 + $0x50] sm:$0xff]
      %v7121 = vld [vmem:[%s1925 + $0x60] sm:$0xff]
      %v7122 = vld [vmem:[%s1925 + $0x68] sm:$0xff]
      %v7123 = vld [vmem:[%s1925 + $0x78] sm:$0xff]
      %v7124 = vld [vmem:[%s1925 + $0x80] sm:$0xff]
      %v7125 = vld [vmem:[%s1925 + $0x90] sm:$0xff]
      %v7126 = vld [vmem:[%s1925 + $0x98] sm:$0xff]
      %v7127 = vld [vmem:[%s1925 + $0xa8] sm:$0xff]
      %v7128 = vld [vmem:[%s1925 + $0xb0] sm:$0xff]
      %v7129 = vld [vmem:[%s1925 + $0xc0] sm:$0xff]
      %v7130 = vld [vmem:[%s1925 + $0xc8] sm:$0xff]
      %v7131 = vld [vmem:[%s1925 + $0xd8] sm:$0xff]
      %v7132 = vld [vmem:[%s1925 + $0xe0] sm:$0xff]
      %v7133 = vld [vmem:[%s1925 + $0xf0] sm:$0xff]
      %v7134 = vld [vmem:[%s1925 + $0xf8] sm:$0xff]
      %v7135 = vld [vmem:[%s1925 + $0x108] sm:$0xff]
      %v7136 = vld [vmem:[%s1925 + $0x110] sm:$0xff]
      %v7137 = vld [vmem:[%s1925 + $0x120] sm:$0xff]
      %v7138 = vld [vmem:[%s1925 + $0x128] sm:$0xff]
      %v7139 = vld [vmem:[%s1925 + $0x138] sm:$0xff]
      %v7140 = vld [vmem:[%s1925 + $0x140] sm:$0xff]
      %v7141 = vld [vmem:[%s1925 + $0x150] sm:$0xff]
      %v7142 = vld [vmem:[%s1925 + $0x158] sm:$0xff]
      %v7143 = vld [vmem:[%s1925 + $0x168] sm:$0xff]
      %v7144 = vld [vmem:[%s1925 + $0x170] sm:$0xff]
      %v7145 = vld [vmem:[%s1958] sm:$0xf]
      %v7147 = vsel %vm198, %v7113, 0
      %v7150 = vsel %vm198, %v7114, 0
      %v7153 = vsel %vm198, %v7115, 0
      %v7156 = vsel %vm198, %v7116, 0
      %v7159 = vsel %vm198, %v7117, 0
      %v7162 = vsel %vm198, %v7118, 0
      %v7165 = vsel %vm198, %v7119, 0
      %v7168 = vsel %vm198, %v7120, 0
      %v7171 = vsel %vm198, %v7121, 0
      %v7174 = vsel %vm198, %v7122, 0
      %v7177 = vsel %vm198, %v7123, 0
      %v7180 = vsel %vm198, %v7124, 0
      %v7183 = vsel %vm198, %v7125, 0
      %v7186 = vsel %vm198, %v7126, 0
      %v7189 = vsel %vm198, %v7127, 0
      %v7192 = vsel %vm198, %v7128, 0
      %v7195 = vsel %vm198, %v7129, 0
      %v7198 = vsel %vm198, %v7130, 0
      %v7201 = vsel %vm198, %v7131, 0
      %v7204 = vsel %vm198, %v7132, 0
      %v7207 = vsel %vm198, %v7133, 0
      %v7210 = vsel %vm198, %v7134, 0
      %v7213 = vsel %vm198, %v7135, 0
      %v7216 = vsel %vm198, %v7136, 0
      %v7219 = vsel %vm198, %v7137, 0
      %v7222 = vsel %vm198, %v7138, 0
      %v7225 = vsel %vm198, %v7139, 0
      %v7228 = vsel %vm198, %v7140, 0
      %v7231 = vsel %vm198, %v7141, 0
      %v7234 = vsel %vm198, %v7142, 0
      %v7237 = vsel %vm198, %v7143, 0
      %v7240 = vsel %vm198, %v7144, 0
      %v7243 = vsel %vm484, %v7145, 0
      %7245 = vmatpush.msra.mxu0 0.0
      %7246 = vmatpush.msra.mxu0 0.0
      %7247 = vmatpush.msra.mxu0 0.0
      %7248 = vmatpush.msra.mxu0 0.0
      %7249 = vmatpush.msra.mxu0 0.0
      %7250 = vmatpush.msra.mxu0 0.0
      %7251 = vmatpush.msra.mxu0 0.0
      %7252 = vmatpush.msra.mxu0 0.0
      %7253 = vmatpush.msra.mxu0 0.0
      %7254 = vmatpush.msra.mxu0 0.0
      %7255 = vmatpush.msra.mxu0 0.0
      %7256 = vmatpush.msra.mxu0 0.0
      %7257 = vmatpush.msra.mxu0 0.0
      %7258 = vmatpush.msra.mxu0 0.0
      %7259 = vmatpush.msra.mxu0 0.0
      %7260 = vmatpush.msra.mxu0 %v7243
      %7261 = vmatmul.f32.gmra.mxu0 %v7147
      %v7262 = vpop.f32.mrf.mxu0
      %v7263 = vadd.f32 0.0, %v7262
      %7264 = vmatmul.f32.gmra.mxu0 %v7150
      %v7265 = vpop.f32.mrf.mxu0
      %v7266 = vadd.f32 0.0, %v7265
      %7267 = vmatmul.f32.gmra.mxu0 %v7153
      %v7268 = vpop.f32.mrf.mxu0
      %v7269 = vadd.f32 0.0, %v7268
      %7270 = vmatmul.f32.gmra.mxu0 %v7156
      %v7271 = vpop.f32.mrf.mxu0
      %v7272 = vadd.f32 0.0, %v7271
      %7273 = vmatmul.f32.gmra.mxu0 %v7159
      %v7274 = vpop.f32.mrf.mxu0
      %v7275 = vadd.f32 0.0, %v7274
      %7276 = vmatmul.f32.gmra.mxu0 %v7162
      %v7277 = vpop.f32.mrf.mxu0
      %v7278 = vadd.f32 0.0, %v7277
      %7279 = vmatmul.f32.gmra.mxu0 %v7165
      %v7280 = vpop.f32.mrf.mxu0
      %v7281 = vadd.f32 0.0, %v7280
      %7282 = vmatmul.f32.gmra.mxu0 %v7168
      %v7283 = vpop.f32.mrf.mxu0
      %v7284 = vadd.f32 0.0, %v7283
      %7285 = vmatmul.f32.gmra.mxu0 %v7171
      %v7286 = vpop.f32.mrf.mxu0
      %v7287 = vadd.f32 0.0, %v7286
      %7288 = vmatmul.f32.gmra.mxu0 %v7174
      %v7289 = vpop.f32.mrf.mxu0
      %v7290 = vadd.f32 0.0, %v7289
      %7291 = vmatmul.f32.gmra.mxu0 %v7177
      %v7292 = vpop.f32.mrf.mxu0
      %v7293 = vadd.f32 0.0, %v7292
      %7294 = vmatmul.f32.gmra.mxu0 %v7180
      %v7295 = vpop.f32.mrf.mxu0
      %v7296 = vadd.f32 0.0, %v7295
      %7297 = vmatmul.f32.gmra.mxu0 %v7183
      %v7298 = vpop.f32.mrf.mxu0
      %v7299 = vadd.f32 0.0, %v7298
      %7300 = vmatmul.f32.gmra.mxu0 %v7186
      %v7301 = vpop.f32.mrf.mxu0
      %v7302 = vadd.f32 0.0, %v7301
      %7303 = vmatmul.f32.gmra.mxu0 %v7189
      %v7304 = vpop.f32.mrf.mxu0
      %v7305 = vadd.f32 0.0, %v7304
      %7306 = vmatmul.f32.gmra.mxu0 %v7192
      %v7307 = vpop.f32.mrf.mxu0
      %v7308 = vadd.f32 0.0, %v7307
      %7309 = vmatmul.f32.gmra.mxu0 %v7195
      %v7310 = vpop.f32.mrf.mxu0
      %v7311 = vadd.f32 0.0, %v7310
      %7312 = vmatmul.f32.gmra.mxu0 %v7198
      %v7313 = vpop.f32.mrf.mxu0
      %v7314 = vadd.f32 0.0, %v7313
      %7315 = vmatmul.f32.gmra.mxu0 %v7201
      %v7316 = vpop.f32.mrf.mxu0
      %v7317 = vadd.f32 0.0, %v7316
      %7318 = vmatmul.f32.gmra.mxu0 %v7204
      %v7319 = vpop.f32.mrf.mxu0
      %v7320 = vadd.f32 0.0, %v7319
      %7321 = vmatmul.f32.gmra.mxu0 %v7207
      %v7322 = vpop.f32.mrf.mxu0
      %v7323 = vadd.f32 0.0, %v7322
      %7324 = vmatmul.f32.gmra.mxu0 %v7210
      %v7325 = vpop.f32.mrf.mxu0
      %v7326 = vadd.f32 0.0, %v7325
      %7327 = vmatmul.f32.gmra.mxu0 %v7213
      %v7328 = vpop.f32.mrf.mxu0
      %v7329 = vadd.f32 0.0, %v7328
      %7330 = vmatmul.f32.gmra.mxu0 %v7216
      %v7331 = vpop.f32.mrf.mxu0
      %v7332 = vadd.f32 0.0, %v7331
      %7333 = vmatmul.f32.gmra.mxu0 %v7219
      %v7334 = vpop.f32.mrf.mxu0
      %v7335 = vadd.f32 0.0, %v7334
      %7336 = vmatmul.f32.gmra.mxu0 %v7222
      %v7337 = vpop.f32.mrf.mxu0
      %v7338 = vadd.f32 0.0, %v7337
      %7339 = vmatmul.f32.gmra.mxu0 %v7225
      %v7340 = vpop.f32.mrf.mxu0
      %v7341 = vadd.f32 0.0, %v7340
      %7342 = vmatmul.f32.gmra.mxu0 %v7228
      %v7343 = vpop.f32.mrf.mxu0
      %v7344 = vadd.f32 0.0, %v7343
      %7345 = vmatmul.f32.gmra.mxu0 %v7231
      %v7346 = vpop.f32.mrf.mxu0
      %v7347 = vadd.f32 0.0, %v7346
      %7348 = vmatmul.f32.gmra.mxu0 %v7234
      %v7349 = vpop.f32.mrf.mxu0
      %v7350 = vadd.f32 0.0, %v7349
      %7351 = vmatmul.f32.gmra.mxu0 %v7237
      %v7352 = vpop.f32.mrf.mxu0
      %v7353 = vadd.f32 0.0, %v7352
      %7354 = vmatmul.f32.gmra.mxu0 %v7240
      %v7355 = vpop.f32.mrf.mxu0
      %v7356 = vadd.f32 0.0, %v7355
      %7357 = vdwg.mxu0
      %v7358 = vadd.f32 %v7081, %v7263
      %v7359 = vadd.f32 %v7082, %v7266
      %v7360 = vadd.f32 %v7083, %v7269
      %v7361 = vadd.f32 %v7084, %v7272
      %v7362 = vadd.f32 %v7085, %v7275
      %v7363 = vadd.f32 %v7086, %v7278
      %v7364 = vadd.f32 %v7087, %v7281
      %v7365 = vadd.f32 %v7088, %v7284
      %v7366 = vadd.f32 %v7089, %v7287
      %v7367 = vadd.f32 %v7090, %v7290
      %v7368 = vadd.f32 %v7091, %v7293
      %v7369 = vadd.f32 %v7092, %v7296
      %v7370 = vadd.f32 %v7093, %v7299
      %v7371 = vadd.f32 %v7094, %v7302
      %v7372 = vadd.f32 %v7095, %v7305
      %v7373 = vadd.f32 %v7096, %v7308
      %v7374 = vadd.f32 %v7097, %v7311
      %v7375 = vadd.f32 %v7098, %v7314
      %v7376 = vadd.f32 %v7099, %v7317
      %v7377 = vadd.f32 %v7100, %v7320
      %v7378 = vadd.f32 %v7101, %v7323
      %v7379 = vadd.f32 %v7102, %v7326
      %v7380 = vadd.f32 %v7103, %v7329
      %v7381 = vadd.f32 %v7104, %v7332
      %v7382 = vadd.f32 %v7105, %v7335
      %v7383 = vadd.f32 %v7106, %v7338
      %v7384 = vadd.f32 %v7107, %v7341
      %v7385 = vadd.f32 %v7108, %v7344
      %v7386 = vadd.f32 %v7109, %v7347
      %v7387 = vadd.f32 %v7110, %v7350
      %v7388 = vadd.f32 %v7111, %v7353
      %v7389 = vadd.f32 %v7112, %v7356
      %v7390 = vld [vmem:[%s1925 + $0x1] sm:$0xff]
      %v7391 = vld [vmem:[%s1925 + $0x9] sm:$0xff]
      %v7392 = vld [vmem:[%s1925 + $0x19] sm:$0xff]
      %v7393 = vld [vmem:[%s1925 + $0x21] sm:$0xff]
      %v7394 = vld [vmem:[%s1925 + $0x31] sm:$0xff]
      %v7395 = vld [vmem:[%s1925 + $0x39] sm:$0xff]
      %v7396 = vld [vmem:[%s1925 + $0x49] sm:$0xff]
      %v7397 = vld [vmem:[%s1925 + $0x51] sm:$0xff]
      %v7398 = vld [vmem:[%s1925 + $0x61] sm:$0xff]
      %v7399 = vld [vmem:[%s1925 + $0x69] sm:$0xff]
      %v7400 = vld [vmem:[%s1925 + $0x79] sm:$0xff]
      %v7401 = vld [vmem:[%s1925 + $0x81] sm:$0xff]
      %v7402 = vld [vmem:[%s1925 + $0x91] sm:$0xff]
      %v7403 = vld [vmem:[%s1925 + $0x99] sm:$0xff]
      %v7404 = vld [vmem:[%s1925 + $0xa9] sm:$0xff]
      %v7405 = vld [vmem:[%s1925 + $0xb1] sm:$0xff]
      %v7406 = vld [vmem:[%s1925 + $0xc1] sm:$0xff]
      %v7407 = vld [vmem:[%s1925 + $0xc9] sm:$0xff]
      %v7408 = vld [vmem:[%s1925 + $0xd9] sm:$0xff]
      %v7409 = vld [vmem:[%s1925 + $0xe1] sm:$0xff]
      %v7410 = vld [vmem:[%s1925 + $0xf1] sm:$0xff]
      %v7411 = vld [vmem:[%s1925 + $0xf9] sm:$0xff]
      %v7412 = vld [vmem:[%s1925 + $0x109] sm:$0xff]
      %v7413 = vld [vmem:[%s1925 + $0x111] sm:$0xff]
      %v7414 = vld [vmem:[%s1925 + $0x121] sm:$0xff]
      %v7415 = vld [vmem:[%s1925 + $0x129] sm:$0xff]
      %v7416 = vld [vmem:[%s1925 + $0x139] sm:$0xff]
      %v7417 = vld [vmem:[%s1925 + $0x141] sm:$0xff]
      %v7418 = vld [vmem:[%s1925 + $0x151] sm:$0xff]
      %v7419 = vld [vmem:[%s1925 + $0x159] sm:$0xff]
      %v7420 = vld [vmem:[%s1925 + $0x169] sm:$0xff]
      %v7421 = vld [vmem:[%s1925 + $0x171] sm:$0xff]
      %v7422 = vld [vmem:[%s2236] sm:$0xf]
      %v7424 = vsel %vm198, %v7390, 0
      %v7427 = vsel %vm198, %v7391, 0
      %v7430 = vsel %vm198, %v7392, 0
      %v7433 = vsel %vm198, %v7393, 0
      %v7436 = vsel %vm198, %v7394, 0
      %v7439 = vsel %vm198, %v7395, 0
      %v7442 = vsel %vm198, %v7396, 0
      %v7445 = vsel %vm198, %v7397, 0
      %v7448 = vsel %vm198, %v7398, 0
      %v7451 = vsel %vm198, %v7399, 0
      %v7454 = vsel %vm198, %v7400, 0
      %v7457 = vsel %vm198, %v7401, 0
      %v7460 = vsel %vm198, %v7402, 0
      %v7463 = vsel %vm198, %v7403, 0
      %v7466 = vsel %vm198, %v7404, 0
      %v7469 = vsel %vm198, %v7405, 0
      %v7472 = vsel %vm198, %v7406, 0
      %v7475 = vsel %vm198, %v7407, 0
      %v7478 = vsel %vm198, %v7408, 0
      %v7481 = vsel %vm198, %v7409, 0
      %v7484 = vsel %vm198, %v7410, 0
      %v7487 = vsel %vm198, %v7411, 0
      %v7490 = vsel %vm198, %v7412, 0
      %v7493 = vsel %vm198, %v7413, 0
      %v7496 = vsel %vm198, %v7414, 0
      %v7499 = vsel %vm198, %v7415, 0
      %v7502 = vsel %vm198, %v7416, 0
      %v7505 = vsel %vm198, %v7417, 0
      %v7508 = vsel %vm198, %v7418, 0
      %v7511 = vsel %vm198, %v7419, 0
      %v7514 = vsel %vm198, %v7420, 0
      %v7517 = vsel %vm198, %v7421, 0
      %v7520 = vsel %vm484, %v7422, 0
      %7522 = vmatpush.msra.mxu0 0.0
      %7523 = vmatpush.msra.mxu0 0.0
      %7524 = vmatpush.msra.mxu0 0.0
      %7525 = vmatpush.msra.mxu0 0.0
      %7526 = vmatpush.msra.mxu0 0.0
      %7527 = vmatpush.msra.mxu0 0.0
      %7528 = vmatpush.msra.mxu0 0.0
      %7529 = vmatpush.msra.mxu0 0.0
      %7530 = vmatpush.msra.mxu0 0.0
      %7531 = vmatpush.msra.mxu0 0.0
      %7532 = vmatpush.msra.mxu0 0.0
      %7533 = vmatpush.msra.mxu0 0.0
      %7534 = vmatpush.msra.mxu0 0.0
      %7535 = vmatpush.msra.mxu0 0.0
      %7536 = vmatpush.msra.mxu0 0.0
      %7537 = vmatpush.msra.mxu0 %v7520
      %7538 = vmatmul.f32.gmra.mxu0 %v7424
      %v7539 = vpop.f32.mrf.mxu0
      %v7540 = vadd.f32 0.0, %v7539
      %7541 = vmatmul.f32.gmra.mxu0 %v7427
      %v7542 = vpop.f32.mrf.mxu0
      %v7543 = vadd.f32 0.0, %v7542
      %7544 = vmatmul.f32.gmra.mxu0 %v7430
      %v7545 = vpop.f32.mrf.mxu0
      %v7546 = vadd.f32 0.0, %v7545
      %7547 = vmatmul.f32.gmra.mxu0 %v7433
      %v7548 = vpop.f32.mrf.mxu0
      %v7549 = vadd.f32 0.0, %v7548
      %7550 = vmatmul.f32.gmra.mxu0 %v7436
      %v7551 = vpop.f32.mrf.mxu0
      %v7552 = vadd.f32 0.0, %v7551
      %7553 = vmatmul.f32.gmra.mxu0 %v7439
      %v7554 = vpop.f32.mrf.mxu0
      %v7555 = vadd.f32 0.0, %v7554
      %7556 = vmatmul.f32.gmra.mxu0 %v7442
      %v7557 = vpop.f32.mrf.mxu0
      %v7558 = vadd.f32 0.0, %v7557
      %7559 = vmatmul.f32.gmra.mxu0 %v7445
      %v7560 = vpop.f32.mrf.mxu0
      %v7561 = vadd.f32 0.0, %v7560
      %7562 = vmatmul.f32.gmra.mxu0 %v7448
      %v7563 = vpop.f32.mrf.mxu0
      %v7564 = vadd.f32 0.0, %v7563
      %7565 = vmatmul.f32.gmra.mxu0 %v7451
      %v7566 = vpop.f32.mrf.mxu0
      %v7567 = vadd.f32 0.0, %v7566
      %7568 = vmatmul.f32.gmra.mxu0 %v7454
      %v7569 = vpop.f32.mrf.mxu0
      %v7570 = vadd.f32 0.0, %v7569
      %7571 = vmatmul.f32.gmra.mxu0 %v7457
      %v7572 = vpop.f32.mrf.mxu0
      %v7573 = vadd.f32 0.0, %v7572
      %7574 = vmatmul.f32.gmra.mxu0 %v7460
      %v7575 = vpop.f32.mrf.mxu0
      %v7576 = vadd.f32 0.0, %v7575
      %7577 = vmatmul.f32.gmra.mxu0 %v7463
      %v7578 = vpop.f32.mrf.mxu0
      %v7579 = vadd.f32 0.0, %v7578
      %7580 = vmatmul.f32.gmra.mxu0 %v7466
      %v7581 = vpop.f32.mrf.mxu0
      %v7582 = vadd.f32 0.0, %v7581
      %7583 = vmatmul.f32.gmra.mxu0 %v7469
      %v7584 = vpop.f32.mrf.mxu0
      %v7585 = vadd.f32 0.0, %v7584
      %7586 = vmatmul.f32.gmra.mxu0 %v7472
      %v7587 = vpop.f32.mrf.mxu0
      %v7588 = vadd.f32 0.0, %v7587
      %7589 = vmatmul.f32.gmra.mxu0 %v7475
      %v7590 = vpop.f32.mrf.mxu0
      %v7591 = vadd.f32 0.0, %v7590
      %7592 = vmatmul.f32.gmra.mxu0 %v7478
      %v7593 = vpop.f32.mrf.mxu0
      %v7594 = vadd.f32 0.0, %v7593
      %7595 = vmatmul.f32.gmra.mxu0 %v7481
      %v7596 = vpop.f32.mrf.mxu0
      %v7597 = vadd.f32 0.0, %v7596
      %7598 = vmatmul.f32.gmra.mxu0 %v7484
      %v7599 = vpop.f32.mrf.mxu0
      %v7600 = vadd.f32 0.0, %v7599
      %7601 = vmatmul.f32.gmra.mxu0 %v7487
      %v7602 = vpop.f32.mrf.mxu0
      %v7603 = vadd.f32 0.0, %v7602
      %7604 = vmatmul.f32.gmra.mxu0 %v7490
      %v7605 = vpop.f32.mrf.mxu0
      %v7606 = vadd.f32 0.0, %v7605
      %7607 = vmatmul.f32.gmra.mxu0 %v7493
      %v7608 = vpop.f32.mrf.mxu0
      %v7609 = vadd.f32 0.0, %v7608
      %7610 = vmatmul.f32.gmra.mxu0 %v7496
      %v7611 = vpop.f32.mrf.mxu0
      %v7612 = vadd.f32 0.0, %v7611
      %7613 = vmatmul.f32.gmra.mxu0 %v7499
      %v7614 = vpop.f32.mrf.mxu0
      %v7615 = vadd.f32 0.0, %v7614
      %7616 = vmatmul.f32.gmra.mxu0 %v7502
      %v7617 = vpop.f32.mrf.mxu0
      %v7618 = vadd.f32 0.0, %v7617
      %7619 = vmatmul.f32.gmra.mxu0 %v7505
      %v7620 = vpop.f32.mrf.mxu0
      %v7621 = vadd.f32 0.0, %v7620
      %7622 = vmatmul.f32.gmra.mxu0 %v7508
      %v7623 = vpop.f32.mrf.mxu0
      %v7624 = vadd.f32 0.0, %v7623
      %7625 = vmatmul.f32.gmra.mxu0 %v7511
      %v7626 = vpop.f32.mrf.mxu0
      %v7627 = vadd.f32 0.0, %v7626
      %7628 = vmatmul.f32.gmra.mxu0 %v7514
      %v7629 = vpop.f32.mrf.mxu0
      %v7630 = vadd.f32 0.0, %v7629
      %7631 = vmatmul.f32.gmra.mxu0 %v7517
      %v7632 = vpop.f32.mrf.mxu0
      %v7633 = vadd.f32 0.0, %v7632
      %7634 = vdwg.mxu0
      %v7635 = vadd.f32 %v7358, %v7540
      %v7636 = vadd.f32 %v7359, %v7543
      %v7637 = vadd.f32 %v7360, %v7546
      %v7638 = vadd.f32 %v7361, %v7549
      %v7639 = vadd.f32 %v7362, %v7552
      %v7640 = vadd.f32 %v7363, %v7555
      %v7641 = vadd.f32 %v7364, %v7558
      %v7642 = vadd.f32 %v7365, %v7561
      %v7643 = vadd.f32 %v7366, %v7564
      %v7644 = vadd.f32 %v7367, %v7567
      %v7645 = vadd.f32 %v7368, %v7570
      %v7646 = vadd.f32 %v7369, %v7573
      %v7647 = vadd.f32 %v7370, %v7576
      %v7648 = vadd.f32 %v7371, %v7579
      %v7649 = vadd.f32 %v7372, %v7582
      %v7650 = vadd.f32 %v7373, %v7585
      %v7651 = vadd.f32 %v7374, %v7588
      %v7652 = vadd.f32 %v7375, %v7591
      %v7653 = vadd.f32 %v7376, %v7594
      %v7654 = vadd.f32 %v7377, %v7597
      %v7655 = vadd.f32 %v7378, %v7600
      %v7656 = vadd.f32 %v7379, %v7603
      %v7657 = vadd.f32 %v7380, %v7606
      %v7658 = vadd.f32 %v7381, %v7609
      %v7659 = vadd.f32 %v7382, %v7612
      %v7660 = vadd.f32 %v7383, %v7615
      %v7661 = vadd.f32 %v7384, %v7618
      %v7662 = vadd.f32 %v7385, %v7621
      %v7663 = vadd.f32 %v7386, %v7624
      %v7664 = vadd.f32 %v7387, %v7627
      %v7665 = vadd.f32 %v7388, %v7630
      %v7666 = vadd.f32 %v7389, %v7633
      %v7667 = vld [vmem:[%s1925 + $0x2] sm:$0xff]
      %v7668 = vld [vmem:[%s1925 + $0xa] sm:$0xff]
      %v7669 = vld [vmem:[%s1925 + $0x1a] sm:$0xff]
      %v7670 = vld [vmem:[%s1925 + $0x22] sm:$0xff]
      %v7671 = vld [vmem:[%s1925 + $0x32] sm:$0xff]
      %v7672 = vld [vmem:[%s1925 + $0x3a] sm:$0xff]
      %v7673 = vld [vmem:[%s1925 + $0x4a] sm:$0xff]
      %v7674 = vld [vmem:[%s1925 + $0x52] sm:$0xff]
      %v7675 = vld [vmem:[%s1925 + $0x62] sm:$0xff]
      %v7676 = vld [vmem:[%s1925 + $0x6a] sm:$0xff]
      %v7677 = vld [vmem:[%s1925 + $0x7a] sm:$0xff]
      %v7678 = vld [vmem:[%s1925 + $0x82] sm:$0xff]
      %v7679 = vld [vmem:[%s1925 + $0x92] sm:$0xff]
      %v7680 = vld [vmem:[%s1925 + $0x9a] sm:$0xff]
      %v7681 = vld [vmem:[%s1925 + $0xaa] sm:$0xff]
      %v7682 = vld [vmem:[%s1925 + $0xb2] sm:$0xff]
      %v7683 = vld [vmem:[%s1925 + $0xc2] sm:$0xff]
      %v7684 = vld [vmem:[%s1925 + $0xca] sm:$0xff]
      %v7685 = vld [vmem:[%s1925 + $0xda] sm:$0xff]
      %v7686 = vld [vmem:[%s1925 + $0xe2] sm:$0xff]
      %v7687 = vld [vmem:[%s1925 + $0xf2] sm:$0xff]
      %v7688 = vld [vmem:[%s1925 + $0xfa] sm:$0xff]
      %v7689 = vld [vmem:[%s1925 + $0x10a] sm:$0xff]
      %v7690 = vld [vmem:[%s1925 + $0x112] sm:$0xff]
      %v7691 = vld [vmem:[%s1925 + $0x122] sm:$0xff]
      %v7692 = vld [vmem:[%s1925 + $0x12a] sm:$0xff]
      %v7693 = vld [vmem:[%s1925 + $0x13a] sm:$0xff]
      %v7694 = vld [vmem:[%s1925 + $0x142] sm:$0xff]
      %v7695 = vld [vmem:[%s1925 + $0x152] sm:$0xff]
      %v7696 = vld [vmem:[%s1925 + $0x15a] sm:$0xff]
      %v7697 = vld [vmem:[%s1925 + $0x16a] sm:$0xff]
      %v7698 = vld [vmem:[%s1925 + $0x172] sm:$0xff]
      %v7699 = vld [vmem:[%s2514] sm:$0xf]
      %v7701 = vsel %vm198, %v7667, 0
      %v7704 = vsel %vm198, %v7668, 0
      %v7707 = vsel %vm198, %v7669, 0
      %v7710 = vsel %vm198, %v7670, 0
      %v7713 = vsel %vm198, %v7671, 0
      %v7716 = vsel %vm198, %v7672, 0
      %v7719 = vsel %vm198, %v7673, 0
      %v7722 = vsel %vm198, %v7674, 0
      %v7725 = vsel %vm198, %v7675, 0
      %v7728 = vsel %vm198, %v7676, 0
      %v7731 = vsel %vm198, %v7677, 0
      %v7734 = vsel %vm198, %v7678, 0
      %v7737 = vsel %vm198, %v7679, 0
      %v7740 = vsel %vm198, %v7680, 0
      %v7743 = vsel %vm198, %v7681, 0
      %v7746 = vsel %vm198, %v7682, 0
      %v7749 = vsel %vm198, %v7683, 0
      %v7752 = vsel %vm198, %v7684, 0
      %v7755 = vsel %vm198, %v7685, 0
      %v7758 = vsel %vm198, %v7686, 0
      %v7761 = vsel %vm198, %v7687, 0
      %v7764 = vsel %vm198, %v7688, 0
      %v7767 = vsel %vm198, %v7689, 0
      %v7770 = vsel %vm198, %v7690, 0
      %v7773 = vsel %vm198, %v7691, 0
      %v7776 = vsel %vm198, %v7692, 0
      %v7779 = vsel %vm198, %v7693, 0
      %v7782 = vsel %vm198, %v7694, 0
      %v7785 = vsel %vm198, %v7695, 0
      %v7788 = vsel %vm198, %v7696, 0
      %v7791 = vsel %vm198, %v7697, 0
      %v7794 = vsel %vm198, %v7698, 0
      %v7797 = vsel %vm484, %v7699, 0
      %7799 = vmatpush.msra.mxu0 0.0
      %7800 = vmatpush.msra.mxu0 0.0
      %7801 = vmatpush.msra.mxu0 0.0
      %7802 = vmatpush.msra.mxu0 0.0
      %7803 = vmatpush.msra.mxu0 0.0
      %7804 = vmatpush.msra.mxu0 0.0
      %7805 = vmatpush.msra.mxu0 0.0
      %7806 = vmatpush.msra.mxu0 0.0
      %7807 = vmatpush.msra.mxu0 0.0
      %7808 = vmatpush.msra.mxu0 0.0
      %7809 = vmatpush.msra.mxu0 0.0
      %7810 = vmatpush.msra.mxu0 0.0
      %7811 = vmatpush.msra.mxu0 0.0
      %7812 = vmatpush.msra.mxu0 0.0
      %7813 = vmatpush.msra.mxu0 0.0
      %7814 = vmatpush.msra.mxu0 %v7797
      %7815 = vmatmul.f32.gmra.mxu0 %v7701
      %v7816 = vpop.f32.mrf.mxu0
      %v7817 = vadd.f32 0.0, %v7816
      %7818 = vmatmul.f32.gmra.mxu0 %v7704
      %v7819 = vpop.f32.mrf.mxu0
      %v7820 = vadd.f32 0.0, %v7819
      %7821 = vmatmul.f32.gmra.mxu0 %v7707
      %v7822 = vpop.f32.mrf.mxu0
      %v7823 = vadd.f32 0.0, %v7822
      %7824 = vmatmul.f32.gmra.mxu0 %v7710
      %v7825 = vpop.f32.mrf.mxu0
      %v7826 = vadd.f32 0.0, %v7825
      %7827 = vmatmul.f32.gmra.mxu0 %v7713
      %v7828 = vpop.f32.mrf.mxu0
      %v7829 = vadd.f32 0.0, %v7828
      %7830 = vmatmul.f32.gmra.mxu0 %v7716
      %v7831 = vpop.f32.mrf.mxu0
      %v7832 = vadd.f32 0.0, %v7831
      %7833 = vmatmul.f32.gmra.mxu0 %v7719
      %v7834 = vpop.f32.mrf.mxu0
      %v7835 = vadd.f32 0.0, %v7834
      %7836 = vmatmul.f32.gmra.mxu0 %v7722
      %v7837 = vpop.f32.mrf.mxu0
      %v7838 = vadd.f32 0.0, %v7837
      %7839 = vmatmul.f32.gmra.mxu0 %v7725
      %v7840 = vpop.f32.mrf.mxu0
      %v7841 = vadd.f32 0.0, %v7840
      %7842 = vmatmul.f32.gmra.mxu0 %v7728
      %v7843 = vpop.f32.mrf.mxu0
      %v7844 = vadd.f32 0.0, %v7843
      %7845 = vmatmul.f32.gmra.mxu0 %v7731
      %v7846 = vpop.f32.mrf.mxu0
      %v7847 = vadd.f32 0.0, %v7846
      %7848 = vmatmul.f32.gmra.mxu0 %v7734
      %v7849 = vpop.f32.mrf.mxu0
      %v7850 = vadd.f32 0.0, %v7849
      %7851 = vmatmul.f32.gmra.mxu0 %v7737
      %v7852 = vpop.f32.mrf.mxu0
      %v7853 = vadd.f32 0.0, %v7852
      %7854 = vmatmul.f32.gmra.mxu0 %v7740
      %v7855 = vpop.f32.mrf.mxu0
      %v7856 = vadd.f32 0.0, %v7855
      %7857 = vmatmul.f32.gmra.mxu0 %v7743
      %v7858 = vpop.f32.mrf.mxu0
      %v7859 = vadd.f32 0.0, %v7858
      %7860 = vmatmul.f32.gmra.mxu0 %v7746
      %v7861 = vpop.f32.mrf.mxu0
      %v7862 = vadd.f32 0.0, %v7861
      %7863 = vmatmul.f32.gmra.mxu0 %v7749
      %v7864 = vpop.f32.mrf.mxu0
      %v7865 = vadd.f32 0.0, %v7864
      %7866 = vmatmul.f32.gmra.mxu0 %v7752
      %v7867 = vpop.f32.mrf.mxu0
      %v7868 = vadd.f32 0.0, %v7867
      %7869 = vmatmul.f32.gmra.mxu0 %v7755
      %v7870 = vpop.f32.mrf.mxu0
      %v7871 = vadd.f32 0.0, %v7870
      %7872 = vmatmul.f32.gmra.mxu0 %v7758
      %v7873 = vpop.f32.mrf.mxu0
      %v7874 = vadd.f32 0.0, %v7873
      %7875 = vmatmul.f32.gmra.mxu0 %v7761
      %v7876 = vpop.f32.mrf.mxu0
      %v7877 = vadd.f32 0.0, %v7876
      %7878 = vmatmul.f32.gmra.mxu0 %v7764
      %v7879 = vpop.f32.mrf.mxu0
      %v7880 = vadd.f32 0.0, %v7879
      %7881 = vmatmul.f32.gmra.mxu0 %v7767
      %v7882 = vpop.f32.mrf.mxu0
      %v7883 = vadd.f32 0.0, %v7882
      %7884 = vmatmul.f32.gmra.mxu0 %v7770
      %v7885 = vpop.f32.mrf.mxu0
      %v7886 = vadd.f32 0.0, %v7885
      %7887 = vmatmul.f32.gmra.mxu0 %v7773
      %v7888 = vpop.f32.mrf.mxu0
      %v7889 = vadd.f32 0.0, %v7888
      %7890 = vmatmul.f32.gmra.mxu0 %v7776
      %v7891 = vpop.f32.mrf.mxu0
      %v7892 = vadd.f32 0.0, %v7891
      %7893 = vmatmul.f32.gmra.mxu0 %v7779
      %v7894 = vpop.f32.mrf.mxu0
      %v7895 = vadd.f32 0.0, %v7894
      %7896 = vmatmul.f32.gmra.mxu0 %v7782
      %v7897 = vpop.f32.mrf.mxu0
      %v7898 = vadd.f32 0.0, %v7897
      %7899 = vmatmul.f32.gmra.mxu0 %v7785
      %v7900 = vpop.f32.mrf.mxu0
      %v7901 = vadd.f32 0.0, %v7900
      %7902 = vmatmul.f32.gmra.mxu0 %v7788
      %v7903 = vpop.f32.mrf.mxu0
      %v7904 = vadd.f32 0.0, %v7903
      %7905 = vmatmul.f32.gmra.mxu0 %v7791
      %v7906 = vpop.f32.mrf.mxu0
      %v7907 = vadd.f32 0.0, %v7906
      %7908 = vmatmul.f32.gmra.mxu0 %v7794
      %v7909 = vpop.f32.mrf.mxu0
      %v7910 = vadd.f32 0.0, %v7909
      %7911 = vdwg.mxu0
      %v7912 = vadd.f32 %v7635, %v7817
      %v7913 = vadd.f32 %v7636, %v7820
      %v7914 = vadd.f32 %v7637, %v7823
      %v7915 = vadd.f32 %v7638, %v7826
      %v7916 = vadd.f32 %v7639, %v7829
      %v7917 = vadd.f32 %v7640, %v7832
      %v7918 = vadd.f32 %v7641, %v7835
      %v7919 = vadd.f32 %v7642, %v7838
      %v7920 = vadd.f32 %v7643, %v7841
      %v7921 = vadd.f32 %v7644, %v7844
      %v7922 = vadd.f32 %v7645, %v7847
      %v7923 = vadd.f32 %v7646, %v7850
      %v7924 = vadd.f32 %v7647, %v7853
      %v7925 = vadd.f32 %v7648, %v7856
      %v7926 = vadd.f32 %v7649, %v7859
      %v7927 = vadd.f32 %v7650, %v7862
      %v7928 = vadd.f32 %v7651, %v7865
      %v7929 = vadd.f32 %v7652, %v7868
      %v7930 = vadd.f32 %v7653, %v7871
      %v7931 = vadd.f32 %v7654, %v7874
      %v7932 = vadd.f32 %v7655, %v7877
      %v7933 = vadd.f32 %v7656, %v7880
      %v7934 = vadd.f32 %v7657, %v7883
      %v7935 = vadd.f32 %v7658, %v7886
      %v7936 = vadd.f32 %v7659, %v7889
      %v7937 = vadd.f32 %v7660, %v7892
      %v7938 = vadd.f32 %v7661, %v7895
      %v7939 = vadd.f32 %v7662, %v7898
      %v7940 = vadd.f32 %v7663, %v7901
      %v7941 = vadd.f32 %v7664, %v7904
      %v7942 = vadd.f32 %v7665, %v7907
      %v7943 = vadd.f32 %v7666, %v7910
      %v7944 = vmul.f32 %v7912, %v2761
      %v7945 = vmul.f32 %v7913, %v2761
      %v7946 = vmul.f32 %v7914, %v2761
      %v7947 = vmul.f32 %v7915, %v2761
      %v7948 = vmul.f32 %v7916, %v2761
      %v7949 = vmul.f32 %v7917, %v2761
      %v7950 = vmul.f32 %v7918, %v2761
      %v7951 = vmul.f32 %v7919, %v2761
      %v7952 = vmul.f32 %v7920, %v2761
      %v7953 = vmul.f32 %v7921, %v2761
      %v7954 = vmul.f32 %v7922, %v2761
      %v7955 = vmul.f32 %v7923, %v2761
      %v7956 = vmul.f32 %v7924, %v2761
      %v7957 = vmul.f32 %v7925, %v2761
      %v7958 = vmul.f32 %v7926, %v2761
      %v7959 = vmul.f32 %v7927, %v2761
      %v7960 = vmul.f32 %v7928, %v2761
      %v7961 = vmul.f32 %v7929, %v2761
      %v7962 = vmul.f32 %v7930, %v2761
      %v7963 = vmul.f32 %v7931, %v2761
      %v7964 = vmul.f32 %v7932, %v2761
      %v7965 = vmul.f32 %v7933, %v2761
      %v7966 = vmul.f32 %v7934, %v2761
      %v7967 = vmul.f32 %v7935, %v2761
      %v7968 = vmul.f32 %v7936, %v2761
      %v7969 = vmul.f32 %v7937, %v2761
      %v7970 = vmul.f32 %v7938, %v2761
      %v7971 = vmul.f32 %v7939, %v2761
      %v7972 = vmul.f32 %v7940, %v2761
      %v7973 = vmul.f32 %v7941, %v2761
      %v7974 = vmul.f32 %v7942, %v2761
      %v7975 = vmul.f32 %v7943, %v2761
      %v7976 = vadd.f32 %v7944, %v2796
      %v7977 = vadd.f32 %v7945, %v2796
      %v7978 = vadd.f32 %v7946, %v2796
      %v7979 = vadd.f32 %v7947, %v2796
      %v7980 = vadd.f32 %v7948, %v2796
      %v7981 = vadd.f32 %v7949, %v2796
      %v7982 = vadd.f32 %v7950, %v2796
      %v7983 = vadd.f32 %v7951, %v2796
      %v7984 = vadd.f32 %v7952, %v2796
      %v7985 = vadd.f32 %v7953, %v2796
      %v7986 = vadd.f32 %v7954, %v2796
      %v7987 = vadd.f32 %v7955, %v2796
      %v7988 = vadd.f32 %v7956, %v2796
      %v7989 = vadd.f32 %v7957, %v2796
      %v7990 = vadd.f32 %v7958, %v2796
      %v7991 = vadd.f32 %v7959, %v2796
      %v7992 = vadd.f32 %v7960, %v2796
      %v7993 = vadd.f32 %v7961, %v2796
      %v7994 = vadd.f32 %v7962, %v2796
      %v7995 = vadd.f32 %v7963, %v2796
      %v7996 = vadd.f32 %v7964, %v2796
      %v7997 = vadd.f32 %v7965, %v2796
      %v7998 = vadd.f32 %v7966, %v2796
      %v7999 = vadd.f32 %v7967, %v2796
      %v8000 = vadd.f32 %v7968, %v2796
      %v8001 = vadd.f32 %v7969, %v2796
      %v8002 = vadd.f32 %v7970, %v2796
      %v8003 = vadd.f32 %v7971, %v2796
      %v8004 = vadd.f32 %v7972, %v2796
      %v8005 = vadd.f32 %v7973, %v2796
      %v8006 = vadd.f32 %v7974, %v2796
      %v8007 = vadd.f32 %v7975, %v2796
      %v8008 = vmax.f32 %v7976, 0.0
      %v8009 = vmax.f32 %v7977, 0.0
      %v8010 = vmax.f32 %v7978, 0.0
      %v8011 = vmax.f32 %v7979, 0.0
      %v8012 = vmax.f32 %v7980, 0.0
      %v8013 = vmax.f32 %v7981, 0.0
      %v8014 = vmax.f32 %v7982, 0.0
      %v8015 = vmax.f32 %v7983, 0.0
      %v8016 = vmax.f32 %v7984, 0.0
      %v8017 = vmax.f32 %v7985, 0.0
      %v8018 = vmax.f32 %v7986, 0.0
      %v8019 = vmax.f32 %v7987, 0.0
      %v8020 = vmax.f32 %v7988, 0.0
      %v8021 = vmax.f32 %v7989, 0.0
      %v8022 = vmax.f32 %v7990, 0.0
      %v8023 = vmax.f32 %v7991, 0.0
      %v8024 = vmax.f32 %v7992, 0.0
      %v8025 = vmax.f32 %v7993, 0.0
      %v8026 = vmax.f32 %v7994, 0.0
      %v8027 = vmax.f32 %v7995, 0.0
      %v8028 = vmax.f32 %v7996, 0.0
      %v8029 = vmax.f32 %v7997, 0.0
      %v8030 = vmax.f32 %v7998, 0.0
      %v8031 = vmax.f32 %v7999, 0.0
      %v8032 = vmax.f32 %v8000, 0.0
      %v8033 = vmax.f32 %v8001, 0.0
      %v8034 = vmax.f32 %v8002, 0.0
      %v8035 = vmax.f32 %v8003, 0.0
      %v8036 = vmax.f32 %v8004, 0.0
      %v8037 = vmax.f32 %v8005, 0.0
      %v8038 = vmax.f32 %v8006, 0.0
      %v8039 = vmax.f32 %v8007, 0.0
      %8040 = vst.msk [vmem:[%s197] sm:$0xff] %vm198, %v8008
      %8041 = vst.msk [vmem:[%s197 + $0x8] sm:$0xff] %vm198, %v8009
      %8042 = vst.msk [vmem:[%s197 + $0x10] sm:$0xff] %vm198, %v8010
      %8043 = vst.msk [vmem:[%s197 + $0x18] sm:$0xff] %vm198, %v8011
      %8044 = vst.msk [vmem:[%s197 + $0x20] sm:$0xff] %vm198, %v8012
      %8045 = vst.msk [vmem:[%s197 + $0x28] sm:$0xff] %vm198, %v8013
      %8046 = vst.msk [vmem:[%s197 + $0x30] sm:$0xff] %vm198, %v8014
      %8047 = vst.msk [vmem:[%s197 + $0x38] sm:$0xff] %vm198, %v8015
      %8048 = vst.msk [vmem:[%s197 + $0x40] sm:$0xff] %vm198, %v8016
      %8049 = vst.msk [vmem:[%s197 + $0x48] sm:$0xff] %vm198, %v8017
      %8050 = vst.msk [vmem:[%s197 + $0x50] sm:$0xff] %vm198, %v8018
      %8051 = vst.msk [vmem:[%s197 + $0x58] sm:$0xff] %vm198, %v8019
      %8052 = vst.msk [vmem:[%s197 + $0x60] sm:$0xff] %vm198, %v8020
      %8053 = vst.msk [vmem:[%s197 + $0x68] sm:$0xff] %vm198, %v8021
      %8054 = vst.msk [vmem:[%s197 + $0x70] sm:$0xff] %vm198, %v8022
      %8055 = vst.msk [vmem:[%s197 + $0x78] sm:$0xff] %vm198, %v8023
      %8056 = vst.msk [vmem:[%s197 + $0x80] sm:$0xff] %vm198, %v8024
      %8057 = vst.msk [vmem:[%s197 + $0x88] sm:$0xff] %vm198, %v8025
      %8058 = vst.msk [vmem:[%s197 + $0x90] sm:$0xff] %vm198, %v8026
      %8059 = vst.msk [vmem:[%s197 + $0x98] sm:$0xff] %vm198, %v8027
      %8060 = vst.msk [vmem:[%s197 + $0xa0] sm:$0xff] %vm198, %v8028
      %8061 = vst.msk [vmem:[%s197 + $0xa8] sm:$0xff] %vm198, %v8029
      %8062 = vst.msk [vmem:[%s197 + $0xb0] sm:$0xff] %vm198, %v8030
      %8063 = vst.msk [vmem:[%s197 + $0xb8] sm:$0xff] %vm198, %v8031
      %8064 = vst.msk [vmem:[%s197 + $0xc0] sm:$0xff] %vm198, %v8032
      %8065 = vst.msk [vmem:[%s197 + $0xc8] sm:$0xff] %vm198, %v8033
      %8066 = vst.msk [vmem:[%s197 + $0xd0] sm:$0xff] %vm198, %v8034
      %8067 = vst.msk [vmem:[%s197 + $0xd8] sm:$0xff] %vm198, %v8035
      %8068 = vst.msk [vmem:[%s197 + $0xe0] sm:$0xff] %vm198, %v8036
      %8069 = vst.msk [vmem:[%s197 + $0xe8] sm:$0xff] %vm198, %v8037
      %8070 = vst.msk [vmem:[%s197 + $0xf0] sm:$0xff] %vm198, %v8038
      %8071 = vst.msk [vmem:[%s197 + $0xf8] sm:$0xff] %vm198, %v8039
      %p8072 = scmp.lt.s32.totalorder %s15, 1
      %s8073 = scalar_select %p8072, %s15, 1
      %s8074 = smul.addr %s8073, 32
      %s8075 = smul.addr %s8074, 8
      %s8076 = scalar_lea.vmem %s4, %s8075
      // Predicated region
      $region37: #{recurrent_block_forward.1} parent=35 // pred_check
        %p8077 = pneg %p122
      $region38: #{recurrent_block_forward.1} parent=35 // pred_check_branch
        %8079 = sbr.rel (%p8077) target = $region40
      $region39: #{recurrent_block_forward.1} parent=35 // pred_region
        _
      $region40: #{recurrent_block_forward.1} parent=35 // pred_fallthru
        _
    $region36: #{recurrent_block_forward.1} parent=5 // pred_fallthru
      _
    %p8080 = scmp.le.s32.totalorder 2, %s10
    // Predicated region
    $region41: #{recurrent_block_forward.1} parent=5 // pred_check
      %p8081 = pneg %p8080
    $region42: #{recurrent_block_forward.1} parent=5 // pred_check_branch
      %8083 = sbr.rel (%p8081) target = $region44
    $region43: #{recurrent_block_forward.1} parent=5 // pred_region
      %s8084 = ssub.s32 %s10, 2
      // Predicated region
      $region45: #{recurrent_block_forward.1} parent=43 // pred_check
        %p8085 = pneg %p128
      $region46: #{recurrent_block_forward.1} parent=43 // pred_check_branch
        %8087 = sbr.rel (%p8085) target = $region48
      $region47: #{recurrent_block_forward.1} parent=43 // pred_region
        %p8088 = scmp.lt.s32.totalorder %s16, 1
        %s8089 = scalar_select %p8088, %s16, 1
        %s8090 = smul.addr %s8089, 32
        %s8091 = smul.addr %s8090, 8
        %s8092 = scalar_lea.vmem %s4, %s8091
      $region48: #{recurrent_block_forward.1} parent=43 // pred_fallthru
        _
    $region44: #{recurrent_block_forward.1} parent=5 // pred_fallthru
      _
  $region6: #{recurrent_block_forward.1} parent=0 // loop_footer
    %s14 = sadd.s32 1, %s10
  $region7: #{recurrent_block_forward.1} parent=0 // loop_footer_branch
    %9 = sbr.rel target = $region3
  $region8: #{recurrent_block_forward.1} parent=0 // loop_exit
    _

</llo_original>
